<compile_context>
chip_gen: v5e
topology: v5e:2x2
jax: 0.10.0
libtpu: 0.0.40
codegen_flags: <defaults>
</compile_context>

<pallas_src>
import functools

import jax
import jax.numpy as jnp
from jax import lax
from jax.experimental import pallas as pl
from jax.experimental.pallas import tpu as pltpu

BN_EPS = 1e-5


def _round_up(v, m):
    return ((v + m - 1) // m) * m


# ----------------------------------------------------------------------------
# Kernel
# ----------------------------------------------------------------------------
def res_encoder3d_kernel(axm_ref, x_ref, w1_ref, s1_ref, b1_ref,
                         w2_ref, s2_ref, b2_ref, br_ref, o_ref,
                         *, D, H, W, Cout_p):
    """Fused ResEncoder3d forward for one sample; activations are (C, D*H*W)."""
    DHW = D * H * W
    HW = H * W

    # 27 per-tap halo masks (each a (1, DHW) row broadcast over channel
    # sublanes), combined once from the separable axis-validity rows and reused
    # by BOTH convs.  The centre tap (kd=kh=kw=1) stays unmasked.
    ax_lo = [axm_ref[0:1, :], axm_ref[2:3, :], axm_ref[4:5, :]]   # d, h, w "low"
    ax_hi = [axm_ref[1:2, :], axm_ref[3:4, :], axm_ref[5:6, :]]   # d, h, w "high"
    masks = []
    for kd in range(3):
        for kh in range(3):
            for kw in range(3):
                m = None
                for axis, k in ((0, kd), (1, kh), (2, kw)):
                    f = ax_lo[axis] if k == 0 else (ax_hi[axis] if k == 2 else None)
                    if f is not None:
                        m = f if m is None else m * f
                masks.append(m)                                   # None => all-ones

    def conv3x3(v, w_ref):
        """v: (C, DHW) f32, w_ref: (3, M, 9*C) bf16 -> (M, DHW) f32.

        kd-loop of 3 accumulating MXU matmuls (K = 9*C); only one kd chunk of
        the im2col (9 shifted/masked bf16 parts) is live at a time.
        """
        acc = None
        for kd in range(3):
            parts = []
            for kh in range(3):
                for kw in range(3):
                    tap = (kd * 3 + kh) * 3 + kw
                    off = (kd - 1) * HW + (kh - 1) * W + (kw - 1)
                    s = v if off == 0 else pltpu.roll(v, shift=(-off) % DHW, axis=1)
                    if masks[tap] is not None:
                        s = s * masks[tap]
                    parts.append(s.astype(jnp.bfloat16))
            # (9*C, DHW) bf16 chunk, consumed immediately by one matmul.
            col = jnp.concatenate(parts, axis=0)
            p = jnp.dot(w_ref[kd], col, preferred_element_type=jnp.float32)
            acc = p if acc is None else acc + p
        return acc

    x = x_ref[...]                                                # (Cin_p, DHW) f32

    # conv1 and the 1x1 residual in ONE matmul: rows [:Cout_p] are pre-BN
    # conv1, rows [Cout_p:] are the residual (its weights only touch the
    # unmasked centre tap of the kd=1 chunk, which is exactly x).
    hr = conv3x3(x, w1_ref)                                       # (2*Cout_p, DHW)
    h = jnp.maximum(hr[:Cout_p] * s1_ref[...] + b1_ref[...], 0.0)
    res = hr[Cout_p:] + br_ref[...]

    # out = relu(bn2(conv2(h)))
    y = conv3x3(h, w2_ref)                                        # (Cout_p, DHW)
    y = jnp.maximum(y * s2_ref[...] + b2_ref[...], 0.0)

    # out = relu(out + residual)  -- lane-dense (Cout_p, DHW) store
    o_ref[...] = jnp.maximum(y + res, 0.0).astype(o_ref.dtype)


# ----------------------------------------------------------------------------
# Host-side helpers
# ----------------------------------------------------------------------------
def _axis_masks(D, H, W):
    """(8, D*H*W) f32 separable halo-validity rows.

    Rows 0..5 = [d>=1, d<=D-2, h>=1, h<=H-2, w>=1, w<=W-2] over the flattened
    (d, h, w) lane axis; rows 6..7 are zero padding to a full sublane tile.
    Taps with k=0 on an axis (reading index-1 voxels) use the "low" row, taps
    with k=2 use the "high" row.
    """
    d, h, w = jnp.meshgrid(jnp.arange(D), jnp.arange(H), jnp.arange(W),
                           indexing="ij")
    rows = [d >= 1, d <= D - 2, h >= 1, h <= H - 2, w >= 1, w <= W - 2]
    m = jnp.stack([r.astype(jnp.float32).reshape(D * H * W) for r in rows])
    return jnp.pad(m, ((0, 2), (0, 0)))


def _fold_bn(conv_bias, bn):
    """Fold conv bias + eval-mode BN into per-channel (scale, bias)."""
    scale = bn["gamma"] / jnp.sqrt(bn["var"] + BN_EPS)
    bias = (conv_bias - bn["mean"]) * scale + bn["beta"]
    return scale, bias


def _pad_col(v, n):
    return jnp.pad(v, (0, n - v.shape[0])).reshape(n, 1)


def _vmem_limit_bytes():
    """Generation-aware scoped-VMEM limit (smaller headroom on 64 MiB parts)."""
    try:
        cap = int(pltpu.get_tpu_info().vmem_capacity_bytes)
    except Exception:
        cap = 128 * 1024 * 1024
    return (40 if cap <= 64 * 1024 * 1024 else 48) * 1024 * 1024


@functools.partial(jax.jit, static_argnames=("single_buffer_weights",))
def res_encoder3d_forward(x, params, single_buffer_weights=True):
    """x: (N, Cin, D, H, W) float32 (PyTorch NCDHW) -> (N, Cout, D, H, W) f32."""
    N, Cin, D, H, W = x.shape
    Cout = params["w1"].shape[0]
    DHW = D * H * W
    Cin_p = _round_up(Cin, 16)      # bf16 sublane packing -> pad channels to 16
    Cout_p = _round_up(Cout, 16)

    # Activations: NCDHW -> (N, C, D*H*W); channels zero-padded.  The flattened
    # spatial dim stays on the lane axis, so every load/store/matmul is
    # lane-dense and no transpose is needed at the boundary.
    x_flat = jnp.pad(x.reshape(N, Cin, DHW), ((0, 0), (0, Cin_p - Cin), (0, 0)))

    # conv1 weights (OIDHW) -> per-kd matmul matrices (3, Cout_p, 9*Cin_p) with
    # column index (kh*3 + kw)*Cin_p + ci; the 1x1 residual weights are stacked
    # as Cout_p extra output rows that only touch the centre tap of kd=1.
    w1 = jnp.pad(params["w1"], ((0, Cout_p - Cout), (0, Cin_p - Cin),
                                (0, 0), (0, 0), (0, 0)))
    w1_k = jnp.transpose(w1, (2, 0, 3, 4, 1)).reshape(3, Cout_p, 9 * Cin_p)
    wr = jnp.pad(params["w1x1"].reshape(Cout, Cin),
                 ((0, Cout_p - Cout), (0, Cin_p - Cin)))
    wres_k = jnp.zeros((3, Cout_p, 9 * Cin_p), jnp.float32)
    wres_k = wres_k.at[1, :, 4 * Cin_p:5 * Cin_p].set(wr)        # centre tap only
    w1f = jnp.concatenate([w1_k, wres_k], axis=1).astype(jnp.bfloat16)

    w2 = jnp.pad(params["w2"], ((0, Cout_p - Cout), (0, Cout_p - Cout),
                                (0, 0), (0, 0), (0, 0)))
    w2_k = (jnp.transpose(w2, (2, 0, 3, 4, 1))
            .reshape(3, Cout_p, 9 * Cout_p).astype(jnp.bfloat16))

    # Eval-mode BN folded into per-channel scale/bias (padded rows stay zero,
    # so padded channels remain exactly zero through every stage).
    s1, t1 = _fold_bn(params["b1"], params["bn1"])
    s2, t2 = _fold_bn(params["b2"], params["bn2"])
    s1, t1 = _pad_col(s1, Cout_p), _pad_col(t1, Cout_p)
    s2, t2 = _pad_col(s2, Cout_p), _pad_col(t2, Cout_p)
    br = _pad_col(params["b1x1"], Cout_p)

    axm = _axis_masks(D, H, W)                                   # (8, DHW) f32

    kernel = functools.partial(res_encoder3d_kernel, D=D, H=H, W=W, Cout_p=Cout_p)

    def const_spec(shape):
        # Grid-invariant operand (index_map constant across the grid):
        # single-buffer it to halve its pipeline footprint.
        idx = lambda n, s=shape: (0,) * len(s)
        if single_buffer_weights:
            return pl.BlockSpec(shape, idx, pipeline_mode=pl.Buffered(buffer_count=1))
        return pl.BlockSpec(shape, idx)

    out = pl.pallas_call(
        kernel,
        out_shape=jax.ShapeDtypeStruct((N, Cout_p, DHW), jnp.float32),
        grid=(N,),
        in_specs=[
            const_spec((8, DHW)),                                     # axis halo masks
            pl.BlockSpec((None, Cin_p, DHW), lambda n: (n, 0, 0)),    # x
            const_spec((3, 2 * Cout_p, 9 * Cin_p)),                   # conv1 + 1x1 fused
            const_spec((Cout_p, 1)), const_spec((Cout_p, 1)),         # bn1 scale / bias
            const_spec((3, Cout_p, 9 * Cout_p)),                      # conv2
            const_spec((Cout_p, 1)), const_spec((Cout_p, 1)),         # bn2 scale / bias
            const_spec((Cout_p, 1)),                                  # conv1x1 bias
        ],
        out_specs=pl.BlockSpec((None, Cout_p, DHW), lambda n: (n, 0, 0)),
        compiler_params=pltpu.CompilerParams(
            dimension_semantics=("parallel",),
            vmem_limit_bytes=_vmem_limit_bytes()),
    )(axm, x_flat, w1f, s1, t1, w2_k, s2, t2, br)

    return out[:, :Cout, :].reshape(N, Cout, D, H, W)


# ----------------------------------------------------------------------------
# Parameters (PyTorch-like layouts) + pure-JAX reference for correctness
# ----------------------------------------------------------------------------
def init_params(key, in_channels, out_channels):
    ks = jax.random.split(key, 14)
    n, u = jax.random.normal, jax.random.uniform
    return {
        "w1": 0.1 * n(ks[0], (out_channels, in_channels, 3, 3, 3), jnp.float32),
        "b1": 0.1 * n(ks[1], (out_channels,), jnp.float32),
        "w2": 0.1 * n(ks[2], (out_channels, out_channels, 3, 3, 3), jnp.float32),
        "b2": 0.1 * n(ks[3], (out_channels,), jnp.float32),
        "w1x1": 0.1 * n(ks[4], (out_channels, in_channels, 1, 1, 1), jnp.float32),
        "b1x1": 0.1 * n(ks[5], (out_channels,), jnp.float32),
        "bn1": {
            "gamma": 1.0 + 0.1 * n(ks[6], (out_channels,), jnp.float32),
            "beta": 0.1 * n(ks[7], (out_channels,), jnp.float32),
            "mean": 0.05 * n(ks[8], (out_channels,), jnp.float32),
            "var": 1.0 + 0.1 * u(ks[9], (out_channels,), jnp.float32),
        },
        "bn2": {
            "gamma": 1.0 + 0.1 * n(ks[10], (out_channels,), jnp.float32),
            "beta": 0.1 * n(ks[11], (out_channels,), jnp.float32),
            "mean": 0.05 * n(ks[12], (out_channels,), jnp.float32),
            "var": 1.0 + 0.1 * u(ks[13], (out_channels,), jnp.float32),
        },
    }


def _ref_forward(x, params):
    dn = ("NCDHW", "OIDHW", "NCDHW")

    def conv(v, w, b):
        y = lax.conv_general_dilated(v, w, (1, 1, 1), "SAME", dimension_numbers=dn)
        return y + b.reshape(1, -1, 1, 1, 1)

    def bn(y, p):
        scale = (p["gamma"] / jnp.sqrt(p["var"] + BN_EPS)).reshape(1, -1, 1, 1, 1)
        return (y - p["mean"].reshape(1, -1, 1, 1, 1)) * scale \
            + p["beta"].reshape(1, -1, 1, 1, 1)

    relu = lambda v: jnp.maximum(v, 0.0)
    residual = conv(x, params["w1x1"], params["b1x1"])
    out = relu(bn(conv(x, params["w1"], params["b1"]), params["bn1"]))
    out = relu(bn(conv(out, params["w2"], params["b2"]), params["bn2"]))
    return relu(out + residual)


# ----------------------------------------------------------------------------
if __name__ == "__main__":
    key = jax.random.PRNGKey(0)
    kx, kp = jax.random.split(key)

    N, Cin, Cout = 2, 4, 8
    D = H = W = 8
    x = jax.random.normal(kx, (N, Cin, D, H, W), jnp.float32)    # NCDHW (PyTorch)
    params = init_params(kp, Cin, Cout)

    try:
        out = jax.block_until_ready(
            res_encoder3d_forward(x, params, single_buffer_weights=True))
    except Exception:
        # Fallback: installed jax does not accept BlockSpec(pipeline_mode=...);
        # rebuild with default double-buffered grid-invariant operands.
        out = jax.block_until_ready(
            res_encoder3d_forward(x, params, single_buffer_weights=False))

    ref = _ref_forward(x, params)

    assert out.shape == (N, Cout, D, H, W)
    err = float(jnp.max(jnp.abs(out - ref)))
    # bf16 MXU operands (f32 accumulate + f32 epilogue) vs an all-f32 reference
    # -> relaxed tolerance.
    assert jnp.allclose(out, ref, atol=5e-2, rtol=5e-2), f"max abs err {err}"

    print("KERNEL_OK")
</pallas_src>

<mosaic_0001>
module attributes {stable_mosaic.version = 11 : i64} {
  func.func @res_encoder3d_kernel(%arg0: i32, %arg1: memref<8x512xf32, #tpu.memory_space<vmem>>, %arg2: memref<1x16x512xf32, #tpu.memory_space<vmem>>, %arg3: memref<3x32x144xbf16, #tpu.memory_space<vmem>>, %arg4: memref<16x1xf32, #tpu.memory_space<vmem>>, %arg5: memref<16x1xf32, #tpu.memory_space<vmem>>, %arg6: memref<3x16x144xbf16, #tpu.memory_space<vmem>>, %arg7: memref<16x1xf32, #tpu.memory_space<vmem>>, %arg8: memref<16x1xf32, #tpu.memory_space<vmem>>, %arg9: memref<16x1xf32, #tpu.memory_space<vmem>>, %arg10: memref<1x16x512xf32, #tpu.memory_space<vmem>>) attributes {dimension_semantics = [#tpu.dimension_semantics<parallel>], iteration_bounds = array<i64: 2>, scalar_prefetch = 0 : i64, scratch_operands = 0 : i64, tpu.core_type = #tpu.core_type<tc>, window_params = [{pipeline_mode = #tpu.pipeline_mode<synchronous>, transform_indices = @transform_0, window_bounds = array<i64: 8, 512>}, {transform_indices = @transform_1, window_bounds = array<i64: 1, 16, 512>}, {pipeline_mode = #tpu.pipeline_mode<synchronous>, transform_indices = @transform_2, window_bounds = array<i64: 3, 32, 144>}, {pipeline_mode = #tpu.pipeline_mode<synchronous>, transform_indices = @transform_3, window_bounds = array<i64: 16, 1>}, {pipeline_mode = #tpu.pipeline_mode<synchronous>, transform_indices = @transform_4, window_bounds = array<i64: 16, 1>}, {pipeline_mode = #tpu.pipeline_mode<synchronous>, transform_indices = @transform_5, window_bounds = array<i64: 3, 16, 144>}, {pipeline_mode = #tpu.pipeline_mode<synchronous>, transform_indices = @transform_6, window_bounds = array<i64: 16, 1>}, {pipeline_mode = #tpu.pipeline_mode<synchronous>, transform_indices = @transform_7, window_bounds = array<i64: 16, 1>}, {pipeline_mode = #tpu.pipeline_mode<synchronous>, transform_indices = @transform_8, window_bounds = array<i64: 16, 1>}, {transform_indices = @transform_9, window_bounds = array<i64: 1, 16, 512>}]} {
    %c0 = arith.constant 0 : index
    %c0_0 = arith.constant 0 : index
    %0 = vector.load %arg1[%c0, %c0_0] : memref<8x512xf32, #tpu.memory_space<vmem>>, vector<1x512xf32>
    %c2 = arith.constant 2 : index
    %c0_1 = arith.constant 0 : index
    %1 = vector.load %arg1[%c2, %c0_1] : memref<8x512xf32, #tpu.memory_space<vmem>>, vector<1x512xf32>
    %c4 = arith.constant 4 : index
    %c0_2 = arith.constant 0 : index
    %2 = vector.load %arg1[%c4, %c0_2] : memref<8x512xf32, #tpu.memory_space<vmem>>, vector<1x512xf32>
    %c1 = arith.constant 1 : index
    %c0_3 = arith.constant 0 : index
    %3 = vector.load %arg1[%c1, %c0_3] : memref<8x512xf32, #tpu.memory_space<vmem>>, vector<1x512xf32>
    %c3 = arith.constant 3 : index
    %c0_4 = arith.constant 0 : index
    %4 = vector.load %arg1[%c3, %c0_4] : memref<8x512xf32, #tpu.memory_space<vmem>>, vector<1x512xf32>
    %c5 = arith.constant 5 : index
    %c0_5 = arith.constant 0 : index
    %5 = vector.load %arg1[%c5, %c0_5] : memref<8x512xf32, #tpu.memory_space<vmem>>, vector<1x512xf32>
    %6 = arith.mulf %0, %1 : vector<1x512xf32>
    %7 = arith.mulf %6, %2 : vector<1x512xf32>
    %8 = arith.mulf %0, %1 : vector<1x512xf32>
    %9 = arith.mulf %0, %1 : vector<1x512xf32>
    %10 = arith.mulf %9, %5 : vector<1x512xf32>
    %11 = arith.mulf %0, %2 : vector<1x512xf32>
    %12 = arith.mulf %0, %5 : vector<1x512xf32>
    %13 = arith.mulf %0, %4 : vector<1x512xf32>
    %14 = arith.mulf %13, %2 : vector<1x512xf32>
    %15 = arith.mulf %0, %4 : vector<1x512xf32>
    %16 = arith.mulf %0, %4 : vector<1x512xf32>
    %17 = arith.mulf %16, %5 : vector<1x512xf32>
    %18 = arith.mulf %1, %2 : vector<1x512xf32>
    %19 = arith.mulf %1, %5 : vector<1x512xf32>
    %20 = arith.mulf %4, %2 : vector<1x512xf32>
    %21 = arith.mulf %4, %5 : vector<1x512xf32>
    %22 = arith.mulf %3, %1 : vector<1x512xf32>
    %23 = arith.mulf %22, %2 : vector<1x512xf32>
    %24 = arith.mulf %3, %1 : vector<1x512xf32>
    %25 = arith.mulf %3, %1 : vector<1x512xf32>
    %26 = arith.mulf %25, %5 : vector<1x512xf32>
    %27 = arith.mulf %3, %2 : vector<1x512xf32>
    %28 = arith.mulf %3, %5 : vector<1x512xf32>
    %29 = arith.mulf %3, %4 : vector<1x512xf32>
    %30 = arith.mulf %29, %2 : vector<1x512xf32>
    %31 = arith.mulf %3, %4 : vector<1x512xf32>
    %32 = arith.mulf %3, %4 : vector<1x512xf32>
    %33 = arith.mulf %32, %5 : vector<1x512xf32>
    %c0_6 = arith.constant 0 : index
    %c0_7 = arith.constant 0 : index
    %c0_8 = arith.constant 0 : index
    %34 = vector.load %arg2[%c0_6, %c0_7, %c0_8] : memref<1x16x512xf32, #tpu.memory_space<vmem>>, vector<1x16x512xf32>
    %35 = vector.shape_cast %34 : vector<1x16x512xf32> to vector<16x512xf32>
    %c73_i32 = arith.constant 73 : i32
    %36 = tpu.dynamic_rotate %35 by %c73_i32 dim 1 : vector<16x512xf32>, i32 -> vector<16x512xf32>
    %37 = vector.broadcast %7 : vector<1x512xf32> to vector<16x512xf32>
    %38 = arith.mulf %36, %37 : vector<16x512xf32>
    %39 = arith.truncf %38 : vector<16x512xf32> to vector<16x512xbf16>
    %c72_i32 = arith.constant 72 : i32
    %40 = tpu.dynamic_rotate %35 by %c72_i32 dim 1 : vector<16x512xf32>, i32 -> vector<16x512xf32>
    %41 = vector.broadcast %8 : vector<1x512xf32> to vector<16x512xf32>
    %42 = arith.mulf %40, %41 : vector<16x512xf32>
    %43 = arith.truncf %42 : vector<16x512xf32> to vector<16x512xbf16>
    %c71_i32 = arith.constant 71 : i32
    %44 = tpu.dynamic_rotate %35 by %c71_i32 dim 1 : vector<16x512xf32>, i32 -> vector<16x512xf32>
    %45 = vector.broadcast %10 : vector<1x512xf32> to vector<16x512xf32>
    %46 = arith.mulf %44, %45 : vector<16x512xf32>
    %47 = arith.truncf %46 : vector<16x512xf32> to vector<16x512xbf16>
    %c65_i32 = arith.constant 65 : i32
    %48 = tpu.dynamic_rotate %35 by %c65_i32 dim 1 : vector<16x512xf32>, i32 -> vector<16x512xf32>
    %49 = vector.broadcast %11 : vector<1x512xf32> to vector<16x512xf32>
    %50 = arith.mulf %48, %49 : vector<16x512xf32>
    %51 = arith.truncf %50 : vector<16x512xf32> to vector<16x512xbf16>
    %c64_i32 = arith.constant 64 : i32
    %52 = tpu.dynamic_rotate %35 by %c64_i32 dim 1 : vector<16x512xf32>, i32 -> vector<16x512xf32>
    %53 = vector.broadcast %0 : vector<1x512xf32> to vector<16x512xf32>
    %54 = arith.mulf %52, %53 : vector<16x512xf32>
    %55 = arith.truncf %54 : vector<16x512xf32> to vector<16x512xbf16>
    %c63_i32 = arith.constant 63 : i32
    %56 = tpu.dynamic_rotate %35 by %c63_i32 dim 1 : vector<16x512xf32>, i32 -> vector<16x512xf32>
    %57 = vector.broadcast %12 : vector<1x512xf32> to vector<16x512xf32>
    %58 = arith.mulf %56, %57 : vector<16x512xf32>
    %59 = arith.truncf %58 : vector<16x512xf32> to vector<16x512xbf16>
    %c57_i32 = arith.constant 57 : i32
    %60 = tpu.dynamic_rotate %35 by %c57_i32 dim 1 : vector<16x512xf32>, i32 -> vector<16x512xf32>
    %61 = vector.broadcast %14 : vector<1x512xf32> to vector<16x512xf32>
    %62 = arith.mulf %60, %61 : vector<16x512xf32>
    %63 = arith.truncf %62 : vector<16x512xf32> to vector<16x512xbf16>
    %c56_i32 = arith.constant 56 : i32
    %64 = tpu.dynamic_rotate %35 by %c56_i32 dim 1 : vector<16x512xf32>, i32 -> vector<16x512xf32>
    %65 = vector.broadcast %15 : vector<1x512xf32> to vector<16x512xf32>
    %66 = arith.mulf %64, %65 : vector<16x512xf32>
    %67 = arith.truncf %66 : vector<16x512xf32> to vector<16x512xbf16>
    %c55_i32 = arith.constant 55 : i32
    %68 = tpu.dynamic_rotate %35 by %c55_i32 dim 1 : vector<16x512xf32>, i32 -> vector<16x512xf32>
    %69 = vector.broadcast %17 : vector<1x512xf32> to vector<16x512xf32>
    %70 = arith.mulf %68, %69 : vector<16x512xf32>
    %71 = arith.truncf %70 : vector<16x512xf32> to vector<16x512xbf16>
    %72 = tpu.concatenate %39, %43, %47, %51, %55, %59, %63, %67, %71 in 0 : vector<16x512xbf16>, vector<16x512xbf16>, vector<16x512xbf16>, vector<16x512xbf16>, vector<16x512xbf16>, vector<16x512xbf16>, vector<16x512xbf16>, vector<16x512xbf16>, vector<16x512xbf16> -> vector<144x512xbf16>
    %c0_9 = arith.constant 0 : index
    %c0_10 = arith.constant 0 : index
    %c0_11 = arith.constant 0 : index
    %73 = vector.load %arg3[%c0_9, %c0_10, %c0_11] : memref<3x32x144xbf16, #tpu.memory_space<vmem>>, vector<1x32x144xbf16>
    %74 = vector.shape_cast %73 : vector<1x32x144xbf16> to vector<32x144xbf16>
    %cst = arith.constant dense<0.000000e+00> : vector<32x512xf32>
    %75 = tpu.matmul %74, %72, %cst {dimension_numbers = #tpu.dot_dimension_numbers<[1], [0], [0], [1], [0, 0, 1, 1], [], []>} : vector<32x144xbf16>, vector<144x512xbf16>, vector<32x512xf32> -> vector<32x512xf32>
    %c9_i32 = arith.constant 9 : i32
    %76 = tpu.dynamic_rotate %35 by %c9_i32 dim 1 : vector<16x512xf32>, i32 -> vector<16x512xf32>
    %77 = vector.broadcast %18 : vector<1x512xf32> to vector<16x512xf32>
    %78 = arith.mulf %76, %77 : vector<16x512xf32>
    %79 = arith.truncf %78 : vector<16x512xf32> to vector<16x512xbf16>
    %c8_i32 = arith.constant 8 : i32
    %80 = tpu.dynamic_rotate %35 by %c8_i32 dim 1 : vector<16x512xf32>, i32 -> vector<16x512xf32>
    %81 = vector.broadcast %1 : vector<1x512xf32> to vector<16x512xf32>
    %82 = arith.mulf %80, %81 : vector<16x512xf32>
    %83 = arith.truncf %82 : vector<16x512xf32> to vector<16x512xbf16>
    %c7_i32 = arith.constant 7 : i32
    %84 = tpu.dynamic_rotate %35 by %c7_i32 dim 1 : vector<16x512xf32>, i32 -> vector<16x512xf32>
    %85 = vector.broadcast %19 : vector<1x512xf32> to vector<16x512xf32>
    %86 = arith.mulf %84, %85 : vector<16x512xf32>
    %87 = arith.truncf %86 : vector<16x512xf32> to vector<16x512xbf16>
    %c1_i32 = arith.constant 1 : i32
    %88 = tpu.dynamic_rotate %35 by %c1_i32 dim 1 : vector<16x512xf32>, i32 -> vector<16x512xf32>
    %89 = vector.broadcast %2 : vector<1x512xf32> to vector<16x512xf32>
    %90 = arith.mulf %88, %89 : vector<16x512xf32>
    %91 = arith.truncf %90 : vector<16x512xf32> to vector<16x512xbf16>
    %92 = arith.truncf %35 : vector<16x512xf32> to vector<16x512xbf16>
    %c511_i32 = arith.constant 511 : i32
    %93 = tpu.dynamic_rotate %35 by %c511_i32 dim 1 : vector<16x512xf32>, i32 -> vector<16x512xf32>
    %94 = vector.broadcast %5 : vector<1x512xf32> to vector<16x512xf32>
    %95 = arith.mulf %93, %94 : vector<16x512xf32>
    %96 = arith.truncf %95 : vector<16x512xf32> to vector<16x512xbf16>
    %c505_i32 = arith.constant 505 : i32
    %97 = tpu.dynamic_rotate %35 by %c505_i32 dim 1 : vector<16x512xf32>, i32 -> vector<16x512xf32>
    %98 = vector.broadcast %20 : vector<1x512xf32> to vector<16x512xf32>
    %99 = arith.mulf %97, %98 : vector<16x512xf32>
    %100 = arith.truncf %99 : vector<16x512xf32> to vector<16x512xbf16>
    %c504_i32 = arith.constant 504 : i32
    %101 = tpu.dynamic_rotate %35 by %c504_i32 dim 1 : vector<16x512xf32>, i32 -> vector<16x512xf32>
    %102 = vector.broadcast %4 : vector<1x512xf32> to vector<16x512xf32>
    %103 = arith.mulf %101, %102 : vector<16x512xf32>
    %104 = arith.truncf %103 : vector<16x512xf32> to vector<16x512xbf16>
    %c503_i32 = arith.constant 503 : i32
    %105 = tpu.dynamic_rotate %35 by %c503_i32 dim 1 : vector<16x512xf32>, i32 -> vector<16x512xf32>
    %106 = vector.broadcast %21 : vector<1x512xf32> to vector<16x512xf32>
    %107 = arith.mulf %105, %106 : vector<16x512xf32>
    %108 = arith.truncf %107 : vector<16x512xf32> to vector<16x512xbf16>
    %109 = tpu.concatenate %79, %83, %87, %91, %92, %96, %100, %104, %108 in 0 : vector<16x512xbf16>, vector<16x512xbf16>, vector<16x512xbf16>, vector<16x512xbf16>, vector<16x512xbf16>, vector<16x512xbf16>, vector<16x512xbf16>, vector<16x512xbf16>, vector<16x512xbf16> -> vector<144x512xbf16>
    %c1_12 = arith.constant 1 : index
    %c0_13 = arith.constant 0 : index
    %c0_14 = arith.constant 0 : index
    %110 = vector.load %arg3[%c1_12, %c0_13, %c0_14] : memref<3x32x144xbf16, #tpu.memory_space<vmem>>, vector<1x32x144xbf16>
    %111 = vector.shape_cast %110 : vector<1x32x144xbf16> to vector<32x144xbf16>
    %cst_15 = arith.constant dense<0.000000e+00> : vector<32x512xf32>
    %112 = tpu.matmul %111, %109, %cst_15 {dimension_numbers = #tpu.dot_dimension_numbers<[1], [0], [0], [1], [0, 0, 1, 1], [], []>} : vector<32x144xbf16>, vector<144x512xbf16>, vector<32x512xf32> -> vector<32x512xf32>
    %113 = arith.addf %75, %112 : vector<32x512xf32>
    %c457_i32 = arith.constant 457 : i32
    %114 = tpu.dynamic_rotate %35 by %c457_i32 dim 1 : vector<16x512xf32>, i32 -> vector<16x512xf32>
    %115 = vector.broadcast %23 : vector<1x512xf32> to vector<16x512xf32>
    %116 = arith.mulf %114, %115 : vector<16x512xf32>
    %117 = arith.truncf %116 : vector<16x512xf32> to vector<16x512xbf16>
    %c456_i32 = arith.constant 456 : i32
    %118 = tpu.dynamic_rotate %35 by %c456_i32 dim 1 : vector<16x512xf32>, i32 -> vector<16x512xf32>
    %119 = vector.broadcast %24 : vector<1x512xf32> to vector<16x512xf32>
    %120 = arith.mulf %118, %119 : vector<16x512xf32>
    %121 = arith.truncf %120 : vector<16x512xf32> to vector<16x512xbf16>
    %c455_i32 = arith.constant 455 : i32
    %122 = tpu.dynamic_rotate %35 by %c455_i32 dim 1 : vector<16x512xf32>, i32 -> vector<16x512xf32>
    %123 = vector.broadcast %26 : vector<1x512xf32> to vector<16x512xf32>
    %124 = arith.mulf %122, %123 : vector<16x512xf32>
    %125 = arith.truncf %124 : vector<16x512xf32> to vector<16x512xbf16>
    %c449_i32 = arith.constant 449 : i32
    %126 = tpu.dynamic_rotate %35 by %c449_i32 dim 1 : vector<16x512xf32>, i32 -> vector<16x512xf32>
    %127 = vector.broadcast %27 : vector<1x512xf32> to vector<16x512xf32>
    %128 = arith.mulf %126, %127 : vector<16x512xf32>
    %129 = arith.truncf %128 : vector<16x512xf32> to vector<16x512xbf16>
    %c448_i32 = arith.constant 448 : i32
    %130 = tpu.dynamic_rotate %35 by %c448_i32 dim 1 : vector<16x512xf32>, i32 -> vector<16x512xf32>
    %131 = vector.broadcast %3 : vector<1x512xf32> to vector<16x512xf32>
    %132 = arith.mulf %130, %131 : vector<16x512xf32>
    %133 = arith.truncf %132 : vector<16x512xf32> to vector<16x512xbf16>
    %c447_i32 = arith.constant 447 : i32
    %134 = tpu.dynamic_rotate %35 by %c447_i32 dim 1 : vector<16x512xf32>, i32 -> vector<16x512xf32>
    %135 = vector.broadcast %28 : vector<1x512xf32> to vector<16x512xf32>
    %136 = arith.mulf %134, %135 : vector<16x512xf32>
    %137 = arith.truncf %136 : vector<16x512xf32> to vector<16x512xbf16>
    %c441_i32 = arith.constant 441 : i32
    %138 = tpu.dynamic_rotate %35 by %c441_i32 dim 1 : vector<16x512xf32>, i32 -> vector<16x512xf32>
    %139 = vector.broadcast %30 : vector<1x512xf32> to vector<16x512xf32>
    %140 = arith.mulf %138, %139 : vector<16x512xf32>
    %141 = arith.truncf %140 : vector<16x512xf32> to vector<16x512xbf16>
    %c440_i32 = arith.constant 440 : i32
    %142 = tpu.dynamic_rotate %35 by %c440_i32 dim 1 : vector<16x512xf32>, i32 -> vector<16x512xf32>
    %143 = vector.broadcast %31 : vector<1x512xf32> to vector<16x512xf32>
    %144 = arith.mulf %142, %143 : vector<16x512xf32>
    %145 = arith.truncf %144 : vector<16x512xf32> to vector<16x512xbf16>
    %c439_i32 = arith.constant 439 : i32
    %146 = tpu.dynamic_rotate %35 by %c439_i32 dim 1 : vector<16x512xf32>, i32 -> vector<16x512xf32>
    %147 = vector.broadcast %33 : vector<1x512xf32> to vector<16x512xf32>
    %148 = arith.mulf %146, %147 : vector<16x512xf32>
    %149 = arith.truncf %148 : vector<16x512xf32> to vector<16x512xbf16>
    %150 = tpu.concatenate %117, %121, %125, %129, %133, %137, %141, %145, %149 in 0 : vector<16x512xbf16>, vector<16x512xbf16>, vector<16x512xbf16>, vector<16x512xbf16>, vector<16x512xbf16>, vector<16x512xbf16>, vector<16x512xbf16>, vector<16x512xbf16>, vector<16x512xbf16> -> vector<144x512xbf16>
    %c2_16 = arith.constant 2 : index
    %c0_17 = arith.constant 0 : index
    %c0_18 = arith.constant 0 : index
    %151 = vector.load %arg3[%c2_16, %c0_17, %c0_18] : memref<3x32x144xbf16, #tpu.memory_space<vmem>>, vector<1x32x144xbf16>
    %152 = vector.shape_cast %151 : vector<1x32x144xbf16> to vector<32x144xbf16>
    %cst_19 = arith.constant dense<0.000000e+00> : vector<32x512xf32>
    %153 = tpu.matmul %152, %150, %cst_19 {dimension_numbers = #tpu.dot_dimension_numbers<[1], [0], [0], [1], [0, 0, 1, 1], [], []>} : vector<32x144xbf16>, vector<144x512xbf16>, vector<32x512xf32> -> vector<32x512xf32>
    %154 = arith.addf %113, %153 : vector<32x512xf32>
    %155 = vector.extract_strided_slice %154 {offsets = [0, 0], sizes = [16, 512], strides = [1, 1]} : vector<32x512xf32> to vector<16x512xf32>
    %c0_20 = arith.constant 0 : index
    %c0_21 = arith.constant 0 : index
    %156 = vector.load %arg4[%c0_20, %c0_21] : memref<16x1xf32, #tpu.memory_space<vmem>>, vector<16x1xf32>
    %157 = vector.broadcast %156 : vector<16x1xf32> to vector<16x512xf32>
    %158 = arith.mulf %155, %157 : vector<16x512xf32>
    %c0_22 = arith.constant 0 : index
    %c0_23 = arith.constant 0 : index
    %159 = vector.load %arg5[%c0_22, %c0_23] : memref<16x1xf32, #tpu.memory_space<vmem>>, vector<16x1xf32>
    %160 = vector.broadcast %159 : vector<16x1xf32> to vector<16x512xf32>
    %161 = arith.addf %158, %160 : vector<16x512xf32>
    %cst_24 = arith.constant 0.000000e+00 : f32
    %162 = vector.broadcast %cst_24 : f32 to vector<16x512xf32>
    %163 = arith.maximumf %161, %162 : vector<16x512xf32>
    %164 = vector.extract_strided_slice %154 {offsets = [16, 0], sizes = [16, 512], strides = [1, 1]} : vector<32x512xf32> to vector<16x512xf32>
    %c0_25 = arith.constant 0 : index
    %c0_26 = arith.constant 0 : index
    %165 = vector.load %arg9[%c0_25, %c0_26] : memref<16x1xf32, #tpu.memory_space<vmem>>, vector<16x1xf32>
    %166 = vector.broadcast %165 : vector<16x1xf32> to vector<16x512xf32>
    %167 = arith.addf %164, %166 : vector<16x512xf32>
    %c73_i32_27 = arith.constant 73 : i32
    %168 = tpu.dynamic_rotate %163 by %c73_i32_27 dim 1 : vector<16x512xf32>, i32 -> vector<16x512xf32>
    %169 = vector.broadcast %7 : vector<1x512xf32> to vector<16x512xf32>
    %170 = arith.mulf %168, %169 : vector<16x512xf32>
    %171 = arith.truncf %170 : vector<16x512xf32> to vector<16x512xbf16>
    %c72_i32_28 = arith.constant 72 : i32
    %172 = tpu.dynamic_rotate %163 by %c72_i32_28 dim 1 : vector<16x512xf32>, i32 -> vector<16x512xf32>
    %173 = vector.broadcast %8 : vector<1x512xf32> to vector<16x512xf32>
    %174 = arith.mulf %172, %173 : vector<16x512xf32>
    %175 = arith.truncf %174 : vector<16x512xf32> to vector<16x512xbf16>
    %c71_i32_29 = arith.constant 71 : i32
    %176 = tpu.dynamic_rotate %163 by %c71_i32_29 dim 1 : vector<16x512xf32>, i32 -> vector<16x512xf32>
    %177 = vector.broadcast %10 : vector<1x512xf32> to vector<16x512xf32>
    %178 = arith.mulf %176, %177 : vector<16x512xf32>
    %179 = arith.truncf %178 : vector<16x512xf32> to vector<16x512xbf16>
    %c65_i32_30 = arith.constant 65 : i32
    %180 = tpu.dynamic_rotate %163 by %c65_i32_30 dim 1 : vector<16x512xf32>, i32 -> vector<16x512xf32>
    %181 = vector.broadcast %11 : vector<1x512xf32> to vector<16x512xf32>
    %182 = arith.mulf %180, %181 : vector<16x512xf32>
    %183 = arith.truncf %182 : vector<16x512xf32> to vector<16x512xbf16>
    %c64_i32_31 = arith.constant 64 : i32
    %184 = tpu.dynamic_rotate %163 by %c64_i32_31 dim 1 : vector<16x512xf32>, i32 -> vector<16x512xf32>
    %185 = vector.broadcast %0 : vector<1x512xf32> to vector<16x512xf32>
    %186 = arith.mulf %184, %185 : vector<16x512xf32>
    %187 = arith.truncf %186 : vector<16x512xf32> to vector<16x512xbf16>
    %c63_i32_32 = arith.constant 63 : i32
    %188 = tpu.dynamic_rotate %163 by %c63_i32_32 dim 1 : vector<16x512xf32>, i32 -> vector<16x512xf32>
    %189 = vector.broadcast %12 : vector<1x512xf32> to vector<16x512xf32>
    %190 = arith.mulf %188, %189 : vector<16x512xf32>
    %191 = arith.truncf %190 : vector<16x512xf32> to vector<16x512xbf16>
    %c57_i32_33 = arith.constant 57 : i32
    %192 = tpu.dynamic_rotate %163 by %c57_i32_33 dim 1 : vector<16x512xf32>, i32 -> vector<16x512xf32>
    %193 = vector.broadcast %14 : vector<1x512xf32> to vector<16x512xf32>
    %194 = arith.mulf %192, %193 : vector<16x512xf32>
    %195 = arith.truncf %194 : vector<16x512xf32> to vector<16x512xbf16>
    %c56_i32_34 = arith.constant 56 : i32
    %196 = tpu.dynamic_rotate %163 by %c56_i32_34 dim 1 : vector<16x512xf32>, i32 -> vector<16x512xf32>
    %197 = vector.broadcast %15 : vector<1x512xf32> to vector<16x512xf32>
    %198 = arith.mulf %196, %197 : vector<16x512xf32>
    %199 = arith.truncf %198 : vector<16x512xf32> to vector<16x512xbf16>
    %c55_i32_35 = arith.constant 55 : i32
    %200 = tpu.dynamic_rotate %163 by %c55_i32_35 dim 1 : vector<16x512xf32>, i32 -> vector<16x512xf32>
    %201 = vector.broadcast %17 : vector<1x512xf32> to vector<16x512xf32>
    %202 = arith.mulf %200, %201 : vector<16x512xf32>
    %203 = arith.truncf %202 : vector<16x512xf32> to vector<16x512xbf16>
    %204 = tpu.concatenate %171, %175, %179, %183, %187, %191, %195, %199, %203 in 0 : vector<16x512xbf16>, vector<16x512xbf16>, vector<16x512xbf16>, vector<16x512xbf16>, vector<16x512xbf16>, vector<16x512xbf16>, vector<16x512xbf16>, vector<16x512xbf16>, vector<16x512xbf16> -> vector<144x512xbf16>
    %c0_36 = arith.constant 0 : index
    %c0_37 = arith.constant 0 : index
    %c0_38 = arith.constant 0 : index
    %205 = vector.load %arg6[%c0_36, %c0_37, %c0_38] : memref<3x16x144xbf16, #tpu.memory_space<vmem>>, vector<1x16x144xbf16>
    %206 = vector.shape_cast %205 : vector<1x16x144xbf16> to vector<16x144xbf16>
    %cst_39 = arith.constant dense<0.000000e+00> : vector<16x512xf32>
    %207 = tpu.matmul %206, %204, %cst_39 {dimension_numbers = #tpu.dot_dimension_numbers<[1], [0], [0], [1], [0, 0, 1, 1], [], []>} : vector<16x144xbf16>, vector<144x512xbf16>, vector<16x512xf32> -> vector<16x512xf32>
    %c9_i32_40 = arith.constant 9 : i32
    %208 = tpu.dynamic_rotate %163 by %c9_i32_40 dim 1 : vector<16x512xf32>, i32 -> vector<16x512xf32>
    %209 = vector.broadcast %18 : vector<1x512xf32> to vector<16x512xf32>
    %210 = arith.mulf %208, %209 : vector<16x512xf32>
    %211 = arith.truncf %210 : vector<16x512xf32> to vector<16x512xbf16>
    %c8_i32_41 = arith.constant 8 : i32
    %212 = tpu.dynamic_rotate %163 by %c8_i32_41 dim 1 : vector<16x512xf32>, i32 -> vector<16x512xf32>
    %213 = vector.broadcast %1 : vector<1x512xf32> to vector<16x512xf32>
    %214 = arith.mulf %212, %213 : vector<16x512xf32>
    %215 = arith.truncf %214 : vector<16x512xf32> to vector<16x512xbf16>
    %c7_i32_42 = arith.constant 7 : i32
    %216 = tpu.dynamic_rotate %163 by %c7_i32_42 dim 1 : vector<16x512xf32>, i32 -> vector<16x512xf32>
    %217 = vector.broadcast %19 : vector<1x512xf32> to vector<16x512xf32>
    %218 = arith.mulf %216, %217 : vector<16x512xf32>
    %219 = arith.truncf %218 : vector<16x512xf32> to vector<16x512xbf16>
    %c1_i32_43 = arith.constant 1 : i32
    %220 = tpu.dynamic_rotate %163 by %c1_i32_43 dim 1 : vector<16x512xf32>, i32 -> vector<16x512xf32>
    %221 = vector.broadcast %2 : vector<1x512xf32> to vector<16x512xf32>
    %222 = arith.mulf %220, %221 : vector<16x512xf32>
    %223 = arith.truncf %222 : vector<16x512xf32> to vector<16x512xbf16>
    %224 = arith.truncf %163 : vector<16x512xf32> to vector<16x512xbf16>
    %c511_i32_44 = arith.constant 511 : i32
    %225 = tpu.dynamic_rotate %163 by %c511_i32_44 dim 1 : vector<16x512xf32>, i32 -> vector<16x512xf32>
    %226 = vector.broadcast %5 : vector<1x512xf32> to vector<16x512xf32>
    %227 = arith.mulf %225, %226 : vector<16x512xf32>
    %228 = arith.truncf %227 : vector<16x512xf32> to vector<16x512xbf16>
    %c505_i32_45 = arith.constant 505 : i32
    %229 = tpu.dynamic_rotate %163 by %c505_i32_45 dim 1 : vector<16x512xf32>, i32 -> vector<16x512xf32>
    %230 = vector.broadcast %20 : vector<1x512xf32> to vector<16x512xf32>
    %231 = arith.mulf %229, %230 : vector<16x512xf32>
    %232 = arith.truncf %231 : vector<16x512xf32> to vector<16x512xbf16>
    %c504_i32_46 = arith.constant 504 : i32
    %233 = tpu.dynamic_rotate %163 by %c504_i32_46 dim 1 : vector<16x512xf32>, i32 -> vector<16x512xf32>
    %234 = vector.broadcast %4 : vector<1x512xf32> to vector<16x512xf32>
    %235 = arith.mulf %233, %234 : vector<16x512xf32>
    %236 = arith.truncf %235 : vector<16x512xf32> to vector<16x512xbf16>
    %c503_i32_47 = arith.constant 503 : i32
    %237 = tpu.dynamic_rotate %163 by %c503_i32_47 dim 1 : vector<16x512xf32>, i32 -> vector<16x512xf32>
    %238 = vector.broadcast %21 : vector<1x512xf32> to vector<16x512xf32>
    %239 = arith.mulf %237, %238 : vector<16x512xf32>
    %240 = arith.truncf %239 : vector<16x512xf32> to vector<16x512xbf16>
    %241 = tpu.concatenate %211, %215, %219, %223, %224, %228, %232, %236, %240 in 0 : vector<16x512xbf16>, vector<16x512xbf16>, vector<16x512xbf16>, vector<16x512xbf16>, vector<16x512xbf16>, vector<16x512xbf16>, vector<16x512xbf16>, vector<16x512xbf16>, vector<16x512xbf16> -> vector<144x512xbf16>
    %c1_48 = arith.constant 1 : index
    %c0_49 = arith.constant 0 : index
    %c0_50 = arith.constant 0 : index
    %242 = vector.load %arg6[%c1_48, %c0_49, %c0_50] : memref<3x16x144xbf16, #tpu.memory_space<vmem>>, vector<1x16x144xbf16>
    %243 = vector.shape_cast %242 : vector<1x16x144xbf16> to vector<16x144xbf16>
    %cst_51 = arith.constant dense<0.000000e+00> : vector<16x512xf32>
    %244 = tpu.matmul %243, %241, %cst_51 {dimension_numbers = #tpu.dot_dimension_numbers<[1], [0], [0], [1], [0, 0, 1, 1], [], []>} : vector<16x144xbf16>, vector<144x512xbf16>, vector<16x512xf32> -> vector<16x512xf32>
    %245 = arith.addf %207, %244 : vector<16x512xf32>
    %c457_i32_52 = arith.constant 457 : i32
    %246 = tpu.dynamic_rotate %163 by %c457_i32_52 dim 1 : vector<16x512xf32>, i32 -> vector<16x512xf32>
    %247 = vector.broadcast %23 : vector<1x512xf32> to vector<16x512xf32>
    %248 = arith.mulf %246, %247 : vector<16x512xf32>
    %249 = arith.truncf %248 : vector<16x512xf32> to vector<16x512xbf16>
    %c456_i32_53 = arith.constant 456 : i32
    %250 = tpu.dynamic_rotate %163 by %c456_i32_53 dim 1 : vector<16x512xf32>, i32 -> vector<16x512xf32>
    %251 = vector.broadcast %24 : vector<1x512xf32> to vector<16x512xf32>
    %252 = arith.mulf %250, %251 : vector<16x512xf32>
    %253 = arith.truncf %252 : vector<16x512xf32> to vector<16x512xbf16>
    %c455_i32_54 = arith.constant 455 : i32
    %254 = tpu.dynamic_rotate %163 by %c455_i32_54 dim 1 : vector<16x512xf32>, i32 -> vector<16x512xf32>
    %255 = vector.broadcast %26 : vector<1x512xf32> to vector<16x512xf32>
    %256 = arith.mulf %254, %255 : vector<16x512xf32>
    %257 = arith.truncf %256 : vector<16x512xf32> to vector<16x512xbf16>
    %c449_i32_55 = arith.constant 449 : i32
    %258 = tpu.dynamic_rotate %163 by %c449_i32_55 dim 1 : vector<16x512xf32>, i32 -> vector<16x512xf32>
    %259 = vector.broadcast %27 : vector<1x512xf32> to vector<16x512xf32>
    %260 = arith.mulf %258, %259 : vector<16x512xf32>
    %261 = arith.truncf %260 : vector<16x512xf32> to vector<16x512xbf16>
    %c448_i32_56 = arith.constant 448 : i32
    %262 = tpu.dynamic_rotate %163 by %c448_i32_56 dim 1 : vector<16x512xf32>, i32 -> vector<16x512xf32>
    %263 = vector.broadcast %3 : vector<1x512xf32> to vector<16x512xf32>
    %264 = arith.mulf %262, %263 : vector<16x512xf32>
    %265 = arith.truncf %264 : vector<16x512xf32> to vector<16x512xbf16>
    %c447_i32_57 = arith.constant 447 : i32
    %266 = tpu.dynamic_rotate %163 by %c447_i32_57 dim 1 : vector<16x512xf32>, i32 -> vector<16x512xf32>
    %267 = vector.broadcast %28 : vector<1x512xf32> to vector<16x512xf32>
    %268 = arith.mulf %266, %267 : vector<16x512xf32>
    %269 = arith.truncf %268 : vector<16x512xf32> to vector<16x512xbf16>
    %c441_i32_58 = arith.constant 441 : i32
    %270 = tpu.dynamic_rotate %163 by %c441_i32_58 dim 1 : vector<16x512xf32>, i32 -> vector<16x512xf32>
    %271 = vector.broadcast %30 : vector<1x512xf32> to vector<16x512xf32>
    %272 = arith.mulf %270, %271 : vector<16x512xf32>
    %273 = arith.truncf %272 : vector<16x512xf32> to vector<16x512xbf16>
    %c440_i32_59 = arith.constant 440 : i32
    %274 = tpu.dynamic_rotate %163 by %c440_i32_59 dim 1 : vector<16x512xf32>, i32 -> vector<16x512xf32>
    %275 = vector.broadcast %31 : vector<1x512xf32> to vector<16x512xf32>
    %276 = arith.mulf %274, %275 : vector<16x512xf32>
    %277 = arith.truncf %276 : vector<16x512xf32> to vector<16x512xbf16>
    %c439_i32_60 = arith.constant 439 : i32
    %278 = tpu.dynamic_rotate %163 by %c439_i32_60 dim 1 : vector<16x512xf32>, i32 -> vector<16x512xf32>
    %279 = vector.broadcast %33 : vector<1x512xf32> to vector<16x512xf32>
    %280 = arith.mulf %278, %279 : vector<16x512xf32>
    %281 = arith.truncf %280 : vector<16x512xf32> to vector<16x512xbf16>
    %282 = tpu.concatenate %249, %253, %257, %261, %265, %269, %273, %277, %281 in 0 : vector<16x512xbf16>, vector<16x512xbf16>, vector<16x512xbf16>, vector<16x512xbf16>, vector<16x512xbf16>, vector<16x512xbf16>, vector<16x512xbf16>, vector<16x512xbf16>, vector<16x512xbf16> -> vector<144x512xbf16>
    %c2_61 = arith.constant 2 : index
    %c0_62 = arith.constant 0 : index
    %c0_63 = arith.constant 0 : index
    %283 = vector.load %arg6[%c2_61, %c0_62, %c0_63] : memref<3x16x144xbf16, #tpu.memory_space<vmem>>, vector<1x16x144xbf16>
    %284 = vector.shape_cast %283 : vector<1x16x144xbf16> to vector<16x144xbf16>
    %cst_64 = arith.constant dense<0.000000e+00> : vector<16x512xf32>
    %285 = tpu.matmul %284, %282, %cst_64 {dimension_numbers = #tpu.dot_dimension_numbers<[1], [0], [0], [1], [0, 0, 1, 1], [], []>} : vector<16x144xbf16>, vector<144x512xbf16>, vector<16x512xf32> -> vector<16x512xf32>
    %286 = arith.addf %245, %285 : vector<16x512xf32>
    %c0_65 = arith.constant 0 : index
    %c0_66 = arith.constant 0 : index
    %287 = vector.load %arg7[%c0_65, %c0_66] : memref<16x1xf32, #tpu.memory_space<vmem>>, vector<16x1xf32>
    %288 = vector.broadcast %287 : vector<16x1xf32> to vector<16x512xf32>
    %289 = arith.mulf %286, %288 : vector<16x512xf32>
    %c0_67 = arith.constant 0 : index
    %c0_68 = arith.constant 0 : index
    %290 = vector.load %arg8[%c0_67, %c0_68] : memref<16x1xf32, #tpu.memory_space<vmem>>, vector<16x1xf32>
    %291 = vector.broadcast %290 : vector<16x1xf32> to vector<16x512xf32>
    %292 = arith.addf %289, %291 : vector<16x512xf32>
    %cst_69 = arith.constant 0.000000e+00 : f32
    %293 = vector.broadcast %cst_69 : f32 to vector<16x512xf32>
    %294 = arith.maximumf %292, %293 : vector<16x512xf32>
    %295 = arith.addf %294, %167 : vector<16x512xf32>
    %cst_70 = arith.constant 0.000000e+00 : f32
    %296 = vector.broadcast %cst_70 : f32 to vector<16x512xf32>
    %297 = arith.maximumf %295, %296 : vector<16x512xf32>
    %c0_71 = arith.constant 0 : index
    %c0_72 = arith.constant 0 : index
    %c0_73 = arith.constant 0 : index
    %298 = vector.load %arg10[%c0_71, %c0_72, %c0_73] : memref<1x16x512xf32, #tpu.memory_space<vmem>>, vector<1x16x512xf32>
    %299 = vector.shape_cast %298 : vector<1x16x512xf32> to vector<16x512xf32>
    %300 = vector.shape_cast %297 : vector<16x512xf32> to vector<1x16x512xf32>
    tpu.vector_store %arg10[%c0_71, %c0_72, %c0_73], %300 {strides = array<i32>} : memref<1x16x512xf32, #tpu.memory_space<vmem>>, vector<1x16x512xf32>,
    return
  }
  func.func @transform_0(%arg0: i32) -> (i32, i32) {
    %c0_i32 = arith.constant 0 : i32
    %c0_i32_0 = arith.constant 0 : i32
    %c0_i32_1 = arith.constant 0 : i32
    return %c0_i32, %c0_i32_0 : i32, i32
  }
  func.func @transform_1(%arg0: i32) -> (i32, i32, i32) {
    %c0_i32 = arith.constant 0 : i32
    %c0_i32_0 = arith.constant 0 : i32
    %c0_i32_1 = arith.constant 0 : i32
    return %arg0, %c0_i32, %c0_i32_0 : i32, i32, i32
  }
  func.func @transform_2(%arg0: i32) -> (i32, i32, i32) {
    %c0_i32 = arith.constant 0 : i32
    %c0_i32_0 = arith.constant 0 : i32
    %c0_i32_1 = arith.constant 0 : i32
    %c0_i32_2 = arith.constant 0 : i32
    return %c0_i32, %c0_i32_0, %c0_i32_1 : i32, i32, i32
  }
  func.func @transform_3(%arg0: i32) -> (i32, i32) {
    %c0_i32 = arith.constant 0 : i32
    %c0_i32_0 = arith.constant 0 : i32
    %c0_i32_1 = arith.constant 0 : i32
    return %c0_i32, %c0_i32_0 : i32, i32
  }
  func.func @transform_4(%arg0: i32) -> (i32, i32) {
    %c0_i32 = arith.constant 0 : i32
    %c0_i32_0 = arith.constant 0 : i32
    %c0_i32_1 = arith.constant 0 : i32
    return %c0_i32, %c0_i32_0 : i32, i32
  }
  func.func @transform_5(%arg0: i32) -> (i32, i32, i32) {
    %c0_i32 = arith.constant 0 : i32
    %c0_i32_0 = arith.constant 0 : i32
    %c0_i32_1 = arith.constant 0 : i32
    %c0_i32_2 = arith.constant 0 : i32
    return %c0_i32, %c0_i32_0, %c0_i32_1 : i32, i32, i32
  }
  func.func @transform_6(%arg0: i32) -> (i32, i32) {
    %c0_i32 = arith.constant 0 : i32
    %c0_i32_0 = arith.constant 0 : i32
    %c0_i32_1 = arith.constant 0 : i32
    return %c0_i32, %c0_i32_0 : i32, i32
  }
  func.func @transform_7(%arg0: i32) -> (i32, i32) {
    %c0_i32 = arith.constant 0 : i32
    %c0_i32_0 = arith.constant 0 : i32
    %c0_i32_1 = arith.constant 0 : i32
    return %c0_i32, %c0_i32_0 : i32, i32
  }
  func.func @transform_8(%arg0: i32) -> (i32, i32) {
    %c0_i32 = arith.constant 0 : i32
    %c0_i32_0 = arith.constant 0 : i32
    %c0_i32_1 = arith.constant 0 : i32
    return %c0_i32, %c0_i32_0 : i32, i32
  }
  func.func @transform_9(%arg0: i32) -> (i32, i32, i32) {
    %c0_i32 = arith.constant 0 : i32
    %c0_i32_0 = arith.constant 0 : i32
    %c0_i32_1 = arith.constant 0 : i32
    return %arg0, %c0_i32, %c0_i32_0 : i32, i32, i32
  }
}

module attributes {stable_mosaic.version = 11 : i64} {
  func.func @res_encoder3d_kernel(%arg0: i32, %arg1: memref<8x512xf32, #tpu.memory_space<vmem>>, %arg2: memref<1x16x512xf32, #tpu.memory_space<vmem>>, %arg3: memref<3x32x144xbf16, #tpu.memory_space<vmem>>, %arg4: memref<16x1xf32, #tpu.memory_space<vmem>>, %arg5: memref<16x1xf32, #tpu.memory_space<vmem>>, %arg6: memref<3x16x144xbf16, #tpu.memory_space<vmem>>, %arg7: memref<16x1xf32, #tpu.memory_space<vmem>>, %arg8: memref<16x1xf32, #tpu.memory_space<vmem>>, %arg9: memref<16x1xf32, #tpu.memory_space<vmem>>, %arg10: memref<1x16x512xf32, #tpu.memory_space<vmem>>) attributes {dimension_semantics = [#tpu.dimension_semantics<parallel>], iteration_bounds = array<i64: 2>, scalar_prefetch = 0 : i64, scratch_operands = 0 : i64, tpu.core_type = #tpu.core_type<tc>, window_params = [{pipeline_mode = #tpu.pipeline_mode<synchronous>, transform_indices = @transform_0, window_bounds = array<i64: 8, 512>}, {transform_indices = @transform_1, window_bounds = array<i64: 1, 16, 512>}, {pipeline_mode = #tpu.pipeline_mode<synchronous>, transform_indices = @transform_2, window_bounds = array<i64: 3, 32, 144>}, {pipeline_mode = #tpu.pipeline_mode<synchronous>, transform_indices = @transform_3, window_bounds = array<i64: 16, 1>}, {pipeline_mode = #tpu.pipeline_mode<synchronous>, transform_indices = @transform_4, window_bounds = array<i64: 16, 1>}, {pipeline_mode = #tpu.pipeline_mode<synchronous>, transform_indices = @transform_5, window_bounds = array<i64: 3, 16, 144>}, {pipeline_mode = #tpu.pipeline_mode<synchronous>, transform_indices = @transform_6, window_bounds = array<i64: 16, 1>}, {pipeline_mode = #tpu.pipeline_mode<synchronous>, transform_indices = @transform_7, window_bounds = array<i64: 16, 1>}, {pipeline_mode = #tpu.pipeline_mode<synchronous>, transform_indices = @transform_8, window_bounds = array<i64: 16, 1>}, {transform_indices = @transform_9, window_bounds = array<i64: 1, 16, 512>}]} {
    %c0 = arith.constant 0 : index
    %c0_0 = arith.constant 0 : index
    %0 = vector.load %arg1[%c0, %c0_0] : memref<8x512xf32, #tpu.memory_space<vmem>>, vector<1x512xf32>
    %c2 = arith.constant 2 : index
    %c0_1 = arith.constant 0 : index
    %1 = vector.load %arg1[%c2, %c0_1] : memref<8x512xf32, #tpu.memory_space<vmem>>, vector<1x512xf32>
    %c4 = arith.constant 4 : index
    %c0_2 = arith.constant 0 : index
    %2 = vector.load %arg1[%c4, %c0_2] : memref<8x512xf32, #tpu.memory_space<vmem>>, vector<1x512xf32>
    %c1 = arith.constant 1 : index
    %c0_3 = arith.constant 0 : index
    %3 = vector.load %arg1[%c1, %c0_3] : memref<8x512xf32, #tpu.memory_space<vmem>>, vector<1x512xf32>
    %c3 = arith.constant 3 : index
    %c0_4 = arith.constant 0 : index
    %4 = vector.load %arg1[%c3, %c0_4] : memref<8x512xf32, #tpu.memory_space<vmem>>, vector<1x512xf32>
    %c5 = arith.constant 5 : index
    %c0_5 = arith.constant 0 : index
    %5 = vector.load %arg1[%c5, %c0_5] : memref<8x512xf32, #tpu.memory_space<vmem>>, vector<1x512xf32>
    %6 = arith.mulf %0, %1 : vector<1x512xf32>
    %7 = arith.mulf %6, %2 : vector<1x512xf32>
    %8 = arith.mulf %0, %1 : vector<1x512xf32>
    %9 = arith.mulf %0, %1 : vector<1x512xf32>
    %10 = arith.mulf %9, %5 : vector<1x512xf32>
    %11 = arith.mulf %0, %2 : vector<1x512xf32>
    %12 = arith.mulf %0, %5 : vector<1x512xf32>
    %13 = arith.mulf %0, %4 : vector<1x512xf32>
    %14 = arith.mulf %13, %2 : vector<1x512xf32>
    %15 = arith.mulf %0, %4 : vector<1x512xf32>
    %16 = arith.mulf %0, %4 : vector<1x512xf32>
    %17 = arith.mulf %16, %5 : vector<1x512xf32>
    %18 = arith.mulf %1, %2 : vector<1x512xf32>
    %19 = arith.mulf %1, %5 : vector<1x512xf32>
    %20 = arith.mulf %4, %2 : vector<1x512xf32>
    %21 = arith.mulf %4, %5 : vector<1x512xf32>
    %22 = arith.mulf %3, %1 : vector<1x512xf32>
    %23 = arith.mulf %22, %2 : vector<1x512xf32>
    %24 = arith.mulf %3, %1 : vector<1x512xf32>
    %25 = arith.mulf %3, %1 : vector<1x512xf32>
    %26 = arith.mulf %25, %5 : vector<1x512xf32>
    %27 = arith.mulf %3, %2 : vector<1x512xf32>
    %28 = arith.mulf %3, %5 : vector<1x512xf32>
    %29 = arith.mulf %3, %4 : vector<1x512xf32>
    %30 = arith.mulf %29, %2 : vector<1x512xf32>
    %31 = arith.mulf %3, %4 : vector<1x512xf32>
    %32 = arith.mulf %3, %4 : vector<1x512xf32>
    %33 = arith.mulf %32, %5 : vector<1x512xf32>
    %c0_6 = arith.constant 0 : index
    %c0_7 = arith.constant 0 : index
    %c0_8 = arith.constant 0 : index
    %34 = vector.load %arg2[%c0_6, %c0_7, %c0_8] : memref<1x16x512xf32, #tpu.memory_space<vmem>>, vector<1x16x512xf32>
    %35 = vector.shape_cast %34 : vector<1x16x512xf32> to vector<16x512xf32>
    %c73_i32 = arith.constant 73 : i32
    %36 = tpu.dynamic_rotate %35 by %c73_i32 dim 1 : vector<16x512xf32>, i32 -> vector<16x512xf32>
    %37 = vector.broadcast %7 : vector<1x512xf32> to vector<16x512xf32>
    %38 = arith.mulf %36, %37 : vector<16x512xf32>
    %39 = arith.truncf %38 : vector<16x512xf32> to vector<16x512xbf16>
    %c72_i32 = arith.constant 72 : i32
    %40 = tpu.dynamic_rotate %35 by %c72_i32 dim 1 : vector<16x512xf32>, i32 -> vector<16x512xf32>
    %41 = vector.broadcast %8 : vector<1x512xf32> to vector<16x512xf32>
    %42 = arith.mulf %40, %41 : vector<16x512xf32>
    %43 = arith.truncf %42 : vector<16x512xf32> to vector<16x512xbf16>
    %c71_i32 = arith.constant 71 : i32
    %44 = tpu.dynamic_rotate %35 by %c71_i32 dim 1 : vector<16x512xf32>, i32 -> vector<16x512xf32>
    %45 = vector.broadcast %10 : vector<1x512xf32> to vector<16x512xf32>
    %46 = arith.mulf %44, %45 : vector<16x512xf32>
    %47 = arith.truncf %46 : vector<16x512xf32> to vector<16x512xbf16>
    %c65_i32 = arith.constant 65 : i32
    %48 = tpu.dynamic_rotate %35 by %c65_i32 dim 1 : vector<16x512xf32>, i32 -> vector<16x512xf32>
    %49 = vector.broadcast %11 : vector<1x512xf32> to vector<16x512xf32>
    %50 = arith.mulf %48, %49 : vector<16x512xf32>
    %51 = arith.truncf %50 : vector<16x512xf32> to vector<16x512xbf16>
    %c64_i32 = arith.constant 64 : i32
    %52 = tpu.dynamic_rotate %35 by %c64_i32 dim 1 : vector<16x512xf32>, i32 -> vector<16x512xf32>
    %53 = vector.broadcast %0 : vector<1x512xf32> to vector<16x512xf32>
    %54 = arith.mulf %52, %53 : vector<16x512xf32>
    %55 = arith.truncf %54 : vector<16x512xf32> to vector<16x512xbf16>
    %c63_i32 = arith.constant 63 : i32
    %56 = tpu.dynamic_rotate %35 by %c63_i32 dim 1 : vector<16x512xf32>, i32 -> vector<16x512xf32>
    %57 = vector.broadcast %12 : vector<1x512xf32> to vector<16x512xf32>
    %58 = arith.mulf %56, %57 : vector<16x512xf32>
    %59 = arith.truncf %58 : vector<16x512xf32> to vector<16x512xbf16>
    %c57_i32 = arith.constant 57 : i32
    %60 = tpu.dynamic_rotate %35 by %c57_i32 dim 1 : vector<16x512xf32>, i32 -> vector<16x512xf32>
    %61 = vector.broadcast %14 : vector<1x512xf32> to vector<16x512xf32>
    %62 = arith.mulf %60, %61 : vector<16x512xf32>
    %63 = arith.truncf %62 : vector<16x512xf32> to vector<16x512xbf16>
    %c56_i32 = arith.constant 56 : i32
    %64 = tpu.dynamic_rotate %35 by %c56_i32 dim 1 : vector<16x512xf32>, i32 -> vector<16x512xf32>
    %65 = vector.broadcast %15 : vector<1x512xf32> to vector<16x512xf32>
    %66 = arith.mulf %64, %65 : vector<16x512xf32>
    %67 = arith.truncf %66 : vector<16x512xf32> to vector<16x512xbf16>
    %c55_i32 = arith.constant 55 : i32
    %68 = tpu.dynamic_rotate %35 by %c55_i32 dim 1 : vector<16x512xf32>, i32 -> vector<16x512xf32>
    %69 = vector.broadcast %17 : vector<1x512xf32> to vector<16x512xf32>
    %70 = arith.mulf %68, %69 : vector<16x512xf32>
    %71 = arith.truncf %70 : vector<16x512xf32> to vector<16x512xbf16>
    %72 = tpu.concatenate %39, %43, %47, %51, %55, %59, %63, %67, %71 in 0 : vector<16x512xbf16>, vector<16x512xbf16>, vector<16x512xbf16>, vector<16x512xbf16>, vector<16x512xbf16>, vector<16x512xbf16>, vector<16x512xbf16>, vector<16x512xbf16>, vector<16x512xbf16> -> vector<144x512xbf16>
    %c0_9 = arith.constant 0 : index
    %c0_10 = arith.constant 0 : index
    %c0_11 = arith.constant 0 : index
    %73 = vector.load %arg3[%c0_9, %c0_10, %c0_11] : memref<3x32x144xbf16, #tpu.memory_space<vmem>>, vector<1x32x144xbf16>
    %74 = vector.shape_cast %73 : vector<1x32x144xbf16> to vector<32x144xbf16>
    %cst = arith.constant dense<0.000000e+00> : vector<32x512xf32>
    %75 = tpu.matmul %74, %72, %cst {dimension_numbers = #tpu.dot_dimension_numbers<[1], [0], [0], [1], [0, 0, 1, 1], [], []>} : vector<32x144xbf16>, vector<144x512xbf16>, vector<32x512xf32> -> vector<32x512xf32>
    %c9_i32 = arith.constant 9 : i32
    %76 = tpu.dynamic_rotate %35 by %c9_i32 dim 1 : vector<16x512xf32>, i32 -> vector<16x512xf32>
    %77 = vector.broadcast %18 : vector<1x512xf32> to vector<16x512xf32>
    %78 = arith.mulf %76, %77 : vector<16x512xf32>
    %79 = arith.truncf %78 : vector<16x512xf32> to vector<16x512xbf16>
    %c8_i32 = arith.constant 8 : i32
    %80 = tpu.dynamic_rotate %35 by %c8_i32 dim 1 : vector<16x512xf32>, i32 -> vector<16x512xf32>
    %81 = vector.broadcast %1 : vector<1x512xf32> to vector<16x512xf32>
    %82 = arith.mulf %80, %81 : vector<16x512xf32>
    %83 = arith.truncf %82 : vector<16x512xf32> to vector<16x512xbf16>
    %c7_i32 = arith.constant 7 : i32
    %84 = tpu.dynamic_rotate %35 by %c7_i32 dim 1 : vector<16x512xf32>, i32 -> vector<16x512xf32>
    %85 = vector.broadcast %19 : vector<1x512xf32> to vector<16x512xf32>
    %86 = arith.mulf %84, %85 : vector<16x512xf32>
    %87 = arith.truncf %86 : vector<16x512xf32> to vector<16x512xbf16>
    %c1_i32 = arith.constant 1 : i32
    %88 = tpu.dynamic_rotate %35 by %c1_i32 dim 1 : vector<16x512xf32>, i32 -> vector<16x512xf32>
    %89 = vector.broadcast %2 : vector<1x512xf32> to vector<16x512xf32>
    %90 = arith.mulf %88, %89 : vector<16x512xf32>
    %91 = arith.truncf %90 : vector<16x512xf32> to vector<16x512xbf16>
    %92 = arith.truncf %35 : vector<16x512xf32> to vector<16x512xbf16>
    %c511_i32 = arith.constant 511 : i32
    %93 = tpu.dynamic_rotate %35 by %c511_i32 dim 1 : vector<16x512xf32>, i32 -> vector<16x512xf32>
    %94 = vector.broadcast %5 : vector<1x512xf32> to vector<16x512xf32>
    %95 = arith.mulf %93, %94 : vector<16x512xf32>
    %96 = arith.truncf %95 : vector<16x512xf32> to vector<16x512xbf16>
    %c505_i32 = arith.constant 505 : i32
    %97 = tpu.dynamic_rotate %35 by %c505_i32 dim 1 : vector<16x512xf32>, i32 -> vector<16x512xf32>
    %98 = vector.broadcast %20 : vector<1x512xf32> to vector<16x512xf32>
    %99 = arith.mulf %97, %98 : vector<16x512xf32>
    %100 = arith.truncf %99 : vector<16x512xf32> to vector<16x512xbf16>
    %c504_i32 = arith.constant 504 : i32
    %101 = tpu.dynamic_rotate %35 by %c504_i32 dim 1 : vector<16x512xf32>, i32 -> vector<16x512xf32>
    %102 = vector.broadcast %4 : vector<1x512xf32> to vector<16x512xf32>
    %103 = arith.mulf %101, %102 : vector<16x512xf32>
    %104 = arith.truncf %103 : vector<16x512xf32> to vector<16x512xbf16>
    %c503_i32 = arith.constant 503 : i32
    %105 = tpu.dynamic_rotate %35 by %c503_i32 dim 1 : vector<16x512xf32>, i32 -> vector<16x512xf32>
    %106 = vector.broadcast %21 : vector<1x512xf32> to vector<16x512xf32>
    %107 = arith.mulf %105, %106 : vector<16x512xf32>
    %108 = arith.truncf %107 : vector<16x512xf32> to vector<16x512xbf16>
    %109 = tpu.concatenate %79, %83, %87, %91, %92, %96, %100, %104, %108 in 0 : vector<16x512xbf16>, vector<16x512xbf16>, vector<16x512xbf16>, vector<16x512xbf16>, vector<16x512xbf16>, vector<16x512xbf16>, vector<16x512xbf16>, vector<16x512xbf16>, vector<16x512xbf16> -> vector<144x512xbf16>
    %c1_12 = arith.constant 1 : index
    %c0_13 = arith.constant 0 : index
    %c0_14 = arith.constant 0 : index
    %110 = vector.load %arg3[%c1_12, %c0_13, %c0_14] : memref<3x32x144xbf16, #tpu.memory_space<vmem>>, vector<1x32x144xbf16>
    %111 = vector.shape_cast %110 : vector<1x32x144xbf16> to vector<32x144xbf16>
    %cst_15 = arith.constant dense<0.000000e+00> : vector<32x512xf32>
    %112 = tpu.matmul %111, %109, %cst_15 {dimension_numbers = #tpu.dot_dimension_numbers<[1], [0], [0], [1], [0, 0, 1, 1], [], []>} : vector<32x144xbf16>, vector<144x512xbf16>, vector<32x512xf32> -> vector<32x512xf32>
    %113 = arith.addf %75, %112 : vector<32x512xf32>
    %c457_i32 = arith.constant 457 : i32
    %114 = tpu.dynamic_rotate %35 by %c457_i32 dim 1 : vector<16x512xf32>, i32 -> vector<16x512xf32>
    %115 = vector.broadcast %23 : vector<1x512xf32> to vector<16x512xf32>
    %116 = arith.mulf %114, %115 : vector<16x512xf32>
    %117 = arith.truncf %116 : vector<16x512xf32> to vector<16x512xbf16>
    %c456_i32 = arith.constant 456 : i32
    %118 = tpu.dynamic_rotate %35 by %c456_i32 dim 1 : vector<16x512xf32>, i32 -> vector<16x512xf32>
    %119 = vector.broadcast %24 : vector<1x512xf32> to vector<16x512xf32>
    %120 = arith.mulf %118, %119 : vector<16x512xf32>
    %121 = arith.truncf %120 : vector<16x512xf32> to vector<16x512xbf16>
    %c455_i32 = arith.constant 455 : i32
    %122 = tpu.dynamic_rotate %35 by %c455_i32 dim 1 : vector<16x512xf32>, i32 -> vector<16x512xf32>
    %123 = vector.broadcast %26 : vector<1x512xf32> to vector<16x512xf32>
    %124 = arith.mulf %122, %123 : vector<16x512xf32>
    %125 = arith.truncf %124 : vector<16x512xf32> to vector<16x512xbf16>
    %c449_i32 = arith.constant 449 : i32
    %126 = tpu.dynamic_rotate %35 by %c449_i32 dim 1 : vector<16x512xf32>, i32 -> vector<16x512xf32>
    %127 = vector.broadcast %27 : vector<1x512xf32> to vector<16x512xf32>
    %128 = arith.mulf %126, %127 : vector<16x512xf32>
    %129 = arith.truncf %128 : vector<16x512xf32> to vector<16x512xbf16>
    %c448_i32 = arith.constant 448 : i32
    %130 = tpu.dynamic_rotate %35 by %c448_i32 dim 1 : vector<16x512xf32>, i32 -> vector<16x512xf32>
    %131 = vector.broadcast %3 : vector<1x512xf32> to vector<16x512xf32>
    %132 = arith.mulf %130, %131 : vector<16x512xf32>
    %133 = arith.truncf %132 : vector<16x512xf32> to vector<16x512xbf16>
    %c447_i32 = arith.constant 447 : i32
    %134 = tpu.dynamic_rotate %35 by %c447_i32 dim 1 : vector<16x512xf32>, i32 -> vector<16x512xf32>
    %135 = vector.broadcast %28 : vector<1x512xf32> to vector<16x512xf32>
    %136 = arith.mulf %134, %135 : vector<16x512xf32>
    %137 = arith.truncf %136 : vector<16x512xf32> to vector<16x512xbf16>
    %c441_i32 = arith.constant 441 : i32
    %138 = tpu.dynamic_rotate %35 by %c441_i32 dim 1 : vector<16x512xf32>, i32 -> vector<16x512xf32>
    %139 = vector.broadcast %30 : vector<1x512xf32> to vector<16x512xf32>
    %140 = arith.mulf %138, %139 : vector<16x512xf32>
    %141 = arith.truncf %140 : vector<16x512xf32> to vector<16x512xbf16>
    %c440_i32 = arith.constant 440 : i32
    %142 = tpu.dynamic_rotate %35 by %c440_i32 dim 1 : vector<16x512xf32>, i32 -> vector<16x512xf32>
    %143 = vector.broadcast %31 : vector<1x512xf32> to vector<16x512xf32>
    %144 = arith.mulf %142, %143 : vector<16x512xf32>
    %145 = arith.truncf %144 : vector<16x512xf32> to vector<16x512xbf16>
    %c439_i32 = arith.constant 439 : i32
    %146 = tpu.dynamic_rotate %35 by %c439_i32 dim 1 : vector<16x512xf32>, i32 -> vector<16x512xf32>
    %147 = vector.broadcast %33 : vector<1x512xf32> to vector<16x512xf32>
    %148 = arith.mulf %146, %147 : vector<16x512xf32>
    %149 = arith.truncf %148 : vector<16x512xf32> to vector<16x512xbf16>
    %150 = tpu.concatenate %117, %121, %125, %129, %133, %137, %141, %145, %149 in 0 : vector<16x512xbf16>, vector<16x512xbf16>, vector<16x512xbf16>, vector<16x512xbf16>, vector<16x512xbf16>, vector<16x512xbf16>, vector<16x512xbf16>, vector<16x512xbf16>, vector<16x512xbf16> -> vector<144x512xbf16>
    %c2_16 = arith.constant 2 : index
    %c0_17 = arith.constant 0 : index
    %c0_18 = arith.constant 0 : index
    %151 = vector.load %arg3[%c2_16, %c0_17, %c0_18] : memref<3x32x144xbf16, #tpu.memory_space<vmem>>, vector<1x32x144xbf16>
    %152 = vector.shape_cast %151 : vector<1x32x144xbf16> to vector<32x144xbf16>
    %cst_19 = arith.constant dense<0.000000e+00> : vector<32x512xf32>
    %153 = tpu.matmul %152, %150, %cst_19 {dimension_numbers = #tpu.dot_dimension_numbers<[1], [0], [0], [1], [0, 0, 1, 1], [], []>} : vector<32x144xbf16>, vector<144x512xbf16>, vector<32x512xf32> -> vector<32x512xf32>
    %154 = arith.addf %113, %153 : vector<32x512xf32>
    %155 = vector.extract_strided_slice %154 {offsets = [0, 0], sizes = [16, 512], strides = [1, 1]} : vector<32x512xf32> to vector<16x512xf32>
    %c0_20 = arith.constant 0 : index
    %c0_21 = arith.constant 0 : index
    %156 = vector.load %arg4[%c0_20, %c0_21] : memref<16x1xf32, #tpu.memory_space<vmem>>, vector<16x1xf32>
    %157 = vector.broadcast %156 : vector<16x1xf32> to vector<16x512xf32>
    %158 = arith.mulf %155, %157 : vector<16x512xf32>
    %c0_22 = arith.constant 0 : index
    %c0_23 = arith.constant 0 : index
    %159 = vector.load %arg5[%c0_22, %c0_23] : memref<16x1xf32, #tpu.memory_space<vmem>>, vector<16x1xf32>
    %160 = vector.broadcast %159 : vector<16x1xf32> to vector<16x512xf32>
    %161 = arith.addf %158, %160 : vector<16x512xf32>
    %cst_24 = arith.constant 0.000000e+00 : f32
    %162 = vector.broadcast %cst_24 : f32 to vector<16x512xf32>
    %163 = arith.maximumf %161, %162 : vector<16x512xf32>
    %164 = vector.extract_strided_slice %154 {offsets = [16, 0], sizes = [16, 512], strides = [1, 1]} : vector<32x512xf32> to vector<16x512xf32>
    %c0_25 = arith.constant 0 : index
    %c0_26 = arith.constant 0 : index
    %165 = vector.load %arg9[%c0_25, %c0_26] : memref<16x1xf32, #tpu.memory_space<vmem>>, vector<16x1xf32>
    %166 = vector.broadcast %165 : vector<16x1xf32> to vector<16x512xf32>
    %167 = arith.addf %164, %166 : vector<16x512xf32>
    %c73_i32_27 = arith.constant 73 : i32
    %168 = tpu.dynamic_rotate %163 by %c73_i32_27 dim 1 : vector<16x512xf32>, i32 -> vector<16x512xf32>
    %169 = vector.broadcast %7 : vector<1x512xf32> to vector<16x512xf32>
    %170 = arith.mulf %168, %169 : vector<16x512xf32>
    %171 = arith.truncf %170 : vector<16x512xf32> to vector<16x512xbf16>
    %c72_i32_28 = arith.constant 72 : i32
    %172 = tpu.dynamic_rotate %163 by %c72_i32_28 dim 1 : vector<16x512xf32>, i32 -> vector<16x512xf32>
    %173 = vector.broadcast %8 : vector<1x512xf32> to vector<16x512xf32>
    %174 = arith.mulf %172, %173 : vector<16x512xf32>
    %175 = arith.truncf %174 : vector<16x512xf32> to vector<16x512xbf16>
    %c71_i32_29 = arith.constant 71 : i32
    %176 = tpu.dynamic_rotate %163 by %c71_i32_29 dim 1 : vector<16x512xf32>, i32 -> vector<16x512xf32>
    %177 = vector.broadcast %10 : vector<1x512xf32> to vector<16x512xf32>
    %178 = arith.mulf %176, %177 : vector<16x512xf32>
    %179 = arith.truncf %178 : vector<16x512xf32> to vector<16x512xbf16>
    %c65_i32_30 = arith.constant 65 : i32
    %180 = tpu.dynamic_rotate %163 by %c65_i32_30 dim 1 : vector<16x512xf32>, i32 -> vector<16x512xf32>
    %181 = vector.broadcast %11 : vector<1x512xf32> to vector<16x512xf32>
    %182 = arith.mulf %180, %181 : vector<16x512xf32>
    %183 = arith.truncf %182 : vector<16x512xf32> to vector<16x512xbf16>
    %c64_i32_31 = arith.constant 64 : i32
    %184 = tpu.dynamic_rotate %163 by %c64_i32_31 dim 1 : vector<16x512xf32>, i32 -> vector<16x512xf32>
    %185 = vector.broadcast %0 : vector<1x512xf32> to vector<16x512xf32>
    %186 = arith.mulf %184, %185 : vector<16x512xf32>
    %187 = arith.truncf %186 : vector<16x512xf32> to vector<16x512xbf16>
    %c63_i32_32 = arith.constant 63 : i32
    %188 = tpu.dynamic_rotate %163 by %c63_i32_32 dim 1 : vector<16x512xf32>, i32 -> vector<16x512xf32>
    %189 = vector.broadcast %12 : vector<1x512xf32> to vector<16x512xf32>
    %190 = arith.mulf %188, %189 : vector<16x512xf32>
    %191 = arith.truncf %190 : vector<16x512xf32> to vector<16x512xbf16>
    %c57_i32_33 = arith.constant 57 : i32
    %192 = tpu.dynamic_rotate %163 by %c57_i32_33 dim 1 : vector<16x512xf32>, i32 -> vector<16x512xf32>
    %193 = vector.broadcast %14 : vector<1x512xf32> to vector<16x512xf32>
    %194 = arith.mulf %192, %193 : vector<16x512xf32>
    %195 = arith.truncf %194 : vector<16x512xf32> to vector<16x512xbf16>
    %c56_i32_34 = arith.constant 56 : i32
    %196 = tpu.dynamic_rotate %163 by %c56_i32_34 dim 1 : vector<16x512xf32>, i32 -> vector<16x512xf32>
    %197 = vector.broadcast %15 : vector<1x512xf32> to vector<16x512xf32>
    %198 = arith.mulf %196, %197 : vector<16x512xf32>
    %199 = arith.truncf %198 : vector<16x512xf32> to vector<16x512xbf16>
    %c55_i32_35 = arith.constant 55 : i32
    %200 = tpu.dynamic_rotate %163 by %c55_i32_35 dim 1 : vector<16x512xf32>, i32 -> vector<16x512xf32>
    %201 = vector.broadcast %17 : vector<1x512xf32> to vector<16x512xf32>
    %202 = arith.mulf %200, %201 : vector<16x512xf32>
    %203 = arith.truncf %202 : vector<16x512xf32> to vector<16x512xbf16>
    %204 = tpu.concatenate %171, %175, %179, %183, %187, %191, %195, %199, %203 in 0 : vector<16x512xbf16>, vector<16x512xbf16>, vector<16x512xbf16>, vector<16x512xbf16>, vector<16x512xbf16>, vector<16x512xbf16>, vector<16x512xbf16>, vector<16x512xbf16>, vector<16x512xbf16> -> vector<144x512xbf16>
    %c0_36 = arith.constant 0 : index
    %c0_37 = arith.constant 0 : index
    %c0_38 = arith.constant 0 : index
    %205 = vector.load %arg6[%c0_36, %c0_37, %c0_38] : memref<3x16x144xbf16, #tpu.memory_space<vmem>>, vector<1x16x144xbf16>
    %206 = vector.shape_cast %205 : vector<1x16x144xbf16> to vector<16x144xbf16>
    %cst_39 = arith.constant dense<0.000000e+00> : vector<16x512xf32>
    %207 = tpu.matmul %206, %204, %cst_39 {dimension_numbers = #tpu.dot_dimension_numbers<[1], [0], [0], [1], [0, 0, 1, 1], [], []>} : vector<16x144xbf16>, vector<144x512xbf16>, vector<16x512xf32> -> vector<16x512xf32>
    %c9_i32_40 = arith.constant 9 : i32
    %208 = tpu.dynamic_rotate %163 by %c9_i32_40 dim 1 : vector<16x512xf32>, i32 -> vector<16x512xf32>
    %209 = vector.broadcast %18 : vector<1x512xf32> to vector<16x512xf32>
    %210 = arith.mulf %208, %209 : vector<16x512xf32>
    %211 = arith.truncf %210 : vector<16x512xf32> to vector<16x512xbf16>
    %c8_i32_41 = arith.constant 8 : i32
    %212 = tpu.dynamic_rotate %163 by %c8_i32_41 dim 1 : vector<16x512xf32>, i32 -> vector<16x512xf32>
    %213 = vector.broadcast %1 : vector<1x512xf32> to vector<16x512xf32>
    %214 = arith.mulf %212, %213 : vector<16x512xf32>
    %215 = arith.truncf %214 : vector<16x512xf32> to vector<16x512xbf16>
    %c7_i32_42 = arith.constant 7 : i32
    %216 = tpu.dynamic_rotate %163 by %c7_i32_42 dim 1 : vector<16x512xf32>, i32 -> vector<16x512xf32>
    %217 = vector.broadcast %19 : vector<1x512xf32> to vector<16x512xf32>
    %218 = arith.mulf %216, %217 : vector<16x512xf32>
    %219 = arith.truncf %218 : vector<16x512xf32> to vector<16x512xbf16>
    %c1_i32_43 = arith.constant 1 : i32
    %220 = tpu.dynamic_rotate %163 by %c1_i32_43 dim 1 : vector<16x512xf32>, i32 -> vector<16x512xf32>
    %221 = vector.broadcast %2 : vector<1x512xf32> to vector<16x512xf32>
    %222 = arith.mulf %220, %221 : vector<16x512xf32>
    %223 = arith.truncf %222 : vector<16x512xf32> to vector<16x512xbf16>
    %224 = arith.truncf %163 : vector<16x512xf32> to vector<16x512xbf16>
    %c511_i32_44 = arith.constant 511 : i32
    %225 = tpu.dynamic_rotate %163 by %c511_i32_44 dim 1 : vector<16x512xf32>, i32 -> vector<16x512xf32>
    %226 = vector.broadcast %5 : vector<1x512xf32> to vector<16x512xf32>
    %227 = arith.mulf %225, %226 : vector<16x512xf32>
    %228 = arith.truncf %227 : vector<16x512xf32> to vector<16x512xbf16>
    %c505_i32_45 = arith.constant 505 : i32
    %229 = tpu.dynamic_rotate %163 by %c505_i32_45 dim 1 : vector<16x512xf32>, i32 -> vector<16x512xf32>
    %230 = vector.broadcast %20 : vector<1x512xf32> to vector<16x512xf32>
    %231 = arith.mulf %229, %230 : vector<16x512xf32>
    %232 = arith.truncf %231 : vector<16x512xf32> to vector<16x512xbf16>
    %c504_i32_46 = arith.constant 504 : i32
    %233 = tpu.dynamic_rotate %163 by %c504_i32_46 dim 1 : vector<16x512xf32>, i32 -> vector<16x512xf32>
    %234 = vector.broadcast %4 : vector<1x512xf32> to vector<16x512xf32>
    %235 = arith.mulf %233, %234 : vector<16x512xf32>
    %236 = arith.truncf %235 : vector<16x512xf32> to vector<16x512xbf16>
    %c503_i32_47 = arith.constant 503 : i32
    %237 = tpu.dynamic_rotate %163 by %c503_i32_47 dim 1 : vector<16x512xf32>, i32 -> vector<16x512xf32>
    %238 = vector.broadcast %21 : vector<1x512xf32> to vector<16x512xf32>
    %239 = arith.mulf %237, %238 : vector<16x512xf32>
    %240 = arith.truncf %239 : vector<16x512xf32> to vector<16x512xbf16>
    %241 = tpu.concatenate %211, %215, %219, %223, %224, %228, %232, %236, %240 in 0 : vector<16x512xbf16>, vector<16x512xbf16>, vector<16x512xbf16>, vector<16x512xbf16>, vector<16x512xbf16>, vector<16x512xbf16>, vector<16x512xbf16>, vector<16x512xbf16>, vector<16x512xbf16> -> vector<144x512xbf16>
    %c1_48 = arith.constant 1 : index
    %c0_49 = arith.constant 0 : index
    %c0_50 = arith.constant 0 : index
    %242 = vector.load %arg6[%c1_48, %c0_49, %c0_50] : memref<3x16x144xbf16, #tpu.memory_space<vmem>>, vector<1x16x144xbf16>
    %243 = vector.shape_cast %242 : vector<1x16x144xbf16> to vector<16x144xbf16>
    %cst_51 = arith.constant dense<0.000000e+00> : vector<16x512xf32>
    %244 = tpu.matmul %243, %241, %cst_51 {dimension_numbers = #tpu.dot_dimension_numbers<[1], [0], [0], [1], [0, 0, 1, 1], [], []>} : vector<16x144xbf16>, vector<144x512xbf16>, vector<16x512xf32> -> vector<16x512xf32>
    %245 = arith.addf %207, %244 : vector<16x512xf32>
    %c457_i32_52 = arith.constant 457 : i32
    %246 = tpu.dynamic_rotate %163 by %c457_i32_52 dim 1 : vector<16x512xf32>, i32 -> vector<16x512xf32>
    %247 = vector.broadcast %23 : vector<1x512xf32> to vector<16x512xf32>
    %248 = arith.mulf %246, %247 : vector<16x512xf32>
    %249 = arith.truncf %248 : vector<16x512xf32> to vector<16x512xbf16>
    %c456_i32_53 = arith.constant 456 : i32
    %250 = tpu.dynamic_rotate %163 by %c456_i32_53 dim 1 : vector<16x512xf32>, i32 -> vector<16x512xf32>
    %251 = vector.broadcast %24 : vector<1x512xf32> to vector<16x512xf32>
    %252 = arith.mulf %250, %251 : vector<16x512xf32>
    %253 = arith.truncf %252 : vector<16x512xf32> to vector<16x512xbf16>
    %c455_i32_54 = arith.constant 455 : i32
    %254 = tpu.dynamic_rotate %163 by %c455_i32_54 dim 1 : vector<16x512xf32>, i32 -> vector<16x512xf32>
    %255 = vector.broadcast %26 : vector<1x512xf32> to vector<16x512xf32>
    %256 = arith.mulf %254, %255 : vector<16x512xf32>
    %257 = arith.truncf %256 : vector<16x512xf32> to vector<16x512xbf16>
    %c449_i32_55 = arith.constant 449 : i32
    %258 = tpu.dynamic_rotate %163 by %c449_i32_55 dim 1 : vector<16x512xf32>, i32 -> vector<16x512xf32>
    %259 = vector.broadcast %27 : vector<1x512xf32> to vector<16x512xf32>
    %260 = arith.mulf %258, %259 : vector<16x512xf32>
    %261 = arith.truncf %260 : vector<16x512xf32> to vector<16x512xbf16>
    %c448_i32_56 = arith.constant 448 : i32
    %262 = tpu.dynamic_rotate %163 by %c448_i32_56 dim 1 : vector<16x512xf32>, i32 -> vector<16x512xf32>
    %263 = vector.broadcast %3 : vector<1x512xf32> to vector<16x512xf32>
    %264 = arith.mulf %262, %263 : vector<16x512xf32>
    %265 = arith.truncf %264 : vector<16x512xf32> to vector<16x512xbf16>
    %c447_i32_57 = arith.constant 447 : i32
    %266 = tpu.dynamic_rotate %163 by %c447_i32_57 dim 1 : vector<16x512xf32>, i32 -> vector<16x512xf32>
    %267 = vector.broadcast %28 : vector<1x512xf32> to vector<16x512xf32>
    %268 = arith.mulf %266, %267 : vector<16x512xf32>
    %269 = arith.truncf %268 : vector<16x512xf32> to vector<16x512xbf16>
    %c441_i32_58 = arith.constant 441 : i32
    %270 = tpu.dynamic_rotate %163 by %c441_i32_58 dim 1 : vector<16x512xf32>, i32 -> vector<16x512xf32>
    %271 = vector.broadcast %30 : vector<1x512xf32> to vector<16x512xf32>
    %272 = arith.mulf %270, %271 : vector<16x512xf32>
    %273 = arith.truncf %272 : vector<16x512xf32> to vector<16x512xbf16>
    %c440_i32_59 = arith.constant 440 : i32
    %274 = tpu.dynamic_rotate %163 by %c440_i32_59 dim 1 : vector<16x512xf32>, i32 -> vector<16x512xf32>
    %275 = vector.broadcast %31 : vector<1x512xf32> to vector<16x512xf32>
    %276 = arith.mulf %274, %275 : vector<16x512xf32>
    %277 = arith.truncf %276 : vector<16x512xf32> to vector<16x512xbf16>
    %c439_i32_60 = arith.constant 439 : i32
    %278 = tpu.dynamic_rotate %163 by %c439_i32_60 dim 1 : vector<16x512xf32>, i32 -> vector<16x512xf32>
    %279 = vector.broadcast %33 : vector<1x512xf32> to vector<16x512xf32>
    %280 = arith.mulf %278, %279 : vector<16x512xf32>
    %281 = arith.truncf %280 : vector<16x512xf32> to vector<16x512xbf16>
    %282 = tpu.concatenate %249, %253, %257, %261, %265, %269, %273, %277, %281 in 0 : vector<16x512xbf16>, vector<16x512xbf16>, vector<16x512xbf16>, vector<16x512xbf16>, vector<16x512xbf16>, vector<16x512xbf16>, vector<16x512xbf16>, vector<16x512xbf16>, vector<16x512xbf16> -> vector<144x512xbf16>
    %c2_61 = arith.constant 2 : index
    %c0_62 = arith.constant 0 : index
    %c0_63 = arith.constant 0 : index
    %283 = vector.load %arg6[%c2_61, %c0_62, %c0_63] : memref<3x16x144xbf16, #tpu.memory_space<vmem>>, vector<1x16x144xbf16>
    %284 = vector.shape_cast %283 : vector<1x16x144xbf16> to vector<16x144xbf16>
    %cst_64 = arith.constant dense<0.000000e+00> : vector<16x512xf32>
    %285 = tpu.matmul %284, %282, %cst_64 {dimension_numbers = #tpu.dot_dimension_numbers<[1], [0], [0], [1], [0, 0, 1, 1], [], []>} : vector<16x144xbf16>, vector<144x512xbf16>, vector<16x512xf32> -> vector<16x512xf32>
    %286 = arith.addf %245, %285 : vector<16x512xf32>
    %c0_65 = arith.constant 0 : index
    %c0_66 = arith.constant 0 : index
    %287 = vector.load %arg7[%c0_65, %c0_66] : memref<16x1xf32, #tpu.memory_space<vmem>>, vector<16x1xf32>
    %288 = vector.broadcast %287 : vector<16x1xf32> to vector<16x512xf32>
    %289 = arith.mulf %286, %288 : vector<16x512xf32>
    %c0_67 = arith.constant 0 : index
    %c0_68 = arith.constant 0 : index
    %290 = vector.load %arg8[%c0_67, %c0_68] : memref<16x1xf32, #tpu.memory_space<vmem>>, vector<16x1xf32>
    %291 = vector.broadcast %290 : vector<16x1xf32> to vector<16x512xf32>
    %292 = arith.addf %289, %291 : vector<16x512xf32>
    %cst_69 = arith.constant 0.000000e+00 : f32
    %293 = vector.broadcast %cst_69 : f32 to vector<16x512xf32>
    %294 = arith.maximumf %292, %293 : vector<16x512xf32>
    %295 = arith.addf %294, %167 : vector<16x512xf32>
    %cst_70 = arith.constant 0.000000e+00 : f32
    %296 = vector.broadcast %cst_70 : f32 to vector<16x512xf32>
    %297 = arith.maximumf %295, %296 : vector<16x512xf32>
    %c0_71 = arith.constant 0 : index
    %c0_72 = arith.constant 0 : index
    %c0_73 = arith.constant 0 : index
    %298 = vector.load %arg10[%c0_71, %c0_72, %c0_73] : memref<1x16x512xf32, #tpu.memory_space<vmem>>, vector<1x16x512xf32>
    %299 = vector.shape_cast %298 : vector<1x16x512xf32> to vector<16x512xf32>
    %300 = vector.shape_cast %297 : vector<16x512xf32> to vector<1x16x512xf32>
    tpu.vector_store %arg10[%c0_71, %c0_72, %c0_73], %300 {strides = array<i32>} : memref<1x16x512xf32, #tpu.memory_space<vmem>>, vector<1x16x512xf32>,
    return
  }
  func.func @transform_0(%arg0: i32) -> (i32, i32) {
    %c0_i32 = arith.constant 0 : i32
    %c0_i32_0 = arith.constant 0 : i32
    %c0_i32_1 = arith.constant 0 : i32
    return %c0_i32, %c0_i32_0 : i32, i32
  }
  func.func @transform_1(%arg0: i32) -> (i32, i32, i32) {
    %c0_i32 = arith.constant 0 : i32
    %c0_i32_0 = arith.constant 0 : i32
    %c0_i32_1 = arith.constant 0 : i32
    return %arg0, %c0_i32, %c0_i32_0 : i32, i32, i32
  }
  func.func @transform_2(%arg0: i32) -> (i32, i32, i32) {
    %c0_i32 = arith.constant 0 : i32
    %c0_i32_0 = arith.constant 0 : i32
    %c0_i32_1 = arith.constant 0 : i32
    %c0_i32_2 = arith.constant 0 : i32
    return %c0_i32, %c0_i32_0, %c0_i32_1 : i32, i32, i32
  }
  func.func @transform_3(%arg0: i32) -> (i32, i32) {
    %c0_i32 = arith.constant 0 : i32
    %c0_i32_0 = arith.constant 0 : i32
    %c0_i32_1 = arith.constant 0 : i32
    return %c0_i32, %c0_i32_0 : i32, i32
  }
  func.func @transform_4(%arg0: i32) -> (i32, i32) {
    %c0_i32 = arith.constant 0 : i32
    %c0_i32_0 = arith.constant 0 : i32
    %c0_i32_1 = arith.constant 0 : i32
    return %c0_i32, %c0_i32_0 : i32, i32
  }
  func.func @transform_5(%arg0: i32) -> (i32, i32, i32) {
    %c0_i32 = arith.constant 0 : i32
    %c0_i32_0 = arith.constant 0 : i32
    %c0_i32_1 = arith.constant 0 : i32
    %c0_i32_2 = arith.constant 0 : i32
    return %c0_i32, %c0_i32_0, %c0_i32_1 : i32, i32, i32
  }
  func.func @transform_6(%arg0: i32) -> (i32, i32) {
    %c0_i32 = arith.constant 0 : i32
    %c0_i32_0 = arith.constant 0 : i32
    %c0_i32_1 = arith.constant 0 : i32
    return %c0_i32, %c0_i32_0 : i32, i32
  }
  func.func @transform_7(%arg0: i32) -> (i32, i32) {
    %c0_i32 = arith.constant 0 : i32
    %c0_i32_0 = arith.constant 0 : i32
    %c0_i32_1 = arith.constant 0 : i32
    return %c0_i32, %c0_i32_0 : i32, i32
  }
  func.func @transform_8(%arg0: i32) -> (i32, i32) {
    %c0_i32 = arith.constant 0 : i32
    %c0_i32_0 = arith.constant 0 : i32
    %c0_i32_1 = arith.constant 0 : i32
    return %c0_i32, %c0_i32_0 : i32, i32
  }
  func.func @transform_9(%arg0: i32) -> (i32, i32, i32) {
    %c0_i32 = arith.constant 0 : i32
    %c0_i32_0 = arith.constant 0 : i32
    %c0_i32_1 = arith.constant 0 : i32
    return %arg0, %c0_i32, %c0_i32_0 : i32, i32, i32
  }
}

</mosaic_0001>

<llo_original>
// kernel: res_encoder3d_forward.1
$region0: #{res_encoder3d_forward.1}
  #allocation0 [shape = 'u32[]', space=smem, size = 0x4, offset = 0x4, fixed_abs, tag = 'smem constant byte address 0x4 - core index']
  #allocation1 [shape = 'u32[72,128]{1,0:T(1,128)}', space=vmem, size = 0x9000, scoped, tag = 'internal scratch']
  %s0 = inlined_call_operand.vmem [shape: f32[8,512], index: 0, kind: input, shape index: {}]
  %s1 = inlined_call_operand.vmem [shape: f32[2,16,512], index: 1, kind: input, shape index: {}]
  %s2 = inlined_call_operand.vmem [shape: bf16[3,32,144], index: 2, kind: input, shape index: {}]
  %s3 = inlined_call_operand.vmem [shape: f32[16,1], index: 3, kind: input, shape index: {}]
  %s4 = inlined_call_operand.vmem [shape: f32[16,1], index: 4, kind: input, shape index: {}]
  %s5 = inlined_call_operand.vmem [shape: bf16[3,16,144], index: 5, kind: input, shape index: {}]
  %s6 = inlined_call_operand.vmem [shape: f32[16,1], index: 6, kind: input, shape index: {}]
  %s7 = inlined_call_operand.vmem [shape: f32[16,1], index: 7, kind: input, shape index: {}]
  %s8 = inlined_call_operand.vmem [shape: f32[16,1], index: 8, kind: input, shape index: {}]
  %s9 = inlined_call_operand.vmem [shape: f32[2,16,512], index: 9, kind: output, shape index: {}]
  %s10 = sld [smem:[#allocation0]]
  $region69: #{res_encoder3d_forward.1} parent=0
    _
  %s12 = ssub.s32 1, %s10
  %s13 = scalar_select 0, %s12, %s10
  loop: start=0, step=1, limit=4
  $region2: #{res_encoder3d_forward.1} parent=0 // loop_pre_header
    _
  $region3: #{res_encoder3d_forward.1} parent=0 // loop_header
    %s15 = sphi 0, %s19
    %p16 = scmp.ge.s32.totalorder %s15, 4
    %s23 = sphi 0, %s23
    %s25 = sphi 0, %s23
    %s26 = sphi 0, %s25
    %s40 = sphi 0, %s26
    %s46 = sphi 0, %s48
    %s49 = sphi 0, %s46
    %s50 = sphi 0, %s49
    %s66 = sphi 0, %s50
    %s70 = sphi 0, %s70
    %s72 = sphi 0, %s70
    %s73 = sphi 0, %s72
    %s87 = sphi 0, %s73
    %s91 = sphi 0, %s91
    %s93 = sphi 0, %s91
    %s94 = sphi 0, %s93
    %s108 = sphi 0, %s94
    %s112 = sphi 0, %s112
    %s114 = sphi 0, %s112
    %s115 = sphi 0, %s114
    %s129 = sphi 0, %s115
    %s133 = sphi 0, %s133
    %s135 = sphi 0, %s133
    %s136 = sphi 0, %s135
    %s150 = sphi 0, %s136
    %s154 = sphi 0, %s154
    %s156 = sphi 0, %s154
    %s157 = sphi 0, %s156
    %s171 = sphi 0, %s157
    %s175 = sphi 0, %s175
    %s177 = sphi 0, %s175
    %s178 = sphi 0, %s177
    %s192 = sphi 0, %s178
    %s196 = sphi 0, %s196
    %s198 = sphi 0, %s196
    %s199 = sphi 0, %s198
    %s213 = sphi 0, %s199
    %s219 = sphi 0, %s221
    %s222 = sphi 0, %s219
    %s223 = sphi 0, %s222
    %s239 = sphi 0, %s223
  $region4: #{res_encoder3d_forward.1} parent=0 // loop_header_branch
    %18 = sbr.rel (%p16) target = $region8
  $region5: #{res_encoder3d_forward.1} parent=0 // loop_body
    %s20 = ssub.s32 %s15, 1
    %s21 = ssub.s32 %s15, 2
    %s22 = sadd.s32 %s15, 1
    %s24 = sadd.s32 %s23, 1
    %p27 = scmp.eq.s32.totalorder %s15, 1
    %p28 = scmp.ne.s32.totalorder %s23, %s25
    %p29 = scmp.eq.s32.totalorder %s15, 0
    %p30 = por %p28, %p29
    %p31 = scmp.ne.s32.totalorder %s23, %s25
    %p32 = scmp.eq.s32.totalorder %s20, 1
    %p33 = por %p31, %p32
    %p34 = scmp.ne.s32.totalorder %s25, %s26
    %p35 = scmp.eq.s32.totalorder %s20, 0
    %p36 = por %p34, %p35
    %p37 = scmp.ne.s32.totalorder %s25, %s26
    %p38 = scmp.eq.s32.totalorder %s21, 1
    %p39 = por %p37, %p38
    %p41 = scmp.ne.s32.totalorder %s26, %s40
    %p42 = scmp.eq.s32.totalorder %s21, 0
    %p43 = por %p41, %p42
    %s44 = ssub.s32 %s15, %s22
    %p45 = scmp.eq.s32.totalorder %s44, 0
    %s47 = sadd.s32 %s46, 1
    %s48 = scalar_select %p45, %s46, %s47
    %p51 = pneg %p45
    %p52 = scmp.eq.s32.totalorder %s15, 1
    %p53 = por %p51, %p52
    %p54 = scmp.ne.s32.totalorder %s46, %s49
    %p55 = scmp.eq.s32.totalorder %s15, 0
    %p56 = por %p54, %p55
    %p57 = scmp.ne.s32.totalorder %s46, %s49
    %p58 = scmp.eq.s32.totalorder %s20, 1
    %p59 = por %p57, %p58
    %p60 = scmp.ne.s32.totalorder %s49, %s50
    %p61 = scmp.eq.s32.totalorder %s20, 0
    %p62 = por %p60, %p61
    %p63 = scmp.ne.s32.totalorder %s49, %s50
    %p64 = scmp.eq.s32.totalorder %s21, 1
    %p65 = por %p63, %p64
    %p67 = scmp.ne.s32.totalorder %s50, %s66
    %p68 = scmp.eq.s32.totalorder %s21, 0
    %p69 = por %p67, %p68
    %s71 = sadd.s32 %s70, 1
    %p74 = scmp.eq.s32.totalorder %s15, 1
    %p75 = scmp.ne.s32.totalorder %s70, %s72
    %p76 = scmp.eq.s32.totalorder %s15, 0
    %p77 = por %p75, %p76
    %p78 = scmp.ne.s32.totalorder %s70, %s72
    %p79 = scmp.eq.s32.totalorder %s20, 1
    %p80 = por %p78, %p79
    %p81 = scmp.ne.s32.totalorder %s72, %s73
    %p82 = scmp.eq.s32.totalorder %s20, 0
    %p83 = por %p81, %p82
    %p84 = scmp.ne.s32.totalorder %s72, %s73
    %p85 = scmp.eq.s32.totalorder %s21, 1
    %p86 = por %p84, %p85
    %p88 = scmp.ne.s32.totalorder %s73, %s87
    %p89 = scmp.eq.s32.totalorder %s21, 0
    %p90 = por %p88, %p89
    %s92 = sadd.s32 %s91, 1
    %p95 = scmp.eq.s32.totalorder %s15, 1
    %p96 = scmp.ne.s32.totalorder %s91, %s93
    %p97 = scmp.eq.s32.totalorder %s15, 0
    %p98 = por %p96, %p97
    %p99 = scmp.ne.s32.totalorder %s91, %s93
    %p100 = scmp.eq.s32.totalorder %s20, 1
    %p101 = por %p99, %p100
    %p102 = scmp.ne.s32.totalorder %s93, %s94
    %p103 = scmp.eq.s32.totalorder %s20, 0
    %p104 = por %p102, %p103
    %p105 = scmp.ne.s32.totalorder %s93, %s94
    %p106 = scmp.eq.s32.totalorder %s21, 1
    %p107 = por %p105, %p106
    %p109 = scmp.ne.s32.totalorder %s94, %s108
    %p110 = scmp.eq.s32.totalorder %s21, 0
    %p111 = por %p109, %p110
    %s113 = sadd.s32 %s112, 1
    %p116 = scmp.eq.s32.totalorder %s15, 1
    %p117 = scmp.ne.s32.totalorder %s112, %s114
    %p118 = scmp.eq.s32.totalorder %s15, 0
    %p119 = por %p117, %p118
    %p120 = scmp.ne.s32.totalorder %s112, %s114
    %p121 = scmp.eq.s32.totalorder %s20, 1
    %p122 = por %p120, %p121
    %p123 = scmp.ne.s32.totalorder %s114, %s115
    %p124 = scmp.eq.s32.totalorder %s20, 0
    %p125 = por %p123, %p124
    %p126 = scmp.ne.s32.totalorder %s114, %s115
    %p127 = scmp.eq.s32.totalorder %s21, 1
    %p128 = por %p126, %p127
    %p130 = scmp.ne.s32.totalorder %s115, %s129
    %p131 = scmp.eq.s32.totalorder %s21, 0
    %p132 = por %p130, %p131
    %s134 = sadd.s32 %s133, 1
    %p137 = scmp.eq.s32.totalorder %s15, 1
    %p138 = scmp.ne.s32.totalorder %s133, %s135
    %p139 = scmp.eq.s32.totalorder %s15, 0
    %p140 = por %p138, %p139
    %p141 = scmp.ne.s32.totalorder %s133, %s135
    %p142 = scmp.eq.s32.totalorder %s20, 1
    %p143 = por %p141, %p142
    %p144 = scmp.ne.s32.totalorder %s135, %s136
    %p145 = scmp.eq.s32.totalorder %s20, 0
    %p146 = por %p144, %p145
    %p147 = scmp.ne.s32.totalorder %s135, %s136
    %p148 = scmp.eq.s32.totalorder %s21, 1
    %p149 = por %p147, %p148
    %p151 = scmp.ne.s32.totalorder %s136, %s150
    %p152 = scmp.eq.s32.totalorder %s21, 0
    %p153 = por %p151, %p152
    %s155 = sadd.s32 %s154, 1
    %p158 = scmp.eq.s32.totalorder %s15, 1
    %p159 = scmp.ne.s32.totalorder %s154, %s156
    %p160 = scmp.eq.s32.totalorder %s15, 0
    %p161 = por %p159, %p160
    %p162 = scmp.ne.s32.totalorder %s154, %s156
    %p163 = scmp.eq.s32.totalorder %s20, 1
    %p164 = por %p162, %p163
    %p165 = scmp.ne.s32.totalorder %s156, %s157
    %p166 = scmp.eq.s32.totalorder %s20, 0
    %p167 = por %p165, %p166
    %p168 = scmp.ne.s32.totalorder %s156, %s157
    %p169 = scmp.eq.s32.totalorder %s21, 1
    %p170 = por %p168, %p169
    %p172 = scmp.ne.s32.totalorder %s157, %s171
    %p173 = scmp.eq.s32.totalorder %s21, 0
    %p174 = por %p172, %p173
    %s176 = sadd.s32 %s175, 1
    %p179 = scmp.eq.s32.totalorder %s15, 1
    %p180 = scmp.ne.s32.totalorder %s175, %s177
    %p181 = scmp.eq.s32.totalorder %s15, 0
    %p182 = por %p180, %p181
    %p183 = scmp.ne.s32.totalorder %s175, %s177
    %p184 = scmp.eq.s32.totalorder %s20, 1
    %p185 = por %p183, %p184
    %p186 = scmp.ne.s32.totalorder %s177, %s178
    %p187 = scmp.eq.s32.totalorder %s20, 0
    %p188 = por %p186, %p187
    %p189 = scmp.ne.s32.totalorder %s177, %s178
    %p190 = scmp.eq.s32.totalorder %s21, 1
    %p191 = por %p189, %p190
    %p193 = scmp.ne.s32.totalorder %s178, %s192
    %p194 = scmp.eq.s32.totalorder %s21, 0
    %p195 = por %p193, %p194
    %s197 = sadd.s32 %s196, 1
    %p200 = scmp.eq.s32.totalorder %s15, 1
    %p201 = scmp.ne.s32.totalorder %s196, %s198
    %p202 = scmp.eq.s32.totalorder %s15, 0
    %p203 = por %p201, %p202
    %p204 = scmp.ne.s32.totalorder %s196, %s198
    %p205 = scmp.eq.s32.totalorder %s20, 1
    %p206 = por %p204, %p205
    %p207 = scmp.ne.s32.totalorder %s198, %s199
    %p208 = scmp.eq.s32.totalorder %s20, 0
    %p209 = por %p207, %p208
    %p210 = scmp.ne.s32.totalorder %s198, %s199
    %p211 = scmp.eq.s32.totalorder %s21, 1
    %p212 = por %p210, %p211
    %p214 = scmp.ne.s32.totalorder %s199, %s213
    %p215 = scmp.eq.s32.totalorder %s21, 0
    %p216 = por %p214, %p215
    %s217 = ssub.s32 %s15, %s22
    %p218 = scmp.eq.s32.totalorder %s217, 0
    %s220 = sadd.s32 %s219, 1
    %s221 = scalar_select %p218, %s219, %s220
    %p224 = pneg %p218
    %p225 = scmp.eq.s32.totalorder %s15, 1
    %p226 = por %p224, %p225
    %p227 = scmp.ne.s32.totalorder %s219, %s222
    %p228 = scmp.eq.s32.totalorder %s15, 0
    %p229 = por %p227, %p228
    %p230 = scmp.ne.s32.totalorder %s219, %s222
    %p231 = scmp.eq.s32.totalorder %s20, 1
    %p232 = por %p230, %p231
    %p233 = scmp.ne.s32.totalorder %s222, %s223
    %p234 = scmp.eq.s32.totalorder %s20, 0
    %p235 = por %p233, %p234
    %p236 = scmp.ne.s32.totalorder %s222, %s223
    %p237 = scmp.eq.s32.totalorder %s21, 1
    %p238 = por %p236, %p237
    %p240 = scmp.ne.s32.totalorder %s223, %s239
    %p241 = scmp.eq.s32.totalorder %s21, 0
    %p242 = por %p240, %p241
    %p243 = scmp.le.s32.totalorder 1, %s15
    %p244 = scmp.lt.s32.totalorder %s15, 3
    %p245 = pnand %p243, %p244
    %p246 = pneg %p245
    // Predicated region
    $region9: #{res_encoder3d_forward.1} parent=5 // pred_check
      _
    $region10: #{res_encoder3d_forward.1} parent=5 // pred_check_branch
      %248 = sbr.rel (%p245) target = $region12
    $region11: #{res_encoder3d_forward.1} parent=5 // pred_region
      %s249 = ssub.s32 %s15, 1
      // Predicated region
      $region13: #{res_encoder3d_forward.1} parent=11 // pred_check
        %p250 = pneg %p36
      $region14: #{res_encoder3d_forward.1} parent=11 // pred_check_branch
        %252 = sbr.rel (%p250) target = $region16
      $region15: #{res_encoder3d_forward.1} parent=11 // pred_region
        _
      $region16: #{res_encoder3d_forward.1} parent=11 // pred_fallthru
        _
      // Predicated region
      $region17: #{res_encoder3d_forward.1} parent=11 // pred_check
        %p253 = pneg %p83
      $region18: #{res_encoder3d_forward.1} parent=11 // pred_check_branch
        %255 = sbr.rel (%p253) target = $region20
      $region19: #{res_encoder3d_forward.1} parent=11 // pred_region
        _
      $region20: #{res_encoder3d_forward.1} parent=11 // pred_fallthru
        _
      // Predicated region
      $region21: #{res_encoder3d_forward.1} parent=11 // pred_check
        %p256 = pneg %p104
      $region22: #{res_encoder3d_forward.1} parent=11 // pred_check_branch
        %258 = sbr.rel (%p256) target = $region24
      $region23: #{res_encoder3d_forward.1} parent=11 // pred_region
        _
      $region24: #{res_encoder3d_forward.1} parent=11 // pred_fallthru
        _
      // Predicated region
      $region25: #{res_encoder3d_forward.1} parent=11 // pred_check
        %p259 = pneg %p125
      $region26: #{res_encoder3d_forward.1} parent=11 // pred_check_branch
        %261 = sbr.rel (%p259) target = $region28
      $region27: #{res_encoder3d_forward.1} parent=11 // pred_region
        _
      $region28: #{res_encoder3d_forward.1} parent=11 // pred_fallthru
        _
      // Predicated region
      $region29: #{res_encoder3d_forward.1} parent=11 // pred_check
        %p262 = pneg %p146
      $region30: #{res_encoder3d_forward.1} parent=11 // pred_check_branch
        %264 = sbr.rel (%p262) target = $region32
      $region31: #{res_encoder3d_forward.1} parent=11 // pred_region
        _
      $region32: #{res_encoder3d_forward.1} parent=11 // pred_fallthru
        _
      // Predicated region
      $region33: #{res_encoder3d_forward.1} parent=11 // pred_check
        %p265 = pneg %p167
      $region34: #{res_encoder3d_forward.1} parent=11 // pred_check_branch
        %267 = sbr.rel (%p265) target = $region36
      $region35: #{res_encoder3d_forward.1} parent=11 // pred_region
        _
      $region36: #{res_encoder3d_forward.1} parent=11 // pred_fallthru
        _
      // Predicated region
      $region37: #{res_encoder3d_forward.1} parent=11 // pred_check
        %p268 = pneg %p188
      $region38: #{res_encoder3d_forward.1} parent=11 // pred_check_branch
        %270 = sbr.rel (%p268) target = $region40
      $region39: #{res_encoder3d_forward.1} parent=11 // pred_region
        _
      $region40: #{res_encoder3d_forward.1} parent=11 // pred_fallthru
        _
      // Predicated region
      $region41: #{res_encoder3d_forward.1} parent=11 // pred_check
        %p271 = pneg %p209
      $region42: #{res_encoder3d_forward.1} parent=11 // pred_check_branch
        %273 = sbr.rel (%p271) target = $region44
      $region43: #{res_encoder3d_forward.1} parent=11 // pred_region
        _
      $region44: #{res_encoder3d_forward.1} parent=11 // pred_fallthru
        _
    $region12: #{res_encoder3d_forward.1} parent=5 // pred_fallthru
      _
    %p274 = scmp.lt.s32.totalorder %s15, 2
    // Predicated region
    $region45: #{res_encoder3d_forward.1} parent=5 // pred_check
      %p275 = pneg %p274
    $region46: #{res_encoder3d_forward.1} parent=5 // pred_check_branch
      %277 = sbr.rel (%p275) target = $region48
    $region47: #{res_encoder3d_forward.1} parent=5 // pred_region
      // Predicated region
      $region49: #{res_encoder3d_forward.1} parent=47 // pred_check
        %p278 = pneg %p56
      $region50: #{res_encoder3d_forward.1} parent=47 // pred_check_branch
        %280 = sbr.rel (%p278) target = $region52
      $region51: #{res_encoder3d_forward.1} parent=47 // pred_region
        %p281 = scmp.lt.s32.totalorder %s15, 1
        %s282 = scalar_select %p281, %s15, 1
        %s283 = smul.addr %s282, 8
        %s284 = smul.addr %s283, 8
        %s285 = scalar_lea.vmem %s1, %s284
      $region52: #{res_encoder3d_forward.1} parent=47 // pred_fallthru
        _
    $region48: #{res_encoder3d_forward.1} parent=5 // pred_fallthru
      _
    %p286 = scmp.le.s32.totalorder 1, %s15
    %p287 = scmp.lt.s32.totalorder %s15, 3
    %p288 = pnand %p286, %p287
    %p289 = pneg %p288
    // Predicated region
    $region53: #{res_encoder3d_forward.1} parent=5 // pred_check
      _
    $region54: #{res_encoder3d_forward.1} parent=5 // pred_check_branch
      %291 = sbr.rel (%p288) target = $region56
    $region55: #{res_encoder3d_forward.1} parent=5 // pred_region
      %s292 = ssub.s32 %s15, 1
      %p293 = pneg %p36
      %p294 = pneg %p33
      %p295 = scmp.lt.s32.totalorder %s20, 1
      %s296 = scalar_select %p295, %s20, 1
      %s297 = smul.addr %s296, 8
      %s298 = smul.addr %s297, 8
      %s299 = scalar_lea.vmem %s1, %s298
      %p300 = pneg %p62
      %p301 = pneg %p59
      %p302 = pneg %p83
      %p303 = pneg %p80
      %p304 = pneg %p104
      %p305 = pneg %p101
      %p306 = pneg %p125
      %p307 = pneg %p122
      %p308 = pneg %p146
      %p309 = pneg %p143
      %p310 = pneg %p167
      %p311 = pneg %p164
      %p312 = pneg %p188
      %p313 = pneg %p185
      %p314 = pneg %p209
      %p315 = pneg %p206
      %p316 = pneg %p235
      %p317 = pneg %p232
      %p318 = scmp.lt.s32.totalorder %s20, 1
      %s319 = scalar_select %p318, %s20, 1
      %s320 = smul.addr %s319, 8
      %s321 = smul.addr %s320, 8
      %s322 = scalar_lea.vmem %s9, %s321
      %p323 = scmp.lt.s32.totalorder %s20, 1
      %s324 = scalar_select %p323, %s20, 1
      %s325 = smul.addr %s324, 8
      %s326 = smul.addr %s325, 8
      %s327 = scalar_lea.vmem %s1, %s326
      %p328 = scmp.lt.s32.totalorder %s20, 1
      %s329 = scalar_select %p328, %s20, 1
      %s330 = smul.addr %s329, 8
      %s331 = smul.addr %s330, 8
      %s332 = scalar_lea.vmem %s9, %s331
      %v334 = vld [vmem:[%s0] ss:$8 sm:$0xf]
      %s335 = scalar_lea.vmem %s0, 2
      %v336 = vld [vmem:[%s335] ss:$8 sm:$0xf]
      %s337 = scalar_lea.vmem %s0, 4
      %v338 = vld [vmem:[%s337] ss:$8 sm:$0xf]
      %s339 = scalar_lea.vmem %s0, 1
      %v340 = vld [vmem:[%s339] ss:$8 sm:$0xf]
      %s341 = scalar_lea.vmem %s0, 3
      %v342 = vld [vmem:[%s341] ss:$8 sm:$0xf]
      %s343 = scalar_lea.vmem %s0, 5
      %v344 = vld [vmem:[%s343] ss:$8 sm:$0xf]
      %v345 = vmul.f32 %v334, %v336
      %v346 = vmul.f32 %v345, %v338
      %v347 = vmul.f32 %v345, %v344
      %v348 = vmul.f32 %v334, %v338
      %v349 = vmul.f32 %v334, %v344
      %v350 = vmul.f32 %v334, %v342
      %v351 = vmul.f32 %v350, %v338
      %v352 = vmul.f32 %v350, %v344
      %v353 = vmul.f32 %v336, %v338
      %v354 = vmul.f32 %v336, %v344
      %v355 = vmul.f32 %v342, %v338
      %v356 = vmul.f32 %v342, %v344
      %v357 = vmul.f32 %v340, %v336
      %v358 = vmul.f32 %v357, %v338
      %v359 = vmul.f32 %v357, %v344
      %v360 = vmul.f32 %v340, %v338
      %v361 = vmul.f32 %v340, %v344
      %v362 = vmul.f32 %v340, %v342
      %v363 = vmul.f32 %v362, %v338
      %v364 = vmul.f32 %v362, %v344
      %v365 = vld [vmem:[%s327] sm:$0xff]
      %v366 = vld [vmem:[%s327 + $0x8] sm:$0xff]
      %v367 = vld [vmem:[%s327 + $0x10] sm:$0xff]
      %v368 = vld [vmem:[%s327 + $0x18] sm:$0xff]
      %v369 = vld [vmem:[%s327 + $0x20] sm:$0xff]
      %v370 = vld [vmem:[%s327 + $0x28] sm:$0xff]
      %v371 = vld [vmem:[%s327 + $0x30] sm:$0xff]
      %v372 = vld [vmem:[%s327 + $0x38] sm:$0xff]
      %373 = vrot.lane.b32.xlu0 %v365, 73
      %v374 = vpop.permute.xlu0 %373
      %375 = vrot.lane.b32.xlu0 %v369, 73
      %v376 = vpop.permute.xlu0 %375
      %377 = vrot.lane.b32.xlu0 %v366, 73
      %v378 = vpop.permute.xlu0 %377
      %379 = vrot.lane.b32.xlu0 %v370, 73
      %v380 = vpop.permute.xlu0 %379
      %381 = vrot.lane.b32.xlu0 %v367, 73
      %v382 = vpop.permute.xlu0 %381
      %383 = vrot.lane.b32.xlu0 %v371, 73
      %v384 = vpop.permute.xlu0 %383
      %385 = vrot.lane.b32.xlu0 %v368, 73
      %v386 = vpop.permute.xlu0 %385
      %387 = vrot.lane.b32.xlu0 %v372, 73
      %v388 = vpop.permute.xlu0 %387
      %v389 = vlaneseq
      %v390 = vand.u32 %v389, 127
      %vm391 = vcmp.lt.s32.totalorder %v390, 73
      %v392 = vsel %vm391, %v382, %v386
      %v393 = vsel %vm391, %v384, %v388
      %v394 = vsel %vm391, %v378, %v382
      %v395 = vsel %vm391, %v380, %v384
      %v396 = vsel %vm391, %v374, %v378
      %v397 = vsel %vm391, %v376, %v380
      %v398 = vsel %vm391, %v386, %v374
      %v399 = vsel %vm391, %v388, %v376
      %v401 = vperm.slane %v346, 0
      %v402 = vperm.slane %v346, 1
      %v403 = vperm.slane %v346, 2
      %v404 = vperm.slane %v346, 3
      %v409 = vmul.f32 %v398, %v401
      %v410 = vmul.f32 %v396, %v402
      %v411 = vmul.f32 %v394, %v403
      %v412 = vmul.f32 %v392, %v404
      %v413 = vmul.f32 %v399, %v401
      %v414 = vmul.f32 %v397, %v402
      %v415 = vmul.f32 %v395, %v403
      %v416 = vmul.f32 %v393, %v404
      %v417 = vpack.c.bf16 %v410, %v409
      %v418 = vpack.c.bf16 %v412, %v411
      %v419 = vpack.c.bf16 %v414, %v413
      %v420 = vpack.c.bf16 %v416, %v415
      %421 = vrot.lane.b32.xlu0 %v365, 72
      %v422 = vpop.permute.xlu0 %421
      %423 = vrot.lane.b32.xlu0 %v369, 72
      %v424 = vpop.permute.xlu0 %423
      %425 = vrot.lane.b32.xlu0 %v366, 72
      %v426 = vpop.permute.xlu0 %425
      %427 = vrot.lane.b32.xlu0 %v370, 72
      %v428 = vpop.permute.xlu0 %427
      %429 = vrot.lane.b32.xlu0 %v367, 72
      %v430 = vpop.permute.xlu0 %429
      %431 = vrot.lane.b32.xlu0 %v371, 72
      %v432 = vpop.permute.xlu0 %431
      %433 = vrot.lane.b32.xlu0 %v368, 72
      %v434 = vpop.permute.xlu0 %433
      %435 = vrot.lane.b32.xlu0 %v372, 72
      %v436 = vpop.permute.xlu0 %435
      %vm437 = vcmp.lt.s32.totalorder %v390, 72
      %v438 = vsel %vm437, %v430, %v434
      %v439 = vsel %vm437, %v432, %v436
      %v440 = vsel %vm437, %v426, %v430
      %v441 = vsel %vm437, %v428, %v432
      %v442 = vsel %vm437, %v422, %v426
      %v443 = vsel %vm437, %v424, %v428
      %v444 = vsel %vm437, %v434, %v422
      %v445 = vsel %vm437, %v436, %v424
      %v447 = vperm.slane %v345, 0
      %v448 = vperm.slane %v345, 1
      %v449 = vperm.slane %v345, 2
      %v450 = vperm.slane %v345, 3
      %v455 = vmul.f32 %v444, %v447
      %v456 = vmul.f32 %v442, %v448
      %v457 = vmul.f32 %v440, %v449
      %v458 = vmul.f32 %v438, %v450
      %v459 = vmul.f32 %v445, %v447
      %v460 = vmul.f32 %v443, %v448
      %v461 = vmul.f32 %v441, %v449
      %v462 = vmul.f32 %v439, %v450
      %v463 = vpack.c.bf16 %v456, %v455
      %v464 = vpack.c.bf16 %v458, %v457
      %v465 = vpack.c.bf16 %v460, %v459
      %v466 = vpack.c.bf16 %v462, %v461
      %467 = vrot.lane.b32.xlu0 %v365, 71
      %v468 = vpop.permute.xlu0 %467
      %469 = vrot.lane.b32.xlu0 %v369, 71
      %v470 = vpop.permute.xlu0 %469
      %471 = vrot.lane.b32.xlu0 %v366, 71
      %v472 = vpop.permute.xlu0 %471
      %473 = vrot.lane.b32.xlu0 %v370, 71
      %v474 = vpop.permute.xlu0 %473
      %475 = vrot.lane.b32.xlu0 %v367, 71
      %v476 = vpop.permute.xlu0 %475
      %477 = vrot.lane.b32.xlu0 %v371, 71
      %v478 = vpop.permute.xlu0 %477
      %479 = vrot.lane.b32.xlu0 %v368, 71
      %v480 = vpop.permute.xlu0 %479
      %481 = vrot.lane.b32.xlu0 %v372, 71
      %v482 = vpop.permute.xlu0 %481
      %vm483 = vcmp.lt.s32.totalorder %v390, 71
      %v484 = vsel %vm483, %v476, %v480
      %v485 = vsel %vm483, %v478, %v482
      %v486 = vsel %vm483, %v472, %v476
      %v487 = vsel %vm483, %v474, %v478
      %v488 = vsel %vm483, %v468, %v472
      %v489 = vsel %vm483, %v470, %v474
      %v490 = vsel %vm483, %v480, %v468
      %v491 = vsel %vm483, %v482, %v470
      %v493 = vperm.slane %v347, 0
      %v494 = vperm.slane %v347, 1
      %v495 = vperm.slane %v347, 2
      %v496 = vperm.slane %v347, 3
      %v501 = vmul.f32 %v490, %v493
      %v502 = vmul.f32 %v488, %v494
      %v503 = vmul.f32 %v486, %v495
      %v504 = vmul.f32 %v484, %v496
      %v505 = vmul.f32 %v491, %v493
      %v506 = vmul.f32 %v489, %v494
      %v507 = vmul.f32 %v487, %v495
      %v508 = vmul.f32 %v485, %v496
      %v509 = vpack.c.bf16 %v502, %v501
      %v510 = vpack.c.bf16 %v504, %v503
      %v511 = vpack.c.bf16 %v506, %v505
      %v512 = vpack.c.bf16 %v508, %v507
      %513 = vrot.lane.b32.xlu0 %v365, 65
      %v514 = vpop.permute.xlu0 %513
      %515 = vrot.lane.b32.xlu0 %v369, 65
      %v516 = vpop.permute.xlu0 %515
      %517 = vrot.lane.b32.xlu0 %v366, 65
      %v518 = vpop.permute.xlu0 %517
      %519 = vrot.lane.b32.xlu0 %v370, 65
      %v520 = vpop.permute.xlu0 %519
      %521 = vrot.lane.b32.xlu0 %v367, 65
      %v522 = vpop.permute.xlu0 %521
      %523 = vrot.lane.b32.xlu0 %v371, 65
      %v524 = vpop.permute.xlu0 %523
      %525 = vrot.lane.b32.xlu0 %v368, 65
      %v526 = vpop.permute.xlu0 %525
      %527 = vrot.lane.b32.xlu0 %v372, 65
      %v528 = vpop.permute.xlu0 %527
      %vm529 = vcmp.lt.s32.totalorder %v390, 65
      %v530 = vsel %vm529, %v522, %v526
      %v531 = vsel %vm529, %v524, %v528
      %v532 = vsel %vm529, %v518, %v522
      %v533 = vsel %vm529, %v520, %v524
      %v534 = vsel %vm529, %v514, %v518
      %v535 = vsel %vm529, %v516, %v520
      %v536 = vsel %vm529, %v526, %v514
      %v537 = vsel %vm529, %v528, %v516
      %v539 = vperm.slane %v348, 0
      %v540 = vperm.slane %v348, 1
      %v541 = vperm.slane %v348, 2
      %v542 = vperm.slane %v348, 3
      %v547 = vmul.f32 %v536, %v539
      %v548 = vmul.f32 %v534, %v540
      %v549 = vmul.f32 %v532, %v541
      %v550 = vmul.f32 %v530, %v542
      %v551 = vmul.f32 %v537, %v539
      %v552 = vmul.f32 %v535, %v540
      %v553 = vmul.f32 %v533, %v541
      %v554 = vmul.f32 %v531, %v542
      %v555 = vpack.c.bf16 %v548, %v547
      %v556 = vpack.c.bf16 %v550, %v549
      %v557 = vpack.c.bf16 %v552, %v551
      %v558 = vpack.c.bf16 %v554, %v553
      %559 = vrot.lane.b32.xlu0 %v365, 64
      %v560 = vpop.permute.xlu0 %559
      %561 = vrot.lane.b32.xlu0 %v369, 64
      %v562 = vpop.permute.xlu0 %561
      %563 = vrot.lane.b32.xlu0 %v366, 64
      %v564 = vpop.permute.xlu0 %563
      %565 = vrot.lane.b32.xlu0 %v370, 64
      %v566 = vpop.permute.xlu0 %565
      %567 = vrot.lane.b32.xlu0 %v367, 64
      %v568 = vpop.permute.xlu0 %567
      %569 = vrot.lane.b32.xlu0 %v371, 64
      %v570 = vpop.permute.xlu0 %569
      %571 = vrot.lane.b32.xlu0 %v368, 64
      %v572 = vpop.permute.xlu0 %571
      %573 = vrot.lane.b32.xlu0 %v372, 64
      %v574 = vpop.permute.xlu0 %573
      %vm575 = vcmp.lt.s32.totalorder %v390, 64
      %v576 = vsel %vm575, %v568, %v572
      %v577 = vsel %vm575, %v570, %v574
      %v578 = vsel %vm575, %v564, %v568
      %v579 = vsel %vm575, %v566, %v570
      %v580 = vsel %vm575, %v560, %v564
      %v581 = vsel %vm575, %v562, %v566
      %v582 = vsel %vm575, %v572, %v560
      %v583 = vsel %vm575, %v574, %v562
      %v585 = vperm.slane %v334, 0
      %v586 = vperm.slane %v334, 1
      %v587 = vperm.slane %v334, 2
      %v588 = vperm.slane %v334, 3
      %v593 = vmul.f32 %v582, %v585
      %v594 = vmul.f32 %v580, %v586
      %v595 = vmul.f32 %v578, %v587
      %v596 = vmul.f32 %v576, %v588
      %v597 = vmul.f32 %v583, %v585
      %v598 = vmul.f32 %v581, %v586
      %v599 = vmul.f32 %v579, %v587
      %v600 = vmul.f32 %v577, %v588
      %v601 = vpack.c.bf16 %v594, %v593
      %v602 = vpack.c.bf16 %v596, %v595
      %v603 = vpack.c.bf16 %v598, %v597
      %v604 = vpack.c.bf16 %v600, %v599
      %605 = vrot.lane.b32.xlu0 %v365, 63
      %v606 = vpop.permute.xlu0 %605
      %607 = vrot.lane.b32.xlu0 %v369, 63
      %v608 = vpop.permute.xlu0 %607
      %609 = vrot.lane.b32.xlu0 %v366, 63
      %v610 = vpop.permute.xlu0 %609
      %611 = vrot.lane.b32.xlu0 %v370, 63
      %v612 = vpop.permute.xlu0 %611
      %613 = vrot.lane.b32.xlu0 %v367, 63
      %v614 = vpop.permute.xlu0 %613
      %615 = vrot.lane.b32.xlu0 %v371, 63
      %v616 = vpop.permute.xlu0 %615
      %617 = vrot.lane.b32.xlu0 %v368, 63
      %v618 = vpop.permute.xlu0 %617
      %619 = vrot.lane.b32.xlu0 %v372, 63
      %v620 = vpop.permute.xlu0 %619
      %vm621 = vcmp.lt.s32.totalorder %v390, 63
      %v622 = vsel %vm621, %v614, %v618
      %v623 = vsel %vm621, %v616, %v620
      %v624 = vsel %vm621, %v610, %v614
      %v625 = vsel %vm621, %v612, %v616
      %v626 = vsel %vm621, %v606, %v610
      %v627 = vsel %vm621, %v608, %v612
      %v628 = vsel %vm621, %v618, %v606
      %v629 = vsel %vm621, %v620, %v608
      %v631 = vperm.slane %v349, 0
      %v632 = vperm.slane %v349, 1
      %v633 = vperm.slane %v349, 2
      %v634 = vperm.slane %v349, 3
      %v639 = vmul.f32 %v628, %v631
      %v640 = vmul.f32 %v626, %v632
      %v641 = vmul.f32 %v624, %v633
      %v642 = vmul.f32 %v622, %v634
      %v643 = vmul.f32 %v629, %v631
      %v644 = vmul.f32 %v627, %v632
      %v645 = vmul.f32 %v625, %v633
      %v646 = vmul.f32 %v623, %v634
      %v647 = vpack.c.bf16 %v640, %v639
      %v648 = vpack.c.bf16 %v642, %v641
      %v649 = vpack.c.bf16 %v644, %v643
      %v650 = vpack.c.bf16 %v646, %v645
      %651 = vrot.lane.b32.xlu0 %v365, 57
      %v652 = vpop.permute.xlu0 %651
      %653 = vrot.lane.b32.xlu0 %v369, 57
      %v654 = vpop.permute.xlu0 %653
      %655 = vrot.lane.b32.xlu0 %v366, 57
      %v656 = vpop.permute.xlu0 %655
      %657 = vrot.lane.b32.xlu0 %v370, 57
      %v658 = vpop.permute.xlu0 %657
      %659 = vrot.lane.b32.xlu0 %v367, 57
      %v660 = vpop.permute.xlu0 %659
      %661 = vrot.lane.b32.xlu0 %v371, 57
      %v662 = vpop.permute.xlu0 %661
      %663 = vrot.lane.b32.xlu0 %v368, 57
      %v664 = vpop.permute.xlu0 %663
      %665 = vrot.lane.b32.xlu0 %v372, 57
      %v666 = vpop.permute.xlu0 %665
      %vm667 = vcmp.lt.s32.totalorder %v390, 57
      %v668 = vsel %vm667, %v660, %v664
      %v669 = vsel %vm667, %v662, %v666
      %v670 = vsel %vm667, %v656, %v660
      %v671 = vsel %vm667, %v658, %v662
      %v672 = vsel %vm667, %v652, %v656
      %v673 = vsel %vm667, %v654, %v658
      %v674 = vsel %vm667, %v664, %v652
      %v675 = vsel %vm667, %v666, %v654
      %v677 = vperm.slane %v351, 0
      %v678 = vperm.slane %v351, 1
      %v679 = vperm.slane %v351, 2
      %v680 = vperm.slane %v351, 3
      %v685 = vmul.f32 %v674, %v677
      %v686 = vmul.f32 %v672, %v678
      %v687 = vmul.f32 %v670, %v679
      %v688 = vmul.f32 %v668, %v680
      %v689 = vmul.f32 %v675, %v677
      %v690 = vmul.f32 %v673, %v678
      %v691 = vmul.f32 %v671, %v679
      %v692 = vmul.f32 %v669, %v680
      %v693 = vpack.c.bf16 %v686, %v685
      %v694 = vpack.c.bf16 %v688, %v687
      %v695 = vpack.c.bf16 %v690, %v689
      %v696 = vpack.c.bf16 %v692, %v691
      %697 = vrot.lane.b32.xlu0 %v365, 56
      %v698 = vpop.permute.xlu0 %697
      %699 = vrot.lane.b32.xlu0 %v369, 56
      %v700 = vpop.permute.xlu0 %699
      %701 = vrot.lane.b32.xlu0 %v366, 56
      %v702 = vpop.permute.xlu0 %701
      %703 = vrot.lane.b32.xlu0 %v370, 56
      %v704 = vpop.permute.xlu0 %703
      %705 = vrot.lane.b32.xlu0 %v367, 56
      %v706 = vpop.permute.xlu0 %705
      %707 = vrot.lane.b32.xlu0 %v371, 56
      %v708 = vpop.permute.xlu0 %707
      %709 = vrot.lane.b32.xlu0 %v368, 56
      %v710 = vpop.permute.xlu0 %709
      %711 = vrot.lane.b32.xlu0 %v372, 56
      %v712 = vpop.permute.xlu0 %711
      %vm713 = vcmp.lt.s32.totalorder %v390, 56
      %v714 = vsel %vm713, %v706, %v710
      %v715 = vsel %vm713, %v708, %v712
      %v716 = vsel %vm713, %v702, %v706
      %v717 = vsel %vm713, %v704, %v708
      %v718 = vsel %vm713, %v698, %v702
      %v719 = vsel %vm713, %v700, %v704
      %v720 = vsel %vm713, %v710, %v698
      %v721 = vsel %vm713, %v712, %v700
      %v723 = vperm.slane %v350, 0
      %v724 = vperm.slane %v350, 1
      %v725 = vperm.slane %v350, 2
      %v726 = vperm.slane %v350, 3
      %v731 = vmul.f32 %v720, %v723
      %v732 = vmul.f32 %v718, %v724
      %v733 = vmul.f32 %v716, %v725
      %v734 = vmul.f32 %v714, %v726
      %v735 = vmul.f32 %v721, %v723
      %v736 = vmul.f32 %v719, %v724
      %v737 = vmul.f32 %v717, %v725
      %v738 = vmul.f32 %v715, %v726
      %v739 = vpack.c.bf16 %v732, %v731
      %v740 = vpack.c.bf16 %v734, %v733
      %v741 = vpack.c.bf16 %v736, %v735
      %v742 = vpack.c.bf16 %v738, %v737
      %743 = vrot.lane.b32.xlu0 %v365, 55
      %v744 = vpop.permute.xlu0 %743
      %745 = vrot.lane.b32.xlu0 %v369, 55
      %v746 = vpop.permute.xlu0 %745
      %747 = vrot.lane.b32.xlu0 %v366, 55
      %v748 = vpop.permute.xlu0 %747
      %749 = vrot.lane.b32.xlu0 %v370, 55
      %v750 = vpop.permute.xlu0 %749
      %751 = vrot.lane.b32.xlu0 %v367, 55
      %v752 = vpop.permute.xlu0 %751
      %753 = vrot.lane.b32.xlu0 %v371, 55
      %v754 = vpop.permute.xlu0 %753
      %755 = vrot.lane.b32.xlu0 %v368, 55
      %v756 = vpop.permute.xlu0 %755
      %757 = vrot.lane.b32.xlu0 %v372, 55
      %v758 = vpop.permute.xlu0 %757
      %vm759 = vcmp.lt.s32.totalorder %v390, 55
      %v760 = vsel %vm759, %v752, %v756
      %v761 = vsel %vm759, %v754, %v758
      %v762 = vsel %vm759, %v748, %v752
      %v763 = vsel %vm759, %v750, %v754
      %v764 = vsel %vm759, %v744, %v748
      %v765 = vsel %vm759, %v746, %v750
      %v766 = vsel %vm759, %v756, %v744
      %v767 = vsel %vm759, %v758, %v746
      %v769 = vperm.slane %v352, 0
      %v770 = vperm.slane %v352, 1
      %v771 = vperm.slane %v352, 2
      %v772 = vperm.slane %v352, 3
      %v777 = vmul.f32 %v766, %v769
      %v778 = vmul.f32 %v764, %v770
      %v779 = vmul.f32 %v762, %v771
      %v780 = vmul.f32 %v760, %v772
      %v781 = vmul.f32 %v767, %v769
      %v782 = vmul.f32 %v765, %v770
      %v783 = vmul.f32 %v763, %v771
      %v784 = vmul.f32 %v761, %v772
      %v785 = vpack.c.bf16 %v778, %v777
      %v786 = vpack.c.bf16 %v780, %v779
      %v787 = vpack.c.bf16 %v782, %v781
      %v788 = vpack.c.bf16 %v784, %v783
      %v793 = vunpack.c.l.b16 %v417
      %v794 = vunpack.c.h.b16 %v417
      %v795 = vunpack.c.l.b16 %v418
      %v796 = vunpack.c.h.b16 %v418
      %v797 = vunpack.c.l.b16 %v419
      %v798 = vunpack.c.h.b16 %v419
      %v799 = vunpack.c.l.b16 %v420
      %v800 = vunpack.c.h.b16 %v420
      %v801 = vpack.c.b16 %v797, %v793
      %v802 = vpack.c.b16 %v798, %v794
      %v803 = vpack.c.b16 %v799, %v795
      %v804 = vpack.c.b16 %v800, %v796
      %v813 = vunpack.c.l.b16 %v463
      %v814 = vunpack.c.h.b16 %v463
      %v815 = vunpack.c.l.b16 %v464
      %v816 = vunpack.c.h.b16 %v464
      %v817 = vunpack.c.l.b16 %v465
      %v818 = vunpack.c.h.b16 %v465
      %v819 = vunpack.c.l.b16 %v466
      %v820 = vunpack.c.h.b16 %v466
      %v821 = vpack.c.b16 %v817, %v813
      %v822 = vpack.c.b16 %v818, %v814
      %v823 = vpack.c.b16 %v819, %v815
      %v824 = vpack.c.b16 %v820, %v816
      %v833 = vunpack.c.l.b16 %v509
      %v834 = vunpack.c.h.b16 %v509
      %v835 = vunpack.c.l.b16 %v510
      %v836 = vunpack.c.h.b16 %v510
      %v837 = vunpack.c.l.b16 %v511
      %v838 = vunpack.c.h.b16 %v511
      %v839 = vunpack.c.l.b16 %v512
      %v840 = vunpack.c.h.b16 %v512
      %v841 = vpack.c.b16 %v837, %v833
      %v842 = vpack.c.b16 %v838, %v834
      %v843 = vpack.c.b16 %v839, %v835
      %v844 = vpack.c.b16 %v840, %v836
      %v853 = vunpack.c.l.b16 %v555
      %v854 = vunpack.c.h.b16 %v555
      %v855 = vunpack.c.l.b16 %v556
      %v856 = vunpack.c.h.b16 %v556
      %v857 = vunpack.c.l.b16 %v557
      %v858 = vunpack.c.h.b16 %v557
      %v859 = vunpack.c.l.b16 %v558
      %v860 = vunpack.c.h.b16 %v558
      %v861 = vpack.c.b16 %v857, %v853
      %v862 = vpack.c.b16 %v858, %v854
      %v863 = vpack.c.b16 %v859, %v855
      %v864 = vpack.c.b16 %v860, %v856
      %v873 = vunpack.c.l.b16 %v601
      %v874 = vunpack.c.h.b16 %v601
      %v875 = vunpack.c.l.b16 %v602
      %v876 = vunpack.c.h.b16 %v602
      %v877 = vunpack.c.l.b16 %v603
      %v878 = vunpack.c.h.b16 %v603
      %v879 = vunpack.c.l.b16 %v604
      %v880 = vunpack.c.h.b16 %v604
      %v881 = vpack.c.b16 %v877, %v873
      %v882 = vpack.c.b16 %v878, %v874
      %v883 = vpack.c.b16 %v879, %v875
      %v884 = vpack.c.b16 %v880, %v876
      %v893 = vunpack.c.l.b16 %v647
      %v894 = vunpack.c.h.b16 %v647
      %v895 = vunpack.c.l.b16 %v648
      %v896 = vunpack.c.h.b16 %v648
      %v897 = vunpack.c.l.b16 %v649
      %v898 = vunpack.c.h.b16 %v649
      %v899 = vunpack.c.l.b16 %v650
      %v900 = vunpack.c.h.b16 %v650
      %v901 = vpack.c.b16 %v897, %v893
      %v902 = vpack.c.b16 %v898, %v894
      %v903 = vpack.c.b16 %v899, %v895
      %v904 = vpack.c.b16 %v900, %v896
      %v913 = vunpack.c.l.b16 %v693
      %v914 = vunpack.c.h.b16 %v693
      %v915 = vunpack.c.l.b16 %v694
      %v916 = vunpack.c.h.b16 %v694
      %v917 = vunpack.c.l.b16 %v695
      %v918 = vunpack.c.h.b16 %v695
      %v919 = vunpack.c.l.b16 %v696
      %v920 = vunpack.c.h.b16 %v696
      %v921 = vpack.c.b16 %v917, %v913
      %v922 = vpack.c.b16 %v918, %v914
      %v923 = vpack.c.b16 %v919, %v915
      %v924 = vpack.c.b16 %v920, %v916
      %v933 = vunpack.c.l.b16 %v739
      %v934 = vunpack.c.h.b16 %v739
      %v935 = vunpack.c.l.b16 %v740
      %v936 = vunpack.c.h.b16 %v740
      %v937 = vunpack.c.l.b16 %v741
      %v938 = vunpack.c.h.b16 %v741
      %v939 = vunpack.c.l.b16 %v742
      %v940 = vunpack.c.h.b16 %v742
      %v941 = vpack.c.b16 %v937, %v933
      %v942 = vpack.c.b16 %v938, %v934
      %v943 = vpack.c.b16 %v939, %v935
      %v944 = vpack.c.b16 %v940, %v936
      %v953 = vunpack.c.l.b16 %v785
      %v954 = vunpack.c.h.b16 %v785
      %v955 = vunpack.c.l.b16 %v786
      %v956 = vunpack.c.h.b16 %v786
      %v957 = vunpack.c.l.b16 %v787
      %v958 = vunpack.c.h.b16 %v787
      %v959 = vunpack.c.l.b16 %v788
      %v960 = vunpack.c.h.b16 %v788
      %v961 = vpack.c.b16 %v957, %v953
      %v962 = vpack.c.b16 %v958, %v954
      %v963 = vpack.c.b16 %v959, %v955
      %v964 = vpack.c.b16 %v960, %v956
      %v969 = vld [vmem:[%s2] sm:$0xff]
      %v970 = vld [vmem:[%s2 + $0x8] sm:$0xff]
      %v971 = vld [vmem:[%s2 + $0x10] sm:$0xff]
      %v972 = vld [vmem:[%s2 + $0x18] sm:$0xff]
      %973 = vrot.lane.b32.xlu0 %v365, 9
      %v974 = vpop.permute.xlu0 %973
      %975 = vrot.lane.b32.xlu0 %v369, 9
      %v976 = vpop.permute.xlu0 %975
      %977 = vrot.lane.b32.xlu0 %v366, 9
      %v978 = vpop.permute.xlu0 %977
      %979 = vrot.lane.b32.xlu0 %v370, 9
      %v980 = vpop.permute.xlu0 %979
      %981 = vrot.lane.b32.xlu0 %v367, 9
      %v982 = vpop.permute.xlu0 %981
      %983 = vrot.lane.b32.xlu0 %v371, 9
      %v984 = vpop.permute.xlu0 %983
      %985 = vrot.lane.b32.xlu0 %v368, 9
      %v986 = vpop.permute.xlu0 %985
      %987 = vrot.lane.b32.xlu0 %v372, 9
      %v988 = vpop.permute.xlu0 %987
      %vm989 = vcmp.lt.s32.totalorder %v390, 9
      %v990 = vsel %vm989, %v982, %v986
      %v991 = vsel %vm989, %v984, %v988
      %v992 = vsel %vm989, %v978, %v982
      %v993 = vsel %vm989, %v980, %v984
      %v994 = vsel %vm989, %v974, %v978
      %v995 = vsel %vm989, %v976, %v980
      %v996 = vsel %vm989, %v986, %v974
      %v997 = vsel %vm989, %v988, %v976
      %v999 = vperm.slane %v353, 0
      %v1000 = vperm.slane %v353, 1
      %v1001 = vperm.slane %v353, 2
      %v1002 = vperm.slane %v353, 3
      %v1007 = vmul.f32 %v996, %v999
      %v1008 = vmul.f32 %v994, %v1000
      %v1009 = vmul.f32 %v992, %v1001
      %v1010 = vmul.f32 %v990, %v1002
      %v1011 = vmul.f32 %v997, %v999
      %v1012 = vmul.f32 %v995, %v1000
      %v1013 = vmul.f32 %v993, %v1001
      %v1014 = vmul.f32 %v991, %v1002
      %v1015 = vpack.c.bf16 %v1008, %v1007
      %v1016 = vpack.c.bf16 %v1010, %v1009
      %v1017 = vpack.c.bf16 %v1012, %v1011
      %v1018 = vpack.c.bf16 %v1014, %v1013
      %1019 = vrot.lane.b32.xlu0 %v365, 8
      %v1020 = vpop.permute.xlu0 %1019
      %1021 = vrot.lane.b32.xlu0 %v369, 8
      %v1022 = vpop.permute.xlu0 %1021
      %1023 = vrot.lane.b32.xlu0 %v366, 8
      %v1024 = vpop.permute.xlu0 %1023
      %1025 = vrot.lane.b32.xlu0 %v370, 8
      %v1026 = vpop.permute.xlu0 %1025
      %1027 = vrot.lane.b32.xlu0 %v367, 8
      %v1028 = vpop.permute.xlu0 %1027
      %1029 = vrot.lane.b32.xlu0 %v371, 8
      %v1030 = vpop.permute.xlu0 %1029
      %1031 = vrot.lane.b32.xlu0 %v368, 8
      %v1032 = vpop.permute.xlu0 %1031
      %1033 = vrot.lane.b32.xlu0 %v372, 8
      %v1034 = vpop.permute.xlu0 %1033
      %vm1035 = vcmp.lt.s32.totalorder %v390, 8
      %v1036 = vsel %vm1035, %v1028, %v1032
      %v1037 = vsel %vm1035, %v1030, %v1034
      %v1038 = vsel %vm1035, %v1024, %v1028
      %v1039 = vsel %vm1035, %v1026, %v1030
      %v1040 = vsel %vm1035, %v1020, %v1024
      %v1041 = vsel %vm1035, %v1022, %v1026
      %v1042 = vsel %vm1035, %v1032, %v1020
      %v1043 = vsel %vm1035, %v1034, %v1022
      %v1045 = vperm.slane %v336, 0
      %v1046 = vperm.slane %v336, 1
      %v1047 = vperm.slane %v336, 2
      %v1048 = vperm.slane %v336, 3
      %v1053 = vmul.f32 %v1042, %v1045
      %v1054 = vmul.f32 %v1040, %v1046
      %v1055 = vmul.f32 %v1038, %v1047
      %v1056 = vmul.f32 %v1036, %v1048
      %v1057 = vmul.f32 %v1043, %v1045
      %v1058 = vmul.f32 %v1041, %v1046
      %v1059 = vmul.f32 %v1039, %v1047
      %v1060 = vmul.f32 %v1037, %v1048
      %v1061 = vpack.c.bf16 %v1054, %v1053
      %v1062 = vpack.c.bf16 %v1056, %v1055
      %v1063 = vpack.c.bf16 %v1058, %v1057
      %v1064 = vpack.c.bf16 %v1060, %v1059
      %1065 = vrot.lane.b32.xlu0 %v365, 7
      %v1066 = vpop.permute.xlu0 %1065
      %1067 = vrot.lane.b32.xlu0 %v369, 7
      %v1068 = vpop.permute.xlu0 %1067
      %1069 = vrot.lane.b32.xlu0 %v366, 7
      %v1070 = vpop.permute.xlu0 %1069
      %1071 = vrot.lane.b32.xlu0 %v370, 7
      %v1072 = vpop.permute.xlu0 %1071
      %1073 = vrot.lane.b32.xlu0 %v367, 7
      %v1074 = vpop.permute.xlu0 %1073
      %1075 = vrot.lane.b32.xlu0 %v371, 7
      %v1076 = vpop.permute.xlu0 %1075
      %1077 = vrot.lane.b32.xlu0 %v368, 7
      %v1078 = vpop.permute.xlu0 %1077
      %1079 = vrot.lane.b32.xlu0 %v372, 7
      %v1080 = vpop.permute.xlu0 %1079
      %vm1081 = vcmp.lt.s32.totalorder %v390, 7
      %v1082 = vsel %vm1081, %v1074, %v1078
      %v1083 = vsel %vm1081, %v1076, %v1080
      %v1084 = vsel %vm1081, %v1070, %v1074
      %v1085 = vsel %vm1081, %v1072, %v1076
      %v1086 = vsel %vm1081, %v1066, %v1070
      %v1087 = vsel %vm1081, %v1068, %v1072
      %v1088 = vsel %vm1081, %v1078, %v1066
      %v1089 = vsel %vm1081, %v1080, %v1068
      %v1091 = vperm.slane %v354, 0
      %v1092 = vperm.slane %v354, 1
      %v1093 = vperm.slane %v354, 2
      %v1094 = vperm.slane %v354, 3
      %v1099 = vmul.f32 %v1088, %v1091
      %v1100 = vmul.f32 %v1086, %v1092
      %v1101 = vmul.f32 %v1084, %v1093
      %v1102 = vmul.f32 %v1082, %v1094
      %v1103 = vmul.f32 %v1089, %v1091
      %v1104 = vmul.f32 %v1087, %v1092
      %v1105 = vmul.f32 %v1085, %v1093
      %v1106 = vmul.f32 %v1083, %v1094
      %v1107 = vpack.c.bf16 %v1100, %v1099
      %v1108 = vpack.c.bf16 %v1102, %v1101
      %v1109 = vpack.c.bf16 %v1104, %v1103
      %v1110 = vpack.c.bf16 %v1106, %v1105
      %1111 = vrot.lane.b32.xlu0 %v365, 1
      %v1112 = vpop.permute.xlu0 %1111
      %1113 = vrot.lane.b32.xlu0 %v369, 1
      %v1114 = vpop.permute.xlu0 %1113
      %1115 = vrot.lane.b32.xlu0 %v366, 1
      %v1116 = vpop.permute.xlu0 %1115
      %1117 = vrot.lane.b32.xlu0 %v370, 1
      %v1118 = vpop.permute.xlu0 %1117
      %1119 = vrot.lane.b32.xlu0 %v367, 1
      %v1120 = vpop.permute.xlu0 %1119
      %1121 = vrot.lane.b32.xlu0 %v371, 1
      %v1122 = vpop.permute.xlu0 %1121
      %1123 = vrot.lane.b32.xlu0 %v368, 1
      %v1124 = vpop.permute.xlu0 %1123
      %1125 = vrot.lane.b32.xlu0 %v372, 1
      %v1126 = vpop.permute.xlu0 %1125
      %vm1127 = vcmp.lt.s32.totalorder %v390, 1
      %v1128 = vsel %vm1127, %v1120, %v1124
      %v1129 = vsel %vm1127, %v1122, %v1126
      %v1130 = vsel %vm1127, %v1116, %v1120
      %v1131 = vsel %vm1127, %v1118, %v1122
      %v1132 = vsel %vm1127, %v1112, %v1116
      %v1133 = vsel %vm1127, %v1114, %v1118
      %v1134 = vsel %vm1127, %v1124, %v1112
      %v1135 = vsel %vm1127, %v1126, %v1114
      %v1137 = vperm.slane %v338, 0
      %v1138 = vperm.slane %v338, 1
      %v1139 = vperm.slane %v338, 2
      %v1140 = vperm.slane %v338, 3
      %v1145 = vmul.f32 %v1134, %v1137
      %v1146 = vmul.f32 %v1132, %v1138
      %v1147 = vmul.f32 %v1130, %v1139
      %v1148 = vmul.f32 %v1128, %v1140
      %v1149 = vmul.f32 %v1135, %v1137
      %v1150 = vmul.f32 %v1133, %v1138
      %v1151 = vmul.f32 %v1131, %v1139
      %v1152 = vmul.f32 %v1129, %v1140
      %v1153 = vpack.c.bf16 %v1146, %v1145
      %v1154 = vpack.c.bf16 %v1148, %v1147
      %v1155 = vpack.c.bf16 %v1150, %v1149
      %v1156 = vpack.c.bf16 %v1152, %v1151
      %v1157 = vpack.c.bf16 %v366, %v365
      %v1158 = vpack.c.bf16 %v368, %v367
      %v1159 = vpack.c.bf16 %v370, %v369
      %v1160 = vpack.c.bf16 %v372, %v371
      %1161 = vrot.lane.b32.xlu0 %v365, 127
      %v1162 = vpop.permute.xlu0 %1161
      %1163 = vrot.lane.b32.xlu0 %v369, 127
      %v1164 = vpop.permute.xlu0 %1163
      %1165 = vrot.lane.b32.xlu0 %v366, 127
      %v1166 = vpop.permute.xlu0 %1165
      %1167 = vrot.lane.b32.xlu0 %v370, 127
      %v1168 = vpop.permute.xlu0 %1167
      %1169 = vrot.lane.b32.xlu0 %v367, 127
      %v1170 = vpop.permute.xlu0 %1169
      %1171 = vrot.lane.b32.xlu0 %v371, 127
      %v1172 = vpop.permute.xlu0 %1171
      %1173 = vrot.lane.b32.xlu0 %v368, 127
      %v1174 = vpop.permute.xlu0 %1173
      %1175 = vrot.lane.b32.xlu0 %v372, 127
      %v1176 = vpop.permute.xlu0 %1175
      %vm1177 = vcmp.lt.s32.totalorder %v390, 127
      %v1178 = vsel %vm1177, %v1170, %v1174
      %v1179 = vsel %vm1177, %v1172, %v1176
      %v1180 = vsel %vm1177, %v1166, %v1170
      %v1181 = vsel %vm1177, %v1168, %v1172
      %v1182 = vsel %vm1177, %v1162, %v1166
      %v1183 = vsel %vm1177, %v1164, %v1168
      %v1184 = vsel %vm1177, %v1174, %v1162
      %v1185 = vsel %vm1177, %v1176, %v1164
      %v1187 = vperm.slane %v344, 0
      %v1188 = vperm.slane %v344, 1
      %v1189 = vperm.slane %v344, 2
      %v1190 = vperm.slane %v344, 3
      %v1195 = vmul.f32 %v1182, %v1187
      %v1196 = vmul.f32 %v1180, %v1188
      %v1197 = vmul.f32 %v1178, %v1189
      %v1198 = vmul.f32 %v1184, %v1190
      %v1199 = vmul.f32 %v1183, %v1187
      %v1200 = vmul.f32 %v1181, %v1188
      %v1201 = vmul.f32 %v1179, %v1189
      %v1202 = vmul.f32 %v1185, %v1190
      %v1203 = vpack.c.bf16 %v1196, %v1195
      %v1204 = vpack.c.bf16 %v1198, %v1197
      %v1205 = vpack.c.bf16 %v1200, %v1199
      %v1206 = vpack.c.bf16 %v1202, %v1201
      %1207 = vrot.lane.b32.xlu0 %v365, 121
      %v1208 = vpop.permute.xlu0 %1207
      %1209 = vrot.lane.b32.xlu0 %v369, 121
      %v1210 = vpop.permute.xlu0 %1209
      %1211 = vrot.lane.b32.xlu0 %v366, 121
      %v1212 = vpop.permute.xlu0 %1211
      %1213 = vrot.lane.b32.xlu0 %v370, 121
      %v1214 = vpop.permute.xlu0 %1213
      %1215 = vrot.lane.b32.xlu0 %v367, 121
      %v1216 = vpop.permute.xlu0 %1215
      %1217 = vrot.lane.b32.xlu0 %v371, 121
      %v1218 = vpop.permute.xlu0 %1217
      %1219 = vrot.lane.b32.xlu0 %v368, 121
      %v1220 = vpop.permute.xlu0 %1219
      %1221 = vrot.lane.b32.xlu0 %v372, 121
      %v1222 = vpop.permute.xlu0 %1221
      %vm1223 = vcmp.lt.s32.totalorder %v390, 121
      %v1224 = vsel %vm1223, %v1216, %v1220
      %v1225 = vsel %vm1223, %v1218, %v1222
      %v1226 = vsel %vm1223, %v1212, %v1216
      %v1227 = vsel %vm1223, %v1214, %v1218
      %v1228 = vsel %vm1223, %v1208, %v1212
      %v1229 = vsel %vm1223, %v1210, %v1214
      %v1230 = vsel %vm1223, %v1220, %v1208
      %v1231 = vsel %vm1223, %v1222, %v1210
      %v1233 = vperm.slane %v355, 0
      %v1234 = vperm.slane %v355, 1
      %v1235 = vperm.slane %v355, 2
      %v1236 = vperm.slane %v355, 3
      %v1241 = vmul.f32 %v1228, %v1233
      %v1242 = vmul.f32 %v1226, %v1234
      %v1243 = vmul.f32 %v1224, %v1235
      %v1244 = vmul.f32 %v1230, %v1236
      %v1245 = vmul.f32 %v1229, %v1233
      %v1246 = vmul.f32 %v1227, %v1234
      %v1247 = vmul.f32 %v1225, %v1235
      %v1248 = vmul.f32 %v1231, %v1236
      %v1249 = vpack.c.bf16 %v1242, %v1241
      %v1250 = vpack.c.bf16 %v1244, %v1243
      %v1251 = vpack.c.bf16 %v1246, %v1245
      %v1252 = vpack.c.bf16 %v1248, %v1247
      %1253 = vrot.lane.b32.xlu0 %v365, 120
      %v1254 = vpop.permute.xlu0 %1253
      %1255 = vrot.lane.b32.xlu0 %v369, 120
      %v1256 = vpop.permute.xlu0 %1255
      %1257 = vrot.lane.b32.xlu0 %v366, 120
      %v1258 = vpop.permute.xlu0 %1257
      %1259 = vrot.lane.b32.xlu0 %v370, 120
      %v1260 = vpop.permute.xlu0 %1259
      %1261 = vrot.lane.b32.xlu0 %v367, 120
      %v1262 = vpop.permute.xlu0 %1261
      %1263 = vrot.lane.b32.xlu0 %v371, 120
      %v1264 = vpop.permute.xlu0 %1263
      %1265 = vrot.lane.b32.xlu0 %v368, 120
      %v1266 = vpop.permute.xlu0 %1265
      %1267 = vrot.lane.b32.xlu0 %v372, 120
      %v1268 = vpop.permute.xlu0 %1267
      %vm1269 = vcmp.lt.s32.totalorder %v390, 120
      %v1270 = vsel %vm1269, %v1262, %v1266
      %v1271 = vsel %vm1269, %v1264, %v1268
      %v1272 = vsel %vm1269, %v1258, %v1262
      %v1273 = vsel %vm1269, %v1260, %v1264
      %v1274 = vsel %vm1269, %v1254, %v1258
      %v1275 = vsel %vm1269, %v1256, %v1260
      %v1276 = vsel %vm1269, %v1266, %v1254
      %v1277 = vsel %vm1269, %v1268, %v1256
      %v1279 = vperm.slane %v342, 0
      %v1280 = vperm.slane %v342, 1
      %v1281 = vperm.slane %v342, 2
      %v1282 = vperm.slane %v342, 3
      %v1287 = vmul.f32 %v1274, %v1279
      %v1288 = vmul.f32 %v1272, %v1280
      %v1289 = vmul.f32 %v1270, %v1281
      %v1290 = vmul.f32 %v1276, %v1282
      %v1291 = vmul.f32 %v1275, %v1279
      %v1292 = vmul.f32 %v1273, %v1280
      %v1293 = vmul.f32 %v1271, %v1281
      %v1294 = vmul.f32 %v1277, %v1282
      %v1295 = vpack.c.bf16 %v1288, %v1287
      %v1296 = vpack.c.bf16 %v1290, %v1289
      %v1297 = vpack.c.bf16 %v1292, %v1291
      %v1298 = vpack.c.bf16 %v1294, %v1293
      %1299 = vrot.lane.b32.xlu0 %v365, 119
      %v1300 = vpop.permute.xlu0 %1299
      %1301 = vrot.lane.b32.xlu0 %v369, 119
      %v1302 = vpop.permute.xlu0 %1301
      %1303 = vrot.lane.b32.xlu0 %v366, 119
      %v1304 = vpop.permute.xlu0 %1303
      %1305 = vrot.lane.b32.xlu0 %v370, 119
      %v1306 = vpop.permute.xlu0 %1305
      %1307 = vrot.lane.b32.xlu0 %v367, 119
      %v1308 = vpop.permute.xlu0 %1307
      %1309 = vrot.lane.b32.xlu0 %v371, 119
      %v1310 = vpop.permute.xlu0 %1309
      %1311 = vrot.lane.b32.xlu0 %v368, 119
      %v1312 = vpop.permute.xlu0 %1311
      %1313 = vrot.lane.b32.xlu0 %v372, 119
      %v1314 = vpop.permute.xlu0 %1313
      %vm1315 = vcmp.lt.s32.totalorder %v390, 119
      %v1316 = vsel %vm1315, %v1308, %v1312
      %v1317 = vsel %vm1315, %v1310, %v1314
      %v1318 = vsel %vm1315, %v1304, %v1308
      %v1319 = vsel %vm1315, %v1306, %v1310
      %v1320 = vsel %vm1315, %v1300, %v1304
      %v1321 = vsel %vm1315, %v1302, %v1306
      %v1322 = vsel %vm1315, %v1312, %v1300
      %v1323 = vsel %vm1315, %v1314, %v1302
      %v1325 = vperm.slane %v356, 0
      %v1326 = vperm.slane %v356, 1
      %v1327 = vperm.slane %v356, 2
      %v1328 = vperm.slane %v356, 3
      %v1333 = vmul.f32 %v1320, %v1325
      %v1334 = vmul.f32 %v1318, %v1326
      %v1335 = vmul.f32 %v1316, %v1327
      %v1336 = vmul.f32 %v1322, %v1328
      %v1337 = vmul.f32 %v1321, %v1325
      %v1338 = vmul.f32 %v1319, %v1326
      %v1339 = vmul.f32 %v1317, %v1327
      %v1340 = vmul.f32 %v1323, %v1328
      %v1341 = vpack.c.bf16 %v1334, %v1333
      %v1342 = vpack.c.bf16 %v1336, %v1335
      %v1343 = vpack.c.bf16 %v1338, %v1337
      %v1344 = vpack.c.bf16 %v1340, %v1339
      %v1349 = vunpack.c.l.b16 %v1015
      %v1350 = vunpack.c.h.b16 %v1015
      %v1351 = vunpack.c.l.b16 %v1016
      %v1352 = vunpack.c.h.b16 %v1016
      %v1353 = vunpack.c.l.b16 %v1017
      %v1354 = vunpack.c.h.b16 %v1017
      %v1355 = vunpack.c.l.b16 %v1018
      %v1356 = vunpack.c.h.b16 %v1018
      %v1357 = vpack.c.b16 %v1353, %v1349
      %v1358 = vpack.c.b16 %v1354, %v1350
      %v1359 = vpack.c.b16 %v1355, %v1351
      %v1360 = vpack.c.b16 %v1356, %v1352
      %v1369 = vunpack.c.l.b16 %v1061
      %v1370 = vunpack.c.h.b16 %v1061
      %v1371 = vunpack.c.l.b16 %v1062
      %v1372 = vunpack.c.h.b16 %v1062
      %v1373 = vunpack.c.l.b16 %v1063
      %v1374 = vunpack.c.h.b16 %v1063
      %v1375 = vunpack.c.l.b16 %v1064
      %v1376 = vunpack.c.h.b16 %v1064
      %v1377 = vpack.c.b16 %v1373, %v1369
      %v1378 = vpack.c.b16 %v1374, %v1370
      %v1379 = vpack.c.b16 %v1375, %v1371
      %v1380 = vpack.c.b16 %v1376, %v1372
      %v1389 = vunpack.c.l.b16 %v1107
      %v1390 = vunpack.c.h.b16 %v1107
      %v1391 = vunpack.c.l.b16 %v1108
      %v1392 = vunpack.c.h.b16 %v1108
      %v1393 = vunpack.c.l.b16 %v1109
      %v1394 = vunpack.c.h.b16 %v1109
      %v1395 = vunpack.c.l.b16 %v1110
      %v1396 = vunpack.c.h.b16 %v1110
      %v1397 = vpack.c.b16 %v1393, %v1389
      %v1398 = vpack.c.b16 %v1394, %v1390
      %v1399 = vpack.c.b16 %v1395, %v1391
      %v1400 = vpack.c.b16 %v1396, %v1392
      %v1409 = vunpack.c.l.b16 %v1153
      %v1410 = vunpack.c.h.b16 %v1153
      %v1411 = vunpack.c.l.b16 %v1154
      %v1412 = vunpack.c.h.b16 %v1154
      %v1413 = vunpack.c.l.b16 %v1155
      %v1414 = vunpack.c.h.b16 %v1155
      %v1415 = vunpack.c.l.b16 %v1156
      %v1416 = vunpack.c.h.b16 %v1156
      %v1417 = vpack.c.b16 %v1413, %v1409
      %v1418 = vpack.c.b16 %v1414, %v1410
      %v1419 = vpack.c.b16 %v1415, %v1411
      %v1420 = vpack.c.b16 %v1416, %v1412
      %v1429 = vunpack.c.l.b16 %v1157
      %v1430 = vunpack.c.h.b16 %v1157
      %v1431 = vunpack.c.l.b16 %v1158
      %v1432 = vunpack.c.h.b16 %v1158
      %v1433 = vunpack.c.l.b16 %v1159
      %v1434 = vunpack.c.h.b16 %v1159
      %v1435 = vunpack.c.l.b16 %v1160
      %v1436 = vunpack.c.h.b16 %v1160
      %v1437 = vpack.c.b16 %v1433, %v1429
      %v1438 = vpack.c.b16 %v1434, %v1430
      %v1439 = vpack.c.b16 %v1435, %v1431
      %v1440 = vpack.c.b16 %v1436, %v1432
      %v1449 = vunpack.c.l.b16 %v1203
      %v1450 = vunpack.c.h.b16 %v1203
      %v1451 = vunpack.c.l.b16 %v1204
      %v1452 = vunpack.c.h.b16 %v1204
      %v1453 = vunpack.c.l.b16 %v1205
      %v1454 = vunpack.c.h.b16 %v1205
      %v1455 = vunpack.c.l.b16 %v1206
      %v1456 = vunpack.c.h.b16 %v1206
      %v1457 = vpack.c.b16 %v1453, %v1449
      %v1458 = vpack.c.b16 %v1454, %v1450
      %v1459 = vpack.c.b16 %v1455, %v1451
      %v1460 = vpack.c.b16 %v1456, %v1452
      %v1469 = vunpack.c.l.b16 %v1249
      %v1470 = vunpack.c.h.b16 %v1249
      %v1471 = vunpack.c.l.b16 %v1250
      %v1472 = vunpack.c.h.b16 %v1250
      %v1473 = vunpack.c.l.b16 %v1251
      %v1474 = vunpack.c.h.b16 %v1251
      %v1475 = vunpack.c.l.b16 %v1252
      %v1476 = vunpack.c.h.b16 %v1252
      %v1477 = vpack.c.b16 %v1473, %v1469
      %v1478 = vpack.c.b16 %v1474, %v1470
      %v1479 = vpack.c.b16 %v1475, %v1471
      %v1480 = vpack.c.b16 %v1476, %v1472
      %v1489 = vunpack.c.l.b16 %v1295
      %v1490 = vunpack.c.h.b16 %v1295
      %v1491 = vunpack.c.l.b16 %v1296
      %v1492 = vunpack.c.h.b16 %v1296
      %v1493 = vunpack.c.l.b16 %v1297
      %v1494 = vunpack.c.h.b16 %v1297
      %v1495 = vunpack.c.l.b16 %v1298
      %v1496 = vunpack.c.h.b16 %v1298
      %v1497 = vpack.c.b16 %v1493, %v1489
      %v1498 = vpack.c.b16 %v1494, %v1490
      %v1499 = vpack.c.b16 %v1495, %v1491
      %v1500 = vpack.c.b16 %v1496, %v1492
      %v1509 = vunpack.c.l.b16 %v1341
      %v1510 = vunpack.c.h.b16 %v1341
      %v1511 = vunpack.c.l.b16 %v1342
      %v1512 = vunpack.c.h.b16 %v1342
      %v1513 = vunpack.c.l.b16 %v1343
      %v1514 = vunpack.c.h.b16 %v1343
      %v1515 = vunpack.c.l.b16 %v1344
      %v1516 = vunpack.c.h.b16 %v1344
      %v1517 = vpack.c.b16 %v1513, %v1509
      %v1518 = vpack.c.b16 %v1514, %v1510
      %v1519 = vpack.c.b16 %v1515, %v1511
      %v1520 = vpack.c.b16 %v1516, %v1512
      %s1525 = scalar_lea.vmem %s2, 32
      %v1526 = vld [vmem:[%s1525] sm:$0xff]
      %v1527 = vld [vmem:[%s1525 + $0x8] sm:$0xff]
      %v1528 = vld [vmem:[%s1525 + $0x10] sm:$0xff]
      %v1529 = vld [vmem:[%s1525 + $0x18] sm:$0xff]
      %v1534 = vunpack.c.l.b16 %v1526
      %v1535 = vunpack.c.h.b16 %v1526
      %v1536 = vunpack.c.l.b16 %v1527
      %v1537 = vunpack.c.h.b16 %v1527
      %v1538 = vunpack.c.l.b16 %v1528
      %v1539 = vunpack.c.h.b16 %v1528
      %v1540 = vunpack.c.l.b16 %v1529
      %v1541 = vunpack.c.h.b16 %v1529
      %v1542 = vpack.c.b16 %v1536, %v1534
      %v1543 = vpack.c.b16 %v1537, %v1535
      %v1544 = vpack.c.b16 %v1540, %v1538
      %v1545 = vpack.c.b16 %v1541, %v1539
      %vm1548 = vcmask 130048
      %v1550 = vsel %vm1548, %v1543, 0
      %v1553 = vsel %vm1548, %v1545, 0
      %1555 = vmatpush.bf16.msra.mxu0 %v1497
      %1556 = vmatpush.bf16.msra.mxu0 %v1477
      %1557 = vmatpush.bf16.msra.mxu0 %v1457
      %1558 = vmatpush.bf16.msra.mxu0 %v1437
      %1559 = vmatpush.bf16.msra.mxu0 %v1417
      %1560 = vmatpush.bf16.msra.mxu0 %v1397
      %1561 = vmatpush.bf16.msra.mxu0 %v1377
      %1562 = vmatpush.bf16.msra.mxu0 %v1357
      %1563 = vmatmul.bf16.gmra.mxu0 %v1542
      %v1564 = vpop.f32.mrf.mxu0
      %v1565 = vadd.f32 0.0, %v1564
      %v1566 = vpop.f32.mrf.mxu0
      %v1567 = vadd.f32 0.0, %v1566
      %1568 = vmatmul.bf16.gmra.mxu0 %v1544
      %v1569 = vpop.f32.mrf.mxu0
      %v1570 = vadd.f32 0.0, %v1569
      %v1571 = vpop.f32.mrf.mxu0
      %v1572 = vadd.f32 0.0, %v1571
      %1573 = vdwg.mxu0
      %1574 = vmatpush.bf16.msra.mxu0 0
      %1575 = vmatpush.bf16.msra.mxu0 0
      %1576 = vmatpush.bf16.msra.mxu0 0
      %1577 = vmatpush.bf16.msra.mxu0 0
      %1578 = vmatpush.bf16.msra.mxu0 0
      %1579 = vmatpush.bf16.msra.mxu0 0
      %1580 = vmatpush.bf16.msra.mxu0 0
      %1581 = vmatpush.bf16.msra.mxu0 %v1517
      %1582 = vmatmul.bf16.gmra.mxu0 %v1550
      %v1583 = vpop.f32.mrf.mxu0
      %v1584 = vadd.f32 %v1565, %v1583
      %v1585 = vpop.f32.mrf.mxu0
      %v1586 = vadd.f32 %v1567, %v1585
      %1587 = vmatmul.bf16.gmra.mxu0 %v1553
      %v1588 = vpop.f32.mrf.mxu0
      %v1589 = vadd.f32 %v1570, %v1588
      %v1590 = vpop.f32.mrf.mxu0
      %v1591 = vadd.f32 %v1572, %v1590
      %1592 = vdwg.mxu0
      %1593 = vmatpush.bf16.msra.mxu0 %v1498
      %1594 = vmatpush.bf16.msra.mxu0 %v1478
      %1595 = vmatpush.bf16.msra.mxu0 %v1458
      %1596 = vmatpush.bf16.msra.mxu0 %v1438
      %1597 = vmatpush.bf16.msra.mxu0 %v1418
      %1598 = vmatpush.bf16.msra.mxu0 %v1398
      %1599 = vmatpush.bf16.msra.mxu0 %v1378
      %1600 = vmatpush.bf16.msra.mxu0 %v1358
      %1601 = vmatmul.bf16.gmra.mxu0 %v1542
      %v1602 = vpop.f32.mrf.mxu0
      %v1603 = vadd.f32 0.0, %v1602
      %v1604 = vpop.f32.mrf.mxu0
      %v1605 = vadd.f32 0.0, %v1604
      %1606 = vmatmul.bf16.gmra.mxu0 %v1544
      %v1607 = vpop.f32.mrf.mxu0
      %v1608 = vadd.f32 0.0, %v1607
      %v1609 = vpop.f32.mrf.mxu0
      %v1610 = vadd.f32 0.0, %v1609
      %1611 = vdwg.mxu0
      %1612 = vmatpush.bf16.msra.mxu0 0
      %1613 = vmatpush.bf16.msra.mxu0 0
      %1614 = vmatpush.bf16.msra.mxu0 0
      %1615 = vmatpush.bf16.msra.mxu0 0
      %1616 = vmatpush.bf16.msra.mxu0 0
      %1617 = vmatpush.bf16.msra.mxu0 0
      %1618 = vmatpush.bf16.msra.mxu0 0
      %1619 = vmatpush.bf16.msra.mxu0 %v1518
      %1620 = vmatmul.bf16.gmra.mxu0 %v1550
      %v1621 = vpop.f32.mrf.mxu0
      %v1622 = vadd.f32 %v1603, %v1621
      %v1623 = vpop.f32.mrf.mxu0
      %v1624 = vadd.f32 %v1605, %v1623
      %1625 = vmatmul.bf16.gmra.mxu0 %v1553
      %v1626 = vpop.f32.mrf.mxu0
      %v1627 = vadd.f32 %v1608, %v1626
      %v1628 = vpop.f32.mrf.mxu0
      %v1629 = vadd.f32 %v1610, %v1628
      %1630 = vdwg.mxu0
      %1631 = vmatpush.bf16.msra.mxu0 %v1499
      %1632 = vmatpush.bf16.msra.mxu0 %v1479
      %1633 = vmatpush.bf16.msra.mxu0 %v1459
      %1634 = vmatpush.bf16.msra.mxu0 %v1439
      %1635 = vmatpush.bf16.msra.mxu0 %v1419
      %1636 = vmatpush.bf16.msra.mxu0 %v1399
      %1637 = vmatpush.bf16.msra.mxu0 %v1379
      %1638 = vmatpush.bf16.msra.mxu0 %v1359
      %1639 = vmatmul.bf16.gmra.mxu0 %v1542
      %v1640 = vpop.f32.mrf.mxu0
      %v1641 = vadd.f32 0.0, %v1640
      %v1642 = vpop.f32.mrf.mxu0
      %v1643 = vadd.f32 0.0, %v1642
      %1644 = vmatmul.bf16.gmra.mxu0 %v1544
      %v1645 = vpop.f32.mrf.mxu0
      %v1646 = vadd.f32 0.0, %v1645
      %v1647 = vpop.f32.mrf.mxu0
      %v1648 = vadd.f32 0.0, %v1647
      %1649 = vdwg.mxu0
      %1650 = vmatpush.bf16.msra.mxu0 0
      %1651 = vmatpush.bf16.msra.mxu0 0
      %1652 = vmatpush.bf16.msra.mxu0 0
      %1653 = vmatpush.bf16.msra.mxu0 0
      %1654 = vmatpush.bf16.msra.mxu0 0
      %1655 = vmatpush.bf16.msra.mxu0 0
      %1656 = vmatpush.bf16.msra.mxu0 0
      %1657 = vmatpush.bf16.msra.mxu0 %v1519
      %1658 = vmatmul.bf16.gmra.mxu0 %v1550
      %v1659 = vpop.f32.mrf.mxu0
      %v1660 = vadd.f32 %v1641, %v1659
      %v1661 = vpop.f32.mrf.mxu0
      %v1662 = vadd.f32 %v1643, %v1661
      %1663 = vmatmul.bf16.gmra.mxu0 %v1553
      %v1664 = vpop.f32.mrf.mxu0
      %v1665 = vadd.f32 %v1646, %v1664
      %v1666 = vpop.f32.mrf.mxu0
      %v1667 = vadd.f32 %v1648, %v1666
      %1668 = vdwg.mxu0
      %1669 = vmatpush.bf16.msra.mxu0 %v1500
      %1670 = vmatpush.bf16.msra.mxu0 %v1480
      %1671 = vmatpush.bf16.msra.mxu0 %v1460
      %1672 = vmatpush.bf16.msra.mxu0 %v1440
      %1673 = vmatpush.bf16.msra.mxu0 %v1420
      %1674 = vmatpush.bf16.msra.mxu0 %v1400
      %1675 = vmatpush.bf16.msra.mxu0 %v1380
      %1676 = vmatpush.bf16.msra.mxu0 %v1360
      %1677 = vmatmul.bf16.gmra.mxu0 %v1542
      %v1678 = vpop.f32.mrf.mxu0
      %v1679 = vadd.f32 0.0, %v1678
      %v1680 = vpop.f32.mrf.mxu0
      %v1681 = vadd.f32 0.0, %v1680
      %1682 = vmatmul.bf16.gmra.mxu0 %v1544
      %v1683 = vpop.f32.mrf.mxu0
      %v1684 = vadd.f32 0.0, %v1683
      %v1685 = vpop.f32.mrf.mxu0
      %v1686 = vadd.f32 0.0, %v1685
      %1687 = vdwg.mxu0
      %1688 = vmatpush.bf16.msra.mxu0 0
      %1689 = vmatpush.bf16.msra.mxu0 0
      %1690 = vmatpush.bf16.msra.mxu0 0
      %1691 = vmatpush.bf16.msra.mxu0 0
      %1692 = vmatpush.bf16.msra.mxu0 0
      %1693 = vmatpush.bf16.msra.mxu0 0
      %1694 = vmatpush.bf16.msra.mxu0 0
      %1695 = vmatpush.bf16.msra.mxu0 %v1520
      %1696 = vmatmul.bf16.gmra.mxu0 %v1550
      %v1697 = vpop.f32.mrf.mxu0
      %v1698 = vadd.f32 %v1679, %v1697
      %v1699 = vpop.f32.mrf.mxu0
      %v1700 = vadd.f32 %v1681, %v1699
      %1701 = vmatmul.bf16.gmra.mxu0 %v1553
      %v1702 = vpop.f32.mrf.mxu0
      %v1703 = vadd.f32 %v1684, %v1702
      %v1704 = vpop.f32.mrf.mxu0
      %v1705 = vadd.f32 %v1686, %v1704
      %1706 = vdwg.mxu0
      %v1711 = vunpack.c.l.b16 %v969
      %v1712 = vunpack.c.h.b16 %v969
      %v1713 = vunpack.c.l.b16 %v970
      %v1714 = vunpack.c.h.b16 %v970
      %v1715 = vunpack.c.l.b16 %v971
      %v1716 = vunpack.c.h.b16 %v971
      %v1717 = vunpack.c.l.b16 %v972
      %v1718 = vunpack.c.h.b16 %v972
      %v1719 = vpack.c.b16 %v1713, %v1711
      %v1720 = vpack.c.b16 %v1714, %v1712
      %v1721 = vpack.c.b16 %v1717, %v1715
      %v1722 = vpack.c.b16 %v1718, %v1716
      %v1726 = vsel %vm1548, %v1720, 0
      %v1729 = vsel %vm1548, %v1722, 0
      %1731 = vmatpush.bf16.msra.mxu0 %v941
      %1732 = vmatpush.bf16.msra.mxu0 %v921
      %1733 = vmatpush.bf16.msra.mxu0 %v901
      %1734 = vmatpush.bf16.msra.mxu0 %v881
      %1735 = vmatpush.bf16.msra.mxu0 %v861
      %1736 = vmatpush.bf16.msra.mxu0 %v841
      %1737 = vmatpush.bf16.msra.mxu0 %v821
      %1738 = vmatpush.bf16.msra.mxu0 %v801
      %1739 = vmatmul.bf16.gmra.mxu0 %v1719
      %v1740 = vpop.f32.mrf.mxu0
      %v1741 = vadd.f32 %v1584, %v1740
      %v1742 = vpop.f32.mrf.mxu0
      %v1743 = vadd.f32 %v1586, %v1742
      %1744 = vmatmul.bf16.gmra.mxu0 %v1721
      %v1745 = vpop.f32.mrf.mxu0
      %v1746 = vadd.f32 %v1589, %v1745
      %v1747 = vpop.f32.mrf.mxu0
      %v1748 = vadd.f32 %v1591, %v1747
      %1749 = vdwg.mxu0
      %1750 = vmatpush.bf16.msra.mxu0 0
      %1751 = vmatpush.bf16.msra.mxu0 0
      %1752 = vmatpush.bf16.msra.mxu0 0
      %1753 = vmatpush.bf16.msra.mxu0 0
      %1754 = vmatpush.bf16.msra.mxu0 0
      %1755 = vmatpush.bf16.msra.mxu0 0
      %1756 = vmatpush.bf16.msra.mxu0 0
      %1757 = vmatpush.bf16.msra.mxu0 %v961
      %1758 = vmatmul.bf16.gmra.mxu0 %v1726
      %v1759 = vpop.f32.mrf.mxu0
      %v1760 = vadd.f32 %v1741, %v1759
      %v1761 = vpop.f32.mrf.mxu0
      %v1762 = vadd.f32 %v1743, %v1761
      %1763 = vmatmul.bf16.gmra.mxu0 %v1729
      %v1764 = vpop.f32.mrf.mxu0
      %v1765 = vadd.f32 %v1746, %v1764
      %v1766 = vpop.f32.mrf.mxu0
      %v1767 = vadd.f32 %v1748, %v1766
      %1768 = vdwg.mxu0
      %1769 = vmatpush.bf16.msra.mxu0 %v942
      %1770 = vmatpush.bf16.msra.mxu0 %v922
      %1771 = vmatpush.bf16.msra.mxu0 %v902
      %1772 = vmatpush.bf16.msra.mxu0 %v882
      %1773 = vmatpush.bf16.msra.mxu0 %v862
      %1774 = vmatpush.bf16.msra.mxu0 %v842
      %1775 = vmatpush.bf16.msra.mxu0 %v822
      %1776 = vmatpush.bf16.msra.mxu0 %v802
      %1777 = vmatmul.bf16.gmra.mxu0 %v1719
      %v1778 = vpop.f32.mrf.mxu0
      %v1779 = vadd.f32 %v1622, %v1778
      %v1780 = vpop.f32.mrf.mxu0
      %v1781 = vadd.f32 %v1624, %v1780
      %1782 = vmatmul.bf16.gmra.mxu0 %v1721
      %v1783 = vpop.f32.mrf.mxu0
      %v1784 = vadd.f32 %v1627, %v1783
      %v1785 = vpop.f32.mrf.mxu0
      %v1786 = vadd.f32 %v1629, %v1785
      %1787 = vdwg.mxu0
      %1788 = vmatpush.bf16.msra.mxu0 0
      %1789 = vmatpush.bf16.msra.mxu0 0
      %1790 = vmatpush.bf16.msra.mxu0 0
      %1791 = vmatpush.bf16.msra.mxu0 0
      %1792 = vmatpush.bf16.msra.mxu0 0
      %1793 = vmatpush.bf16.msra.mxu0 0
      %1794 = vmatpush.bf16.msra.mxu0 0
      %1795 = vmatpush.bf16.msra.mxu0 %v962
      %1796 = vmatmul.bf16.gmra.mxu0 %v1726
      %v1797 = vpop.f32.mrf.mxu0
      %v1798 = vadd.f32 %v1779, %v1797
      %v1799 = vpop.f32.mrf.mxu0
      %v1800 = vadd.f32 %v1781, %v1799
      %1801 = vmatmul.bf16.gmra.mxu0 %v1729
      %v1802 = vpop.f32.mrf.mxu0
      %v1803 = vadd.f32 %v1784, %v1802
      %v1804 = vpop.f32.mrf.mxu0
      %v1805 = vadd.f32 %v1786, %v1804
      %1806 = vdwg.mxu0
      %1807 = vmatpush.bf16.msra.mxu0 %v943
      %1808 = vmatpush.bf16.msra.mxu0 %v923
      %1809 = vmatpush.bf16.msra.mxu0 %v903
      %1810 = vmatpush.bf16.msra.mxu0 %v883
      %1811 = vmatpush.bf16.msra.mxu0 %v863
      %1812 = vmatpush.bf16.msra.mxu0 %v843
      %1813 = vmatpush.bf16.msra.mxu0 %v823
      %1814 = vmatpush.bf16.msra.mxu0 %v803
      %1815 = vmatmul.bf16.gmra.mxu0 %v1719
      %v1816 = vpop.f32.mrf.mxu0
      %v1817 = vadd.f32 %v1660, %v1816
      %v1818 = vpop.f32.mrf.mxu0
      %v1819 = vadd.f32 %v1662, %v1818
      %1820 = vmatmul.bf16.gmra.mxu0 %v1721
      %v1821 = vpop.f32.mrf.mxu0
      %v1822 = vadd.f32 %v1665, %v1821
      %v1823 = vpop.f32.mrf.mxu0
      %v1824 = vadd.f32 %v1667, %v1823
      %1825 = vdwg.mxu0
      %1826 = vmatpush.bf16.msra.mxu0 0
      %1827 = vmatpush.bf16.msra.mxu0 0
      %1828 = vmatpush.bf16.msra.mxu0 0
      %1829 = vmatpush.bf16.msra.mxu0 0
      %1830 = vmatpush.bf16.msra.mxu0 0
      %1831 = vmatpush.bf16.msra.mxu0 0
      %1832 = vmatpush.bf16.msra.mxu0 0
      %1833 = vmatpush.bf16.msra.mxu0 %v963
      %1834 = vmatmul.bf16.gmra.mxu0 %v1726
      %v1835 = vpop.f32.mrf.mxu0
      %v1836 = vadd.f32 %v1817, %v1835
      %v1837 = vpop.f32.mrf.mxu0
      %v1838 = vadd.f32 %v1819, %v1837
      %1839 = vmatmul.bf16.gmra.mxu0 %v1729
      %v1840 = vpop.f32.mrf.mxu0
      %v1841 = vadd.f32 %v1822, %v1840
      %v1842 = vpop.f32.mrf.mxu0
      %v1843 = vadd.f32 %v1824, %v1842
      %1844 = vdwg.mxu0
      %1845 = vmatpush.bf16.msra.mxu0 %v944
      %1846 = vmatpush.bf16.msra.mxu0 %v924
      %1847 = vmatpush.bf16.msra.mxu0 %v904
      %1848 = vmatpush.bf16.msra.mxu0 %v884
      %1849 = vmatpush.bf16.msra.mxu0 %v864
      %1850 = vmatpush.bf16.msra.mxu0 %v844
      %1851 = vmatpush.bf16.msra.mxu0 %v824
      %1852 = vmatpush.bf16.msra.mxu0 %v804
      %1853 = vmatmul.bf16.gmra.mxu0 %v1719
      %v1854 = vpop.f32.mrf.mxu0
      %v1855 = vadd.f32 %v1698, %v1854
      %v1856 = vpop.f32.mrf.mxu0
      %v1857 = vadd.f32 %v1700, %v1856
      %1858 = vmatmul.bf16.gmra.mxu0 %v1721
      %v1859 = vpop.f32.mrf.mxu0
      %v1860 = vadd.f32 %v1703, %v1859
      %v1861 = vpop.f32.mrf.mxu0
      %v1862 = vadd.f32 %v1705, %v1861
      %1863 = vdwg.mxu0
      %1864 = vmatpush.bf16.msra.mxu0 0
      %1865 = vmatpush.bf16.msra.mxu0 0
      %1866 = vmatpush.bf16.msra.mxu0 0
      %1867 = vmatpush.bf16.msra.mxu0 0
      %1868 = vmatpush.bf16.msra.mxu0 0
      %1869 = vmatpush.bf16.msra.mxu0 0
      %1870 = vmatpush.bf16.msra.mxu0 0
      %1871 = vmatpush.bf16.msra.mxu0 %v964
      %1872 = vmatmul.bf16.gmra.mxu0 %v1726
      %v1873 = vpop.f32.mrf.mxu0
      %v1874 = vadd.f32 %v1855, %v1873
      %v1875 = vpop.f32.mrf.mxu0
      %v1876 = vadd.f32 %v1857, %v1875
      %1877 = vmatmul.bf16.gmra.mxu0 %v1729
      %v1878 = vpop.f32.mrf.mxu0
      %v1879 = vadd.f32 %v1860, %v1878
      %v1880 = vpop.f32.mrf.mxu0
      %v1881 = vadd.f32 %v1862, %v1880
      %1882 = vdwg.mxu0
      %v1884 = vperm.slane %v358, 0
      %v1885 = vperm.slane %v358, 1
      %v1886 = vperm.slane %v358, 2
      %v1887 = vperm.slane %v358, 3
      %v1892 = vmul.f32 %v396, %v1884
      %v1893 = vmul.f32 %v394, %v1885
      %v1894 = vmul.f32 %v392, %v1886
      %v1895 = vmul.f32 %v398, %v1887
      %v1896 = vmul.f32 %v397, %v1884
      %v1897 = vmul.f32 %v395, %v1885
      %v1898 = vmul.f32 %v393, %v1886
      %v1899 = vmul.f32 %v399, %v1887
      %v1900 = vpack.c.bf16 %v1893, %v1892
      %v1901 = vpack.c.bf16 %v1895, %v1894
      %v1902 = vpack.c.bf16 %v1897, %v1896
      %v1903 = vpack.c.bf16 %v1899, %v1898
      %v1905 = vperm.slane %v357, 0
      %v1906 = vperm.slane %v357, 1
      %v1907 = vperm.slane %v357, 2
      %v1908 = vperm.slane %v357, 3
      %v1913 = vmul.f32 %v442, %v1905
      %v1914 = vmul.f32 %v440, %v1906
      %v1915 = vmul.f32 %v438, %v1907
      %v1916 = vmul.f32 %v444, %v1908
      %v1917 = vmul.f32 %v443, %v1905
      %v1918 = vmul.f32 %v441, %v1906
      %v1919 = vmul.f32 %v439, %v1907
      %v1920 = vmul.f32 %v445, %v1908
      %v1921 = vpack.c.bf16 %v1914, %v1913
      %v1922 = vpack.c.bf16 %v1916, %v1915
      %v1923 = vpack.c.bf16 %v1918, %v1917
      %v1924 = vpack.c.bf16 %v1920, %v1919
      %v1926 = vperm.slane %v359, 0
      %v1927 = vperm.slane %v359, 1
      %v1928 = vperm.slane %v359, 2
      %v1929 = vperm.slane %v359, 3
      %v1934 = vmul.f32 %v488, %v1926
      %v1935 = vmul.f32 %v486, %v1927
      %v1936 = vmul.f32 %v484, %v1928
      %v1937 = vmul.f32 %v490, %v1929
      %v1938 = vmul.f32 %v489, %v1926
      %v1939 = vmul.f32 %v487, %v1927
      %v1940 = vmul.f32 %v485, %v1928
      %v1941 = vmul.f32 %v491, %v1929
      %v1942 = vpack.c.bf16 %v1935, %v1934
      %v1943 = vpack.c.bf16 %v1937, %v1936
      %v1944 = vpack.c.bf16 %v1939, %v1938
      %v1945 = vpack.c.bf16 %v1941, %v1940
      %v1947 = vperm.slane %v360, 0
      %v1948 = vperm.slane %v360, 1
      %v1949 = vperm.slane %v360, 2
      %v1950 = vperm.slane %v360, 3
      %v1955 = vmul.f32 %v534, %v1947
      %v1956 = vmul.f32 %v532, %v1948
      %v1957 = vmul.f32 %v530, %v1949
      %v1958 = vmul.f32 %v536, %v1950
      %v1959 = vmul.f32 %v535, %v1947
      %v1960 = vmul.f32 %v533, %v1948
      %v1961 = vmul.f32 %v531, %v1949
      %v1962 = vmul.f32 %v537, %v1950
      %v1963 = vpack.c.bf16 %v1956, %v1955
      %v1964 = vpack.c.bf16 %v1958, %v1957
      %v1965 = vpack.c.bf16 %v1960, %v1959
      %v1966 = vpack.c.bf16 %v1962, %v1961
      %v1968 = vperm.slane %v340, 0
      %v1969 = vperm.slane %v340, 1
      %v1970 = vperm.slane %v340, 2
      %v1971 = vperm.slane %v340, 3
      %v1976 = vmul.f32 %v580, %v1968
      %v1977 = vmul.f32 %v578, %v1969
      %v1978 = vmul.f32 %v576, %v1970
      %v1979 = vmul.f32 %v582, %v1971
      %v1980 = vmul.f32 %v581, %v1968
      %v1981 = vmul.f32 %v579, %v1969
      %v1982 = vmul.f32 %v577, %v1970
      %v1983 = vmul.f32 %v583, %v1971
      %v1984 = vpack.c.bf16 %v1977, %v1976
      %v1985 = vpack.c.bf16 %v1979, %v1978
      %v1986 = vpack.c.bf16 %v1981, %v1980
      %v1987 = vpack.c.bf16 %v1983, %v1982
      %v1989 = vperm.slane %v361, 0
      %v1990 = vperm.slane %v361, 1
      %v1991 = vperm.slane %v361, 2
      %v1992 = vperm.slane %v361, 3
      %v1997 = vmul.f32 %v626, %v1989
      %v1998 = vmul.f32 %v624, %v1990
      %v1999 = vmul.f32 %v622, %v1991
      %v2000 = vmul.f32 %v628, %v1992
      %v2001 = vmul.f32 %v627, %v1989
      %v2002 = vmul.f32 %v625, %v1990
      %v2003 = vmul.f32 %v623, %v1991
      %v2004 = vmul.f32 %v629, %v1992
      %v2005 = vpack.c.bf16 %v1998, %v1997
      %v2006 = vpack.c.bf16 %v2000, %v1999
      %v2007 = vpack.c.bf16 %v2002, %v2001
      %v2008 = vpack.c.bf16 %v2004, %v2003
      %v2010 = vperm.slane %v363, 0
      %v2011 = vperm.slane %v363, 1
      %v2012 = vperm.slane %v363, 2
      %v2013 = vperm.slane %v363, 3
      %v2018 = vmul.f32 %v672, %v2010
      %v2019 = vmul.f32 %v670, %v2011
      %v2020 = vmul.f32 %v668, %v2012
      %v2021 = vmul.f32 %v674, %v2013
      %v2022 = vmul.f32 %v673, %v2010
      %v2023 = vmul.f32 %v671, %v2011
      %v2024 = vmul.f32 %v669, %v2012
      %v2025 = vmul.f32 %v675, %v2013
      %v2026 = vpack.c.bf16 %v2019, %v2018
      %v2027 = vpack.c.bf16 %v2021, %v2020
      %v2028 = vpack.c.bf16 %v2023, %v2022
      %v2029 = vpack.c.bf16 %v2025, %v2024
      %v2031 = vperm.slane %v362, 0
      %v2032 = vperm.slane %v362, 1
      %v2033 = vperm.slane %v362, 2
      %v2034 = vperm.slane %v362, 3
      %v2039 = vmul.f32 %v718, %v2031
      %v2040 = vmul.f32 %v716, %v2032
      %v2041 = vmul.f32 %v714, %v2033
      %v2042 = vmul.f32 %v720, %v2034
      %v2043 = vmul.f32 %v719, %v2031
      %v2044 = vmul.f32 %v717, %v2032
      %v2045 = vmul.f32 %v715, %v2033
      %v2046 = vmul.f32 %v721, %v2034
      %v2047 = vpack.c.bf16 %v2040, %v2039
      %v2048 = vpack.c.bf16 %v2042, %v2041
      %v2049 = vpack.c.bf16 %v2044, %v2043
      %v2050 = vpack.c.bf16 %v2046, %v2045
      %v2052 = vperm.slane %v364, 0
      %v2053 = vperm.slane %v364, 1
      %v2054 = vperm.slane %v364, 2
      %v2055 = vperm.slane %v364, 3
      %v2060 = vmul.f32 %v764, %v2052
      %v2061 = vmul.f32 %v762, %v2053
      %v2062 = vmul.f32 %v760, %v2054
      %v2063 = vmul.f32 %v766, %v2055
      %v2064 = vmul.f32 %v765, %v2052
      %v2065 = vmul.f32 %v763, %v2053
      %v2066 = vmul.f32 %v761, %v2054
      %v2067 = vmul.f32 %v767, %v2055
      %v2068 = vpack.c.bf16 %v2061, %v2060
      %v2069 = vpack.c.bf16 %v2063, %v2062
      %v2070 = vpack.c.bf16 %v2065, %v2064
      %v2071 = vpack.c.bf16 %v2067, %v2066
      %v2076 = vunpack.c.l.b16 %v1900
      %v2077 = vunpack.c.h.b16 %v1900
      %v2078 = vunpack.c.l.b16 %v1901
      %v2079 = vunpack.c.h.b16 %v1901
      %v2080 = vunpack.c.l.b16 %v1902
      %v2081 = vunpack.c.h.b16 %v1902
      %v2082 = vunpack.c.l.b16 %v1903
      %v2083 = vunpack.c.h.b16 %v1903
      %v2084 = vpack.c.b16 %v2080, %v2076
      %v2085 = vpack.c.b16 %v2081, %v2077
      %v2086 = vpack.c.b16 %v2082, %v2078
      %v2087 = vpack.c.b16 %v2083, %v2079
      %v2096 = vunpack.c.l.b16 %v1921
      %v2097 = vunpack.c.h.b16 %v1921
      %v2098 = vunpack.c.l.b16 %v1922
      %v2099 = vunpack.c.h.b16 %v1922
      %v2100 = vunpack.c.l.b16 %v1923
      %v2101 = vunpack.c.h.b16 %v1923
      %v2102 = vunpack.c.l.b16 %v1924
      %v2103 = vunpack.c.h.b16 %v1924
      %v2104 = vpack.c.b16 %v2100, %v2096
      %v2105 = vpack.c.b16 %v2101, %v2097
      %v2106 = vpack.c.b16 %v2102, %v2098
      %v2107 = vpack.c.b16 %v2103, %v2099
      %v2116 = vunpack.c.l.b16 %v1942
      %v2117 = vunpack.c.h.b16 %v1942
      %v2118 = vunpack.c.l.b16 %v1943
      %v2119 = vunpack.c.h.b16 %v1943
      %v2120 = vunpack.c.l.b16 %v1944
      %v2121 = vunpack.c.h.b16 %v1944
      %v2122 = vunpack.c.l.b16 %v1945
      %v2123 = vunpack.c.h.b16 %v1945
      %v2124 = vpack.c.b16 %v2120, %v2116
      %v2125 = vpack.c.b16 %v2121, %v2117
      %v2126 = vpack.c.b16 %v2122, %v2118
      %v2127 = vpack.c.b16 %v2123, %v2119
      %v2136 = vunpack.c.l.b16 %v1963
      %v2137 = vunpack.c.h.b16 %v1963
      %v2138 = vunpack.c.l.b16 %v1964
      %v2139 = vunpack.c.h.b16 %v1964
      %v2140 = vunpack.c.l.b16 %v1965
      %v2141 = vunpack.c.h.b16 %v1965
      %v2142 = vunpack.c.l.b16 %v1966
      %v2143 = vunpack.c.h.b16 %v1966
      %v2144 = vpack.c.b16 %v2140, %v2136
      %v2145 = vpack.c.b16 %v2141, %v2137
      %v2146 = vpack.c.b16 %v2142, %v2138
      %v2147 = vpack.c.b16 %v2143, %v2139
      %v2156 = vunpack.c.l.b16 %v1984
      %v2157 = vunpack.c.h.b16 %v1984
      %v2158 = vunpack.c.l.b16 %v1985
      %v2159 = vunpack.c.h.b16 %v1985
      %v2160 = vunpack.c.l.b16 %v1986
      %v2161 = vunpack.c.h.b16 %v1986
      %v2162 = vunpack.c.l.b16 %v1987
      %v2163 = vunpack.c.h.b16 %v1987
      %v2164 = vpack.c.b16 %v2160, %v2156
      %v2165 = vpack.c.b16 %v2161, %v2157
      %v2166 = vpack.c.b16 %v2162, %v2158
      %v2167 = vpack.c.b16 %v2163, %v2159
      %v2176 = vunpack.c.l.b16 %v2005
      %v2177 = vunpack.c.h.b16 %v2005
      %v2178 = vunpack.c.l.b16 %v2006
      %v2179 = vunpack.c.h.b16 %v2006
      %v2180 = vunpack.c.l.b16 %v2007
      %v2181 = vunpack.c.h.b16 %v2007
      %v2182 = vunpack.c.l.b16 %v2008
      %v2183 = vunpack.c.h.b16 %v2008
      %v2184 = vpack.c.b16 %v2180, %v2176
      %v2185 = vpack.c.b16 %v2181, %v2177
      %v2186 = vpack.c.b16 %v2182, %v2178
      %v2187 = vpack.c.b16 %v2183, %v2179
      %v2196 = vunpack.c.l.b16 %v2026
      %v2197 = vunpack.c.h.b16 %v2026
      %v2198 = vunpack.c.l.b16 %v2027
      %v2199 = vunpack.c.h.b16 %v2027
      %v2200 = vunpack.c.l.b16 %v2028
      %v2201 = vunpack.c.h.b16 %v2028
      %v2202 = vunpack.c.l.b16 %v2029
      %v2203 = vunpack.c.h.b16 %v2029
      %v2204 = vpack.c.b16 %v2200, %v2196
      %v2205 = vpack.c.b16 %v2201, %v2197
      %v2206 = vpack.c.b16 %v2202, %v2198
      %v2207 = vpack.c.b16 %v2203, %v2199
      %v2216 = vunpack.c.l.b16 %v2047
      %v2217 = vunpack.c.h.b16 %v2047
      %v2218 = vunpack.c.l.b16 %v2048
      %v2219 = vunpack.c.h.b16 %v2048
      %v2220 = vunpack.c.l.b16 %v2049
      %v2221 = vunpack.c.h.b16 %v2049
      %v2222 = vunpack.c.l.b16 %v2050
      %v2223 = vunpack.c.h.b16 %v2050
      %v2224 = vpack.c.b16 %v2220, %v2216
      %v2225 = vpack.c.b16 %v2221, %v2217
      %v2226 = vpack.c.b16 %v2222, %v2218
      %v2227 = vpack.c.b16 %v2223, %v2219
      %v2236 = vunpack.c.l.b16 %v2068
      %v2237 = vunpack.c.h.b16 %v2068
      %v2238 = vunpack.c.l.b16 %v2069
      %v2239 = vunpack.c.h.b16 %v2069
      %v2240 = vunpack.c.l.b16 %v2070
      %v2241 = vunpack.c.h.b16 %v2070
      %v2242 = vunpack.c.l.b16 %v2071
      %v2243 = vunpack.c.h.b16 %v2071
      %v2244 = vpack.c.b16 %v2240, %v2236
      %v2245 = vpack.c.b16 %v2241, %v2237
      %v2246 = vpack.c.b16 %v2242, %v2238
      %v2247 = vpack.c.b16 %v2243, %v2239
      %s2252 = scalar_lea.vmem %s2, 64
      %v2253 = vld [vmem:[%s2252] sm:$0xff]
      %v2254 = vld [vmem:[%s2252 + $0x8] sm:$0xff]
      %v2255 = vld [vmem:[%s2252 + $0x10] sm:$0xff]
      %v2256 = vld [vmem:[%s2252 + $0x18] sm:$0xff]
      %v2261 = vunpack.c.l.b16 %v2253
      %v2262 = vunpack.c.h.b16 %v2253
      %v2263 = vunpack.c.l.b16 %v2254
      %v2264 = vunpack.c.h.b16 %v2254
      %v2265 = vunpack.c.l.b16 %v2255
      %v2266 = vunpack.c.h.b16 %v2255
      %v2267 = vunpack.c.l.b16 %v2256
      %v2268 = vunpack.c.h.b16 %v2256
      %v2269 = vpack.c.b16 %v2263, %v2261
      %v2270 = vpack.c.b16 %v2264, %v2262
      %v2271 = vpack.c.b16 %v2267, %v2265
      %v2272 = vpack.c.b16 %v2268, %v2266
      %v2276 = vsel %vm1548, %v2270, 0
      %v2279 = vsel %vm1548, %v2272, 0
      %2281 = vmatpush.bf16.msra.mxu0 %v2224
      %2282 = vmatpush.bf16.msra.mxu0 %v2204
      %2283 = vmatpush.bf16.msra.mxu0 %v2184
      %2284 = vmatpush.bf16.msra.mxu0 %v2164
      %2285 = vmatpush.bf16.msra.mxu0 %v2144
      %2286 = vmatpush.bf16.msra.mxu0 %v2124
      %2287 = vmatpush.bf16.msra.mxu0 %v2104
      %2288 = vmatpush.bf16.msra.mxu0 %v2084
      %2289 = vmatmul.bf16.gmra.mxu0 %v2269
      %v2290 = vpop.f32.mrf.mxu0
      %v2291 = vadd.f32 0.0, %v2290
      %v2292 = vpop.f32.mrf.mxu0
      %v2293 = vadd.f32 0.0, %v2292
      %2294 = vmatmul.bf16.gmra.mxu0 %v2271
      %v2295 = vpop.f32.mrf.mxu0
      %v2296 = vadd.f32 0.0, %v2295
      %v2297 = vpop.f32.mrf.mxu0
      %v2298 = vadd.f32 0.0, %v2297
      %2299 = vdwg.mxu0
      %2300 = vmatpush.bf16.msra.mxu0 0
      %2301 = vmatpush.bf16.msra.mxu0 0
      %2302 = vmatpush.bf16.msra.mxu0 0
      %2303 = vmatpush.bf16.msra.mxu0 0
      %2304 = vmatpush.bf16.msra.mxu0 0
      %2305 = vmatpush.bf16.msra.mxu0 0
      %2306 = vmatpush.bf16.msra.mxu0 0
      %2307 = vmatpush.bf16.msra.mxu0 %v2244
      %2308 = vmatmul.bf16.gmra.mxu0 %v2276
      %v2309 = vpop.f32.mrf.mxu0
      %v2310 = vadd.f32 %v2291, %v2309
      %v2311 = vpop.f32.mrf.mxu0
      %v2312 = vadd.f32 %v2293, %v2311
      %2313 = vmatmul.bf16.gmra.mxu0 %v2279
      %v2314 = vpop.f32.mrf.mxu0
      %v2315 = vadd.f32 %v2296, %v2314
      %v2316 = vpop.f32.mrf.mxu0
      %v2317 = vadd.f32 %v2298, %v2316
      %2318 = vdwg.mxu0
      %2319 = vmatpush.bf16.msra.mxu0 %v2225
      %2320 = vmatpush.bf16.msra.mxu0 %v2205
      %2321 = vmatpush.bf16.msra.mxu0 %v2185
      %2322 = vmatpush.bf16.msra.mxu0 %v2165
      %2323 = vmatpush.bf16.msra.mxu0 %v2145
      %2324 = vmatpush.bf16.msra.mxu0 %v2125
      %2325 = vmatpush.bf16.msra.mxu0 %v2105
      %2326 = vmatpush.bf16.msra.mxu0 %v2085
      %2327 = vmatmul.bf16.gmra.mxu0 %v2269
      %v2328 = vpop.f32.mrf.mxu0
      %v2329 = vadd.f32 0.0, %v2328
      %v2330 = vpop.f32.mrf.mxu0
      %v2331 = vadd.f32 0.0, %v2330
      %2332 = vmatmul.bf16.gmra.mxu0 %v2271
      %v2333 = vpop.f32.mrf.mxu0
      %v2334 = vadd.f32 0.0, %v2333
      %v2335 = vpop.f32.mrf.mxu0
      %v2336 = vadd.f32 0.0, %v2335
      %2337 = vdwg.mxu0
      %2338 = vmatpush.bf16.msra.mxu0 0
      %2339 = vmatpush.bf16.msra.mxu0 0
      %2340 = vmatpush.bf16.msra.mxu0 0
      %2341 = vmatpush.bf16.msra.mxu0 0
      %2342 = vmatpush.bf16.msra.mxu0 0
      %2343 = vmatpush.bf16.msra.mxu0 0
      %2344 = vmatpush.bf16.msra.mxu0 0
      %2345 = vmatpush.bf16.msra.mxu0 %v2245
      %2346 = vmatmul.bf16.gmra.mxu0 %v2276
      %v2347 = vpop.f32.mrf.mxu0
      %v2348 = vadd.f32 %v2329, %v2347
      %v2349 = vpop.f32.mrf.mxu0
      %v2350 = vadd.f32 %v2331, %v2349
      %2351 = vmatmul.bf16.gmra.mxu0 %v2279
      %v2352 = vpop.f32.mrf.mxu0
      %v2353 = vadd.f32 %v2334, %v2352
      %v2354 = vpop.f32.mrf.mxu0
      %v2355 = vadd.f32 %v2336, %v2354
      %2356 = vdwg.mxu0
      %2357 = vmatpush.bf16.msra.mxu0 %v2226
      %2358 = vmatpush.bf16.msra.mxu0 %v2206
      %2359 = vmatpush.bf16.msra.mxu0 %v2186
      %2360 = vmatpush.bf16.msra.mxu0 %v2166
      %2361 = vmatpush.bf16.msra.mxu0 %v2146
      %2362 = vmatpush.bf16.msra.mxu0 %v2126
      %2363 = vmatpush.bf16.msra.mxu0 %v2106
      %2364 = vmatpush.bf16.msra.mxu0 %v2086
      %2365 = vmatmul.bf16.gmra.mxu0 %v2269
      %v2366 = vpop.f32.mrf.mxu0
      %v2367 = vadd.f32 0.0, %v2366
      %v2368 = vpop.f32.mrf.mxu0
      %v2369 = vadd.f32 0.0, %v2368
      %2370 = vmatmul.bf16.gmra.mxu0 %v2271
      %v2371 = vpop.f32.mrf.mxu0
      %v2372 = vadd.f32 0.0, %v2371
      %v2373 = vpop.f32.mrf.mxu0
      %v2374 = vadd.f32 0.0, %v2373
      %2375 = vdwg.mxu0
      %2376 = vmatpush.bf16.msra.mxu0 0
      %2377 = vmatpush.bf16.msra.mxu0 0
      %2378 = vmatpush.bf16.msra.mxu0 0
      %2379 = vmatpush.bf16.msra.mxu0 0
      %2380 = vmatpush.bf16.msra.mxu0 0
      %2381 = vmatpush.bf16.msra.mxu0 0
      %2382 = vmatpush.bf16.msra.mxu0 0
      %2383 = vmatpush.bf16.msra.mxu0 %v2246
      %2384 = vmatmul.bf16.gmra.mxu0 %v2276
      %v2385 = vpop.f32.mrf.mxu0
      %v2386 = vadd.f32 %v2367, %v2385
      %v2387 = vpop.f32.mrf.mxu0
      %v2388 = vadd.f32 %v2369, %v2387
      %2389 = vmatmul.bf16.gmra.mxu0 %v2279
      %v2390 = vpop.f32.mrf.mxu0
      %v2391 = vadd.f32 %v2372, %v2390
      %v2392 = vpop.f32.mrf.mxu0
      %v2393 = vadd.f32 %v2374, %v2392
      %2394 = vdwg.mxu0
      %2395 = vmatpush.bf16.msra.mxu0 %v2227
      %2396 = vmatpush.bf16.msra.mxu0 %v2207
      %2397 = vmatpush.bf16.msra.mxu0 %v2187
      %2398 = vmatpush.bf16.msra.mxu0 %v2167
      %2399 = vmatpush.bf16.msra.mxu0 %v2147
      %2400 = vmatpush.bf16.msra.mxu0 %v2127
      %2401 = vmatpush.bf16.msra.mxu0 %v2107
      %2402 = vmatpush.bf16.msra.mxu0 %v2087
      %2403 = vmatmul.bf16.gmra.mxu0 %v2269
      %v2404 = vpop.f32.mrf.mxu0
      %v2405 = vadd.f32 0.0, %v2404
      %v2406 = vpop.f32.mrf.mxu0
      %v2407 = vadd.f32 0.0, %v2406
      %2408 = vmatmul.bf16.gmra.mxu0 %v2271
      %v2409 = vpop.f32.mrf.mxu0
      %v2410 = vadd.f32 0.0, %v2409
      %v2411 = vpop.f32.mrf.mxu0
      %v2412 = vadd.f32 0.0, %v2411
      %2413 = vdwg.mxu0
      %2414 = vmatpush.bf16.msra.mxu0 0
      %2415 = vmatpush.bf16.msra.mxu0 0
      %2416 = vmatpush.bf16.msra.mxu0 0
      %2417 = vmatpush.bf16.msra.mxu0 0
      %2418 = vmatpush.bf16.msra.mxu0 0
      %2419 = vmatpush.bf16.msra.mxu0 0
      %2420 = vmatpush.bf16.msra.mxu0 0
      %2421 = vmatpush.bf16.msra.mxu0 %v2247
      %2422 = vmatmul.bf16.gmra.mxu0 %v2276
      %v2423 = vpop.f32.mrf.mxu0
      %v2424 = vadd.f32 %v2405, %v2423
      %v2425 = vpop.f32.mrf.mxu0
      %v2426 = vadd.f32 %v2407, %v2425
      %2427 = vmatmul.bf16.gmra.mxu0 %v2279
      %v2428 = vpop.f32.mrf.mxu0
      %v2429 = vadd.f32 %v2410, %v2428
      %v2430 = vpop.f32.mrf.mxu0
      %v2431 = vadd.f32 %v2412, %v2430
      %2432 = vdwg.mxu0
      %v2433 = vadd.f32 %v1760, %v2310
      %v2434 = vadd.f32 %v1798, %v2348
      %v2435 = vadd.f32 %v1836, %v2386
      %v2436 = vadd.f32 %v1874, %v2424
      %v2437 = vadd.f32 %v1762, %v2312
      %v2438 = vadd.f32 %v1800, %v2350
      %v2439 = vadd.f32 %v1838, %v2388
      %v2440 = vadd.f32 %v1876, %v2426
      %v2441 = vadd.f32 %v1765, %v2315
      %v2442 = vadd.f32 %v1803, %v2353
      %v2443 = vadd.f32 %v1841, %v2391
      %v2444 = vadd.f32 %v1879, %v2429
      %v2445 = vadd.f32 %v1767, %v2317
      %v2446 = vadd.f32 %v1805, %v2355
      %v2447 = vadd.f32 %v1843, %v2393
      %v2448 = vadd.f32 %v1881, %v2431
      %v2449 = vld [vmem:[%s3] sm:$0xff]
      %v2450 = vld [vmem:[%s3 + $0x8] sm:$0xff]
      %2452 = vset.pattern.permute.xlu0 0
      %2453 = vperm.xlu0 %2452, %v2449
      %v2454 = vpop.permute.xlu0 %2453
      %2457 = vset.pattern.permute.xlu0 0
      %2458 = vperm.xlu0 %2457, %v2450
      %v2459 = vpop.permute.xlu0 %2458
      %v2461 = vmul.f32 %v2433, %v2454
      %v2462 = vmul.f32 %v2434, %v2454
      %v2463 = vmul.f32 %v2435, %v2454
      %v2464 = vmul.f32 %v2436, %v2454
      %v2465 = vmul.f32 %v2437, %v2459
      %v2466 = vmul.f32 %v2438, %v2459
      %v2467 = vmul.f32 %v2439, %v2459
      %v2468 = vmul.f32 %v2440, %v2459
      %v2469 = vld [vmem:[%s4] sm:$0xff]
      %v2470 = vld [vmem:[%s4 + $0x8] sm:$0xff]
      %2472 = vset.pattern.permute.xlu0 0
      %2473 = vperm.xlu0 %2472, %v2469
      %v2474 = vpop.permute.xlu0 %2473
      %2477 = vset.pattern.permute.xlu0 0
      %2478 = vperm.xlu0 %2477, %v2470
      %v2479 = vpop.permute.xlu0 %2478
      %v2481 = vadd.f32 %v2461, %v2474
      %v2482 = vadd.f32 %v2462, %v2474
      %v2483 = vadd.f32 %v2463, %v2474
      %v2484 = vadd.f32 %v2464, %v2474
      %v2485 = vadd.f32 %v2465, %v2479
      %v2486 = vadd.f32 %v2466, %v2479
      %v2487 = vadd.f32 %v2467, %v2479
      %v2488 = vadd.f32 %v2468, %v2479
      %v2489 = vmax.f32 %v2481, 0.0
      %v2490 = vmax.f32 %v2482, 0.0
      %v2491 = vmax.f32 %v2483, 0.0
      %v2492 = vmax.f32 %v2484, 0.0
      %v2493 = vmax.f32 %v2485, 0.0
      %v2494 = vmax.f32 %v2486, 0.0
      %v2495 = vmax.f32 %v2487, 0.0
      %v2496 = vmax.f32 %v2488, 0.0
      %v2497 = vld [vmem:[%s8] sm:$0xff]
      %v2498 = vld [vmem:[%s8 + $0x8] sm:$0xff]
      %2500 = vset.pattern.permute.xlu0 0
      %2501 = vperm.xlu0 %2500, %v2497
      %v2502 = vpop.permute.xlu0 %2501
      %2505 = vset.pattern.permute.xlu0 0
      %2506 = vperm.xlu0 %2505, %v2498
      %v2507 = vpop.permute.xlu0 %2506
      %v2509 = vadd.f32 %v2441, %v2502
      %v2510 = vadd.f32 %v2442, %v2502
      %v2511 = vadd.f32 %v2443, %v2502
      %v2512 = vadd.f32 %v2444, %v2502
      %v2513 = vadd.f32 %v2445, %v2507
      %v2514 = vadd.f32 %v2446, %v2507
      %v2515 = vadd.f32 %v2447, %v2507
      %v2516 = vadd.f32 %v2448, %v2507
      %2517 = vrot.lane.b32.xlu0 %v2489, 73
      %v2518 = vpop.permute.xlu0 %2517
      %2519 = vrot.lane.b32.xlu0 %v2493, 73
      %v2520 = vpop.permute.xlu0 %2519
      %2521 = vrot.lane.b32.xlu0 %v2490, 73
      %v2522 = vpop.permute.xlu0 %2521
      %2523 = vrot.lane.b32.xlu0 %v2494, 73
      %v2524 = vpop.permute.xlu0 %2523
      %2525 = vrot.lane.b32.xlu0 %v2491, 73
      %v2526 = vpop.permute.xlu0 %2525
      %2527 = vrot.lane.b32.xlu0 %v2495, 73
      %v2528 = vpop.permute.xlu0 %2527
      %2529 = vrot.lane.b32.xlu0 %v2492, 73
      %v2530 = vpop.permute.xlu0 %2529
      %2531 = vrot.lane.b32.xlu0 %v2496, 73
      %v2532 = vpop.permute.xlu0 %2531
      %v2533 = vsel %vm391, %v2526, %v2530
      %v2534 = vsel %vm391, %v2528, %v2532
      %v2535 = vsel %vm391, %v2522, %v2526
      %v2536 = vsel %vm391, %v2524, %v2528
      %v2537 = vsel %vm391, %v2518, %v2522
      %v2538 = vsel %vm391, %v2520, %v2524
      %v2539 = vsel %vm391, %v2530, %v2518
      %v2540 = vsel %vm391, %v2532, %v2520
      %v2541 = vmul.f32 %v2539, %v401
      %v2542 = vmul.f32 %v2537, %v402
      %v2543 = vmul.f32 %v2535, %v403
      %v2544 = vmul.f32 %v2533, %v404
      %v2545 = vmul.f32 %v2540, %v401
      %v2546 = vmul.f32 %v2538, %v402
      %v2547 = vmul.f32 %v2536, %v403
      %v2548 = vmul.f32 %v2534, %v404
      %v2549 = vpack.c.bf16 %v2542, %v2541
      %v2550 = vpack.c.bf16 %v2544, %v2543
      %v2551 = vpack.c.bf16 %v2546, %v2545
      %v2552 = vpack.c.bf16 %v2548, %v2547
      %2553 = vrot.lane.b32.xlu0 %v2489, 72
      %v2554 = vpop.permute.xlu0 %2553
      %2555 = vrot.lane.b32.xlu0 %v2493, 72
      %v2556 = vpop.permute.xlu0 %2555
      %2557 = vrot.lane.b32.xlu0 %v2490, 72
      %v2558 = vpop.permute.xlu0 %2557
      %2559 = vrot.lane.b32.xlu0 %v2494, 72
      %v2560 = vpop.permute.xlu0 %2559
      %2561 = vrot.lane.b32.xlu0 %v2491, 72
      %v2562 = vpop.permute.xlu0 %2561
      %2563 = vrot.lane.b32.xlu0 %v2495, 72
      %v2564 = vpop.permute.xlu0 %2563
      %2565 = vrot.lane.b32.xlu0 %v2492, 72
      %v2566 = vpop.permute.xlu0 %2565
      %2567 = vrot.lane.b32.xlu0 %v2496, 72
      %v2568 = vpop.permute.xlu0 %2567
      %v2569 = vsel %vm437, %v2562, %v2566
      %v2570 = vsel %vm437, %v2564, %v2568
      %v2571 = vsel %vm437, %v2558, %v2562
      %v2572 = vsel %vm437, %v2560, %v2564
      %v2573 = vsel %vm437, %v2554, %v2558
      %v2574 = vsel %vm437, %v2556, %v2560
      %v2575 = vsel %vm437, %v2566, %v2554
      %v2576 = vsel %vm437, %v2568, %v2556
      %v2577 = vmul.f32 %v2575, %v447
      %v2578 = vmul.f32 %v2573, %v448
      %v2579 = vmul.f32 %v2571, %v449
      %v2580 = vmul.f32 %v2569, %v450
      %v2581 = vmul.f32 %v2576, %v447
      %v2582 = vmul.f32 %v2574, %v448
      %v2583 = vmul.f32 %v2572, %v449
      %v2584 = vmul.f32 %v2570, %v450
      %v2585 = vpack.c.bf16 %v2578, %v2577
      %v2586 = vpack.c.bf16 %v2580, %v2579
      %v2587 = vpack.c.bf16 %v2582, %v2581
      %v2588 = vpack.c.bf16 %v2584, %v2583
      %2589 = vrot.lane.b32.xlu0 %v2489, 71
      %v2590 = vpop.permute.xlu0 %2589
      %2591 = vrot.lane.b32.xlu0 %v2493, 71
      %v2592 = vpop.permute.xlu0 %2591
      %2593 = vrot.lane.b32.xlu0 %v2490, 71
      %v2594 = vpop.permute.xlu0 %2593
      %2595 = vrot.lane.b32.xlu0 %v2494, 71
      %v2596 = vpop.permute.xlu0 %2595
      %2597 = vrot.lane.b32.xlu0 %v2491, 71
      %v2598 = vpop.permute.xlu0 %2597
      %2599 = vrot.lane.b32.xlu0 %v2495, 71
      %v2600 = vpop.permute.xlu0 %2599
      %2601 = vrot.lane.b32.xlu0 %v2492, 71
      %v2602 = vpop.permute.xlu0 %2601
      %2603 = vrot.lane.b32.xlu0 %v2496, 71
      %v2604 = vpop.permute.xlu0 %2603
      %v2605 = vsel %vm483, %v2598, %v2602
      %v2606 = vsel %vm483, %v2600, %v2604
      %v2607 = vsel %vm483, %v2594, %v2598
      %v2608 = vsel %vm483, %v2596, %v2600
      %v2609 = vsel %vm483, %v2590, %v2594
      %v2610 = vsel %vm483, %v2592, %v2596
      %v2611 = vsel %vm483, %v2602, %v2590
      %v2612 = vsel %vm483, %v2604, %v2592
      %v2613 = vmul.f32 %v2611, %v493
      %v2614 = vmul.f32 %v2609, %v494
      %v2615 = vmul.f32 %v2607, %v495
      %v2616 = vmul.f32 %v2605, %v496
      %v2617 = vmul.f32 %v2612, %v493
      %v2618 = vmul.f32 %v2610, %v494
      %v2619 = vmul.f32 %v2608, %v495
      %v2620 = vmul.f32 %v2606, %v496
      %v2621 = vpack.c.bf16 %v2614, %v2613
      %v2622 = vpack.c.bf16 %v2616, %v2615
      %v2623 = vpack.c.bf16 %v2618, %v2617
      %v2624 = vpack.c.bf16 %v2620, %v2619
      %2625 = vrot.lane.b32.xlu0 %v2489, 65
      %v2626 = vpop.permute.xlu0 %2625
      %2627 = vrot.lane.b32.xlu0 %v2493, 65
      %v2628 = vpop.permute.xlu0 %2627
      %2629 = vrot.lane.b32.xlu0 %v2490, 65
      %v2630 = vpop.permute.xlu0 %2629
      %2631 = vrot.lane.b32.xlu0 %v2494, 65
      %v2632 = vpop.permute.xlu0 %2631
      %2633 = vrot.lane.b32.xlu0 %v2491, 65
      %v2634 = vpop.permute.xlu0 %2633
      %2635 = vrot.lane.b32.xlu0 %v2495, 65
      %v2636 = vpop.permute.xlu0 %2635
      %2637 = vrot.lane.b32.xlu0 %v2492, 65
      %v2638 = vpop.permute.xlu0 %2637
      %2639 = vrot.lane.b32.xlu0 %v2496, 65
      %v2640 = vpop.permute.xlu0 %2639
      %v2641 = vsel %vm529, %v2634, %v2638
      %v2642 = vsel %vm529, %v2636, %v2640
      %v2643 = vsel %vm529, %v2630, %v2634
      %v2644 = vsel %vm529, %v2632, %v2636
      %v2645 = vsel %vm529, %v2626, %v2630
      %v2646 = vsel %vm529, %v2628, %v2632
      %v2647 = vsel %vm529, %v2638, %v2626
      %v2648 = vsel %vm529, %v2640, %v2628
      %v2649 = vmul.f32 %v2647, %v539
      %v2650 = vmul.f32 %v2645, %v540
      %v2651 = vmul.f32 %v2643, %v541
      %v2652 = vmul.f32 %v2641, %v542
      %v2653 = vmul.f32 %v2648, %v539
      %v2654 = vmul.f32 %v2646, %v540
      %v2655 = vmul.f32 %v2644, %v541
      %v2656 = vmul.f32 %v2642, %v542
      %v2657 = vpack.c.bf16 %v2650, %v2649
      %v2658 = vpack.c.bf16 %v2652, %v2651
      %v2659 = vpack.c.bf16 %v2654, %v2653
      %v2660 = vpack.c.bf16 %v2656, %v2655
      %2661 = vrot.lane.b32.xlu0 %v2489, 64
      %v2662 = vpop.permute.xlu0 %2661
      %2663 = vrot.lane.b32.xlu0 %v2493, 64
      %v2664 = vpop.permute.xlu0 %2663
      %2665 = vrot.lane.b32.xlu0 %v2490, 64
      %v2666 = vpop.permute.xlu0 %2665
      %2667 = vrot.lane.b32.xlu0 %v2494, 64
      %v2668 = vpop.permute.xlu0 %2667
      %2669 = vrot.lane.b32.xlu0 %v2491, 64
      %v2670 = vpop.permute.xlu0 %2669
      %2671 = vrot.lane.b32.xlu0 %v2495, 64
      %v2672 = vpop.permute.xlu0 %2671
      %2673 = vrot.lane.b32.xlu0 %v2492, 64
      %v2674 = vpop.permute.xlu0 %2673
      %2675 = vrot.lane.b32.xlu0 %v2496, 64
      %v2676 = vpop.permute.xlu0 %2675
      %v2677 = vsel %vm575, %v2670, %v2674
      %v2678 = vsel %vm575, %v2672, %v2676
      %v2679 = vsel %vm575, %v2666, %v2670
      %v2680 = vsel %vm575, %v2668, %v2672
      %v2681 = vsel %vm575, %v2662, %v2666
      %v2682 = vsel %vm575, %v2664, %v2668
      %v2683 = vsel %vm575, %v2674, %v2662
      %v2684 = vsel %vm575, %v2676, %v2664
      %v2685 = vmul.f32 %v2683, %v585
      %v2686 = vmul.f32 %v2681, %v586
      %v2687 = vmul.f32 %v2679, %v587
      %v2688 = vmul.f32 %v2677, %v588
      %v2689 = vmul.f32 %v2684, %v585
      %v2690 = vmul.f32 %v2682, %v586
      %v2691 = vmul.f32 %v2680, %v587
      %v2692 = vmul.f32 %v2678, %v588
      %v2693 = vpack.c.bf16 %v2686, %v2685
      %v2694 = vpack.c.bf16 %v2688, %v2687
      %v2695 = vpack.c.bf16 %v2690, %v2689
      %v2696 = vpack.c.bf16 %v2692, %v2691
      %2697 = vrot.lane.b32.xlu0 %v2489, 63
      %v2698 = vpop.permute.xlu0 %2697
      %2699 = vrot.lane.b32.xlu0 %v2493, 63
      %v2700 = vpop.permute.xlu0 %2699
      %2701 = vrot.lane.b32.xlu0 %v2490, 63
      %v2702 = vpop.permute.xlu0 %2701
      %2703 = vrot.lane.b32.xlu0 %v2494, 63
      %v2704 = vpop.permute.xlu0 %2703
      %2705 = vrot.lane.b32.xlu0 %v2491, 63
      %v2706 = vpop.permute.xlu0 %2705
      %2707 = vrot.lane.b32.xlu0 %v2495, 63
      %v2708 = vpop.permute.xlu0 %2707
      %2709 = vrot.lane.b32.xlu0 %v2492, 63
      %v2710 = vpop.permute.xlu0 %2709
      %2711 = vrot.lane.b32.xlu0 %v2496, 63
      %v2712 = vpop.permute.xlu0 %2711
      %v2713 = vsel %vm621, %v2706, %v2710
      %v2714 = vsel %vm621, %v2708, %v2712
      %v2715 = vsel %vm621, %v2702, %v2706
      %v2716 = vsel %vm621, %v2704, %v2708
      %v2717 = vsel %vm621, %v2698, %v2702
      %v2718 = vsel %vm621, %v2700, %v2704
      %v2719 = vsel %vm621, %v2710, %v2698
      %v2720 = vsel %vm621, %v2712, %v2700
      %v2721 = vmul.f32 %v2719, %v631
      %v2722 = vmul.f32 %v2717, %v632
      %v2723 = vmul.f32 %v2715, %v633
      %v2724 = vmul.f32 %v2713, %v634
      %v2725 = vmul.f32 %v2720, %v631
      %v2726 = vmul.f32 %v2718, %v632
      %v2727 = vmul.f32 %v2716, %v633
      %v2728 = vmul.f32 %v2714, %v634
      %v2729 = vpack.c.bf16 %v2722, %v2721
      %v2730 = vpack.c.bf16 %v2724, %v2723
      %v2731 = vpack.c.bf16 %v2726, %v2725
      %v2732 = vpack.c.bf16 %v2728, %v2727
      %2733 = vrot.lane.b32.xlu0 %v2489, 57
      %v2734 = vpop.permute.xlu0 %2733
      %2735 = vrot.lane.b32.xlu0 %v2493, 57
      %v2736 = vpop.permute.xlu0 %2735
      %2737 = vrot.lane.b32.xlu0 %v2490, 57
      %v2738 = vpop.permute.xlu0 %2737
      %2739 = vrot.lane.b32.xlu0 %v2494, 57
      %v2740 = vpop.permute.xlu0 %2739
      %2741 = vrot.lane.b32.xlu0 %v2491, 57
      %v2742 = vpop.permute.xlu0 %2741
      %2743 = vrot.lane.b32.xlu0 %v2495, 57
      %v2744 = vpop.permute.xlu0 %2743
      %2745 = vrot.lane.b32.xlu0 %v2492, 57
      %v2746 = vpop.permute.xlu0 %2745
      %2747 = vrot.lane.b32.xlu0 %v2496, 57
      %v2748 = vpop.permute.xlu0 %2747
      %v2749 = vsel %vm667, %v2742, %v2746
      %v2750 = vsel %vm667, %v2744, %v2748
      %v2751 = vsel %vm667, %v2738, %v2742
      %v2752 = vsel %vm667, %v2740, %v2744
      %v2753 = vsel %vm667, %v2734, %v2738
      %v2754 = vsel %vm667, %v2736, %v2740
      %v2755 = vsel %vm667, %v2746, %v2734
      %v2756 = vsel %vm667, %v2748, %v2736
      %v2757 = vmul.f32 %v2755, %v677
      %v2758 = vmul.f32 %v2753, %v678
      %v2759 = vmul.f32 %v2751, %v679
      %v2760 = vmul.f32 %v2749, %v680
      %v2761 = vmul.f32 %v2756, %v677
      %v2762 = vmul.f32 %v2754, %v678
      %v2763 = vmul.f32 %v2752, %v679
      %v2764 = vmul.f32 %v2750, %v680
      %v2765 = vpack.c.bf16 %v2758, %v2757
      %v2766 = vpack.c.bf16 %v2760, %v2759
      %v2767 = vpack.c.bf16 %v2762, %v2761
      %v2768 = vpack.c.bf16 %v2764, %v2763
      %2769 = vrot.lane.b32.xlu0 %v2489, 56
      %v2770 = vpop.permute.xlu0 %2769
      %2771 = vrot.lane.b32.xlu0 %v2493, 56
      %v2772 = vpop.permute.xlu0 %2771
      %2773 = vrot.lane.b32.xlu0 %v2490, 56
      %v2774 = vpop.permute.xlu0 %2773
      %2775 = vrot.lane.b32.xlu0 %v2494, 56
      %v2776 = vpop.permute.xlu0 %2775
      %2777 = vrot.lane.b32.xlu0 %v2491, 56
      %v2778 = vpop.permute.xlu0 %2777
      %2779 = vrot.lane.b32.xlu0 %v2495, 56
      %v2780 = vpop.permute.xlu0 %2779
      %2781 = vrot.lane.b32.xlu0 %v2492, 56
      %v2782 = vpop.permute.xlu0 %2781
      %2783 = vrot.lane.b32.xlu0 %v2496, 56
      %v2784 = vpop.permute.xlu0 %2783
      %v2785 = vsel %vm713, %v2778, %v2782
      %v2786 = vsel %vm713, %v2780, %v2784
      %v2787 = vsel %vm713, %v2774, %v2778
      %v2788 = vsel %vm713, %v2776, %v2780
      %v2789 = vsel %vm713, %v2770, %v2774
      %v2790 = vsel %vm713, %v2772, %v2776
      %v2791 = vsel %vm713, %v2782, %v2770
      %v2792 = vsel %vm713, %v2784, %v2772
      %v2793 = vmul.f32 %v2791, %v723
      %v2794 = vmul.f32 %v2789, %v724
      %v2795 = vmul.f32 %v2787, %v725
      %v2796 = vmul.f32 %v2785, %v726
      %v2797 = vmul.f32 %v2792, %v723
      %v2798 = vmul.f32 %v2790, %v724
      %v2799 = vmul.f32 %v2788, %v725
      %v2800 = vmul.f32 %v2786, %v726
      %v2801 = vpack.c.bf16 %v2794, %v2793
      %v2802 = vpack.c.bf16 %v2796, %v2795
      %v2803 = vpack.c.bf16 %v2798, %v2797
      %v2804 = vpack.c.bf16 %v2800, %v2799
      %2805 = vrot.lane.b32.xlu0 %v2489, 55
      %v2806 = vpop.permute.xlu0 %2805
      %2807 = vrot.lane.b32.xlu0 %v2493, 55
      %v2808 = vpop.permute.xlu0 %2807
      %2809 = vrot.lane.b32.xlu0 %v2490, 55
      %v2810 = vpop.permute.xlu0 %2809
      %2811 = vrot.lane.b32.xlu0 %v2494, 55
      %v2812 = vpop.permute.xlu0 %2811
      %2813 = vrot.lane.b32.xlu0 %v2491, 55
      %v2814 = vpop.permute.xlu0 %2813
      %2815 = vrot.lane.b32.xlu0 %v2495, 55
      %v2816 = vpop.permute.xlu0 %2815
      %2817 = vrot.lane.b32.xlu0 %v2492, 55
      %v2818 = vpop.permute.xlu0 %2817
      %2819 = vrot.lane.b32.xlu0 %v2496, 55
      %v2820 = vpop.permute.xlu0 %2819
      %v2821 = vsel %vm759, %v2814, %v2818
      %v2822 = vsel %vm759, %v2816, %v2820
      %v2823 = vsel %vm759, %v2810, %v2814
      %v2824 = vsel %vm759, %v2812, %v2816
      %v2825 = vsel %vm759, %v2806, %v2810
      %v2826 = vsel %vm759, %v2808, %v2812
      %v2827 = vsel %vm759, %v2818, %v2806
      %v2828 = vsel %vm759, %v2820, %v2808
      %v2829 = vmul.f32 %v2827, %v769
      %v2830 = vmul.f32 %v2825, %v770
      %v2831 = vmul.f32 %v2823, %v771
      %v2832 = vmul.f32 %v2821, %v772
      %v2833 = vmul.f32 %v2828, %v769
      %v2834 = vmul.f32 %v2826, %v770
      %v2835 = vmul.f32 %v2824, %v771
      %v2836 = vmul.f32 %v2822, %v772
      %v2837 = vpack.c.bf16 %v2830, %v2829
      %v2838 = vpack.c.bf16 %v2832, %v2831
      %v2839 = vpack.c.bf16 %v2834, %v2833
      %v2840 = vpack.c.bf16 %v2836, %v2835
      %v2845 = vunpack.c.l.b16 %v2549
      %v2846 = vunpack.c.h.b16 %v2549
      %v2847 = vunpack.c.l.b16 %v2550
      %v2848 = vunpack.c.h.b16 %v2550
      %v2849 = vunpack.c.l.b16 %v2551
      %v2850 = vunpack.c.h.b16 %v2551
      %v2851 = vunpack.c.l.b16 %v2552
      %v2852 = vunpack.c.h.b16 %v2552
      %v2853 = vpack.c.b16 %v2849, %v2845
      %v2854 = vpack.c.b16 %v2850, %v2846
      %v2855 = vpack.c.b16 %v2851, %v2847
      %v2856 = vpack.c.b16 %v2852, %v2848
      %v2865 = vunpack.c.l.b16 %v2585
      %v2866 = vunpack.c.h.b16 %v2585
      %v2867 = vunpack.c.l.b16 %v2586
      %v2868 = vunpack.c.h.b16 %v2586
      %v2869 = vunpack.c.l.b16 %v2587
      %v2870 = vunpack.c.h.b16 %v2587
      %v2871 = vunpack.c.l.b16 %v2588
      %v2872 = vunpack.c.h.b16 %v2588
      %v2873 = vpack.c.b16 %v2869, %v2865
      %v2874 = vpack.c.b16 %v2870, %v2866
      %v2875 = vpack.c.b16 %v2871, %v2867
      %v2876 = vpack.c.b16 %v2872, %v2868
      %v2885 = vunpack.c.l.b16 %v2621
      %v2886 = vunpack.c.h.b16 %v2621
      %v2887 = vunpack.c.l.b16 %v2622
      %v2888 = vunpack.c.h.b16 %v2622
      %v2889 = vunpack.c.l.b16 %v2623
      %v2890 = vunpack.c.h.b16 %v2623
      %v2891 = vunpack.c.l.b16 %v2624
      %v2892 = vunpack.c.h.b16 %v2624
      %v2893 = vpack.c.b16 %v2889, %v2885
      %v2894 = vpack.c.b16 %v2890, %v2886
      %v2895 = vpack.c.b16 %v2891, %v2887
      %v2896 = vpack.c.b16 %v2892, %v2888
      %v2905 = vunpack.c.l.b16 %v2657
      %v2906 = vunpack.c.h.b16 %v2657
      %v2907 = vunpack.c.l.b16 %v2658
      %v2908 = vunpack.c.h.b16 %v2658
      %v2909 = vunpack.c.l.b16 %v2659
      %v2910 = vunpack.c.h.b16 %v2659
      %v2911 = vunpack.c.l.b16 %v2660
      %v2912 = vunpack.c.h.b16 %v2660
      %v2913 = vpack.c.b16 %v2909, %v2905
      %v2914 = vpack.c.b16 %v2910, %v2906
      %v2915 = vpack.c.b16 %v2911, %v2907
      %v2916 = vpack.c.b16 %v2912, %v2908
      %v2925 = vunpack.c.l.b16 %v2693
      %v2926 = vunpack.c.h.b16 %v2693
      %v2927 = vunpack.c.l.b16 %v2694
      %v2928 = vunpack.c.h.b16 %v2694
      %v2929 = vunpack.c.l.b16 %v2695
      %v2930 = vunpack.c.h.b16 %v2695
      %v2931 = vunpack.c.l.b16 %v2696
      %v2932 = vunpack.c.h.b16 %v2696
      %v2933 = vpack.c.b16 %v2929, %v2925
      %v2934 = vpack.c.b16 %v2930, %v2926
      %v2935 = vpack.c.b16 %v2931, %v2927
      %v2936 = vpack.c.b16 %v2932, %v2928
      %v2945 = vunpack.c.l.b16 %v2729
      %v2946 = vunpack.c.h.b16 %v2729
      %v2947 = vunpack.c.l.b16 %v2730
      %v2948 = vunpack.c.h.b16 %v2730
      %v2949 = vunpack.c.l.b16 %v2731
      %v2950 = vunpack.c.h.b16 %v2731
      %v2951 = vunpack.c.l.b16 %v2732
      %v2952 = vunpack.c.h.b16 %v2732
      %v2953 = vpack.c.b16 %v2949, %v2945
      %v2954 = vpack.c.b16 %v2950, %v2946
      %v2955 = vpack.c.b16 %v2951, %v2947
      %v2956 = vpack.c.b16 %v2952, %v2948
      %v2965 = vunpack.c.l.b16 %v2765
      %v2966 = vunpack.c.h.b16 %v2765
      %v2967 = vunpack.c.l.b16 %v2766
      %v2968 = vunpack.c.h.b16 %v2766
      %v2969 = vunpack.c.l.b16 %v2767
      %v2970 = vunpack.c.h.b16 %v2767
      %v2971 = vunpack.c.l.b16 %v2768
      %v2972 = vunpack.c.h.b16 %v2768
      %v2973 = vpack.c.b16 %v2969, %v2965
      %v2974 = vpack.c.b16 %v2970, %v2966
      %v2975 = vpack.c.b16 %v2971, %v2967
      %v2976 = vpack.c.b16 %v2972, %v2968
      %v2985 = vunpack.c.l.b16 %v2801
      %v2986 = vunpack.c.h.b16 %v2801
      %v2987 = vunpack.c.l.b16 %v2802
      %v2988 = vunpack.c.h.b16 %v2802
      %v2989 = vunpack.c.l.b16 %v2803
      %v2990 = vunpack.c.h.b16 %v2803
      %v2991 = vunpack.c.l.b16 %v2804
      %v2992 = vunpack.c.h.b16 %v2804
      %v2993 = vpack.c.b16 %v2989, %v2985
      %v2994 = vpack.c.b16 %v2990, %v2986
      %v2995 = vpack.c.b16 %v2991, %v2987
      %v2996 = vpack.c.b16 %v2992, %v2988
      %v3005 = vunpack.c.l.b16 %v2837
      %v3006 = vunpack.c.h.b16 %v2837
      %v3007 = vunpack.c.l.b16 %v2838
      %v3008 = vunpack.c.h.b16 %v2838
      %v3009 = vunpack.c.l.b16 %v2839
      %v3010 = vunpack.c.h.b16 %v2839
      %v3011 = vunpack.c.l.b16 %v2840
      %v3012 = vunpack.c.h.b16 %v2840
      %v3013 = vpack.c.b16 %v3009, %v3005
      %v3014 = vpack.c.b16 %v3010, %v3006
      %v3015 = vpack.c.b16 %v3011, %v3007
      %v3016 = vpack.c.b16 %v3012, %v3008
      %v3021 = vld [vmem:[%s5] sm:$0xff]
      %v3022 = vld [vmem:[%s5 + $0x8] sm:$0xff]
      %3023 = vrot.lane.b32.xlu0 %v2489, 9
      %v3024 = vpop.permute.xlu0 %3023
      %3025 = vrot.lane.b32.xlu0 %v2493, 9
      %v3026 = vpop.permute.xlu0 %3025
      %3027 = vrot.lane.b32.xlu0 %v2490, 9
      %v3028 = vpop.permute.xlu0 %3027
      %3029 = vrot.lane.b32.xlu0 %v2494, 9
      %v3030 = vpop.permute.xlu0 %3029
      %3031 = vrot.lane.b32.xlu0 %v2491, 9
      %v3032 = vpop.permute.xlu0 %3031
      %3033 = vrot.lane.b32.xlu0 %v2495, 9
      %v3034 = vpop.permute.xlu0 %3033
      %3035 = vrot.lane.b32.xlu0 %v2492, 9
      %v3036 = vpop.permute.xlu0 %3035
      %3037 = vrot.lane.b32.xlu0 %v2496, 9
      %v3038 = vpop.permute.xlu0 %3037
      %v3039 = vsel %vm989, %v3032, %v3036
      %v3040 = vsel %vm989, %v3034, %v3038
      %v3041 = vsel %vm989, %v3028, %v3032
      %v3042 = vsel %vm989, %v3030, %v3034
      %v3043 = vsel %vm989, %v3024, %v3028
      %v3044 = vsel %vm989, %v3026, %v3030
      %v3045 = vsel %vm989, %v3036, %v3024
      %v3046 = vsel %vm989, %v3038, %v3026
      %v3047 = vmul.f32 %v3045, %v999
      %v3048 = vmul.f32 %v3043, %v1000
      %v3049 = vmul.f32 %v3041, %v1001
      %v3050 = vmul.f32 %v3039, %v1002
      %v3051 = vmul.f32 %v3046, %v999
      %v3052 = vmul.f32 %v3044, %v1000
      %v3053 = vmul.f32 %v3042, %v1001
      %v3054 = vmul.f32 %v3040, %v1002
      %v3055 = vpack.c.bf16 %v3048, %v3047
      %v3056 = vpack.c.bf16 %v3050, %v3049
      %v3057 = vpack.c.bf16 %v3052, %v3051
      %v3058 = vpack.c.bf16 %v3054, %v3053
      %3059 = vrot.lane.b32.xlu0 %v2489, 8
      %v3060 = vpop.permute.xlu0 %3059
      %3061 = vrot.lane.b32.xlu0 %v2493, 8
      %v3062 = vpop.permute.xlu0 %3061
      %3063 = vrot.lane.b32.xlu0 %v2490, 8
      %v3064 = vpop.permute.xlu0 %3063
      %3065 = vrot.lane.b32.xlu0 %v2494, 8
      %v3066 = vpop.permute.xlu0 %3065
      %3067 = vrot.lane.b32.xlu0 %v2491, 8
      %v3068 = vpop.permute.xlu0 %3067
      %3069 = vrot.lane.b32.xlu0 %v2495, 8
      %v3070 = vpop.permute.xlu0 %3069
      %3071 = vrot.lane.b32.xlu0 %v2492, 8
      %v3072 = vpop.permute.xlu0 %3071
      %3073 = vrot.lane.b32.xlu0 %v2496, 8
      %v3074 = vpop.permute.xlu0 %3073
      %v3075 = vsel %vm1035, %v3068, %v3072
      %v3076 = vsel %vm1035, %v3070, %v3074
      %v3077 = vsel %vm1035, %v3064, %v3068
      %v3078 = vsel %vm1035, %v3066, %v3070
      %v3079 = vsel %vm1035, %v3060, %v3064
      %v3080 = vsel %vm1035, %v3062, %v3066
      %v3081 = vsel %vm1035, %v3072, %v3060
      %v3082 = vsel %vm1035, %v3074, %v3062
      %v3083 = vmul.f32 %v3081, %v1045
      %v3084 = vmul.f32 %v3079, %v1046
      %v3085 = vmul.f32 %v3077, %v1047
      %v3086 = vmul.f32 %v3075, %v1048
      %v3087 = vmul.f32 %v3082, %v1045
      %v3088 = vmul.f32 %v3080, %v1046
      %v3089 = vmul.f32 %v3078, %v1047
      %v3090 = vmul.f32 %v3076, %v1048
      %v3091 = vpack.c.bf16 %v3084, %v3083
      %v3092 = vpack.c.bf16 %v3086, %v3085
      %v3093 = vpack.c.bf16 %v3088, %v3087
      %v3094 = vpack.c.bf16 %v3090, %v3089
      %3095 = vrot.lane.b32.xlu0 %v2489, 7
      %v3096 = vpop.permute.xlu0 %3095
      %3097 = vrot.lane.b32.xlu0 %v2493, 7
      %v3098 = vpop.permute.xlu0 %3097
      %3099 = vrot.lane.b32.xlu0 %v2490, 7
      %v3100 = vpop.permute.xlu0 %3099
      %3101 = vrot.lane.b32.xlu0 %v2494, 7
      %v3102 = vpop.permute.xlu0 %3101
      %3103 = vrot.lane.b32.xlu0 %v2491, 7
      %v3104 = vpop.permute.xlu0 %3103
      %3105 = vrot.lane.b32.xlu0 %v2495, 7
      %v3106 = vpop.permute.xlu0 %3105
      %3107 = vrot.lane.b32.xlu0 %v2492, 7
      %v3108 = vpop.permute.xlu0 %3107
      %3109 = vrot.lane.b32.xlu0 %v2496, 7
      %v3110 = vpop.permute.xlu0 %3109
      %v3111 = vsel %vm1081, %v3104, %v3108
      %v3112 = vsel %vm1081, %v3106, %v3110
      %v3113 = vsel %vm1081, %v3100, %v3104
      %v3114 = vsel %vm1081, %v3102, %v3106
      %v3115 = vsel %vm1081, %v3096, %v3100
      %v3116 = vsel %vm1081, %v3098, %v3102
      %v3117 = vsel %vm1081, %v3108, %v3096
      %v3118 = vsel %vm1081, %v3110, %v3098
      %v3119 = vmul.f32 %v3117, %v1091
      %v3120 = vmul.f32 %v3115, %v1092
      %v3121 = vmul.f32 %v3113, %v1093
      %v3122 = vmul.f32 %v3111, %v1094
      %v3123 = vmul.f32 %v3118, %v1091
      %v3124 = vmul.f32 %v3116, %v1092
      %v3125 = vmul.f32 %v3114, %v1093
      %v3126 = vmul.f32 %v3112, %v1094
      %v3127 = vpack.c.bf16 %v3120, %v3119
      %v3128 = vpack.c.bf16 %v3122, %v3121
      %v3129 = vpack.c.bf16 %v3124, %v3123
      %v3130 = vpack.c.bf16 %v3126, %v3125
      %3131 = vrot.lane.b32.xlu0 %v2489, 1
      %v3132 = vpop.permute.xlu0 %3131
      %3133 = vrot.lane.b32.xlu0 %v2493, 1
      %v3134 = vpop.permute.xlu0 %3133
      %3135 = vrot.lane.b32.xlu0 %v2490, 1
      %v3136 = vpop.permute.xlu0 %3135
      %3137 = vrot.lane.b32.xlu0 %v2494, 1
      %v3138 = vpop.permute.xlu0 %3137
      %3139 = vrot.lane.b32.xlu0 %v2491, 1
      %v3140 = vpop.permute.xlu0 %3139
      %3141 = vrot.lane.b32.xlu0 %v2495, 1
      %v3142 = vpop.permute.xlu0 %3141
      %3143 = vrot.lane.b32.xlu0 %v2492, 1
      %v3144 = vpop.permute.xlu0 %3143
      %3145 = vrot.lane.b32.xlu0 %v2496, 1
      %v3146 = vpop.permute.xlu0 %3145
      %v3147 = vsel %vm1127, %v3140, %v3144
      %v3148 = vsel %vm1127, %v3142, %v3146
      %v3149 = vsel %vm1127, %v3136, %v3140
      %v3150 = vsel %vm1127, %v3138, %v3142
      %v3151 = vsel %vm1127, %v3132, %v3136
      %v3152 = vsel %vm1127, %v3134, %v3138
      %v3153 = vsel %vm1127, %v3144, %v3132
      %v3154 = vsel %vm1127, %v3146, %v3134
      %v3155 = vmul.f32 %v3153, %v1137
      %v3156 = vmul.f32 %v3151, %v1138
      %v3157 = vmul.f32 %v3149, %v1139
      %v3158 = vmul.f32 %v3147, %v1140
      %v3159 = vmul.f32 %v3154, %v1137
      %v3160 = vmul.f32 %v3152, %v1138
      %v3161 = vmul.f32 %v3150, %v1139
      %v3162 = vmul.f32 %v3148, %v1140
      %v3163 = vpack.c.bf16 %v3156, %v3155
      %v3164 = vpack.c.bf16 %v3158, %v3157
      %v3165 = vpack.c.bf16 %v3160, %v3159
      %v3166 = vpack.c.bf16 %v3162, %v3161
      %v3167 = vpack.c.bf16 %v2490, %v2489
      %v3168 = vpack.c.bf16 %v2492, %v2491
      %v3169 = vpack.c.bf16 %v2494, %v2493
      %v3170 = vpack.c.bf16 %v2496, %v2495
      %3171 = vrot.lane.b32.xlu0 %v2489, 127
      %v3172 = vpop.permute.xlu0 %3171
      %3173 = vrot.lane.b32.xlu0 %v2493, 127
      %v3174 = vpop.permute.xlu0 %3173
      %3175 = vrot.lane.b32.xlu0 %v2490, 127
      %v3176 = vpop.permute.xlu0 %3175
      %3177 = vrot.lane.b32.xlu0 %v2494, 127
      %v3178 = vpop.permute.xlu0 %3177
      %3179 = vrot.lane.b32.xlu0 %v2491, 127
      %v3180 = vpop.permute.xlu0 %3179
      %3181 = vrot.lane.b32.xlu0 %v2495, 127
      %v3182 = vpop.permute.xlu0 %3181
      %3183 = vrot.lane.b32.xlu0 %v2492, 127
      %v3184 = vpop.permute.xlu0 %3183
      %3185 = vrot.lane.b32.xlu0 %v2496, 127
      %v3186 = vpop.permute.xlu0 %3185
      %v3187 = vsel %vm1177, %v3180, %v3184
      %v3188 = vsel %vm1177, %v3182, %v3186
      %v3189 = vsel %vm1177, %v3176, %v3180
      %v3190 = vsel %vm1177, %v3178, %v3182
      %v3191 = vsel %vm1177, %v3172, %v3176
      %v3192 = vsel %vm1177, %v3174, %v3178
      %v3193 = vsel %vm1177, %v3184, %v3172
      %v3194 = vsel %vm1177, %v3186, %v3174
      %v3195 = vmul.f32 %v3191, %v1187
      %v3196 = vmul.f32 %v3189, %v1188
      %v3197 = vmul.f32 %v3187, %v1189
      %v3198 = vmul.f32 %v3193, %v1190
      %v3199 = vmul.f32 %v3192, %v1187
      %v3200 = vmul.f32 %v3190, %v1188
      %v3201 = vmul.f32 %v3188, %v1189
      %v3202 = vmul.f32 %v3194, %v1190
      %v3203 = vpack.c.bf16 %v3196, %v3195
      %v3204 = vpack.c.bf16 %v3198, %v3197
      %v3205 = vpack.c.bf16 %v3200, %v3199
      %v3206 = vpack.c.bf16 %v3202, %v3201
      %3207 = vrot.lane.b32.xlu0 %v2489, 121
      %v3208 = vpop.permute.xlu0 %3207
      %3209 = vrot.lane.b32.xlu0 %v2493, 121
      %v3210 = vpop.permute.xlu0 %3209
      %3211 = vrot.lane.b32.xlu0 %v2490, 121
      %v3212 = vpop.permute.xlu0 %3211
      %3213 = vrot.lane.b32.xlu0 %v2494, 121
      %v3214 = vpop.permute.xlu0 %3213
      %3215 = vrot.lane.b32.xlu0 %v2491, 121
      %v3216 = vpop.permute.xlu0 %3215
      %3217 = vrot.lane.b32.xlu0 %v2495, 121
      %v3218 = vpop.permute.xlu0 %3217
      %3219 = vrot.lane.b32.xlu0 %v2492, 121
      %v3220 = vpop.permute.xlu0 %3219
      %3221 = vrot.lane.b32.xlu0 %v2496, 121
      %v3222 = vpop.permute.xlu0 %3221
      %v3223 = vsel %vm1223, %v3216, %v3220
      %v3224 = vsel %vm1223, %v3218, %v3222
      %v3225 = vsel %vm1223, %v3212, %v3216
      %v3226 = vsel %vm1223, %v3214, %v3218
      %v3227 = vsel %vm1223, %v3208, %v3212
      %v3228 = vsel %vm1223, %v3210, %v3214
      %v3229 = vsel %vm1223, %v3220, %v3208
      %v3230 = vsel %vm1223, %v3222, %v3210
      %v3231 = vmul.f32 %v3227, %v1233
      %v3232 = vmul.f32 %v3225, %v1234
      %v3233 = vmul.f32 %v3223, %v1235
      %v3234 = vmul.f32 %v3229, %v1236
      %v3235 = vmul.f32 %v3228, %v1233
      %v3236 = vmul.f32 %v3226, %v1234
      %v3237 = vmul.f32 %v3224, %v1235
      %v3238 = vmul.f32 %v3230, %v1236
      %v3239 = vpack.c.bf16 %v3232, %v3231
      %v3240 = vpack.c.bf16 %v3234, %v3233
      %v3241 = vpack.c.bf16 %v3236, %v3235
      %v3242 = vpack.c.bf16 %v3238, %v3237
      %3243 = vrot.lane.b32.xlu0 %v2489, 120
      %v3244 = vpop.permute.xlu0 %3243
      %3245 = vrot.lane.b32.xlu0 %v2493, 120
      %v3246 = vpop.permute.xlu0 %3245
      %3247 = vrot.lane.b32.xlu0 %v2490, 120
      %v3248 = vpop.permute.xlu0 %3247
      %3249 = vrot.lane.b32.xlu0 %v2494, 120
      %v3250 = vpop.permute.xlu0 %3249
      %3251 = vrot.lane.b32.xlu0 %v2491, 120
      %v3252 = vpop.permute.xlu0 %3251
      %3253 = vrot.lane.b32.xlu0 %v2495, 120
      %v3254 = vpop.permute.xlu0 %3253
      %3255 = vrot.lane.b32.xlu0 %v2492, 120
      %v3256 = vpop.permute.xlu0 %3255
      %3257 = vrot.lane.b32.xlu0 %v2496, 120
      %v3258 = vpop.permute.xlu0 %3257
      %v3259 = vsel %vm1269, %v3252, %v3256
      %v3260 = vsel %vm1269, %v3254, %v3258
      %v3261 = vsel %vm1269, %v3248, %v3252
      %v3262 = vsel %vm1269, %v3250, %v3254
      %v3263 = vsel %vm1269, %v3244, %v3248
      %v3264 = vsel %vm1269, %v3246, %v3250
      %v3265 = vsel %vm1269, %v3256, %v3244
      %v3266 = vsel %vm1269, %v3258, %v3246
      %v3267 = vmul.f32 %v3263, %v1279
      %v3268 = vmul.f32 %v3261, %v1280
      %v3269 = vmul.f32 %v3259, %v1281
      %v3270 = vmul.f32 %v3265, %v1282
      %v3271 = vmul.f32 %v3264, %v1279
      %v3272 = vmul.f32 %v3262, %v1280
      %v3273 = vmul.f32 %v3260, %v1281
      %v3274 = vmul.f32 %v3266, %v1282
      %v3275 = vpack.c.bf16 %v3268, %v3267
      %v3276 = vpack.c.bf16 %v3270, %v3269
      %v3277 = vpack.c.bf16 %v3272, %v3271
      %v3278 = vpack.c.bf16 %v3274, %v3273
      %3279 = vrot.lane.b32.xlu0 %v2489, 119
      %v3280 = vpop.permute.xlu0 %3279
      %3281 = vrot.lane.b32.xlu0 %v2493, 119
      %v3282 = vpop.permute.xlu0 %3281
      %3283 = vrot.lane.b32.xlu0 %v2490, 119
      %v3284 = vpop.permute.xlu0 %3283
      %3285 = vrot.lane.b32.xlu0 %v2494, 119
      %v3286 = vpop.permute.xlu0 %3285
      %3287 = vrot.lane.b32.xlu0 %v2491, 119
      %v3288 = vpop.permute.xlu0 %3287
      %3289 = vrot.lane.b32.xlu0 %v2495, 119
      %v3290 = vpop.permute.xlu0 %3289
      %3291 = vrot.lane.b32.xlu0 %v2492, 119
      %v3292 = vpop.permute.xlu0 %3291
      %3293 = vrot.lane.b32.xlu0 %v2496, 119
      %v3294 = vpop.permute.xlu0 %3293
      %v3295 = vsel %vm1315, %v3288, %v3292
      %v3296 = vsel %vm1315, %v3290, %v3294
      %v3297 = vsel %vm1315, %v3284, %v3288
      %v3298 = vsel %vm1315, %v3286, %v3290
      %v3299 = vsel %vm1315, %v3280, %v3284
      %v3300 = vsel %vm1315, %v3282, %v3286
      %v3301 = vsel %vm1315, %v3292, %v3280
      %v3302 = vsel %vm1315, %v3294, %v3282
      %v3303 = vmul.f32 %v3299, %v1325
      %v3304 = vmul.f32 %v3297, %v1326
      %v3305 = vmul.f32 %v3295, %v1327
      %v3306 = vmul.f32 %v3301, %v1328
      %v3307 = vmul.f32 %v3300, %v1325
      %v3308 = vmul.f32 %v3298, %v1326
      %v3309 = vmul.f32 %v3296, %v1327
      %v3310 = vmul.f32 %v3302, %v1328
      %v3311 = vpack.c.bf16 %v3304, %v3303
      %v3312 = vpack.c.bf16 %v3306, %v3305
      %v3313 = vpack.c.bf16 %v3308, %v3307
      %v3314 = vpack.c.bf16 %v3310, %v3309
      %v3319 = vunpack.c.l.b16 %v3055
      %v3320 = vunpack.c.h.b16 %v3055
      %v3321 = vunpack.c.l.b16 %v3056
      %v3322 = vunpack.c.h.b16 %v3056
      %v3323 = vunpack.c.l.b16 %v3057
      %v3324 = vunpack.c.h.b16 %v3057
      %v3325 = vunpack.c.l.b16 %v3058
      %v3326 = vunpack.c.h.b16 %v3058
      %v3327 = vpack.c.b16 %v3323, %v3319
      %v3328 = vpack.c.b16 %v3324, %v3320
      %v3329 = vpack.c.b16 %v3325, %v3321
      %v3330 = vpack.c.b16 %v3326, %v3322
      %v3339 = vunpack.c.l.b16 %v3091
      %v3340 = vunpack.c.h.b16 %v3091
      %v3341 = vunpack.c.l.b16 %v3092
      %v3342 = vunpack.c.h.b16 %v3092
      %v3343 = vunpack.c.l.b16 %v3093
      %v3344 = vunpack.c.h.b16 %v3093
      %v3345 = vunpack.c.l.b16 %v3094
      %v3346 = vunpack.c.h.b16 %v3094
      %v3347 = vpack.c.b16 %v3343, %v3339
      %v3348 = vpack.c.b16 %v3344, %v3340
      %v3349 = vpack.c.b16 %v3345, %v3341
      %v3350 = vpack.c.b16 %v3346, %v3342
      %v3359 = vunpack.c.l.b16 %v3127
      %v3360 = vunpack.c.h.b16 %v3127
      %v3361 = vunpack.c.l.b16 %v3128
      %v3362 = vunpack.c.h.b16 %v3128
      %v3363 = vunpack.c.l.b16 %v3129
      %v3364 = vunpack.c.h.b16 %v3129
      %v3365 = vunpack.c.l.b16 %v3130
      %v3366 = vunpack.c.h.b16 %v3130
      %v3367 = vpack.c.b16 %v3363, %v3359
      %v3368 = vpack.c.b16 %v3364, %v3360
      %v3369 = vpack.c.b16 %v3365, %v3361
      %v3370 = vpack.c.b16 %v3366, %v3362
      %v3379 = vunpack.c.l.b16 %v3163
      %v3380 = vunpack.c.h.b16 %v3163
      %v3381 = vunpack.c.l.b16 %v3164
      %v3382 = vunpack.c.h.b16 %v3164
      %v3383 = vunpack.c.l.b16 %v3165
      %v3384 = vunpack.c.h.b16 %v3165
      %v3385 = vunpack.c.l.b16 %v3166
      %v3386 = vunpack.c.h.b16 %v3166
      %v3387 = vpack.c.b16 %v3383, %v3379
      %v3388 = vpack.c.b16 %v3384, %v3380
      %v3389 = vpack.c.b16 %v3385, %v3381
      %v3390 = vpack.c.b16 %v3386, %v3382
      %v3399 = vunpack.c.l.b16 %v3167
      %v3400 = vunpack.c.h.b16 %v3167
      %v3401 = vunpack.c.l.b16 %v3168
      %v3402 = vunpack.c.h.b16 %v3168
      %v3403 = vunpack.c.l.b16 %v3169
      %v3404 = vunpack.c.h.b16 %v3169
      %v3405 = vunpack.c.l.b16 %v3170
      %v3406 = vunpack.c.h.b16 %v3170
      %v3407 = vpack.c.b16 %v3403, %v3399
      %v3408 = vpack.c.b16 %v3404, %v3400
      %v3409 = vpack.c.b16 %v3405, %v3401
      %v3410 = vpack.c.b16 %v3406, %v3402
      %v3419 = vunpack.c.l.b16 %v3203
      %v3420 = vunpack.c.h.b16 %v3203
      %v3421 = vunpack.c.l.b16 %v3204
      %v3422 = vunpack.c.h.b16 %v3204
      %v3423 = vunpack.c.l.b16 %v3205
      %v3424 = vunpack.c.h.b16 %v3205
      %v3425 = vunpack.c.l.b16 %v3206
      %v3426 = vunpack.c.h.b16 %v3206
      %v3427 = vpack.c.b16 %v3423, %v3419
      %v3428 = vpack.c.b16 %v3424, %v3420
      %v3429 = vpack.c.b16 %v3425, %v3421
      %v3430 = vpack.c.b16 %v3426, %v3422
      %v3439 = vunpack.c.l.b16 %v3239
      %v3440 = vunpack.c.h.b16 %v3239
      %v3441 = vunpack.c.l.b16 %v3240
      %v3442 = vunpack.c.h.b16 %v3240
      %v3443 = vunpack.c.l.b16 %v3241
      %v3444 = vunpack.c.h.b16 %v3241
      %v3445 = vunpack.c.l.b16 %v3242
      %v3446 = vunpack.c.h.b16 %v3242
      %v3447 = vpack.c.b16 %v3443, %v3439
      %v3448 = vpack.c.b16 %v3444, %v3440
      %v3449 = vpack.c.b16 %v3445, %v3441
      %v3450 = vpack.c.b16 %v3446, %v3442
      %v3459 = vunpack.c.l.b16 %v3275
      %v3460 = vunpack.c.h.b16 %v3275
      %v3461 = vunpack.c.l.b16 %v3276
      %v3462 = vunpack.c.h.b16 %v3276
      %v3463 = vunpack.c.l.b16 %v3277
      %v3464 = vunpack.c.h.b16 %v3277
      %v3465 = vunpack.c.l.b16 %v3278
      %v3466 = vunpack.c.h.b16 %v3278
      %v3467 = vpack.c.b16 %v3463, %v3459
      %v3468 = vpack.c.b16 %v3464, %v3460
      %v3469 = vpack.c.b16 %v3465, %v3461
      %v3470 = vpack.c.b16 %v3466, %v3462
      %v3479 = vunpack.c.l.b16 %v3311
      %v3480 = vunpack.c.h.b16 %v3311
      %v3481 = vunpack.c.l.b16 %v3312
      %v3482 = vunpack.c.h.b16 %v3312
      %v3483 = vunpack.c.l.b16 %v3313
      %v3484 = vunpack.c.h.b16 %v3313
      %v3485 = vunpack.c.l.b16 %v3314
      %v3486 = vunpack.c.h.b16 %v3314
      %v3487 = vpack.c.b16 %v3483, %v3479
      %v3488 = vpack.c.b16 %v3484, %v3480
      %v3489 = vpack.c.b16 %v3485, %v3481
      %v3490 = vpack.c.b16 %v3486, %v3482
      %s3495 = scalar_lea.vmem %s5, 16
      %v3496 = vld [vmem:[%s3495] sm:$0xff]
      %v3497 = vld [vmem:[%s3495 + $0x8] sm:$0xff]
      %v3500 = vunpack.c.l.b16 %v3496
      %v3501 = vunpack.c.h.b16 %v3496
      %v3502 = vunpack.c.l.b16 %v3497
      %v3503 = vunpack.c.h.b16 %v3497
      %v3504 = vpack.c.b16 %v3502, %v3500
      %v3505 = vpack.c.b16 %v3503, %v3501
      %v3508 = vsel %vm1548, %v3505, 0
      %3510 = vmatpush.bf16.msra.mxu0 %v3467
      %3511 = vmatpush.bf16.msra.mxu0 %v3447
      %3512 = vmatpush.bf16.msra.mxu0 %v3427
      %3513 = vmatpush.bf16.msra.mxu0 %v3407
      %3514 = vmatpush.bf16.msra.mxu0 %v3387
      %3515 = vmatpush.bf16.msra.mxu0 %v3367
      %3516 = vmatpush.bf16.msra.mxu0 %v3347
      %3517 = vmatpush.bf16.msra.mxu0 %v3327
      %3518 = vmatmul.bf16.gmra.mxu0 %v3504
      %v3519 = vpop.f32.mrf.mxu0
      %v3520 = vadd.f32 0.0, %v3519
      %v3521 = vpop.f32.mrf.mxu0
      %v3522 = vadd.f32 0.0, %v3521
      %3523 = vdwg.mxu0
      %3524 = vmatpush.bf16.msra.mxu0 0
      %3525 = vmatpush.bf16.msra.mxu0 0
      %3526 = vmatpush.bf16.msra.mxu0 0
      %3527 = vmatpush.bf16.msra.mxu0 0
      %3528 = vmatpush.bf16.msra.mxu0 0
      %3529 = vmatpush.bf16.msra.mxu0 0
      %3530 = vmatpush.bf16.msra.mxu0 0
      %3531 = vmatpush.bf16.msra.mxu0 %v3487
      %3532 = vmatmul.bf16.gmra.mxu0 %v3508
      %v3533 = vpop.f32.mrf.mxu0
      %v3534 = vadd.f32 %v3520, %v3533
      %v3535 = vpop.f32.mrf.mxu0
      %v3536 = vadd.f32 %v3522, %v3535
      %3537 = vdwg.mxu0
      %3538 = vmatpush.bf16.msra.mxu0 %v3468
      %3539 = vmatpush.bf16.msra.mxu0 %v3448
      %3540 = vmatpush.bf16.msra.mxu0 %v3428
      %3541 = vmatpush.bf16.msra.mxu0 %v3408
      %3542 = vmatpush.bf16.msra.mxu0 %v3388
      %3543 = vmatpush.bf16.msra.mxu0 %v3368
      %3544 = vmatpush.bf16.msra.mxu0 %v3348
      %3545 = vmatpush.bf16.msra.mxu0 %v3328
      %3546 = vmatmul.bf16.gmra.mxu0 %v3504
      %v3547 = vpop.f32.mrf.mxu0
      %v3548 = vadd.f32 0.0, %v3547
      %v3549 = vpop.f32.mrf.mxu0
      %v3550 = vadd.f32 0.0, %v3549
      %3551 = vdwg.mxu0
      %3552 = vmatpush.bf16.msra.mxu0 0
      %3553 = vmatpush.bf16.msra.mxu0 0
      %3554 = vmatpush.bf16.msra.mxu0 0
      %3555 = vmatpush.bf16.msra.mxu0 0
      %3556 = vmatpush.bf16.msra.mxu0 0
      %3557 = vmatpush.bf16.msra.mxu0 0
      %3558 = vmatpush.bf16.msra.mxu0 0
      %3559 = vmatpush.bf16.msra.mxu0 %v3488
      %3560 = vmatmul.bf16.gmra.mxu0 %v3508
      %v3561 = vpop.f32.mrf.mxu0
      %v3562 = vadd.f32 %v3548, %v3561
      %v3563 = vpop.f32.mrf.mxu0
      %v3564 = vadd.f32 %v3550, %v3563
      %3565 = vdwg.mxu0
      %3566 = vmatpush.bf16.msra.mxu0 %v3469
      %3567 = vmatpush.bf16.msra.mxu0 %v3449
      %3568 = vmatpush.bf16.msra.mxu0 %v3429
      %3569 = vmatpush.bf16.msra.mxu0 %v3409
      %3570 = vmatpush.bf16.msra.mxu0 %v3389
      %3571 = vmatpush.bf16.msra.mxu0 %v3369
      %3572 = vmatpush.bf16.msra.mxu0 %v3349
      %3573 = vmatpush.bf16.msra.mxu0 %v3329
      %3574 = vmatmul.bf16.gmra.mxu0 %v3504
      %v3575 = vpop.f32.mrf.mxu0
      %v3576 = vadd.f32 0.0, %v3575
      %v3577 = vpop.f32.mrf.mxu0
      %v3578 = vadd.f32 0.0, %v3577
      %3579 = vdwg.mxu0
      %3580 = vmatpush.bf16.msra.mxu0 0
      %3581 = vmatpush.bf16.msra.mxu0 0
      %3582 = vmatpush.bf16.msra.mxu0 0
      %3583 = vmatpush.bf16.msra.mxu0 0
      %3584 = vmatpush.bf16.msra.mxu0 0
      %3585 = vmatpush.bf16.msra.mxu0 0
      %3586 = vmatpush.bf16.msra.mxu0 0
      %3587 = vmatpush.bf16.msra.mxu0 %v3489
      %3588 = vmatmul.bf16.gmra.mxu0 %v3508
      %v3589 = vpop.f32.mrf.mxu0
      %v3590 = vadd.f32 %v3576, %v3589
      %v3591 = vpop.f32.mrf.mxu0
      %v3592 = vadd.f32 %v3578, %v3591
      %3593 = vdwg.mxu0
      %3594 = vmatpush.bf16.msra.mxu0 %v3470
      %3595 = vmatpush.bf16.msra.mxu0 %v3450
      %3596 = vmatpush.bf16.msra.mxu0 %v3430
      %3597 = vmatpush.bf16.msra.mxu0 %v3410
      %3598 = vmatpush.bf16.msra.mxu0 %v3390
      %3599 = vmatpush.bf16.msra.mxu0 %v3370
      %3600 = vmatpush.bf16.msra.mxu0 %v3350
      %3601 = vmatpush.bf16.msra.mxu0 %v3330
      %3602 = vmatmul.bf16.gmra.mxu0 %v3504
      %v3603 = vpop.f32.mrf.mxu0
      %v3604 = vadd.f32 0.0, %v3603
      %v3605 = vpop.f32.mrf.mxu0
      %v3606 = vadd.f32 0.0, %v3605
      %3607 = vdwg.mxu0
      %3608 = vmatpush.bf16.msra.mxu0 0
      %3609 = vmatpush.bf16.msra.mxu0 0
      %3610 = vmatpush.bf16.msra.mxu0 0
      %3611 = vmatpush.bf16.msra.mxu0 0
      %3612 = vmatpush.bf16.msra.mxu0 0
      %3613 = vmatpush.bf16.msra.mxu0 0
      %3614 = vmatpush.bf16.msra.mxu0 0
      %3615 = vmatpush.bf16.msra.mxu0 %v3490
      %3616 = vmatmul.bf16.gmra.mxu0 %v3508
      %v3617 = vpop.f32.mrf.mxu0
      %v3618 = vadd.f32 %v3604, %v3617
      %v3619 = vpop.f32.mrf.mxu0
      %v3620 = vadd.f32 %v3606, %v3619
      %3621 = vdwg.mxu0
      %v3624 = vunpack.c.l.b16 %v3021
      %v3625 = vunpack.c.h.b16 %v3021
      %v3626 = vunpack.c.l.b16 %v3022
      %v3627 = vunpack.c.h.b16 %v3022
      %v3628 = vpack.c.b16 %v3626, %v3624
      %v3629 = vpack.c.b16 %v3627, %v3625
      %v3632 = vsel %vm1548, %v3629, 0
      %3634 = vmatpush.bf16.msra.mxu0 %v2993
      %3635 = vmatpush.bf16.msra.mxu0 %v2973
      %3636 = vmatpush.bf16.msra.mxu0 %v2953
      %3637 = vmatpush.bf16.msra.mxu0 %v2933
      %3638 = vmatpush.bf16.msra.mxu0 %v2913
      %3639 = vmatpush.bf16.msra.mxu0 %v2893
      %3640 = vmatpush.bf16.msra.mxu0 %v2873
      %3641 = vmatpush.bf16.msra.mxu0 %v2853
      %3642 = vmatmul.bf16.gmra.mxu0 %v3628
      %v3643 = vpop.f32.mrf.mxu0
      %v3644 = vadd.f32 %v3534, %v3643
      %v3645 = vpop.f32.mrf.mxu0
      %v3646 = vadd.f32 %v3536, %v3645
      %3647 = vdwg.mxu0
      %3648 = vmatpush.bf16.msra.mxu0 0
      %3649 = vmatpush.bf16.msra.mxu0 0
      %3650 = vmatpush.bf16.msra.mxu0 0
      %3651 = vmatpush.bf16.msra.mxu0 0
      %3652 = vmatpush.bf16.msra.mxu0 0
      %3653 = vmatpush.bf16.msra.mxu0 0
      %3654 = vmatpush.bf16.msra.mxu0 0
      %3655 = vmatpush.bf16.msra.mxu0 %v3013
      %3656 = vmatmul.bf16.gmra.mxu0 %v3632
      %v3657 = vpop.f32.mrf.mxu0
      %v3658 = vadd.f32 %v3644, %v3657
      %v3659 = vpop.f32.mrf.mxu0
      %v3660 = vadd.f32 %v3646, %v3659
      %3661 = vdwg.mxu0
      %3662 = vmatpush.bf16.msra.mxu0 %v2994
      %3663 = vmatpush.bf16.msra.mxu0 %v2974
      %3664 = vmatpush.bf16.msra.mxu0 %v2954
      %3665 = vmatpush.bf16.msra.mxu0 %v2934
      %3666 = vmatpush.bf16.msra.mxu0 %v2914
      %3667 = vmatpush.bf16.msra.mxu0 %v2894
      %3668 = vmatpush.bf16.msra.mxu0 %v2874
      %3669 = vmatpush.bf16.msra.mxu0 %v2854
      %3670 = vmatmul.bf16.gmra.mxu0 %v3628
      %v3671 = vpop.f32.mrf.mxu0
      %v3672 = vadd.f32 %v3562, %v3671
      %v3673 = vpop.f32.mrf.mxu0
      %v3674 = vadd.f32 %v3564, %v3673
      %3675 = vdwg.mxu0
      %3676 = vmatpush.bf16.msra.mxu0 0
      %3677 = vmatpush.bf16.msra.mxu0 0
      %3678 = vmatpush.bf16.msra.mxu0 0
      %3679 = vmatpush.bf16.msra.mxu0 0
      %3680 = vmatpush.bf16.msra.mxu0 0
      %3681 = vmatpush.bf16.msra.mxu0 0
      %3682 = vmatpush.bf16.msra.mxu0 0
      %3683 = vmatpush.bf16.msra.mxu0 %v3014
      %3684 = vmatmul.bf16.gmra.mxu0 %v3632
      %v3685 = vpop.f32.mrf.mxu0
      %v3686 = vadd.f32 %v3672, %v3685
      %v3687 = vpop.f32.mrf.mxu0
      %v3688 = vadd.f32 %v3674, %v3687
      %3689 = vdwg.mxu0
      %3690 = vmatpush.bf16.msra.mxu0 %v2995
      %3691 = vmatpush.bf16.msra.mxu0 %v2975
      %3692 = vmatpush.bf16.msra.mxu0 %v2955
      %3693 = vmatpush.bf16.msra.mxu0 %v2935
      %3694 = vmatpush.bf16.msra.mxu0 %v2915
      %3695 = vmatpush.bf16.msra.mxu0 %v2895
      %3696 = vmatpush.bf16.msra.mxu0 %v2875
      %3697 = vmatpush.bf16.msra.mxu0 %v2855
      %3698 = vmatmul.bf16.gmra.mxu0 %v3628
      %v3699 = vpop.f32.mrf.mxu0
      %v3700 = vadd.f32 %v3590, %v3699
      %v3701 = vpop.f32.mrf.mxu0
      %v3702 = vadd.f32 %v3592, %v3701
      %3703 = vdwg.mxu0
      %3704 = vmatpush.bf16.msra.mxu0 0
      %3705 = vmatpush.bf16.msra.mxu0 0
      %3706 = vmatpush.bf16.msra.mxu0 0
      %3707 = vmatpush.bf16.msra.mxu0 0
      %3708 = vmatpush.bf16.msra.mxu0 0
      %3709 = vmatpush.bf16.msra.mxu0 0
      %3710 = vmatpush.bf16.msra.mxu0 0
      %3711 = vmatpush.bf16.msra.mxu0 %v3015
      %3712 = vmatmul.bf16.gmra.mxu0 %v3632
      %v3713 = vpop.f32.mrf.mxu0
      %v3714 = vadd.f32 %v3700, %v3713
      %v3715 = vpop.f32.mrf.mxu0
      %v3716 = vadd.f32 %v3702, %v3715
      %3717 = vdwg.mxu0
      %3718 = vmatpush.bf16.msra.mxu0 %v2996
      %3719 = vmatpush.bf16.msra.mxu0 %v2976
      %3720 = vmatpush.bf16.msra.mxu0 %v2956
      %3721 = vmatpush.bf16.msra.mxu0 %v2936
      %3722 = vmatpush.bf16.msra.mxu0 %v2916
      %3723 = vmatpush.bf16.msra.mxu0 %v2896
      %3724 = vmatpush.bf16.msra.mxu0 %v2876
      %3725 = vmatpush.bf16.msra.mxu0 %v2856
      %3726 = vmatmul.bf16.gmra.mxu0 %v3628
      %v3727 = vpop.f32.mrf.mxu0
      %v3728 = vadd.f32 %v3618, %v3727
      %v3729 = vpop.f32.mrf.mxu0
      %v3730 = vadd.f32 %v3620, %v3729
      %3731 = vdwg.mxu0
      %3732 = vmatpush.bf16.msra.mxu0 0
      %3733 = vmatpush.bf16.msra.mxu0 0
      %3734 = vmatpush.bf16.msra.mxu0 0
      %3735 = vmatpush.bf16.msra.mxu0 0
      %3736 = vmatpush.bf16.msra.mxu0 0
      %3737 = vmatpush.bf16.msra.mxu0 0
      %3738 = vmatpush.bf16.msra.mxu0 0
      %3739 = vmatpush.bf16.msra.mxu0 %v3016
      %3740 = vmatmul.bf16.gmra.mxu0 %v3632
      %v3741 = vpop.f32.mrf.mxu0
      %v3742 = vadd.f32 %v3728, %v3741
      %v3743 = vpop.f32.mrf.mxu0
      %v3744 = vadd.f32 %v3730, %v3743
      %3745 = vdwg.mxu0
      %v3746 = vmul.f32 %v2537, %v1884
      %v3747 = vmul.f32 %v2535, %v1885
      %v3748 = vmul.f32 %v2533, %v1886
      %v3749 = vmul.f32 %v2539, %v1887
      %v3750 = vmul.f32 %v2538, %v1884
      %v3751 = vmul.f32 %v2536, %v1885
      %v3752 = vmul.f32 %v2534, %v1886
      %v3753 = vmul.f32 %v2540, %v1887
      %v3754 = vpack.c.bf16 %v3747, %v3746
      %v3755 = vpack.c.bf16 %v3749, %v3748
      %v3756 = vpack.c.bf16 %v3751, %v3750
      %v3757 = vpack.c.bf16 %v3753, %v3752
      %v3758 = vmul.f32 %v2573, %v1905
      %v3759 = vmul.f32 %v2571, %v1906
      %v3760 = vmul.f32 %v2569, %v1907
      %v3761 = vmul.f32 %v2575, %v1908
      %v3762 = vmul.f32 %v2574, %v1905
      %v3763 = vmul.f32 %v2572, %v1906
      %v3764 = vmul.f32 %v2570, %v1907
      %v3765 = vmul.f32 %v2576, %v1908
      %v3766 = vpack.c.bf16 %v3759, %v3758
      %v3767 = vpack.c.bf16 %v3761, %v3760
      %v3768 = vpack.c.bf16 %v3763, %v3762
      %v3769 = vpack.c.bf16 %v3765, %v3764
      %v3770 = vmul.f32 %v2609, %v1926
      %v3771 = vmul.f32 %v2607, %v1927
      %v3772 = vmul.f32 %v2605, %v1928
      %v3773 = vmul.f32 %v2611, %v1929
      %v3774 = vmul.f32 %v2610, %v1926
      %v3775 = vmul.f32 %v2608, %v1927
      %v3776 = vmul.f32 %v2606, %v1928
      %v3777 = vmul.f32 %v2612, %v1929
      %v3778 = vpack.c.bf16 %v3771, %v3770
      %v3779 = vpack.c.bf16 %v3773, %v3772
      %v3780 = vpack.c.bf16 %v3775, %v3774
      %v3781 = vpack.c.bf16 %v3777, %v3776
      %v3782 = vmul.f32 %v2645, %v1947
      %v3783 = vmul.f32 %v2643, %v1948
      %v3784 = vmul.f32 %v2641, %v1949
      %v3785 = vmul.f32 %v2647, %v1950
      %v3786 = vmul.f32 %v2646, %v1947
      %v3787 = vmul.f32 %v2644, %v1948
      %v3788 = vmul.f32 %v2642, %v1949
      %v3789 = vmul.f32 %v2648, %v1950
      %v3790 = vpack.c.bf16 %v3783, %v3782
      %v3791 = vpack.c.bf16 %v3785, %v3784
      %v3792 = vpack.c.bf16 %v3787, %v3786
      %v3793 = vpack.c.bf16 %v3789, %v3788
      %v3794 = vmul.f32 %v2681, %v1968
      %v3795 = vmul.f32 %v2679, %v1969
      %v3796 = vmul.f32 %v2677, %v1970
      %v3797 = vmul.f32 %v2683, %v1971
      %v3798 = vmul.f32 %v2682, %v1968
      %v3799 = vmul.f32 %v2680, %v1969
      %v3800 = vmul.f32 %v2678, %v1970
      %v3801 = vmul.f32 %v2684, %v1971
      %v3802 = vpack.c.bf16 %v3795, %v3794
      %v3803 = vpack.c.bf16 %v3797, %v3796
      %v3804 = vpack.c.bf16 %v3799, %v3798
      %v3805 = vpack.c.bf16 %v3801, %v3800
      %v3806 = vmul.f32 %v2717, %v1989
      %v3807 = vmul.f32 %v2715, %v1990
      %v3808 = vmul.f32 %v2713, %v1991
      %v3809 = vmul.f32 %v2719, %v1992
      %v3810 = vmul.f32 %v2718, %v1989
      %v3811 = vmul.f32 %v2716, %v1990
      %v3812 = vmul.f32 %v2714, %v1991
      %v3813 = vmul.f32 %v2720, %v1992
      %v3814 = vpack.c.bf16 %v3807, %v3806
      %v3815 = vpack.c.bf16 %v3809, %v3808
      %v3816 = vpack.c.bf16 %v3811, %v3810
      %v3817 = vpack.c.bf16 %v3813, %v3812
      %v3818 = vmul.f32 %v2753, %v2010
      %v3819 = vmul.f32 %v2751, %v2011
      %v3820 = vmul.f32 %v2749, %v2012
      %v3821 = vmul.f32 %v2755, %v2013
      %v3822 = vmul.f32 %v2754, %v2010
      %v3823 = vmul.f32 %v2752, %v2011
      %v3824 = vmul.f32 %v2750, %v2012
      %v3825 = vmul.f32 %v2756, %v2013
      %v3826 = vpack.c.bf16 %v3819, %v3818
      %v3827 = vpack.c.bf16 %v3821, %v3820
      %v3828 = vpack.c.bf16 %v3823, %v3822
      %v3829 = vpack.c.bf16 %v3825, %v3824
      %v3830 = vmul.f32 %v2789, %v2031
      %v3831 = vmul.f32 %v2787, %v2032
      %v3832 = vmul.f32 %v2785, %v2033
      %v3833 = vmul.f32 %v2791, %v2034
      %v3834 = vmul.f32 %v2790, %v2031
      %v3835 = vmul.f32 %v2788, %v2032
      %v3836 = vmul.f32 %v2786, %v2033
      %v3837 = vmul.f32 %v2792, %v2034
      %v3838 = vpack.c.bf16 %v3831, %v3830
      %v3839 = vpack.c.bf16 %v3833, %v3832
      %v3840 = vpack.c.bf16 %v3835, %v3834
      %v3841 = vpack.c.bf16 %v3837, %v3836
      %v3842 = vmul.f32 %v2825, %v2052
      %v3843 = vmul.f32 %v2823, %v2053
      %v3844 = vmul.f32 %v2821, %v2054
      %v3845 = vmul.f32 %v2827, %v2055
      %v3846 = vmul.f32 %v2826, %v2052
      %v3847 = vmul.f32 %v2824, %v2053
      %v3848 = vmul.f32 %v2822, %v2054
      %v3849 = vmul.f32 %v2828, %v2055
      %v3850 = vpack.c.bf16 %v3843, %v3842
      %v3851 = vpack.c.bf16 %v3845, %v3844
      %v3852 = vpack.c.bf16 %v3847, %v3846
      %v3853 = vpack.c.bf16 %v3849, %v3848
      %v3858 = vunpack.c.l.b16 %v3754
      %v3859 = vunpack.c.h.b16 %v3754
      %v3860 = vunpack.c.l.b16 %v3755
      %v3861 = vunpack.c.h.b16 %v3755
      %v3862 = vunpack.c.l.b16 %v3756
      %v3863 = vunpack.c.h.b16 %v3756
      %v3864 = vunpack.c.l.b16 %v3757
      %v3865 = vunpack.c.h.b16 %v3757
      %v3866 = vpack.c.b16 %v3862, %v3858
      %v3867 = vpack.c.b16 %v3863, %v3859
      %v3868 = vpack.c.b16 %v3864, %v3860
      %v3869 = vpack.c.b16 %v3865, %v3861
      %v3878 = vunpack.c.l.b16 %v3766
      %v3879 = vunpack.c.h.b16 %v3766
      %v3880 = vunpack.c.l.b16 %v3767
      %v3881 = vunpack.c.h.b16 %v3767
      %v3882 = vunpack.c.l.b16 %v3768
      %v3883 = vunpack.c.h.b16 %v3768
      %v3884 = vunpack.c.l.b16 %v3769
      %v3885 = vunpack.c.h.b16 %v3769
      %v3886 = vpack.c.b16 %v3882, %v3878
      %v3887 = vpack.c.b16 %v3883, %v3879
      %v3888 = vpack.c.b16 %v3884, %v3880
      %v3889 = vpack.c.b16 %v3885, %v3881
      %v3898 = vunpack.c.l.b16 %v3778
      %v3899 = vunpack.c.h.b16 %v3778
      %v3900 = vunpack.c.l.b16 %v3779
      %v3901 = vunpack.c.h.b16 %v3779
      %v3902 = vunpack.c.l.b16 %v3780
      %v3903 = vunpack.c.h.b16 %v3780
      %v3904 = vunpack.c.l.b16 %v3781
      %v3905 = vunpack.c.h.b16 %v3781
      %v3906 = vpack.c.b16 %v3902, %v3898
      %v3907 = vpack.c.b16 %v3903, %v3899
      %v3908 = vpack.c.b16 %v3904, %v3900
      %v3909 = vpack.c.b16 %v3905, %v3901
      %v3918 = vunpack.c.l.b16 %v3790
      %v3919 = vunpack.c.h.b16 %v3790
      %v3920 = vunpack.c.l.b16 %v3791
      %v3921 = vunpack.c.h.b16 %v3791
      %v3922 = vunpack.c.l.b16 %v3792
      %v3923 = vunpack.c.h.b16 %v3792
      %v3924 = vunpack.c.l.b16 %v3793
      %v3925 = vunpack.c.h.b16 %v3793
      %v3926 = vpack.c.b16 %v3922, %v3918
      %v3927 = vpack.c.b16 %v3923, %v3919
      %v3928 = vpack.c.b16 %v3924, %v3920
      %v3929 = vpack.c.b16 %v3925, %v3921
      %v3938 = vunpack.c.l.b16 %v3802
      %v3939 = vunpack.c.h.b16 %v3802
      %v3940 = vunpack.c.l.b16 %v3803
      %v3941 = vunpack.c.h.b16 %v3803
      %v3942 = vunpack.c.l.b16 %v3804
      %v3943 = vunpack.c.h.b16 %v3804
      %v3944 = vunpack.c.l.b16 %v3805
      %v3945 = vunpack.c.h.b16 %v3805
      %v3946 = vpack.c.b16 %v3942, %v3938
      %v3947 = vpack.c.b16 %v3943, %v3939
      %v3948 = vpack.c.b16 %v3944, %v3940
      %v3949 = vpack.c.b16 %v3945, %v3941
      %v3958 = vunpack.c.l.b16 %v3814
      %v3959 = vunpack.c.h.b16 %v3814
      %v3960 = vunpack.c.l.b16 %v3815
      %v3961 = vunpack.c.h.b16 %v3815
      %v3962 = vunpack.c.l.b16 %v3816
      %v3963 = vunpack.c.h.b16 %v3816
      %v3964 = vunpack.c.l.b16 %v3817
      %v3965 = vunpack.c.h.b16 %v3817
      %v3966 = vpack.c.b16 %v3962, %v3958
      %v3967 = vpack.c.b16 %v3963, %v3959
      %v3968 = vpack.c.b16 %v3964, %v3960
      %v3969 = vpack.c.b16 %v3965, %v3961
      %v3978 = vunpack.c.l.b16 %v3826
      %v3979 = vunpack.c.h.b16 %v3826
      %v3980 = vunpack.c.l.b16 %v3827
      %v3981 = vunpack.c.h.b16 %v3827
      %v3982 = vunpack.c.l.b16 %v3828
      %v3983 = vunpack.c.h.b16 %v3828
      %v3984 = vunpack.c.l.b16 %v3829
      %v3985 = vunpack.c.h.b16 %v3829
      %v3986 = vpack.c.b16 %v3982, %v3978
      %v3987 = vpack.c.b16 %v3983, %v3979
      %v3988 = vpack.c.b16 %v3984, %v3980
      %v3989 = vpack.c.b16 %v3985, %v3981
      %v3998 = vunpack.c.l.b16 %v3838
      %v3999 = vunpack.c.h.b16 %v3838
      %v4000 = vunpack.c.l.b16 %v3839
      %v4001 = vunpack.c.h.b16 %v3839
      %v4002 = vunpack.c.l.b16 %v3840
      %v4003 = vunpack.c.h.b16 %v3840
      %v4004 = vunpack.c.l.b16 %v3841
      %v4005 = vunpack.c.h.b16 %v3841
      %v4006 = vpack.c.b16 %v4002, %v3998
      %v4007 = vpack.c.b16 %v4003, %v3999
      %v4008 = vpack.c.b16 %v4004, %v4000
      %v4009 = vpack.c.b16 %v4005, %v4001
      %v4018 = vunpack.c.l.b16 %v3850
      %v4019 = vunpack.c.h.b16 %v3850
      %v4020 = vunpack.c.l.b16 %v3851
      %v4021 = vunpack.c.h.b16 %v3851
      %v4022 = vunpack.c.l.b16 %v3852
      %v4023 = vunpack.c.h.b16 %v3852
      %v4024 = vunpack.c.l.b16 %v3853
      %v4025 = vunpack.c.h.b16 %v3853
      %v4026 = vpack.c.b16 %v4022, %v4018
      %v4027 = vpack.c.b16 %v4023, %v4019
      %v4028 = vpack.c.b16 %v4024, %v4020
      %v4029 = vpack.c.b16 %v4025, %v4021
      %s4034 = scalar_lea.vmem %s5, 32
      %v4035 = vld [vmem:[%s4034] sm:$0xff]
      %v4036 = vld [vmem:[%s4034 + $0x8] sm:$0xff]
      %v4039 = vunpack.c.l.b16 %v4035
      %v4040 = vunpack.c.h.b16 %v4035
      %v4041 = vunpack.c.l.b16 %v4036
      %v4042 = vunpack.c.h.b16 %v4036
      %v4043 = vpack.c.b16 %v4041, %v4039
      %v4044 = vpack.c.b16 %v4042, %v4040
      %v4047 = vsel %vm1548, %v4044, 0
      %4049 = vmatpush.bf16.msra.mxu0 %v4006
      %4050 = vmatpush.bf16.msra.mxu0 %v3986
      %4051 = vmatpush.bf16.msra.mxu0 %v3966
      %4052 = vmatpush.bf16.msra.mxu0 %v3946
      %4053 = vmatpush.bf16.msra.mxu0 %v3926
      %4054 = vmatpush.bf16.msra.mxu0 %v3906
      %4055 = vmatpush.bf16.msra.mxu0 %v3886
      %4056 = vmatpush.bf16.msra.mxu0 %v3866
      %4057 = vmatmul.bf16.gmra.mxu0 %v4043
      %v4058 = vpop.f32.mrf.mxu0
      %v4059 = vadd.f32 0.0, %v4058
      %v4060 = vpop.f32.mrf.mxu0
      %v4061 = vadd.f32 0.0, %v4060
      %4062 = vdwg.mxu0
      %4063 = vmatpush.bf16.msra.mxu0 0
      %4064 = vmatpush.bf16.msra.mxu0 0
      %4065 = vmatpush.bf16.msra.mxu0 0
      %4066 = vmatpush.bf16.msra.mxu0 0
      %4067 = vmatpush.bf16.msra.mxu0 0
      %4068 = vmatpush.bf16.msra.mxu0 0
      %4069 = vmatpush.bf16.msra.mxu0 0
      %4070 = vmatpush.bf16.msra.mxu0 %v4026
      %4071 = vmatmul.bf16.gmra.mxu0 %v4047
      %v4072 = vpop.f32.mrf.mxu0
      %v4073 = vadd.f32 %v4059, %v4072
      %v4074 = vpop.f32.mrf.mxu0
      %v4075 = vadd.f32 %v4061, %v4074
      %4076 = vdwg.mxu0
      %4077 = vmatpush.bf16.msra.mxu0 %v4007
      %4078 = vmatpush.bf16.msra.mxu0 %v3987
      %4079 = vmatpush.bf16.msra.mxu0 %v3967
      %4080 = vmatpush.bf16.msra.mxu0 %v3947
      %4081 = vmatpush.bf16.msra.mxu0 %v3927
      %4082 = vmatpush.bf16.msra.mxu0 %v3907
      %4083 = vmatpush.bf16.msra.mxu0 %v3887
      %4084 = vmatpush.bf16.msra.mxu0 %v3867
      %4085 = vmatmul.bf16.gmra.mxu0 %v4043
      %v4086 = vpop.f32.mrf.mxu0
      %v4087 = vadd.f32 0.0, %v4086
      %v4088 = vpop.f32.mrf.mxu0
      %v4089 = vadd.f32 0.0, %v4088
      %4090 = vdwg.mxu0
      %4091 = vmatpush.bf16.msra.mxu0 0
      %4092 = vmatpush.bf16.msra.mxu0 0
      %4093 = vmatpush.bf16.msra.mxu0 0
      %4094 = vmatpush.bf16.msra.mxu0 0
      %4095 = vmatpush.bf16.msra.mxu0 0
      %4096 = vmatpush.bf16.msra.mxu0 0
      %4097 = vmatpush.bf16.msra.mxu0 0
      %4098 = vmatpush.bf16.msra.mxu0 %v4027
      %4099 = vmatmul.bf16.gmra.mxu0 %v4047
      %v4100 = vpop.f32.mrf.mxu0
      %v4101 = vadd.f32 %v4087, %v4100
      %v4102 = vpop.f32.mrf.mxu0
      %v4103 = vadd.f32 %v4089, %v4102
      %4104 = vdwg.mxu0
      %4105 = vmatpush.bf16.msra.mxu0 %v4008
      %4106 = vmatpush.bf16.msra.mxu0 %v3988
      %4107 = vmatpush.bf16.msra.mxu0 %v3968
      %4108 = vmatpush.bf16.msra.mxu0 %v3948
      %4109 = vmatpush.bf16.msra.mxu0 %v3928
      %4110 = vmatpush.bf16.msra.mxu0 %v3908
      %4111 = vmatpush.bf16.msra.mxu0 %v3888
      %4112 = vmatpush.bf16.msra.mxu0 %v3868
      %4113 = vmatmul.bf16.gmra.mxu0 %v4043
      %v4114 = vpop.f32.mrf.mxu0
      %v4115 = vadd.f32 0.0, %v4114
      %v4116 = vpop.f32.mrf.mxu0
      %v4117 = vadd.f32 0.0, %v4116
      %4118 = vdwg.mxu0
      %4119 = vmatpush.bf16.msra.mxu0 0
      %4120 = vmatpush.bf16.msra.mxu0 0
      %4121 = vmatpush.bf16.msra.mxu0 0
      %4122 = vmatpush.bf16.msra.mxu0 0
      %4123 = vmatpush.bf16.msra.mxu0 0
      %4124 = vmatpush.bf16.msra.mxu0 0
      %4125 = vmatpush.bf16.msra.mxu0 0
      %4126 = vmatpush.bf16.msra.mxu0 %v4028
      %4127 = vmatmul.bf16.gmra.mxu0 %v4047
      %v4128 = vpop.f32.mrf.mxu0
      %v4129 = vadd.f32 %v4115, %v4128
      %v4130 = vpop.f32.mrf.mxu0
      %v4131 = vadd.f32 %v4117, %v4130
      %4132 = vdwg.mxu0
      %4133 = vmatpush.bf16.msra.mxu0 %v4009
      %4134 = vmatpush.bf16.msra.mxu0 %v3989
      %4135 = vmatpush.bf16.msra.mxu0 %v3969
      %4136 = vmatpush.bf16.msra.mxu0 %v3949
      %4137 = vmatpush.bf16.msra.mxu0 %v3929
      %4138 = vmatpush.bf16.msra.mxu0 %v3909
      %4139 = vmatpush.bf16.msra.mxu0 %v3889
      %4140 = vmatpush.bf16.msra.mxu0 %v3869
      %4141 = vmatmul.bf16.gmra.mxu0 %v4043
      %v4142 = vpop.f32.mrf.mxu0
      %v4143 = vadd.f32 0.0, %v4142
      %v4144 = vpop.f32.mrf.mxu0
      %v4145 = vadd.f32 0.0, %v4144
      %4146 = vdwg.mxu0
      %4147 = vmatpush.bf16.msra.mxu0 0
      %4148 = vmatpush.bf16.msra.mxu0 0
      %4149 = vmatpush.bf16.msra.mxu0 0
      %4150 = vmatpush.bf16.msra.mxu0 0
      %4151 = vmatpush.bf16.msra.mxu0 0
      %4152 = vmatpush.bf16.msra.mxu0 0
      %4153 = vmatpush.bf16.msra.mxu0 0
      %4154 = vmatpush.bf16.msra.mxu0 %v4029
      %4155 = vmatmul.bf16.gmra.mxu0 %v4047
      %v4156 = vpop.f32.mrf.mxu0
      %v4157 = vadd.f32 %v4143, %v4156
      %v4158 = vpop.f32.mrf.mxu0
      %v4159 = vadd.f32 %v4145, %v4158
      %4160 = vdwg.mxu0
      %v4161 = vadd.f32 %v3658, %v4073
      %v4162 = vadd.f32 %v3686, %v4101
      %v4163 = vadd.f32 %v3714, %v4129
      %v4164 = vadd.f32 %v3742, %v4157
      %v4165 = vadd.f32 %v3660, %v4075
      %v4166 = vadd.f32 %v3688, %v4103
      %v4167 = vadd.f32 %v3716, %v4131
      %v4168 = vadd.f32 %v3744, %v4159
      %v4169 = vld [vmem:[%s6] sm:$0xff]
      %v4170 = vld [vmem:[%s6 + $0x8] sm:$0xff]
      %4172 = vset.pattern.permute.xlu0 0
      %4173 = vperm.xlu0 %4172, %v4169
      %v4174 = vpop.permute.xlu0 %4173
      %4177 = vset.pattern.permute.xlu0 0
      %4178 = vperm.xlu0 %4177, %v4170
      %v4179 = vpop.permute.xlu0 %4178
      %v4181 = vmul.f32 %v4161, %v4174
      %v4182 = vmul.f32 %v4162, %v4174
      %v4183 = vmul.f32 %v4163, %v4174
      %v4184 = vmul.f32 %v4164, %v4174
      %v4185 = vmul.f32 %v4165, %v4179
      %v4186 = vmul.f32 %v4166, %v4179
      %v4187 = vmul.f32 %v4167, %v4179
      %v4188 = vmul.f32 %v4168, %v4179
      %v4189 = vld [vmem:[%s7] sm:$0xff]
      %v4190 = vld [vmem:[%s7 + $0x8] sm:$0xff]
      %4192 = vset.pattern.permute.xlu0 0
      %4193 = vperm.xlu0 %4192, %v4189
      %v4194 = vpop.permute.xlu0 %4193
      %4197 = vset.pattern.permute.xlu0 0
      %4198 = vperm.xlu0 %4197, %v4190
      %v4199 = vpop.permute.xlu0 %4198
      %v4201 = vadd.f32 %v4181, %v4194
      %v4202 = vadd.f32 %v4182, %v4194
      %v4203 = vadd.f32 %v4183, %v4194
      %v4204 = vadd.f32 %v4184, %v4194
      %v4205 = vadd.f32 %v4185, %v4199
      %v4206 = vadd.f32 %v4186, %v4199
      %v4207 = vadd.f32 %v4187, %v4199
      %v4208 = vadd.f32 %v4188, %v4199
      %v4209 = vmax.f32 %v4201, 0.0
      %v4210 = vmax.f32 %v4202, 0.0
      %v4211 = vmax.f32 %v4203, 0.0
      %v4212 = vmax.f32 %v4204, 0.0
      %v4213 = vmax.f32 %v4205, 0.0
      %v4214 = vmax.f32 %v4206, 0.0
      %v4215 = vmax.f32 %v4207, 0.0
      %v4216 = vmax.f32 %v4208, 0.0
      %v4217 = vadd.f32 %v4209, %v2509
      %v4218 = vadd.f32 %v4210, %v2510
      %v4219 = vadd.f32 %v4211, %v2511
      %v4220 = vadd.f32 %v4212, %v2512
      %v4221 = vadd.f32 %v4213, %v2513
      %v4222 = vadd.f32 %v4214, %v2514
      %v4223 = vadd.f32 %v4215, %v2515
      %v4224 = vadd.f32 %v4216, %v2516
      %v4225 = vmax.f32 %v4217, 0.0
      %v4226 = vmax.f32 %v4218, 0.0
      %v4227 = vmax.f32 %v4219, 0.0
      %v4228 = vmax.f32 %v4220, 0.0
      %v4229 = vmax.f32 %v4221, 0.0
      %v4230 = vmax.f32 %v4222, 0.0
      %v4231 = vmax.f32 %v4223, 0.0
      %v4232 = vmax.f32 %v4224, 0.0
      %4233 = vst [vmem:[%s332] sm:$0xff] %v4225
      %4234 = vst [vmem:[%s332 + $0x8] sm:$0xff] %v4226
      %4235 = vst [vmem:[%s332 + $0x10] sm:$0xff] %v4227
      %4236 = vst [vmem:[%s332 + $0x18] sm:$0xff] %v4228
      %4237 = vst [vmem:[%s332 + $0x20] sm:$0xff] %v4229
      %4238 = vst [vmem:[%s332 + $0x28] sm:$0xff] %v4230
      %4239 = vst [vmem:[%s332 + $0x30] sm:$0xff] %v4231
      %4240 = vst [vmem:[%s332 + $0x38] sm:$0xff] %v4232
      %p4241 = scmp.lt.s32.totalorder %s20, 1
      %s4242 = scalar_select %p4241, %s20, 1
      %s4243 = smul.addr %s4242, 8
      %s4244 = smul.addr %s4243, 8
      %s4245 = scalar_lea.vmem %s9, %s4244
      // Predicated region
      $region57: #{res_encoder3d_forward.1} parent=55 // pred_check
        %p4246 = pneg %p232
      $region58: #{res_encoder3d_forward.1} parent=55 // pred_check_branch
        %4248 = sbr.rel (%p4246) target = $region60
      $region59: #{res_encoder3d_forward.1} parent=55 // pred_region
        _
      $region60: #{res_encoder3d_forward.1} parent=55 // pred_fallthru
        _
    $region56: #{res_encoder3d_forward.1} parent=5 // pred_fallthru
      _
    %p4249 = scmp.le.s32.totalorder 2, %s15
    // Predicated region
    $region61: #{res_encoder3d_forward.1} parent=5 // pred_check
      %p4250 = pneg %p4249
    $region62: #{res_encoder3d_forward.1} parent=5 // pred_check_branch
      %4252 = sbr.rel (%p4250) target = $region64
    $region63: #{res_encoder3d_forward.1} parent=5 // pred_region
      %s4253 = ssub.s32 %s15, 2
      // Predicated region
      $region65: #{res_encoder3d_forward.1} parent=63 // pred_check
        %p4254 = pneg %p238
      $region66: #{res_encoder3d_forward.1} parent=63 // pred_check_branch
        %4256 = sbr.rel (%p4254) target = $region68
      $region67: #{res_encoder3d_forward.1} parent=63 // pred_region
        %p4257 = scmp.lt.s32.totalorder %s21, 1
        %s4258 = scalar_select %p4257, %s21, 1
        %s4259 = smul.addr %s4258, 8
        %s4260 = smul.addr %s4259, 8
        %s4261 = scalar_lea.vmem %s9, %s4260
      $region68: #{res_encoder3d_forward.1} parent=63 // pred_fallthru
        _
    $region64: #{res_encoder3d_forward.1} parent=5 // pred_fallthru
      _
  $region6: #{res_encoder3d_forward.1} parent=0 // loop_footer
    %s19 = sadd.s32 1, %s15
  $region7: #{res_encoder3d_forward.1} parent=0 // loop_footer_branch
    %14 = sbr.rel target = $region3
  $region8: #{res_encoder3d_forward.1} parent=0 // loop_exit
    _

// kernel: res_encoder3d_forward.1
$region0: #{res_encoder3d_forward.1}
  #allocation0 [shape = 'u32[]', space=smem, size = 0x4, offset = 0x4, fixed_abs, tag = 'smem constant byte address 0x4 - core index']
  #allocation1 [shape = 'u32[72,128]{1,0:T(1,128)}', space=vmem, size = 0x9000, scoped, tag = 'internal scratch']
  %s0 = inlined_call_operand.vmem [shape: f32[8,512], index: 0, kind: input, shape index: {}]
  %s1 = inlined_call_operand.vmem [shape: f32[2,16,512], index: 1, kind: input, shape index: {}]
  %s2 = inlined_call_operand.vmem [shape: bf16[3,32,144], index: 2, kind: input, shape index: {}]
  %s3 = inlined_call_operand.vmem [shape: f32[16,1], index: 3, kind: input, shape index: {}]
  %s4 = inlined_call_operand.vmem [shape: f32[16,1], index: 4, kind: input, shape index: {}]
  %s5 = inlined_call_operand.vmem [shape: bf16[3,16,144], index: 5, kind: input, shape index: {}]
  %s6 = inlined_call_operand.vmem [shape: f32[16,1], index: 6, kind: input, shape index: {}]
  %s7 = inlined_call_operand.vmem [shape: f32[16,1], index: 7, kind: input, shape index: {}]
  %s8 = inlined_call_operand.vmem [shape: f32[16,1], index: 8, kind: input, shape index: {}]
  %s9 = inlined_call_operand.vmem [shape: f32[2,16,512], index: 9, kind: output, shape index: {}]
  %s10 = sld [smem:[#allocation0]]
  $region69: #{res_encoder3d_forward.1} parent=0
    _
  %s12 = ssub.s32 1, %s10
  %s13 = scalar_select 0, %s12, %s10
  loop: start=0, step=1, limit=4
  $region2: #{res_encoder3d_forward.1} parent=0 // loop_pre_header
    _
  $region3: #{res_encoder3d_forward.1} parent=0 // loop_header
    %s15 = sphi 0, %s19
    %p16 = scmp.ge.s32.totalorder %s15, 4
    %s23 = sphi 0, %s23
    %s25 = sphi 0, %s23
    %s26 = sphi 0, %s25
    %s40 = sphi 0, %s26
    %s46 = sphi 0, %s48
    %s49 = sphi 0, %s46
    %s50 = sphi 0, %s49
    %s66 = sphi 0, %s50
    %s70 = sphi 0, %s70
    %s72 = sphi 0, %s70
    %s73 = sphi 0, %s72
    %s87 = sphi 0, %s73
    %s91 = sphi 0, %s91
    %s93 = sphi 0, %s91
    %s94 = sphi 0, %s93
    %s108 = sphi 0, %s94
    %s112 = sphi 0, %s112
    %s114 = sphi 0, %s112
    %s115 = sphi 0, %s114
    %s129 = sphi 0, %s115
    %s133 = sphi 0, %s133
    %s135 = sphi 0, %s133
    %s136 = sphi 0, %s135
    %s150 = sphi 0, %s136
    %s154 = sphi 0, %s154
    %s156 = sphi 0, %s154
    %s157 = sphi 0, %s156
    %s171 = sphi 0, %s157
    %s175 = sphi 0, %s175
    %s177 = sphi 0, %s175
    %s178 = sphi 0, %s177
    %s192 = sphi 0, %s178
    %s196 = sphi 0, %s196
    %s198 = sphi 0, %s196
    %s199 = sphi 0, %s198
    %s213 = sphi 0, %s199
    %s219 = sphi 0, %s221
    %s222 = sphi 0, %s219
    %s223 = sphi 0, %s222
    %s239 = sphi 0, %s223
  $region4: #{res_encoder3d_forward.1} parent=0 // loop_header_branch
    %18 = sbr.rel (%p16) target = $region8
  $region5: #{res_encoder3d_forward.1} parent=0 // loop_body
    %s20 = ssub.s32 %s15, 1
    %s21 = ssub.s32 %s15, 2
    %s22 = sadd.s32 %s15, 1
    %s24 = sadd.s32 %s23, 1
    %p27 = scmp.eq.s32.totalorder %s15, 1
    %p28 = scmp.ne.s32.totalorder %s23, %s25
    %p29 = scmp.eq.s32.totalorder %s15, 0
    %p30 = por %p28, %p29
    %p31 = scmp.ne.s32.totalorder %s23, %s25
    %p32 = scmp.eq.s32.totalorder %s20, 1
    %p33 = por %p31, %p32
    %p34 = scmp.ne.s32.totalorder %s25, %s26
    %p35 = scmp.eq.s32.totalorder %s20, 0
    %p36 = por %p34, %p35
    %p37 = scmp.ne.s32.totalorder %s25, %s26
    %p38 = scmp.eq.s32.totalorder %s21, 1
    %p39 = por %p37, %p38
    %p41 = scmp.ne.s32.totalorder %s26, %s40
    %p42 = scmp.eq.s32.totalorder %s21, 0
    %p43 = por %p41, %p42
    %s44 = ssub.s32 %s15, %s22
    %p45 = scmp.eq.s32.totalorder %s44, 0
    %s47 = sadd.s32 %s46, 1
    %s48 = scalar_select %p45, %s46, %s47
    %p51 = pneg %p45
    %p52 = scmp.eq.s32.totalorder %s15, 1
    %p53 = por %p51, %p52
    %p54 = scmp.ne.s32.totalorder %s46, %s49
    %p55 = scmp.eq.s32.totalorder %s15, 0
    %p56 = por %p54, %p55
    %p57 = scmp.ne.s32.totalorder %s46, %s49
    %p58 = scmp.eq.s32.totalorder %s20, 1
    %p59 = por %p57, %p58
    %p60 = scmp.ne.s32.totalorder %s49, %s50
    %p61 = scmp.eq.s32.totalorder %s20, 0
    %p62 = por %p60, %p61
    %p63 = scmp.ne.s32.totalorder %s49, %s50
    %p64 = scmp.eq.s32.totalorder %s21, 1
    %p65 = por %p63, %p64
    %p67 = scmp.ne.s32.totalorder %s50, %s66
    %p68 = scmp.eq.s32.totalorder %s21, 0
    %p69 = por %p67, %p68
    %s71 = sadd.s32 %s70, 1
    %p74 = scmp.eq.s32.totalorder %s15, 1
    %p75 = scmp.ne.s32.totalorder %s70, %s72
    %p76 = scmp.eq.s32.totalorder %s15, 0
    %p77 = por %p75, %p76
    %p78 = scmp.ne.s32.totalorder %s70, %s72
    %p79 = scmp.eq.s32.totalorder %s20, 1
    %p80 = por %p78, %p79
    %p81 = scmp.ne.s32.totalorder %s72, %s73
    %p82 = scmp.eq.s32.totalorder %s20, 0
    %p83 = por %p81, %p82
    %p84 = scmp.ne.s32.totalorder %s72, %s73
    %p85 = scmp.eq.s32.totalorder %s21, 1
    %p86 = por %p84, %p85
    %p88 = scmp.ne.s32.totalorder %s73, %s87
    %p89 = scmp.eq.s32.totalorder %s21, 0
    %p90 = por %p88, %p89
    %s92 = sadd.s32 %s91, 1
    %p95 = scmp.eq.s32.totalorder %s15, 1
    %p96 = scmp.ne.s32.totalorder %s91, %s93
    %p97 = scmp.eq.s32.totalorder %s15, 0
    %p98 = por %p96, %p97
    %p99 = scmp.ne.s32.totalorder %s91, %s93
    %p100 = scmp.eq.s32.totalorder %s20, 1
    %p101 = por %p99, %p100
    %p102 = scmp.ne.s32.totalorder %s93, %s94
    %p103 = scmp.eq.s32.totalorder %s20, 0
    %p104 = por %p102, %p103
    %p105 = scmp.ne.s32.totalorder %s93, %s94
    %p106 = scmp.eq.s32.totalorder %s21, 1
    %p107 = por %p105, %p106
    %p109 = scmp.ne.s32.totalorder %s94, %s108
    %p110 = scmp.eq.s32.totalorder %s21, 0
    %p111 = por %p109, %p110
    %s113 = sadd.s32 %s112, 1
    %p116 = scmp.eq.s32.totalorder %s15, 1
    %p117 = scmp.ne.s32.totalorder %s112, %s114
    %p118 = scmp.eq.s32.totalorder %s15, 0
    %p119 = por %p117, %p118
    %p120 = scmp.ne.s32.totalorder %s112, %s114
    %p121 = scmp.eq.s32.totalorder %s20, 1
    %p122 = por %p120, %p121
    %p123 = scmp.ne.s32.totalorder %s114, %s115
    %p124 = scmp.eq.s32.totalorder %s20, 0
    %p125 = por %p123, %p124
    %p126 = scmp.ne.s32.totalorder %s114, %s115
    %p127 = scmp.eq.s32.totalorder %s21, 1
    %p128 = por %p126, %p127
    %p130 = scmp.ne.s32.totalorder %s115, %s129
    %p131 = scmp.eq.s32.totalorder %s21, 0
    %p132 = por %p130, %p131
    %s134 = sadd.s32 %s133, 1
    %p137 = scmp.eq.s32.totalorder %s15, 1
    %p138 = scmp.ne.s32.totalorder %s133, %s135
    %p139 = scmp.eq.s32.totalorder %s15, 0
    %p140 = por %p138, %p139
    %p141 = scmp.ne.s32.totalorder %s133, %s135
    %p142 = scmp.eq.s32.totalorder %s20, 1
    %p143 = por %p141, %p142
    %p144 = scmp.ne.s32.totalorder %s135, %s136
    %p145 = scmp.eq.s32.totalorder %s20, 0
    %p146 = por %p144, %p145
    %p147 = scmp.ne.s32.totalorder %s135, %s136
    %p148 = scmp.eq.s32.totalorder %s21, 1
    %p149 = por %p147, %p148
    %p151 = scmp.ne.s32.totalorder %s136, %s150
    %p152 = scmp.eq.s32.totalorder %s21, 0
    %p153 = por %p151, %p152
    %s155 = sadd.s32 %s154, 1
    %p158 = scmp.eq.s32.totalorder %s15, 1
    %p159 = scmp.ne.s32.totalorder %s154, %s156
    %p160 = scmp.eq.s32.totalorder %s15, 0
    %p161 = por %p159, %p160
    %p162 = scmp.ne.s32.totalorder %s154, %s156
    %p163 = scmp.eq.s32.totalorder %s20, 1
    %p164 = por %p162, %p163
    %p165 = scmp.ne.s32.totalorder %s156, %s157
    %p166 = scmp.eq.s32.totalorder %s20, 0
    %p167 = por %p165, %p166
    %p168 = scmp.ne.s32.totalorder %s156, %s157
    %p169 = scmp.eq.s32.totalorder %s21, 1
    %p170 = por %p168, %p169
    %p172 = scmp.ne.s32.totalorder %s157, %s171
    %p173 = scmp.eq.s32.totalorder %s21, 0
    %p174 = por %p172, %p173
    %s176 = sadd.s32 %s175, 1
    %p179 = scmp.eq.s32.totalorder %s15, 1
    %p180 = scmp.ne.s32.totalorder %s175, %s177
    %p181 = scmp.eq.s32.totalorder %s15, 0
    %p182 = por %p180, %p181
    %p183 = scmp.ne.s32.totalorder %s175, %s177
    %p184 = scmp.eq.s32.totalorder %s20, 1
    %p185 = por %p183, %p184
    %p186 = scmp.ne.s32.totalorder %s177, %s178
    %p187 = scmp.eq.s32.totalorder %s20, 0
    %p188 = por %p186, %p187
    %p189 = scmp.ne.s32.totalorder %s177, %s178
    %p190 = scmp.eq.s32.totalorder %s21, 1
    %p191 = por %p189, %p190
    %p193 = scmp.ne.s32.totalorder %s178, %s192
    %p194 = scmp.eq.s32.totalorder %s21, 0
    %p195 = por %p193, %p194
    %s197 = sadd.s32 %s196, 1
    %p200 = scmp.eq.s32.totalorder %s15, 1
    %p201 = scmp.ne.s32.totalorder %s196, %s198
    %p202 = scmp.eq.s32.totalorder %s15, 0
    %p203 = por %p201, %p202
    %p204 = scmp.ne.s32.totalorder %s196, %s198
    %p205 = scmp.eq.s32.totalorder %s20, 1
    %p206 = por %p204, %p205
    %p207 = scmp.ne.s32.totalorder %s198, %s199
    %p208 = scmp.eq.s32.totalorder %s20, 0
    %p209 = por %p207, %p208
    %p210 = scmp.ne.s32.totalorder %s198, %s199
    %p211 = scmp.eq.s32.totalorder %s21, 1
    %p212 = por %p210, %p211
    %p214 = scmp.ne.s32.totalorder %s199, %s213
    %p215 = scmp.eq.s32.totalorder %s21, 0
    %p216 = por %p214, %p215
    %s217 = ssub.s32 %s15, %s22
    %p218 = scmp.eq.s32.totalorder %s217, 0
    %s220 = sadd.s32 %s219, 1
    %s221 = scalar_select %p218, %s219, %s220
    %p224 = pneg %p218
    %p225 = scmp.eq.s32.totalorder %s15, 1
    %p226 = por %p224, %p225
    %p227 = scmp.ne.s32.totalorder %s219, %s222
    %p228 = scmp.eq.s32.totalorder %s15, 0
    %p229 = por %p227, %p228
    %p230 = scmp.ne.s32.totalorder %s219, %s222
    %p231 = scmp.eq.s32.totalorder %s20, 1
    %p232 = por %p230, %p231
    %p233 = scmp.ne.s32.totalorder %s222, %s223
    %p234 = scmp.eq.s32.totalorder %s20, 0
    %p235 = por %p233, %p234
    %p236 = scmp.ne.s32.totalorder %s222, %s223
    %p237 = scmp.eq.s32.totalorder %s21, 1
    %p238 = por %p236, %p237
    %p240 = scmp.ne.s32.totalorder %s223, %s239
    %p241 = scmp.eq.s32.totalorder %s21, 0
    %p242 = por %p240, %p241
    %p243 = scmp.le.s32.totalorder 1, %s15
    %p244 = scmp.lt.s32.totalorder %s15, 3
    %p245 = pnand %p243, %p244
    %p246 = pneg %p245
    // Predicated region
    $region9: #{res_encoder3d_forward.1} parent=5 // pred_check
      _
    $region10: #{res_encoder3d_forward.1} parent=5 // pred_check_branch
      %248 = sbr.rel (%p245) target = $region12
    $region11: #{res_encoder3d_forward.1} parent=5 // pred_region
      %s249 = ssub.s32 %s15, 1
      // Predicated region
      $region13: #{res_encoder3d_forward.1} parent=11 // pred_check
        %p250 = pneg %p36
      $region14: #{res_encoder3d_forward.1} parent=11 // pred_check_branch
        %252 = sbr.rel (%p250) target = $region16
      $region15: #{res_encoder3d_forward.1} parent=11 // pred_region
        _
      $region16: #{res_encoder3d_forward.1} parent=11 // pred_fallthru
        _
      // Predicated region
      $region17: #{res_encoder3d_forward.1} parent=11 // pred_check
        %p253 = pneg %p83
      $region18: #{res_encoder3d_forward.1} parent=11 // pred_check_branch
        %255 = sbr.rel (%p253) target = $region20
      $region19: #{res_encoder3d_forward.1} parent=11 // pred_region
        _
      $region20: #{res_encoder3d_forward.1} parent=11 // pred_fallthru
        _
      // Predicated region
      $region21: #{res_encoder3d_forward.1} parent=11 // pred_check
        %p256 = pneg %p104
      $region22: #{res_encoder3d_forward.1} parent=11 // pred_check_branch
        %258 = sbr.rel (%p256) target = $region24
      $region23: #{res_encoder3d_forward.1} parent=11 // pred_region
        _
      $region24: #{res_encoder3d_forward.1} parent=11 // pred_fallthru
        _
      // Predicated region
      $region25: #{res_encoder3d_forward.1} parent=11 // pred_check
        %p259 = pneg %p125
      $region26: #{res_encoder3d_forward.1} parent=11 // pred_check_branch
        %261 = sbr.rel (%p259) target = $region28
      $region27: #{res_encoder3d_forward.1} parent=11 // pred_region
        _
      $region28: #{res_encoder3d_forward.1} parent=11 // pred_fallthru
        _
      // Predicated region
      $region29: #{res_encoder3d_forward.1} parent=11 // pred_check
        %p262 = pneg %p146
      $region30: #{res_encoder3d_forward.1} parent=11 // pred_check_branch
        %264 = sbr.rel (%p262) target = $region32
      $region31: #{res_encoder3d_forward.1} parent=11 // pred_region
        _
      $region32: #{res_encoder3d_forward.1} parent=11 // pred_fallthru
        _
      // Predicated region
      $region33: #{res_encoder3d_forward.1} parent=11 // pred_check
        %p265 = pneg %p167
      $region34: #{res_encoder3d_forward.1} parent=11 // pred_check_branch
        %267 = sbr.rel (%p265) target = $region36
      $region35: #{res_encoder3d_forward.1} parent=11 // pred_region
        _
      $region36: #{res_encoder3d_forward.1} parent=11 // pred_fallthru
        _
      // Predicated region
      $region37: #{res_encoder3d_forward.1} parent=11 // pred_check
        %p268 = pneg %p188
      $region38: #{res_encoder3d_forward.1} parent=11 // pred_check_branch
        %270 = sbr.rel (%p268) target = $region40
      $region39: #{res_encoder3d_forward.1} parent=11 // pred_region
        _
      $region40: #{res_encoder3d_forward.1} parent=11 // pred_fallthru
        _
      // Predicated region
      $region41: #{res_encoder3d_forward.1} parent=11 // pred_check
        %p271 = pneg %p209
      $region42: #{res_encoder3d_forward.1} parent=11 // pred_check_branch
        %273 = sbr.rel (%p271) target = $region44
      $region43: #{res_encoder3d_forward.1} parent=11 // pred_region
        _
      $region44: #{res_encoder3d_forward.1} parent=11 // pred_fallthru
        _
    $region12: #{res_encoder3d_forward.1} parent=5 // pred_fallthru
      _
    %p274 = scmp.lt.s32.totalorder %s15, 2
    // Predicated region
    $region45: #{res_encoder3d_forward.1} parent=5 // pred_check
      %p275 = pneg %p274
    $region46: #{res_encoder3d_forward.1} parent=5 // pred_check_branch
      %277 = sbr.rel (%p275) target = $region48
    $region47: #{res_encoder3d_forward.1} parent=5 // pred_region
      // Predicated region
      $region49: #{res_encoder3d_forward.1} parent=47 // pred_check
        %p278 = pneg %p56
      $region50: #{res_encoder3d_forward.1} parent=47 // pred_check_branch
        %280 = sbr.rel (%p278) target = $region52
      $region51: #{res_encoder3d_forward.1} parent=47 // pred_region
        %p281 = scmp.lt.s32.totalorder %s15, 1
        %s282 = scalar_select %p281, %s15, 1
        %s283 = smul.addr %s282, 8
        %s284 = smul.addr %s283, 8
        %s285 = scalar_lea.vmem %s1, %s284
      $region52: #{res_encoder3d_forward.1} parent=47 // pred_fallthru
        _
    $region48: #{res_encoder3d_forward.1} parent=5 // pred_fallthru
      _
    %p286 = scmp.le.s32.totalorder 1, %s15
    %p287 = scmp.lt.s32.totalorder %s15, 3
    %p288 = pnand %p286, %p287
    %p289 = pneg %p288
    // Predicated region
    $region53: #{res_encoder3d_forward.1} parent=5 // pred_check
      _
    $region54: #{res_encoder3d_forward.1} parent=5 // pred_check_branch
      %291 = sbr.rel (%p288) target = $region56
    $region55: #{res_encoder3d_forward.1} parent=5 // pred_region
      %s292 = ssub.s32 %s15, 1
      %p293 = pneg %p36
      %p294 = pneg %p33
      %p295 = scmp.lt.s32.totalorder %s20, 1
      %s296 = scalar_select %p295, %s20, 1
      %s297 = smul.addr %s296, 8
      %s298 = smul.addr %s297, 8
      %s299 = scalar_lea.vmem %s1, %s298
      %p300 = pneg %p62
      %p301 = pneg %p59
      %p302 = pneg %p83
      %p303 = pneg %p80
      %p304 = pneg %p104
      %p305 = pneg %p101
      %p306 = pneg %p125
      %p307 = pneg %p122
      %p308 = pneg %p146
      %p309 = pneg %p143
      %p310 = pneg %p167
      %p311 = pneg %p164
      %p312 = pneg %p188
      %p313 = pneg %p185
      %p314 = pneg %p209
      %p315 = pneg %p206
      %p316 = pneg %p235
      %p317 = pneg %p232
      %p318 = scmp.lt.s32.totalorder %s20, 1
      %s319 = scalar_select %p318, %s20, 1
      %s320 = smul.addr %s319, 8
      %s321 = smul.addr %s320, 8
      %s322 = scalar_lea.vmem %s9, %s321
      %p323 = scmp.lt.s32.totalorder %s20, 1
      %s324 = scalar_select %p323, %s20, 1
      %s325 = smul.addr %s324, 8
      %s326 = smul.addr %s325, 8
      %s327 = scalar_lea.vmem %s1, %s326
      %p328 = scmp.lt.s32.totalorder %s20, 1
      %s329 = scalar_select %p328, %s20, 1
      %s330 = smul.addr %s329, 8
      %s331 = smul.addr %s330, 8
      %s332 = scalar_lea.vmem %s9, %s331
      %v334 = vld [vmem:[%s0] ss:$8 sm:$0xf]
      %s335 = scalar_lea.vmem %s0, 2
      %v336 = vld [vmem:[%s335] ss:$8 sm:$0xf]
      %s337 = scalar_lea.vmem %s0, 4
      %v338 = vld [vmem:[%s337] ss:$8 sm:$0xf]
      %s339 = scalar_lea.vmem %s0, 1
      %v340 = vld [vmem:[%s339] ss:$8 sm:$0xf]
      %s341 = scalar_lea.vmem %s0, 3
      %v342 = vld [vmem:[%s341] ss:$8 sm:$0xf]
      %s343 = scalar_lea.vmem %s0, 5
      %v344 = vld [vmem:[%s343] ss:$8 sm:$0xf]
      %v345 = vmul.f32 %v334, %v336
      %v346 = vmul.f32 %v345, %v338
      %v347 = vmul.f32 %v345, %v344
      %v348 = vmul.f32 %v334, %v338
      %v349 = vmul.f32 %v334, %v344
      %v350 = vmul.f32 %v334, %v342
      %v351 = vmul.f32 %v350, %v338
      %v352 = vmul.f32 %v350, %v344
      %v353 = vmul.f32 %v336, %v338
      %v354 = vmul.f32 %v336, %v344
      %v355 = vmul.f32 %v342, %v338
      %v356 = vmul.f32 %v342, %v344
      %v357 = vmul.f32 %v340, %v336
      %v358 = vmul.f32 %v357, %v338
      %v359 = vmul.f32 %v357, %v344
      %v360 = vmul.f32 %v340, %v338
      %v361 = vmul.f32 %v340, %v344
      %v362 = vmul.f32 %v340, %v342
      %v363 = vmul.f32 %v362, %v338
      %v364 = vmul.f32 %v362, %v344
      %v365 = vld [vmem:[%s327] sm:$0xff]
      %v366 = vld [vmem:[%s327 + $0x8] sm:$0xff]
      %v367 = vld [vmem:[%s327 + $0x10] sm:$0xff]
      %v368 = vld [vmem:[%s327 + $0x18] sm:$0xff]
      %v369 = vld [vmem:[%s327 + $0x20] sm:$0xff]
      %v370 = vld [vmem:[%s327 + $0x28] sm:$0xff]
      %v371 = vld [vmem:[%s327 + $0x30] sm:$0xff]
      %v372 = vld [vmem:[%s327 + $0x38] sm:$0xff]
      %373 = vrot.lane.b32.xlu0 %v365, 73
      %v374 = vpop.permute.xlu0 %373
      %375 = vrot.lane.b32.xlu0 %v369, 73
      %v376 = vpop.permute.xlu0 %375
      %377 = vrot.lane.b32.xlu0 %v366, 73
      %v378 = vpop.permute.xlu0 %377
      %379 = vrot.lane.b32.xlu0 %v370, 73
      %v380 = vpop.permute.xlu0 %379
      %381 = vrot.lane.b32.xlu0 %v367, 73
      %v382 = vpop.permute.xlu0 %381
      %383 = vrot.lane.b32.xlu0 %v371, 73
      %v384 = vpop.permute.xlu0 %383
      %385 = vrot.lane.b32.xlu0 %v368, 73
      %v386 = vpop.permute.xlu0 %385
      %387 = vrot.lane.b32.xlu0 %v372, 73
      %v388 = vpop.permute.xlu0 %387
      %v389 = vlaneseq
      %v390 = vand.u32 %v389, 127
      %vm391 = vcmp.lt.s32.totalorder %v390, 73
      %v392 = vsel %vm391, %v382, %v386
      %v393 = vsel %vm391, %v384, %v388
      %v394 = vsel %vm391, %v378, %v382
      %v395 = vsel %vm391, %v380, %v384
      %v396 = vsel %vm391, %v374, %v378
      %v397 = vsel %vm391, %v376, %v380
      %v398 = vsel %vm391, %v386, %v374
      %v399 = vsel %vm391, %v388, %v376
      %v401 = vperm.slane %v346, 0
      %v402 = vperm.slane %v346, 1
      %v403 = vperm.slane %v346, 2
      %v404 = vperm.slane %v346, 3
      %v409 = vmul.f32 %v398, %v401
      %v410 = vmul.f32 %v396, %v402
      %v411 = vmul.f32 %v394, %v403
      %v412 = vmul.f32 %v392, %v404
      %v413 = vmul.f32 %v399, %v401
      %v414 = vmul.f32 %v397, %v402
      %v415 = vmul.f32 %v395, %v403
      %v416 = vmul.f32 %v393, %v404
      %v417 = vpack.c.bf16 %v410, %v409
      %v418 = vpack.c.bf16 %v412, %v411
      %v419 = vpack.c.bf16 %v414, %v413
      %v420 = vpack.c.bf16 %v416, %v415
      %421 = vrot.lane.b32.xlu0 %v365, 72
      %v422 = vpop.permute.xlu0 %421
      %423 = vrot.lane.b32.xlu0 %v369, 72
      %v424 = vpop.permute.xlu0 %423
      %425 = vrot.lane.b32.xlu0 %v366, 72
      %v426 = vpop.permute.xlu0 %425
      %427 = vrot.lane.b32.xlu0 %v370, 72
      %v428 = vpop.permute.xlu0 %427
      %429 = vrot.lane.b32.xlu0 %v367, 72
      %v430 = vpop.permute.xlu0 %429
      %431 = vrot.lane.b32.xlu0 %v371, 72
      %v432 = vpop.permute.xlu0 %431
      %433 = vrot.lane.b32.xlu0 %v368, 72
      %v434 = vpop.permute.xlu0 %433
      %435 = vrot.lane.b32.xlu0 %v372, 72
      %v436 = vpop.permute.xlu0 %435
      %vm437 = vcmp.lt.s32.totalorder %v390, 72
      %v438 = vsel %vm437, %v430, %v434
      %v439 = vsel %vm437, %v432, %v436
      %v440 = vsel %vm437, %v426, %v430
      %v441 = vsel %vm437, %v428, %v432
      %v442 = vsel %vm437, %v422, %v426
      %v443 = vsel %vm437, %v424, %v428
      %v444 = vsel %vm437, %v434, %v422
      %v445 = vsel %vm437, %v436, %v424
      %v447 = vperm.slane %v345, 0
      %v448 = vperm.slane %v345, 1
      %v449 = vperm.slane %v345, 2
      %v450 = vperm.slane %v345, 3
      %v455 = vmul.f32 %v444, %v447
      %v456 = vmul.f32 %v442, %v448
      %v457 = vmul.f32 %v440, %v449
      %v458 = vmul.f32 %v438, %v450
      %v459 = vmul.f32 %v445, %v447
      %v460 = vmul.f32 %v443, %v448
      %v461 = vmul.f32 %v441, %v449
      %v462 = vmul.f32 %v439, %v450
      %v463 = vpack.c.bf16 %v456, %v455
      %v464 = vpack.c.bf16 %v458, %v457
      %v465 = vpack.c.bf16 %v460, %v459
      %v466 = vpack.c.bf16 %v462, %v461
      %467 = vrot.lane.b32.xlu0 %v365, 71
      %v468 = vpop.permute.xlu0 %467
      %469 = vrot.lane.b32.xlu0 %v369, 71
      %v470 = vpop.permute.xlu0 %469
      %471 = vrot.lane.b32.xlu0 %v366, 71
      %v472 = vpop.permute.xlu0 %471
      %473 = vrot.lane.b32.xlu0 %v370, 71
      %v474 = vpop.permute.xlu0 %473
      %475 = vrot.lane.b32.xlu0 %v367, 71
      %v476 = vpop.permute.xlu0 %475
      %477 = vrot.lane.b32.xlu0 %v371, 71
      %v478 = vpop.permute.xlu0 %477
      %479 = vrot.lane.b32.xlu0 %v368, 71
      %v480 = vpop.permute.xlu0 %479
      %481 = vrot.lane.b32.xlu0 %v372, 71
      %v482 = vpop.permute.xlu0 %481
      %vm483 = vcmp.lt.s32.totalorder %v390, 71
      %v484 = vsel %vm483, %v476, %v480
      %v485 = vsel %vm483, %v478, %v482
      %v486 = vsel %vm483, %v472, %v476
      %v487 = vsel %vm483, %v474, %v478
      %v488 = vsel %vm483, %v468, %v472
      %v489 = vsel %vm483, %v470, %v474
      %v490 = vsel %vm483, %v480, %v468
      %v491 = vsel %vm483, %v482, %v470
      %v493 = vperm.slane %v347, 0
      %v494 = vperm.slane %v347, 1
      %v495 = vperm.slane %v347, 2
      %v496 = vperm.slane %v347, 3
      %v501 = vmul.f32 %v490, %v493
      %v502 = vmul.f32 %v488, %v494
      %v503 = vmul.f32 %v486, %v495
      %v504 = vmul.f32 %v484, %v496
      %v505 = vmul.f32 %v491, %v493
      %v506 = vmul.f32 %v489, %v494
      %v507 = vmul.f32 %v487, %v495
      %v508 = vmul.f32 %v485, %v496
      %v509 = vpack.c.bf16 %v502, %v501
      %v510 = vpack.c.bf16 %v504, %v503
      %v511 = vpack.c.bf16 %v506, %v505
      %v512 = vpack.c.bf16 %v508, %v507
      %513 = vrot.lane.b32.xlu0 %v365, 65
      %v514 = vpop.permute.xlu0 %513
      %515 = vrot.lane.b32.xlu0 %v369, 65
      %v516 = vpop.permute.xlu0 %515
      %517 = vrot.lane.b32.xlu0 %v366, 65
      %v518 = vpop.permute.xlu0 %517
      %519 = vrot.lane.b32.xlu0 %v370, 65
      %v520 = vpop.permute.xlu0 %519
      %521 = vrot.lane.b32.xlu0 %v367, 65
      %v522 = vpop.permute.xlu0 %521
      %523 = vrot.lane.b32.xlu0 %v371, 65
      %v524 = vpop.permute.xlu0 %523
      %525 = vrot.lane.b32.xlu0 %v368, 65
      %v526 = vpop.permute.xlu0 %525
      %527 = vrot.lane.b32.xlu0 %v372, 65
      %v528 = vpop.permute.xlu0 %527
      %vm529 = vcmp.lt.s32.totalorder %v390, 65
      %v530 = vsel %vm529, %v522, %v526
      %v531 = vsel %vm529, %v524, %v528
      %v532 = vsel %vm529, %v518, %v522
      %v533 = vsel %vm529, %v520, %v524
      %v534 = vsel %vm529, %v514, %v518
      %v535 = vsel %vm529, %v516, %v520
      %v536 = vsel %vm529, %v526, %v514
      %v537 = vsel %vm529, %v528, %v516
      %v539 = vperm.slane %v348, 0
      %v540 = vperm.slane %v348, 1
      %v541 = vperm.slane %v348, 2
      %v542 = vperm.slane %v348, 3
      %v547 = vmul.f32 %v536, %v539
      %v548 = vmul.f32 %v534, %v540
      %v549 = vmul.f32 %v532, %v541
      %v550 = vmul.f32 %v530, %v542
      %v551 = vmul.f32 %v537, %v539
      %v552 = vmul.f32 %v535, %v540
      %v553 = vmul.f32 %v533, %v541
      %v554 = vmul.f32 %v531, %v542
      %v555 = vpack.c.bf16 %v548, %v547
      %v556 = vpack.c.bf16 %v550, %v549
      %v557 = vpack.c.bf16 %v552, %v551
      %v558 = vpack.c.bf16 %v554, %v553
      %559 = vrot.lane.b32.xlu0 %v365, 64
      %v560 = vpop.permute.xlu0 %559
      %561 = vrot.lane.b32.xlu0 %v369, 64
      %v562 = vpop.permute.xlu0 %561
      %563 = vrot.lane.b32.xlu0 %v366, 64
      %v564 = vpop.permute.xlu0 %563
      %565 = vrot.lane.b32.xlu0 %v370, 64
      %v566 = vpop.permute.xlu0 %565
      %567 = vrot.lane.b32.xlu0 %v367, 64
      %v568 = vpop.permute.xlu0 %567
      %569 = vrot.lane.b32.xlu0 %v371, 64
      %v570 = vpop.permute.xlu0 %569
      %571 = vrot.lane.b32.xlu0 %v368, 64
      %v572 = vpop.permute.xlu0 %571
      %573 = vrot.lane.b32.xlu0 %v372, 64
      %v574 = vpop.permute.xlu0 %573
      %vm575 = vcmp.lt.s32.totalorder %v390, 64
      %v576 = vsel %vm575, %v568, %v572
      %v577 = vsel %vm575, %v570, %v574
      %v578 = vsel %vm575, %v564, %v568
      %v579 = vsel %vm575, %v566, %v570
      %v580 = vsel %vm575, %v560, %v564
      %v581 = vsel %vm575, %v562, %v566
      %v582 = vsel %vm575, %v572, %v560
      %v583 = vsel %vm575, %v574, %v562
      %v585 = vperm.slane %v334, 0
      %v586 = vperm.slane %v334, 1
      %v587 = vperm.slane %v334, 2
      %v588 = vperm.slane %v334, 3
      %v593 = vmul.f32 %v582, %v585
      %v594 = vmul.f32 %v580, %v586
      %v595 = vmul.f32 %v578, %v587
      %v596 = vmul.f32 %v576, %v588
      %v597 = vmul.f32 %v583, %v585
      %v598 = vmul.f32 %v581, %v586
      %v599 = vmul.f32 %v579, %v587
      %v600 = vmul.f32 %v577, %v588
      %v601 = vpack.c.bf16 %v594, %v593
      %v602 = vpack.c.bf16 %v596, %v595
      %v603 = vpack.c.bf16 %v598, %v597
      %v604 = vpack.c.bf16 %v600, %v599
      %605 = vrot.lane.b32.xlu0 %v365, 63
      %v606 = vpop.permute.xlu0 %605
      %607 = vrot.lane.b32.xlu0 %v369, 63
      %v608 = vpop.permute.xlu0 %607
      %609 = vrot.lane.b32.xlu0 %v366, 63
      %v610 = vpop.permute.xlu0 %609
      %611 = vrot.lane.b32.xlu0 %v370, 63
      %v612 = vpop.permute.xlu0 %611
      %613 = vrot.lane.b32.xlu0 %v367, 63
      %v614 = vpop.permute.xlu0 %613
      %615 = vrot.lane.b32.xlu0 %v371, 63
      %v616 = vpop.permute.xlu0 %615
      %617 = vrot.lane.b32.xlu0 %v368, 63
      %v618 = vpop.permute.xlu0 %617
      %619 = vrot.lane.b32.xlu0 %v372, 63
      %v620 = vpop.permute.xlu0 %619
      %vm621 = vcmp.lt.s32.totalorder %v390, 63
      %v622 = vsel %vm621, %v614, %v618
      %v623 = vsel %vm621, %v616, %v620
      %v624 = vsel %vm621, %v610, %v614
      %v625 = vsel %vm621, %v612, %v616
      %v626 = vsel %vm621, %v606, %v610
      %v627 = vsel %vm621, %v608, %v612
      %v628 = vsel %vm621, %v618, %v606
      %v629 = vsel %vm621, %v620, %v608
      %v631 = vperm.slane %v349, 0
      %v632 = vperm.slane %v349, 1
      %v633 = vperm.slane %v349, 2
      %v634 = vperm.slane %v349, 3
      %v639 = vmul.f32 %v628, %v631
      %v640 = vmul.f32 %v626, %v632
      %v641 = vmul.f32 %v624, %v633
      %v642 = vmul.f32 %v622, %v634
      %v643 = vmul.f32 %v629, %v631
      %v644 = vmul.f32 %v627, %v632
      %v645 = vmul.f32 %v625, %v633
      %v646 = vmul.f32 %v623, %v634
      %v647 = vpack.c.bf16 %v640, %v639
      %v648 = vpack.c.bf16 %v642, %v641
      %v649 = vpack.c.bf16 %v644, %v643
      %v650 = vpack.c.bf16 %v646, %v645
      %651 = vrot.lane.b32.xlu0 %v365, 57
      %v652 = vpop.permute.xlu0 %651
      %653 = vrot.lane.b32.xlu0 %v369, 57
      %v654 = vpop.permute.xlu0 %653
      %655 = vrot.lane.b32.xlu0 %v366, 57
      %v656 = vpop.permute.xlu0 %655
      %657 = vrot.lane.b32.xlu0 %v370, 57
      %v658 = vpop.permute.xlu0 %657
      %659 = vrot.lane.b32.xlu0 %v367, 57
      %v660 = vpop.permute.xlu0 %659
      %661 = vrot.lane.b32.xlu0 %v371, 57
      %v662 = vpop.permute.xlu0 %661
      %663 = vrot.lane.b32.xlu0 %v368, 57
      %v664 = vpop.permute.xlu0 %663
      %665 = vrot.lane.b32.xlu0 %v372, 57
      %v666 = vpop.permute.xlu0 %665
      %vm667 = vcmp.lt.s32.totalorder %v390, 57
      %v668 = vsel %vm667, %v660, %v664
      %v669 = vsel %vm667, %v662, %v666
      %v670 = vsel %vm667, %v656, %v660
      %v671 = vsel %vm667, %v658, %v662
      %v672 = vsel %vm667, %v652, %v656
      %v673 = vsel %vm667, %v654, %v658
      %v674 = vsel %vm667, %v664, %v652
      %v675 = vsel %vm667, %v666, %v654
      %v677 = vperm.slane %v351, 0
      %v678 = vperm.slane %v351, 1
      %v679 = vperm.slane %v351, 2
      %v680 = vperm.slane %v351, 3
      %v685 = vmul.f32 %v674, %v677
      %v686 = vmul.f32 %v672, %v678
      %v687 = vmul.f32 %v670, %v679
      %v688 = vmul.f32 %v668, %v680
      %v689 = vmul.f32 %v675, %v677
      %v690 = vmul.f32 %v673, %v678
      %v691 = vmul.f32 %v671, %v679
      %v692 = vmul.f32 %v669, %v680
      %v693 = vpack.c.bf16 %v686, %v685
      %v694 = vpack.c.bf16 %v688, %v687
      %v695 = vpack.c.bf16 %v690, %v689
      %v696 = vpack.c.bf16 %v692, %v691
      %697 = vrot.lane.b32.xlu0 %v365, 56
      %v698 = vpop.permute.xlu0 %697
      %699 = vrot.lane.b32.xlu0 %v369, 56
      %v700 = vpop.permute.xlu0 %699
      %701 = vrot.lane.b32.xlu0 %v366, 56
      %v702 = vpop.permute.xlu0 %701
      %703 = vrot.lane.b32.xlu0 %v370, 56
      %v704 = vpop.permute.xlu0 %703
      %705 = vrot.lane.b32.xlu0 %v367, 56
      %v706 = vpop.permute.xlu0 %705
      %707 = vrot.lane.b32.xlu0 %v371, 56
      %v708 = vpop.permute.xlu0 %707
      %709 = vrot.lane.b32.xlu0 %v368, 56
      %v710 = vpop.permute.xlu0 %709
      %711 = vrot.lane.b32.xlu0 %v372, 56
      %v712 = vpop.permute.xlu0 %711
      %vm713 = vcmp.lt.s32.totalorder %v390, 56
      %v714 = vsel %vm713, %v706, %v710
      %v715 = vsel %vm713, %v708, %v712
      %v716 = vsel %vm713, %v702, %v706
      %v717 = vsel %vm713, %v704, %v708
      %v718 = vsel %vm713, %v698, %v702
      %v719 = vsel %vm713, %v700, %v704
      %v720 = vsel %vm713, %v710, %v698
      %v721 = vsel %vm713, %v712, %v700
      %v723 = vperm.slane %v350, 0
      %v724 = vperm.slane %v350, 1
      %v725 = vperm.slane %v350, 2
      %v726 = vperm.slane %v350, 3
      %v731 = vmul.f32 %v720, %v723
      %v732 = vmul.f32 %v718, %v724
      %v733 = vmul.f32 %v716, %v725
      %v734 = vmul.f32 %v714, %v726
      %v735 = vmul.f32 %v721, %v723
      %v736 = vmul.f32 %v719, %v724
      %v737 = vmul.f32 %v717, %v725
      %v738 = vmul.f32 %v715, %v726
      %v739 = vpack.c.bf16 %v732, %v731
      %v740 = vpack.c.bf16 %v734, %v733
      %v741 = vpack.c.bf16 %v736, %v735
      %v742 = vpack.c.bf16 %v738, %v737
      %743 = vrot.lane.b32.xlu0 %v365, 55
      %v744 = vpop.permute.xlu0 %743
      %745 = vrot.lane.b32.xlu0 %v369, 55
      %v746 = vpop.permute.xlu0 %745
      %747 = vrot.lane.b32.xlu0 %v366, 55
      %v748 = vpop.permute.xlu0 %747
      %749 = vrot.lane.b32.xlu0 %v370, 55
      %v750 = vpop.permute.xlu0 %749
      %751 = vrot.lane.b32.xlu0 %v367, 55
      %v752 = vpop.permute.xlu0 %751
      %753 = vrot.lane.b32.xlu0 %v371, 55
      %v754 = vpop.permute.xlu0 %753
      %755 = vrot.lane.b32.xlu0 %v368, 55
      %v756 = vpop.permute.xlu0 %755
      %757 = vrot.lane.b32.xlu0 %v372, 55
      %v758 = vpop.permute.xlu0 %757
      %vm759 = vcmp.lt.s32.totalorder %v390, 55
      %v760 = vsel %vm759, %v752, %v756
      %v761 = vsel %vm759, %v754, %v758
      %v762 = vsel %vm759, %v748, %v752
      %v763 = vsel %vm759, %v750, %v754
      %v764 = vsel %vm759, %v744, %v748
      %v765 = vsel %vm759, %v746, %v750
      %v766 = vsel %vm759, %v756, %v744
      %v767 = vsel %vm759, %v758, %v746
      %v769 = vperm.slane %v352, 0
      %v770 = vperm.slane %v352, 1
      %v771 = vperm.slane %v352, 2
      %v772 = vperm.slane %v352, 3
      %v777 = vmul.f32 %v766, %v769
      %v778 = vmul.f32 %v764, %v770
      %v779 = vmul.f32 %v762, %v771
      %v780 = vmul.f32 %v760, %v772
      %v781 = vmul.f32 %v767, %v769
      %v782 = vmul.f32 %v765, %v770
      %v783 = vmul.f32 %v763, %v771
      %v784 = vmul.f32 %v761, %v772
      %v785 = vpack.c.bf16 %v778, %v777
      %v786 = vpack.c.bf16 %v780, %v779
      %v787 = vpack.c.bf16 %v782, %v781
      %v788 = vpack.c.bf16 %v784, %v783
      %v793 = vunpack.c.l.b16 %v417
      %v794 = vunpack.c.h.b16 %v417
      %v795 = vunpack.c.l.b16 %v418
      %v796 = vunpack.c.h.b16 %v418
      %v797 = vunpack.c.l.b16 %v419
      %v798 = vunpack.c.h.b16 %v419
      %v799 = vunpack.c.l.b16 %v420
      %v800 = vunpack.c.h.b16 %v420
      %v801 = vpack.c.b16 %v797, %v793
      %v802 = vpack.c.b16 %v798, %v794
      %v803 = vpack.c.b16 %v799, %v795
      %v804 = vpack.c.b16 %v800, %v796
      %v813 = vunpack.c.l.b16 %v463
      %v814 = vunpack.c.h.b16 %v463
      %v815 = vunpack.c.l.b16 %v464
      %v816 = vunpack.c.h.b16 %v464
      %v817 = vunpack.c.l.b16 %v465
      %v818 = vunpack.c.h.b16 %v465
      %v819 = vunpack.c.l.b16 %v466
      %v820 = vunpack.c.h.b16 %v466
      %v821 = vpack.c.b16 %v817, %v813
      %v822 = vpack.c.b16 %v818, %v814
      %v823 = vpack.c.b16 %v819, %v815
      %v824 = vpack.c.b16 %v820, %v816
      %v833 = vunpack.c.l.b16 %v509
      %v834 = vunpack.c.h.b16 %v509
      %v835 = vunpack.c.l.b16 %v510
      %v836 = vunpack.c.h.b16 %v510
      %v837 = vunpack.c.l.b16 %v511
      %v838 = vunpack.c.h.b16 %v511
      %v839 = vunpack.c.l.b16 %v512
      %v840 = vunpack.c.h.b16 %v512
      %v841 = vpack.c.b16 %v837, %v833
      %v842 = vpack.c.b16 %v838, %v834
      %v843 = vpack.c.b16 %v839, %v835
      %v844 = vpack.c.b16 %v840, %v836
      %v853 = vunpack.c.l.b16 %v555
      %v854 = vunpack.c.h.b16 %v555
      %v855 = vunpack.c.l.b16 %v556
      %v856 = vunpack.c.h.b16 %v556
      %v857 = vunpack.c.l.b16 %v557
      %v858 = vunpack.c.h.b16 %v557
      %v859 = vunpack.c.l.b16 %v558
      %v860 = vunpack.c.h.b16 %v558
      %v861 = vpack.c.b16 %v857, %v853
      %v862 = vpack.c.b16 %v858, %v854
      %v863 = vpack.c.b16 %v859, %v855
      %v864 = vpack.c.b16 %v860, %v856
      %v873 = vunpack.c.l.b16 %v601
      %v874 = vunpack.c.h.b16 %v601
      %v875 = vunpack.c.l.b16 %v602
      %v876 = vunpack.c.h.b16 %v602
      %v877 = vunpack.c.l.b16 %v603
      %v878 = vunpack.c.h.b16 %v603
      %v879 = vunpack.c.l.b16 %v604
      %v880 = vunpack.c.h.b16 %v604
      %v881 = vpack.c.b16 %v877, %v873
      %v882 = vpack.c.b16 %v878, %v874
      %v883 = vpack.c.b16 %v879, %v875
      %v884 = vpack.c.b16 %v880, %v876
      %v893 = vunpack.c.l.b16 %v647
      %v894 = vunpack.c.h.b16 %v647
      %v895 = vunpack.c.l.b16 %v648
      %v896 = vunpack.c.h.b16 %v648
      %v897 = vunpack.c.l.b16 %v649
      %v898 = vunpack.c.h.b16 %v649
      %v899 = vunpack.c.l.b16 %v650
      %v900 = vunpack.c.h.b16 %v650
      %v901 = vpack.c.b16 %v897, %v893
      %v902 = vpack.c.b16 %v898, %v894
      %v903 = vpack.c.b16 %v899, %v895
      %v904 = vpack.c.b16 %v900, %v896
      %v913 = vunpack.c.l.b16 %v693
      %v914 = vunpack.c.h.b16 %v693
      %v915 = vunpack.c.l.b16 %v694
      %v916 = vunpack.c.h.b16 %v694
      %v917 = vunpack.c.l.b16 %v695
      %v918 = vunpack.c.h.b16 %v695
      %v919 = vunpack.c.l.b16 %v696
      %v920 = vunpack.c.h.b16 %v696
      %v921 = vpack.c.b16 %v917, %v913
      %v922 = vpack.c.b16 %v918, %v914
      %v923 = vpack.c.b16 %v919, %v915
      %v924 = vpack.c.b16 %v920, %v916
      %v933 = vunpack.c.l.b16 %v739
      %v934 = vunpack.c.h.b16 %v739
      %v935 = vunpack.c.l.b16 %v740
      %v936 = vunpack.c.h.b16 %v740
      %v937 = vunpack.c.l.b16 %v741
      %v938 = vunpack.c.h.b16 %v741
      %v939 = vunpack.c.l.b16 %v742
      %v940 = vunpack.c.h.b16 %v742
      %v941 = vpack.c.b16 %v937, %v933
      %v942 = vpack.c.b16 %v938, %v934
      %v943 = vpack.c.b16 %v939, %v935
      %v944 = vpack.c.b16 %v940, %v936
      %v953 = vunpack.c.l.b16 %v785
      %v954 = vunpack.c.h.b16 %v785
      %v955 = vunpack.c.l.b16 %v786
      %v956 = vunpack.c.h.b16 %v786
      %v957 = vunpack.c.l.b16 %v787
      %v958 = vunpack.c.h.b16 %v787
      %v959 = vunpack.c.l.b16 %v788
      %v960 = vunpack.c.h.b16 %v788
      %v961 = vpack.c.b16 %v957, %v953
      %v962 = vpack.c.b16 %v958, %v954
      %v963 = vpack.c.b16 %v959, %v955
      %v964 = vpack.c.b16 %v960, %v956
      %v969 = vld [vmem:[%s2] sm:$0xff]
      %v970 = vld [vmem:[%s2 + $0x8] sm:$0xff]
      %v971 = vld [vmem:[%s2 + $0x10] sm:$0xff]
      %v972 = vld [vmem:[%s2 + $0x18] sm:$0xff]
      %973 = vrot.lane.b32.xlu0 %v365, 9
      %v974 = vpop.permute.xlu0 %973
      %975 = vrot.lane.b32.xlu0 %v369, 9
      %v976 = vpop.permute.xlu0 %975
      %977 = vrot.lane.b32.xlu0 %v366, 9
      %v978 = vpop.permute.xlu0 %977
      %979 = vrot.lane.b32.xlu0 %v370, 9
      %v980 = vpop.permute.xlu0 %979
      %981 = vrot.lane.b32.xlu0 %v367, 9
      %v982 = vpop.permute.xlu0 %981
      %983 = vrot.lane.b32.xlu0 %v371, 9
      %v984 = vpop.permute.xlu0 %983
      %985 = vrot.lane.b32.xlu0 %v368, 9
      %v986 = vpop.permute.xlu0 %985
      %987 = vrot.lane.b32.xlu0 %v372, 9
      %v988 = vpop.permute.xlu0 %987
      %vm989 = vcmp.lt.s32.totalorder %v390, 9
      %v990 = vsel %vm989, %v982, %v986
      %v991 = vsel %vm989, %v984, %v988
      %v992 = vsel %vm989, %v978, %v982
      %v993 = vsel %vm989, %v980, %v984
      %v994 = vsel %vm989, %v974, %v978
      %v995 = vsel %vm989, %v976, %v980
      %v996 = vsel %vm989, %v986, %v974
      %v997 = vsel %vm989, %v988, %v976
      %v999 = vperm.slane %v353, 0
      %v1000 = vperm.slane %v353, 1
      %v1001 = vperm.slane %v353, 2
      %v1002 = vperm.slane %v353, 3
      %v1007 = vmul.f32 %v996, %v999
      %v1008 = vmul.f32 %v994, %v1000
      %v1009 = vmul.f32 %v992, %v1001
      %v1010 = vmul.f32 %v990, %v1002
      %v1011 = vmul.f32 %v997, %v999
      %v1012 = vmul.f32 %v995, %v1000
      %v1013 = vmul.f32 %v993, %v1001
      %v1014 = vmul.f32 %v991, %v1002
      %v1015 = vpack.c.bf16 %v1008, %v1007
      %v1016 = vpack.c.bf16 %v1010, %v1009
      %v1017 = vpack.c.bf16 %v1012, %v1011
      %v1018 = vpack.c.bf16 %v1014, %v1013
      %1019 = vrot.lane.b32.xlu0 %v365, 8
      %v1020 = vpop.permute.xlu0 %1019
      %1021 = vrot.lane.b32.xlu0 %v369, 8
      %v1022 = vpop.permute.xlu0 %1021
      %1023 = vrot.lane.b32.xlu0 %v366, 8
      %v1024 = vpop.permute.xlu0 %1023
      %1025 = vrot.lane.b32.xlu0 %v370, 8
      %v1026 = vpop.permute.xlu0 %1025
      %1027 = vrot.lane.b32.xlu0 %v367, 8
      %v1028 = vpop.permute.xlu0 %1027
      %1029 = vrot.lane.b32.xlu0 %v371, 8
      %v1030 = vpop.permute.xlu0 %1029
      %1031 = vrot.lane.b32.xlu0 %v368, 8
      %v1032 = vpop.permute.xlu0 %1031
      %1033 = vrot.lane.b32.xlu0 %v372, 8
      %v1034 = vpop.permute.xlu0 %1033
      %vm1035 = vcmp.lt.s32.totalorder %v390, 8
      %v1036 = vsel %vm1035, %v1028, %v1032
      %v1037 = vsel %vm1035, %v1030, %v1034
      %v1038 = vsel %vm1035, %v1024, %v1028
      %v1039 = vsel %vm1035, %v1026, %v1030
      %v1040 = vsel %vm1035, %v1020, %v1024
      %v1041 = vsel %vm1035, %v1022, %v1026
      %v1042 = vsel %vm1035, %v1032, %v1020
      %v1043 = vsel %vm1035, %v1034, %v1022
      %v1045 = vperm.slane %v336, 0
      %v1046 = vperm.slane %v336, 1
      %v1047 = vperm.slane %v336, 2
      %v1048 = vperm.slane %v336, 3
      %v1053 = vmul.f32 %v1042, %v1045
      %v1054 = vmul.f32 %v1040, %v1046
      %v1055 = vmul.f32 %v1038, %v1047
      %v1056 = vmul.f32 %v1036, %v1048
      %v1057 = vmul.f32 %v1043, %v1045
      %v1058 = vmul.f32 %v1041, %v1046
      %v1059 = vmul.f32 %v1039, %v1047
      %v1060 = vmul.f32 %v1037, %v1048
      %v1061 = vpack.c.bf16 %v1054, %v1053
      %v1062 = vpack.c.bf16 %v1056, %v1055
      %v1063 = vpack.c.bf16 %v1058, %v1057
      %v1064 = vpack.c.bf16 %v1060, %v1059
      %1065 = vrot.lane.b32.xlu0 %v365, 7
      %v1066 = vpop.permute.xlu0 %1065
      %1067 = vrot.lane.b32.xlu0 %v369, 7
      %v1068 = vpop.permute.xlu0 %1067
      %1069 = vrot.lane.b32.xlu0 %v366, 7
      %v1070 = vpop.permute.xlu0 %1069
      %1071 = vrot.lane.b32.xlu0 %v370, 7
      %v1072 = vpop.permute.xlu0 %1071
      %1073 = vrot.lane.b32.xlu0 %v367, 7
      %v1074 = vpop.permute.xlu0 %1073
      %1075 = vrot.lane.b32.xlu0 %v371, 7
      %v1076 = vpop.permute.xlu0 %1075
      %1077 = vrot.lane.b32.xlu0 %v368, 7
      %v1078 = vpop.permute.xlu0 %1077
      %1079 = vrot.lane.b32.xlu0 %v372, 7
      %v1080 = vpop.permute.xlu0 %1079
      %vm1081 = vcmp.lt.s32.totalorder %v390, 7
      %v1082 = vsel %vm1081, %v1074, %v1078
      %v1083 = vsel %vm1081, %v1076, %v1080
      %v1084 = vsel %vm1081, %v1070, %v1074
      %v1085 = vsel %vm1081, %v1072, %v1076
      %v1086 = vsel %vm1081, %v1066, %v1070
      %v1087 = vsel %vm1081, %v1068, %v1072
      %v1088 = vsel %vm1081, %v1078, %v1066
      %v1089 = vsel %vm1081, %v1080, %v1068
      %v1091 = vperm.slane %v354, 0
      %v1092 = vperm.slane %v354, 1
      %v1093 = vperm.slane %v354, 2
      %v1094 = vperm.slane %v354, 3
      %v1099 = vmul.f32 %v1088, %v1091
      %v1100 = vmul.f32 %v1086, %v1092
      %v1101 = vmul.f32 %v1084, %v1093
      %v1102 = vmul.f32 %v1082, %v1094
      %v1103 = vmul.f32 %v1089, %v1091
      %v1104 = vmul.f32 %v1087, %v1092
      %v1105 = vmul.f32 %v1085, %v1093
      %v1106 = vmul.f32 %v1083, %v1094
      %v1107 = vpack.c.bf16 %v1100, %v1099
      %v1108 = vpack.c.bf16 %v1102, %v1101
      %v1109 = vpack.c.bf16 %v1104, %v1103
      %v1110 = vpack.c.bf16 %v1106, %v1105
      %1111 = vrot.lane.b32.xlu0 %v365, 1
      %v1112 = vpop.permute.xlu0 %1111
      %1113 = vrot.lane.b32.xlu0 %v369, 1
      %v1114 = vpop.permute.xlu0 %1113
      %1115 = vrot.lane.b32.xlu0 %v366, 1
      %v1116 = vpop.permute.xlu0 %1115
      %1117 = vrot.lane.b32.xlu0 %v370, 1
      %v1118 = vpop.permute.xlu0 %1117
      %1119 = vrot.lane.b32.xlu0 %v367, 1
      %v1120 = vpop.permute.xlu0 %1119
      %1121 = vrot.lane.b32.xlu0 %v371, 1
      %v1122 = vpop.permute.xlu0 %1121
      %1123 = vrot.lane.b32.xlu0 %v368, 1
      %v1124 = vpop.permute.xlu0 %1123
      %1125 = vrot.lane.b32.xlu0 %v372, 1
      %v1126 = vpop.permute.xlu0 %1125
      %vm1127 = vcmp.lt.s32.totalorder %v390, 1
      %v1128 = vsel %vm1127, %v1120, %v1124
      %v1129 = vsel %vm1127, %v1122, %v1126
      %v1130 = vsel %vm1127, %v1116, %v1120
      %v1131 = vsel %vm1127, %v1118, %v1122
      %v1132 = vsel %vm1127, %v1112, %v1116
      %v1133 = vsel %vm1127, %v1114, %v1118
      %v1134 = vsel %vm1127, %v1124, %v1112
      %v1135 = vsel %vm1127, %v1126, %v1114
      %v1137 = vperm.slane %v338, 0
      %v1138 = vperm.slane %v338, 1
      %v1139 = vperm.slane %v338, 2
      %v1140 = vperm.slane %v338, 3
      %v1145 = vmul.f32 %v1134, %v1137
      %v1146 = vmul.f32 %v1132, %v1138
      %v1147 = vmul.f32 %v1130, %v1139
      %v1148 = vmul.f32 %v1128, %v1140
      %v1149 = vmul.f32 %v1135, %v1137
      %v1150 = vmul.f32 %v1133, %v1138
      %v1151 = vmul.f32 %v1131, %v1139
      %v1152 = vmul.f32 %v1129, %v1140
      %v1153 = vpack.c.bf16 %v1146, %v1145
      %v1154 = vpack.c.bf16 %v1148, %v1147
      %v1155 = vpack.c.bf16 %v1150, %v1149
      %v1156 = vpack.c.bf16 %v1152, %v1151
      %v1157 = vpack.c.bf16 %v366, %v365
      %v1158 = vpack.c.bf16 %v368, %v367
      %v1159 = vpack.c.bf16 %v370, %v369
      %v1160 = vpack.c.bf16 %v372, %v371
      %1161 = vrot.lane.b32.xlu0 %v365, 127
      %v1162 = vpop.permute.xlu0 %1161
      %1163 = vrot.lane.b32.xlu0 %v369, 127
      %v1164 = vpop.permute.xlu0 %1163
      %1165 = vrot.lane.b32.xlu0 %v366, 127
      %v1166 = vpop.permute.xlu0 %1165
      %1167 = vrot.lane.b32.xlu0 %v370, 127
      %v1168 = vpop.permute.xlu0 %1167
      %1169 = vrot.lane.b32.xlu0 %v367, 127
      %v1170 = vpop.permute.xlu0 %1169
      %1171 = vrot.lane.b32.xlu0 %v371, 127
      %v1172 = vpop.permute.xlu0 %1171
      %1173 = vrot.lane.b32.xlu0 %v368, 127
      %v1174 = vpop.permute.xlu0 %1173
      %1175 = vrot.lane.b32.xlu0 %v372, 127
      %v1176 = vpop.permute.xlu0 %1175
      %vm1177 = vcmp.lt.s32.totalorder %v390, 127
      %v1178 = vsel %vm1177, %v1170, %v1174
      %v1179 = vsel %vm1177, %v1172, %v1176
      %v1180 = vsel %vm1177, %v1166, %v1170
      %v1181 = vsel %vm1177, %v1168, %v1172
      %v1182 = vsel %vm1177, %v1162, %v1166
      %v1183 = vsel %vm1177, %v1164, %v1168
      %v1184 = vsel %vm1177, %v1174, %v1162
      %v1185 = vsel %vm1177, %v1176, %v1164
      %v1187 = vperm.slane %v344, 0
      %v1188 = vperm.slane %v344, 1
      %v1189 = vperm.slane %v344, 2
      %v1190 = vperm.slane %v344, 3
      %v1195 = vmul.f32 %v1182, %v1187
      %v1196 = vmul.f32 %v1180, %v1188
      %v1197 = vmul.f32 %v1178, %v1189
      %v1198 = vmul.f32 %v1184, %v1190
      %v1199 = vmul.f32 %v1183, %v1187
      %v1200 = vmul.f32 %v1181, %v1188
      %v1201 = vmul.f32 %v1179, %v1189
      %v1202 = vmul.f32 %v1185, %v1190
      %v1203 = vpack.c.bf16 %v1196, %v1195
      %v1204 = vpack.c.bf16 %v1198, %v1197
      %v1205 = vpack.c.bf16 %v1200, %v1199
      %v1206 = vpack.c.bf16 %v1202, %v1201
      %1207 = vrot.lane.b32.xlu0 %v365, 121
      %v1208 = vpop.permute.xlu0 %1207
      %1209 = vrot.lane.b32.xlu0 %v369, 121
      %v1210 = vpop.permute.xlu0 %1209
      %1211 = vrot.lane.b32.xlu0 %v366, 121
      %v1212 = vpop.permute.xlu0 %1211
      %1213 = vrot.lane.b32.xlu0 %v370, 121
      %v1214 = vpop.permute.xlu0 %1213
      %1215 = vrot.lane.b32.xlu0 %v367, 121
      %v1216 = vpop.permute.xlu0 %1215
      %1217 = vrot.lane.b32.xlu0 %v371, 121
      %v1218 = vpop.permute.xlu0 %1217
      %1219 = vrot.lane.b32.xlu0 %v368, 121
      %v1220 = vpop.permute.xlu0 %1219
      %1221 = vrot.lane.b32.xlu0 %v372, 121
      %v1222 = vpop.permute.xlu0 %1221
      %vm1223 = vcmp.lt.s32.totalorder %v390, 121
      %v1224 = vsel %vm1223, %v1216, %v1220
      %v1225 = vsel %vm1223, %v1218, %v1222
      %v1226 = vsel %vm1223, %v1212, %v1216
      %v1227 = vsel %vm1223, %v1214, %v1218
      %v1228 = vsel %vm1223, %v1208, %v1212
      %v1229 = vsel %vm1223, %v1210, %v1214
      %v1230 = vsel %vm1223, %v1220, %v1208
      %v1231 = vsel %vm1223, %v1222, %v1210
      %v1233 = vperm.slane %v355, 0
      %v1234 = vperm.slane %v355, 1
      %v1235 = vperm.slane %v355, 2
      %v1236 = vperm.slane %v355, 3
      %v1241 = vmul.f32 %v1228, %v1233
      %v1242 = vmul.f32 %v1226, %v1234
      %v1243 = vmul.f32 %v1224, %v1235
      %v1244 = vmul.f32 %v1230, %v1236
      %v1245 = vmul.f32 %v1229, %v1233
      %v1246 = vmul.f32 %v1227, %v1234
      %v1247 = vmul.f32 %v1225, %v1235
      %v1248 = vmul.f32 %v1231, %v1236
      %v1249 = vpack.c.bf16 %v1242, %v1241
      %v1250 = vpack.c.bf16 %v1244, %v1243
      %v1251 = vpack.c.bf16 %v1246, %v1245
      %v1252 = vpack.c.bf16 %v1248, %v1247
      %1253 = vrot.lane.b32.xlu0 %v365, 120
      %v1254 = vpop.permute.xlu0 %1253
      %1255 = vrot.lane.b32.xlu0 %v369, 120
      %v1256 = vpop.permute.xlu0 %1255
      %1257 = vrot.lane.b32.xlu0 %v366, 120
      %v1258 = vpop.permute.xlu0 %1257
      %1259 = vrot.lane.b32.xlu0 %v370, 120
      %v1260 = vpop.permute.xlu0 %1259
      %1261 = vrot.lane.b32.xlu0 %v367, 120
      %v1262 = vpop.permute.xlu0 %1261
      %1263 = vrot.lane.b32.xlu0 %v371, 120
      %v1264 = vpop.permute.xlu0 %1263
      %1265 = vrot.lane.b32.xlu0 %v368, 120
      %v1266 = vpop.permute.xlu0 %1265
      %1267 = vrot.lane.b32.xlu0 %v372, 120
      %v1268 = vpop.permute.xlu0 %1267
      %vm1269 = vcmp.lt.s32.totalorder %v390, 120
      %v1270 = vsel %vm1269, %v1262, %v1266
      %v1271 = vsel %vm1269, %v1264, %v1268
      %v1272 = vsel %vm1269, %v1258, %v1262
      %v1273 = vsel %vm1269, %v1260, %v1264
      %v1274 = vsel %vm1269, %v1254, %v1258
      %v1275 = vsel %vm1269, %v1256, %v1260
      %v1276 = vsel %vm1269, %v1266, %v1254
      %v1277 = vsel %vm1269, %v1268, %v1256
      %v1279 = vperm.slane %v342, 0
      %v1280 = vperm.slane %v342, 1
      %v1281 = vperm.slane %v342, 2
      %v1282 = vperm.slane %v342, 3
      %v1287 = vmul.f32 %v1274, %v1279
      %v1288 = vmul.f32 %v1272, %v1280
      %v1289 = vmul.f32 %v1270, %v1281
      %v1290 = vmul.f32 %v1276, %v1282
      %v1291 = vmul.f32 %v1275, %v1279
      %v1292 = vmul.f32 %v1273, %v1280
      %v1293 = vmul.f32 %v1271, %v1281
      %v1294 = vmul.f32 %v1277, %v1282
      %v1295 = vpack.c.bf16 %v1288, %v1287
      %v1296 = vpack.c.bf16 %v1290, %v1289
      %v1297 = vpack.c.bf16 %v1292, %v1291
      %v1298 = vpack.c.bf16 %v1294, %v1293
      %1299 = vrot.lane.b32.xlu0 %v365, 119
      %v1300 = vpop.permute.xlu0 %1299
      %1301 = vrot.lane.b32.xlu0 %v369, 119
      %v1302 = vpop.permute.xlu0 %1301
      %1303 = vrot.lane.b32.xlu0 %v366, 119
      %v1304 = vpop.permute.xlu0 %1303
      %1305 = vrot.lane.b32.xlu0 %v370, 119
      %v1306 = vpop.permute.xlu0 %1305
      %1307 = vrot.lane.b32.xlu0 %v367, 119
      %v1308 = vpop.permute.xlu0 %1307
      %1309 = vrot.lane.b32.xlu0 %v371, 119
      %v1310 = vpop.permute.xlu0 %1309
      %1311 = vrot.lane.b32.xlu0 %v368, 119
      %v1312 = vpop.permute.xlu0 %1311
      %1313 = vrot.lane.b32.xlu0 %v372, 119
      %v1314 = vpop.permute.xlu0 %1313
      %vm1315 = vcmp.lt.s32.totalorder %v390, 119
      %v1316 = vsel %vm1315, %v1308, %v1312
      %v1317 = vsel %vm1315, %v1310, %v1314
      %v1318 = vsel %vm1315, %v1304, %v1308
      %v1319 = vsel %vm1315, %v1306, %v1310
      %v1320 = vsel %vm1315, %v1300, %v1304
      %v1321 = vsel %vm1315, %v1302, %v1306
      %v1322 = vsel %vm1315, %v1312, %v1300
      %v1323 = vsel %vm1315, %v1314, %v1302
      %v1325 = vperm.slane %v356, 0
      %v1326 = vperm.slane %v356, 1
      %v1327 = vperm.slane %v356, 2
      %v1328 = vperm.slane %v356, 3
      %v1333 = vmul.f32 %v1320, %v1325
      %v1334 = vmul.f32 %v1318, %v1326
      %v1335 = vmul.f32 %v1316, %v1327
      %v1336 = vmul.f32 %v1322, %v1328
      %v1337 = vmul.f32 %v1321, %v1325
      %v1338 = vmul.f32 %v1319, %v1326
      %v1339 = vmul.f32 %v1317, %v1327
      %v1340 = vmul.f32 %v1323, %v1328
      %v1341 = vpack.c.bf16 %v1334, %v1333
      %v1342 = vpack.c.bf16 %v1336, %v1335
      %v1343 = vpack.c.bf16 %v1338, %v1337
      %v1344 = vpack.c.bf16 %v1340, %v1339
      %v1349 = vunpack.c.l.b16 %v1015
      %v1350 = vunpack.c.h.b16 %v1015
      %v1351 = vunpack.c.l.b16 %v1016
      %v1352 = vunpack.c.h.b16 %v1016
      %v1353 = vunpack.c.l.b16 %v1017
      %v1354 = vunpack.c.h.b16 %v1017
      %v1355 = vunpack.c.l.b16 %v1018
      %v1356 = vunpack.c.h.b16 %v1018
      %v1357 = vpack.c.b16 %v1353, %v1349
      %v1358 = vpack.c.b16 %v1354, %v1350
      %v1359 = vpack.c.b16 %v1355, %v1351
      %v1360 = vpack.c.b16 %v1356, %v1352
      %v1369 = vunpack.c.l.b16 %v1061
      %v1370 = vunpack.c.h.b16 %v1061
      %v1371 = vunpack.c.l.b16 %v1062
      %v1372 = vunpack.c.h.b16 %v1062
      %v1373 = vunpack.c.l.b16 %v1063
      %v1374 = vunpack.c.h.b16 %v1063
      %v1375 = vunpack.c.l.b16 %v1064
      %v1376 = vunpack.c.h.b16 %v1064
      %v1377 = vpack.c.b16 %v1373, %v1369
      %v1378 = vpack.c.b16 %v1374, %v1370
      %v1379 = vpack.c.b16 %v1375, %v1371
      %v1380 = vpack.c.b16 %v1376, %v1372
      %v1389 = vunpack.c.l.b16 %v1107
      %v1390 = vunpack.c.h.b16 %v1107
      %v1391 = vunpack.c.l.b16 %v1108
      %v1392 = vunpack.c.h.b16 %v1108
      %v1393 = vunpack.c.l.b16 %v1109
      %v1394 = vunpack.c.h.b16 %v1109
      %v1395 = vunpack.c.l.b16 %v1110
      %v1396 = vunpack.c.h.b16 %v1110
      %v1397 = vpack.c.b16 %v1393, %v1389
      %v1398 = vpack.c.b16 %v1394, %v1390
      %v1399 = vpack.c.b16 %v1395, %v1391
      %v1400 = vpack.c.b16 %v1396, %v1392
      %v1409 = vunpack.c.l.b16 %v1153
      %v1410 = vunpack.c.h.b16 %v1153
      %v1411 = vunpack.c.l.b16 %v1154
      %v1412 = vunpack.c.h.b16 %v1154
      %v1413 = vunpack.c.l.b16 %v1155
      %v1414 = vunpack.c.h.b16 %v1155
      %v1415 = vunpack.c.l.b16 %v1156
      %v1416 = vunpack.c.h.b16 %v1156
      %v1417 = vpack.c.b16 %v1413, %v1409
      %v1418 = vpack.c.b16 %v1414, %v1410
      %v1419 = vpack.c.b16 %v1415, %v1411
      %v1420 = vpack.c.b16 %v1416, %v1412
      %v1429 = vunpack.c.l.b16 %v1157
      %v1430 = vunpack.c.h.b16 %v1157
      %v1431 = vunpack.c.l.b16 %v1158
      %v1432 = vunpack.c.h.b16 %v1158
      %v1433 = vunpack.c.l.b16 %v1159
      %v1434 = vunpack.c.h.b16 %v1159
      %v1435 = vunpack.c.l.b16 %v1160
      %v1436 = vunpack.c.h.b16 %v1160
      %v1437 = vpack.c.b16 %v1433, %v1429
      %v1438 = vpack.c.b16 %v1434, %v1430
      %v1439 = vpack.c.b16 %v1435, %v1431
      %v1440 = vpack.c.b16 %v1436, %v1432
      %v1449 = vunpack.c.l.b16 %v1203
      %v1450 = vunpack.c.h.b16 %v1203
      %v1451 = vunpack.c.l.b16 %v1204
      %v1452 = vunpack.c.h.b16 %v1204
      %v1453 = vunpack.c.l.b16 %v1205
      %v1454 = vunpack.c.h.b16 %v1205
      %v1455 = vunpack.c.l.b16 %v1206
      %v1456 = vunpack.c.h.b16 %v1206
      %v1457 = vpack.c.b16 %v1453, %v1449
      %v1458 = vpack.c.b16 %v1454, %v1450
      %v1459 = vpack.c.b16 %v1455, %v1451
      %v1460 = vpack.c.b16 %v1456, %v1452
      %v1469 = vunpack.c.l.b16 %v1249
      %v1470 = vunpack.c.h.b16 %v1249
      %v1471 = vunpack.c.l.b16 %v1250
      %v1472 = vunpack.c.h.b16 %v1250
      %v1473 = vunpack.c.l.b16 %v1251
      %v1474 = vunpack.c.h.b16 %v1251
      %v1475 = vunpack.c.l.b16 %v1252
      %v1476 = vunpack.c.h.b16 %v1252
      %v1477 = vpack.c.b16 %v1473, %v1469
      %v1478 = vpack.c.b16 %v1474, %v1470
      %v1479 = vpack.c.b16 %v1475, %v1471
      %v1480 = vpack.c.b16 %v1476, %v1472
      %v1489 = vunpack.c.l.b16 %v1295
      %v1490 = vunpack.c.h.b16 %v1295
      %v1491 = vunpack.c.l.b16 %v1296
      %v1492 = vunpack.c.h.b16 %v1296
      %v1493 = vunpack.c.l.b16 %v1297
      %v1494 = vunpack.c.h.b16 %v1297
      %v1495 = vunpack.c.l.b16 %v1298
      %v1496 = vunpack.c.h.b16 %v1298
      %v1497 = vpack.c.b16 %v1493, %v1489
      %v1498 = vpack.c.b16 %v1494, %v1490
      %v1499 = vpack.c.b16 %v1495, %v1491
      %v1500 = vpack.c.b16 %v1496, %v1492
      %v1509 = vunpack.c.l.b16 %v1341
      %v1510 = vunpack.c.h.b16 %v1341
      %v1511 = vunpack.c.l.b16 %v1342
      %v1512 = vunpack.c.h.b16 %v1342
      %v1513 = vunpack.c.l.b16 %v1343
      %v1514 = vunpack.c.h.b16 %v1343
      %v1515 = vunpack.c.l.b16 %v1344
      %v1516 = vunpack.c.h.b16 %v1344
      %v1517 = vpack.c.b16 %v1513, %v1509
      %v1518 = vpack.c.b16 %v1514, %v1510
      %v1519 = vpack.c.b16 %v1515, %v1511
      %v1520 = vpack.c.b16 %v1516, %v1512
      %s1525 = scalar_lea.vmem %s2, 32
      %v1526 = vld [vmem:[%s1525] sm:$0xff]
      %v1527 = vld [vmem:[%s1525 + $0x8] sm:$0xff]
      %v1528 = vld [vmem:[%s1525 + $0x10] sm:$0xff]
      %v1529 = vld [vmem:[%s1525 + $0x18] sm:$0xff]
      %v1534 = vunpack.c.l.b16 %v1526
      %v1535 = vunpack.c.h.b16 %v1526
      %v1536 = vunpack.c.l.b16 %v1527
      %v1537 = vunpack.c.h.b16 %v1527
      %v1538 = vunpack.c.l.b16 %v1528
      %v1539 = vunpack.c.h.b16 %v1528
      %v1540 = vunpack.c.l.b16 %v1529
      %v1541 = vunpack.c.h.b16 %v1529
      %v1542 = vpack.c.b16 %v1536, %v1534
      %v1543 = vpack.c.b16 %v1537, %v1535
      %v1544 = vpack.c.b16 %v1540, %v1538
      %v1545 = vpack.c.b16 %v1541, %v1539
      %vm1548 = vcmask 130048
      %v1550 = vsel %vm1548, %v1543, 0
      %v1553 = vsel %vm1548, %v1545, 0
      %1555 = vmatpush.bf16.msra.mxu0 %v1497
      %1556 = vmatpush.bf16.msra.mxu0 %v1477
      %1557 = vmatpush.bf16.msra.mxu0 %v1457
      %1558 = vmatpush.bf16.msra.mxu0 %v1437
      %1559 = vmatpush.bf16.msra.mxu0 %v1417
      %1560 = vmatpush.bf16.msra.mxu0 %v1397
      %1561 = vmatpush.bf16.msra.mxu0 %v1377
      %1562 = vmatpush.bf16.msra.mxu0 %v1357
      %1563 = vmatmul.bf16.gmra.mxu0 %v1542
      %v1564 = vpop.f32.mrf.mxu0
      %v1565 = vadd.f32 0.0, %v1564
      %v1566 = vpop.f32.mrf.mxu0
      %v1567 = vadd.f32 0.0, %v1566
      %1568 = vmatmul.bf16.gmra.mxu0 %v1544
      %v1569 = vpop.f32.mrf.mxu0
      %v1570 = vadd.f32 0.0, %v1569
      %v1571 = vpop.f32.mrf.mxu0
      %v1572 = vadd.f32 0.0, %v1571
      %1573 = vdwg.mxu0
      %1574 = vmatpush.bf16.msra.mxu0 0
      %1575 = vmatpush.bf16.msra.mxu0 0
      %1576 = vmatpush.bf16.msra.mxu0 0
      %1577 = vmatpush.bf16.msra.mxu0 0
      %1578 = vmatpush.bf16.msra.mxu0 0
      %1579 = vmatpush.bf16.msra.mxu0 0
      %1580 = vmatpush.bf16.msra.mxu0 0
      %1581 = vmatpush.bf16.msra.mxu0 %v1517
      %1582 = vmatmul.bf16.gmra.mxu0 %v1550
      %v1583 = vpop.f32.mrf.mxu0
      %v1584 = vadd.f32 %v1565, %v1583
      %v1585 = vpop.f32.mrf.mxu0
      %v1586 = vadd.f32 %v1567, %v1585
      %1587 = vmatmul.bf16.gmra.mxu0 %v1553
      %v1588 = vpop.f32.mrf.mxu0
      %v1589 = vadd.f32 %v1570, %v1588
      %v1590 = vpop.f32.mrf.mxu0
      %v1591 = vadd.f32 %v1572, %v1590
      %1592 = vdwg.mxu0
      %1593 = vmatpush.bf16.msra.mxu0 %v1498
      %1594 = vmatpush.bf16.msra.mxu0 %v1478
      %1595 = vmatpush.bf16.msra.mxu0 %v1458
      %1596 = vmatpush.bf16.msra.mxu0 %v1438
      %1597 = vmatpush.bf16.msra.mxu0 %v1418
      %1598 = vmatpush.bf16.msra.mxu0 %v1398
      %1599 = vmatpush.bf16.msra.mxu0 %v1378
      %1600 = vmatpush.bf16.msra.mxu0 %v1358
      %1601 = vmatmul.bf16.gmra.mxu0 %v1542
      %v1602 = vpop.f32.mrf.mxu0
      %v1603 = vadd.f32 0.0, %v1602
      %v1604 = vpop.f32.mrf.mxu0
      %v1605 = vadd.f32 0.0, %v1604
      %1606 = vmatmul.bf16.gmra.mxu0 %v1544
      %v1607 = vpop.f32.mrf.mxu0
      %v1608 = vadd.f32 0.0, %v1607
      %v1609 = vpop.f32.mrf.mxu0
      %v1610 = vadd.f32 0.0, %v1609
      %1611 = vdwg.mxu0
      %1612 = vmatpush.bf16.msra.mxu0 0
      %1613 = vmatpush.bf16.msra.mxu0 0
      %1614 = vmatpush.bf16.msra.mxu0 0
      %1615 = vmatpush.bf16.msra.mxu0 0
      %1616 = vmatpush.bf16.msra.mxu0 0
      %1617 = vmatpush.bf16.msra.mxu0 0
      %1618 = vmatpush.bf16.msra.mxu0 0
      %1619 = vmatpush.bf16.msra.mxu0 %v1518
      %1620 = vmatmul.bf16.gmra.mxu0 %v1550
      %v1621 = vpop.f32.mrf.mxu0
      %v1622 = vadd.f32 %v1603, %v1621
      %v1623 = vpop.f32.mrf.mxu0
      %v1624 = vadd.f32 %v1605, %v1623
      %1625 = vmatmul.bf16.gmra.mxu0 %v1553
      %v1626 = vpop.f32.mrf.mxu0
      %v1627 = vadd.f32 %v1608, %v1626
      %v1628 = vpop.f32.mrf.mxu0
      %v1629 = vadd.f32 %v1610, %v1628
      %1630 = vdwg.mxu0
      %1631 = vmatpush.bf16.msra.mxu0 %v1499
      %1632 = vmatpush.bf16.msra.mxu0 %v1479
      %1633 = vmatpush.bf16.msra.mxu0 %v1459
      %1634 = vmatpush.bf16.msra.mxu0 %v1439
      %1635 = vmatpush.bf16.msra.mxu0 %v1419
      %1636 = vmatpush.bf16.msra.mxu0 %v1399
      %1637 = vmatpush.bf16.msra.mxu0 %v1379
      %1638 = vmatpush.bf16.msra.mxu0 %v1359
      %1639 = vmatmul.bf16.gmra.mxu0 %v1542
      %v1640 = vpop.f32.mrf.mxu0
      %v1641 = vadd.f32 0.0, %v1640
      %v1642 = vpop.f32.mrf.mxu0
      %v1643 = vadd.f32 0.0, %v1642
      %1644 = vmatmul.bf16.gmra.mxu0 %v1544
      %v1645 = vpop.f32.mrf.mxu0
      %v1646 = vadd.f32 0.0, %v1645
      %v1647 = vpop.f32.mrf.mxu0
      %v1648 = vadd.f32 0.0, %v1647
      %1649 = vdwg.mxu0
      %1650 = vmatpush.bf16.msra.mxu0 0
      %1651 = vmatpush.bf16.msra.mxu0 0
      %1652 = vmatpush.bf16.msra.mxu0 0
      %1653 = vmatpush.bf16.msra.mxu0 0
      %1654 = vmatpush.bf16.msra.mxu0 0
      %1655 = vmatpush.bf16.msra.mxu0 0
      %1656 = vmatpush.bf16.msra.mxu0 0
      %1657 = vmatpush.bf16.msra.mxu0 %v1519
      %1658 = vmatmul.bf16.gmra.mxu0 %v1550
      %v1659 = vpop.f32.mrf.mxu0
      %v1660 = vadd.f32 %v1641, %v1659
      %v1661 = vpop.f32.mrf.mxu0
      %v1662 = vadd.f32 %v1643, %v1661
      %1663 = vmatmul.bf16.gmra.mxu0 %v1553
      %v1664 = vpop.f32.mrf.mxu0
      %v1665 = vadd.f32 %v1646, %v1664
      %v1666 = vpop.f32.mrf.mxu0
      %v1667 = vadd.f32 %v1648, %v1666
      %1668 = vdwg.mxu0
      %1669 = vmatpush.bf16.msra.mxu0 %v1500
      %1670 = vmatpush.bf16.msra.mxu0 %v1480
      %1671 = vmatpush.bf16.msra.mxu0 %v1460
      %1672 = vmatpush.bf16.msra.mxu0 %v1440
      %1673 = vmatpush.bf16.msra.mxu0 %v1420
      %1674 = vmatpush.bf16.msra.mxu0 %v1400
      %1675 = vmatpush.bf16.msra.mxu0 %v1380
      %1676 = vmatpush.bf16.msra.mxu0 %v1360
      %1677 = vmatmul.bf16.gmra.mxu0 %v1542
      %v1678 = vpop.f32.mrf.mxu0
      %v1679 = vadd.f32 0.0, %v1678
      %v1680 = vpop.f32.mrf.mxu0
      %v1681 = vadd.f32 0.0, %v1680
      %1682 = vmatmul.bf16.gmra.mxu0 %v1544
      %v1683 = vpop.f32.mrf.mxu0
      %v1684 = vadd.f32 0.0, %v1683
      %v1685 = vpop.f32.mrf.mxu0
      %v1686 = vadd.f32 0.0, %v1685
      %1687 = vdwg.mxu0
      %1688 = vmatpush.bf16.msra.mxu0 0
      %1689 = vmatpush.bf16.msra.mxu0 0
      %1690 = vmatpush.bf16.msra.mxu0 0
      %1691 = vmatpush.bf16.msra.mxu0 0
      %1692 = vmatpush.bf16.msra.mxu0 0
      %1693 = vmatpush.bf16.msra.mxu0 0
      %1694 = vmatpush.bf16.msra.mxu0 0
      %1695 = vmatpush.bf16.msra.mxu0 %v1520
      %1696 = vmatmul.bf16.gmra.mxu0 %v1550
      %v1697 = vpop.f32.mrf.mxu0
      %v1698 = vadd.f32 %v1679, %v1697
      %v1699 = vpop.f32.mrf.mxu0
      %v1700 = vadd.f32 %v1681, %v1699
      %1701 = vmatmul.bf16.gmra.mxu0 %v1553
      %v1702 = vpop.f32.mrf.mxu0
      %v1703 = vadd.f32 %v1684, %v1702
      %v1704 = vpop.f32.mrf.mxu0
      %v1705 = vadd.f32 %v1686, %v1704
      %1706 = vdwg.mxu0
      %v1711 = vunpack.c.l.b16 %v969
      %v1712 = vunpack.c.h.b16 %v969
      %v1713 = vunpack.c.l.b16 %v970
      %v1714 = vunpack.c.h.b16 %v970
      %v1715 = vunpack.c.l.b16 %v971
      %v1716 = vunpack.c.h.b16 %v971
      %v1717 = vunpack.c.l.b16 %v972
      %v1718 = vunpack.c.h.b16 %v972
      %v1719 = vpack.c.b16 %v1713, %v1711
      %v1720 = vpack.c.b16 %v1714, %v1712
      %v1721 = vpack.c.b16 %v1717, %v1715
      %v1722 = vpack.c.b16 %v1718, %v1716
      %v1726 = vsel %vm1548, %v1720, 0
      %v1729 = vsel %vm1548, %v1722, 0
      %1731 = vmatpush.bf16.msra.mxu0 %v941
      %1732 = vmatpush.bf16.msra.mxu0 %v921
      %1733 = vmatpush.bf16.msra.mxu0 %v901
      %1734 = vmatpush.bf16.msra.mxu0 %v881
      %1735 = vmatpush.bf16.msra.mxu0 %v861
      %1736 = vmatpush.bf16.msra.mxu0 %v841
      %1737 = vmatpush.bf16.msra.mxu0 %v821
      %1738 = vmatpush.bf16.msra.mxu0 %v801
      %1739 = vmatmul.bf16.gmra.mxu0 %v1719
      %v1740 = vpop.f32.mrf.mxu0
      %v1741 = vadd.f32 %v1584, %v1740
      %v1742 = vpop.f32.mrf.mxu0
      %v1743 = vadd.f32 %v1586, %v1742
      %1744 = vmatmul.bf16.gmra.mxu0 %v1721
      %v1745 = vpop.f32.mrf.mxu0
      %v1746 = vadd.f32 %v1589, %v1745
      %v1747 = vpop.f32.mrf.mxu0
      %v1748 = vadd.f32 %v1591, %v1747
      %1749 = vdwg.mxu0
      %1750 = vmatpush.bf16.msra.mxu0 0
      %1751 = vmatpush.bf16.msra.mxu0 0
      %1752 = vmatpush.bf16.msra.mxu0 0
      %1753 = vmatpush.bf16.msra.mxu0 0
      %1754 = vmatpush.bf16.msra.mxu0 0
      %1755 = vmatpush.bf16.msra.mxu0 0
      %1756 = vmatpush.bf16.msra.mxu0 0
      %1757 = vmatpush.bf16.msra.mxu0 %v961
      %1758 = vmatmul.bf16.gmra.mxu0 %v1726
      %v1759 = vpop.f32.mrf.mxu0
      %v1760 = vadd.f32 %v1741, %v1759
      %v1761 = vpop.f32.mrf.mxu0
      %v1762 = vadd.f32 %v1743, %v1761
      %1763 = vmatmul.bf16.gmra.mxu0 %v1729
      %v1764 = vpop.f32.mrf.mxu0
      %v1765 = vadd.f32 %v1746, %v1764
      %v1766 = vpop.f32.mrf.mxu0
      %v1767 = vadd.f32 %v1748, %v1766
      %1768 = vdwg.mxu0
      %1769 = vmatpush.bf16.msra.mxu0 %v942
      %1770 = vmatpush.bf16.msra.mxu0 %v922
      %1771 = vmatpush.bf16.msra.mxu0 %v902
      %1772 = vmatpush.bf16.msra.mxu0 %v882
      %1773 = vmatpush.bf16.msra.mxu0 %v862
      %1774 = vmatpush.bf16.msra.mxu0 %v842
      %1775 = vmatpush.bf16.msra.mxu0 %v822
      %1776 = vmatpush.bf16.msra.mxu0 %v802
      %1777 = vmatmul.bf16.gmra.mxu0 %v1719
      %v1778 = vpop.f32.mrf.mxu0
      %v1779 = vadd.f32 %v1622, %v1778
      %v1780 = vpop.f32.mrf.mxu0
      %v1781 = vadd.f32 %v1624, %v1780
      %1782 = vmatmul.bf16.gmra.mxu0 %v1721
      %v1783 = vpop.f32.mrf.mxu0
      %v1784 = vadd.f32 %v1627, %v1783
      %v1785 = vpop.f32.mrf.mxu0
      %v1786 = vadd.f32 %v1629, %v1785
      %1787 = vdwg.mxu0
      %1788 = vmatpush.bf16.msra.mxu0 0
      %1789 = vmatpush.bf16.msra.mxu0 0
      %1790 = vmatpush.bf16.msra.mxu0 0
      %1791 = vmatpush.bf16.msra.mxu0 0
      %1792 = vmatpush.bf16.msra.mxu0 0
      %1793 = vmatpush.bf16.msra.mxu0 0
      %1794 = vmatpush.bf16.msra.mxu0 0
      %1795 = vmatpush.bf16.msra.mxu0 %v962
      %1796 = vmatmul.bf16.gmra.mxu0 %v1726
      %v1797 = vpop.f32.mrf.mxu0
      %v1798 = vadd.f32 %v1779, %v1797
      %v1799 = vpop.f32.mrf.mxu0
      %v1800 = vadd.f32 %v1781, %v1799
      %1801 = vmatmul.bf16.gmra.mxu0 %v1729
      %v1802 = vpop.f32.mrf.mxu0
      %v1803 = vadd.f32 %v1784, %v1802
      %v1804 = vpop.f32.mrf.mxu0
      %v1805 = vadd.f32 %v1786, %v1804
      %1806 = vdwg.mxu0
      %1807 = vmatpush.bf16.msra.mxu0 %v943
      %1808 = vmatpush.bf16.msra.mxu0 %v923
      %1809 = vmatpush.bf16.msra.mxu0 %v903
      %1810 = vmatpush.bf16.msra.mxu0 %v883
      %1811 = vmatpush.bf16.msra.mxu0 %v863
      %1812 = vmatpush.bf16.msra.mxu0 %v843
      %1813 = vmatpush.bf16.msra.mxu0 %v823
      %1814 = vmatpush.bf16.msra.mxu0 %v803
      %1815 = vmatmul.bf16.gmra.mxu0 %v1719
      %v1816 = vpop.f32.mrf.mxu0
      %v1817 = vadd.f32 %v1660, %v1816
      %v1818 = vpop.f32.mrf.mxu0
      %v1819 = vadd.f32 %v1662, %v1818
      %1820 = vmatmul.bf16.gmra.mxu0 %v1721
      %v1821 = vpop.f32.mrf.mxu0
      %v1822 = vadd.f32 %v1665, %v1821
      %v1823 = vpop.f32.mrf.mxu0
      %v1824 = vadd.f32 %v1667, %v1823
      %1825 = vdwg.mxu0
      %1826 = vmatpush.bf16.msra.mxu0 0
      %1827 = vmatpush.bf16.msra.mxu0 0
      %1828 = vmatpush.bf16.msra.mxu0 0
      %1829 = vmatpush.bf16.msra.mxu0 0
      %1830 = vmatpush.bf16.msra.mxu0 0
      %1831 = vmatpush.bf16.msra.mxu0 0
      %1832 = vmatpush.bf16.msra.mxu0 0
      %1833 = vmatpush.bf16.msra.mxu0 %v963
      %1834 = vmatmul.bf16.gmra.mxu0 %v1726
      %v1835 = vpop.f32.mrf.mxu0
      %v1836 = vadd.f32 %v1817, %v1835
      %v1837 = vpop.f32.mrf.mxu0
      %v1838 = vadd.f32 %v1819, %v1837
      %1839 = vmatmul.bf16.gmra.mxu0 %v1729
      %v1840 = vpop.f32.mrf.mxu0
      %v1841 = vadd.f32 %v1822, %v1840
      %v1842 = vpop.f32.mrf.mxu0
      %v1843 = vadd.f32 %v1824, %v1842
      %1844 = vdwg.mxu0
      %1845 = vmatpush.bf16.msra.mxu0 %v944
      %1846 = vmatpush.bf16.msra.mxu0 %v924
      %1847 = vmatpush.bf16.msra.mxu0 %v904
      %1848 = vmatpush.bf16.msra.mxu0 %v884
      %1849 = vmatpush.bf16.msra.mxu0 %v864
      %1850 = vmatpush.bf16.msra.mxu0 %v844
      %1851 = vmatpush.bf16.msra.mxu0 %v824
      %1852 = vmatpush.bf16.msra.mxu0 %v804
      %1853 = vmatmul.bf16.gmra.mxu0 %v1719
      %v1854 = vpop.f32.mrf.mxu0
      %v1855 = vadd.f32 %v1698, %v1854
      %v1856 = vpop.f32.mrf.mxu0
      %v1857 = vadd.f32 %v1700, %v1856
      %1858 = vmatmul.bf16.gmra.mxu0 %v1721
      %v1859 = vpop.f32.mrf.mxu0
      %v1860 = vadd.f32 %v1703, %v1859
      %v1861 = vpop.f32.mrf.mxu0
      %v1862 = vadd.f32 %v1705, %v1861
      %1863 = vdwg.mxu0
      %1864 = vmatpush.bf16.msra.mxu0 0
      %1865 = vmatpush.bf16.msra.mxu0 0
      %1866 = vmatpush.bf16.msra.mxu0 0
      %1867 = vmatpush.bf16.msra.mxu0 0
      %1868 = vmatpush.bf16.msra.mxu0 0
      %1869 = vmatpush.bf16.msra.mxu0 0
      %1870 = vmatpush.bf16.msra.mxu0 0
      %1871 = vmatpush.bf16.msra.mxu0 %v964
      %1872 = vmatmul.bf16.gmra.mxu0 %v1726
      %v1873 = vpop.f32.mrf.mxu0
      %v1874 = vadd.f32 %v1855, %v1873
      %v1875 = vpop.f32.mrf.mxu0
      %v1876 = vadd.f32 %v1857, %v1875
      %1877 = vmatmul.bf16.gmra.mxu0 %v1729
      %v1878 = vpop.f32.mrf.mxu0
      %v1879 = vadd.f32 %v1860, %v1878
      %v1880 = vpop.f32.mrf.mxu0
      %v1881 = vadd.f32 %v1862, %v1880
      %1882 = vdwg.mxu0
      %v1884 = vperm.slane %v358, 0
      %v1885 = vperm.slane %v358, 1
      %v1886 = vperm.slane %v358, 2
      %v1887 = vperm.slane %v358, 3
      %v1892 = vmul.f32 %v396, %v1884
      %v1893 = vmul.f32 %v394, %v1885
      %v1894 = vmul.f32 %v392, %v1886
      %v1895 = vmul.f32 %v398, %v1887
      %v1896 = vmul.f32 %v397, %v1884
      %v1897 = vmul.f32 %v395, %v1885
      %v1898 = vmul.f32 %v393, %v1886
      %v1899 = vmul.f32 %v399, %v1887
      %v1900 = vpack.c.bf16 %v1893, %v1892
      %v1901 = vpack.c.bf16 %v1895, %v1894
      %v1902 = vpack.c.bf16 %v1897, %v1896
      %v1903 = vpack.c.bf16 %v1899, %v1898
      %v1905 = vperm.slane %v357, 0
      %v1906 = vperm.slane %v357, 1
      %v1907 = vperm.slane %v357, 2
      %v1908 = vperm.slane %v357, 3
      %v1913 = vmul.f32 %v442, %v1905
      %v1914 = vmul.f32 %v440, %v1906
      %v1915 = vmul.f32 %v438, %v1907
      %v1916 = vmul.f32 %v444, %v1908
      %v1917 = vmul.f32 %v443, %v1905
      %v1918 = vmul.f32 %v441, %v1906
      %v1919 = vmul.f32 %v439, %v1907
      %v1920 = vmul.f32 %v445, %v1908
      %v1921 = vpack.c.bf16 %v1914, %v1913
      %v1922 = vpack.c.bf16 %v1916, %v1915
      %v1923 = vpack.c.bf16 %v1918, %v1917
      %v1924 = vpack.c.bf16 %v1920, %v1919
      %v1926 = vperm.slane %v359, 0
      %v1927 = vperm.slane %v359, 1
      %v1928 = vperm.slane %v359, 2
      %v1929 = vperm.slane %v359, 3
      %v1934 = vmul.f32 %v488, %v1926
      %v1935 = vmul.f32 %v486, %v1927
      %v1936 = vmul.f32 %v484, %v1928
      %v1937 = vmul.f32 %v490, %v1929
      %v1938 = vmul.f32 %v489, %v1926
      %v1939 = vmul.f32 %v487, %v1927
      %v1940 = vmul.f32 %v485, %v1928
      %v1941 = vmul.f32 %v491, %v1929
      %v1942 = vpack.c.bf16 %v1935, %v1934
      %v1943 = vpack.c.bf16 %v1937, %v1936
      %v1944 = vpack.c.bf16 %v1939, %v1938
      %v1945 = vpack.c.bf16 %v1941, %v1940
      %v1947 = vperm.slane %v360, 0
      %v1948 = vperm.slane %v360, 1
      %v1949 = vperm.slane %v360, 2
      %v1950 = vperm.slane %v360, 3
      %v1955 = vmul.f32 %v534, %v1947
      %v1956 = vmul.f32 %v532, %v1948
      %v1957 = vmul.f32 %v530, %v1949
      %v1958 = vmul.f32 %v536, %v1950
      %v1959 = vmul.f32 %v535, %v1947
      %v1960 = vmul.f32 %v533, %v1948
      %v1961 = vmul.f32 %v531, %v1949
      %v1962 = vmul.f32 %v537, %v1950
      %v1963 = vpack.c.bf16 %v1956, %v1955
      %v1964 = vpack.c.bf16 %v1958, %v1957
      %v1965 = vpack.c.bf16 %v1960, %v1959
      %v1966 = vpack.c.bf16 %v1962, %v1961
      %v1968 = vperm.slane %v340, 0
      %v1969 = vperm.slane %v340, 1
      %v1970 = vperm.slane %v340, 2
      %v1971 = vperm.slane %v340, 3
      %v1976 = vmul.f32 %v580, %v1968
      %v1977 = vmul.f32 %v578, %v1969
      %v1978 = vmul.f32 %v576, %v1970
      %v1979 = vmul.f32 %v582, %v1971
      %v1980 = vmul.f32 %v581, %v1968
      %v1981 = vmul.f32 %v579, %v1969
      %v1982 = vmul.f32 %v577, %v1970
      %v1983 = vmul.f32 %v583, %v1971
      %v1984 = vpack.c.bf16 %v1977, %v1976
      %v1985 = vpack.c.bf16 %v1979, %v1978
      %v1986 = vpack.c.bf16 %v1981, %v1980
      %v1987 = vpack.c.bf16 %v1983, %v1982
      %v1989 = vperm.slane %v361, 0
      %v1990 = vperm.slane %v361, 1
      %v1991 = vperm.slane %v361, 2
      %v1992 = vperm.slane %v361, 3
      %v1997 = vmul.f32 %v626, %v1989
      %v1998 = vmul.f32 %v624, %v1990
      %v1999 = vmul.f32 %v622, %v1991
      %v2000 = vmul.f32 %v628, %v1992
      %v2001 = vmul.f32 %v627, %v1989
      %v2002 = vmul.f32 %v625, %v1990
      %v2003 = vmul.f32 %v623, %v1991
      %v2004 = vmul.f32 %v629, %v1992
      %v2005 = vpack.c.bf16 %v1998, %v1997
      %v2006 = vpack.c.bf16 %v2000, %v1999
      %v2007 = vpack.c.bf16 %v2002, %v2001
      %v2008 = vpack.c.bf16 %v2004, %v2003
      %v2010 = vperm.slane %v363, 0
      %v2011 = vperm.slane %v363, 1
      %v2012 = vperm.slane %v363, 2
      %v2013 = vperm.slane %v363, 3
      %v2018 = vmul.f32 %v672, %v2010
      %v2019 = vmul.f32 %v670, %v2011
      %v2020 = vmul.f32 %v668, %v2012
      %v2021 = vmul.f32 %v674, %v2013
      %v2022 = vmul.f32 %v673, %v2010
      %v2023 = vmul.f32 %v671, %v2011
      %v2024 = vmul.f32 %v669, %v2012
      %v2025 = vmul.f32 %v675, %v2013
      %v2026 = vpack.c.bf16 %v2019, %v2018
      %v2027 = vpack.c.bf16 %v2021, %v2020
      %v2028 = vpack.c.bf16 %v2023, %v2022
      %v2029 = vpack.c.bf16 %v2025, %v2024
      %v2031 = vperm.slane %v362, 0
      %v2032 = vperm.slane %v362, 1
      %v2033 = vperm.slane %v362, 2
      %v2034 = vperm.slane %v362, 3
      %v2039 = vmul.f32 %v718, %v2031
      %v2040 = vmul.f32 %v716, %v2032
      %v2041 = vmul.f32 %v714, %v2033
      %v2042 = vmul.f32 %v720, %v2034
      %v2043 = vmul.f32 %v719, %v2031
      %v2044 = vmul.f32 %v717, %v2032
      %v2045 = vmul.f32 %v715, %v2033
      %v2046 = vmul.f32 %v721, %v2034
      %v2047 = vpack.c.bf16 %v2040, %v2039
      %v2048 = vpack.c.bf16 %v2042, %v2041
      %v2049 = vpack.c.bf16 %v2044, %v2043
      %v2050 = vpack.c.bf16 %v2046, %v2045
      %v2052 = vperm.slane %v364, 0
      %v2053 = vperm.slane %v364, 1
      %v2054 = vperm.slane %v364, 2
      %v2055 = vperm.slane %v364, 3
      %v2060 = vmul.f32 %v764, %v2052
      %v2061 = vmul.f32 %v762, %v2053
      %v2062 = vmul.f32 %v760, %v2054
      %v2063 = vmul.f32 %v766, %v2055
      %v2064 = vmul.f32 %v765, %v2052
      %v2065 = vmul.f32 %v763, %v2053
      %v2066 = vmul.f32 %v761, %v2054
      %v2067 = vmul.f32 %v767, %v2055
      %v2068 = vpack.c.bf16 %v2061, %v2060
      %v2069 = vpack.c.bf16 %v2063, %v2062
      %v2070 = vpack.c.bf16 %v2065, %v2064
      %v2071 = vpack.c.bf16 %v2067, %v2066
      %v2076 = vunpack.c.l.b16 %v1900
      %v2077 = vunpack.c.h.b16 %v1900
      %v2078 = vunpack.c.l.b16 %v1901
      %v2079 = vunpack.c.h.b16 %v1901
      %v2080 = vunpack.c.l.b16 %v1902
      %v2081 = vunpack.c.h.b16 %v1902
      %v2082 = vunpack.c.l.b16 %v1903
      %v2083 = vunpack.c.h.b16 %v1903
      %v2084 = vpack.c.b16 %v2080, %v2076
      %v2085 = vpack.c.b16 %v2081, %v2077
      %v2086 = vpack.c.b16 %v2082, %v2078
      %v2087 = vpack.c.b16 %v2083, %v2079
      %v2096 = vunpack.c.l.b16 %v1921
      %v2097 = vunpack.c.h.b16 %v1921
      %v2098 = vunpack.c.l.b16 %v1922
      %v2099 = vunpack.c.h.b16 %v1922
      %v2100 = vunpack.c.l.b16 %v1923
      %v2101 = vunpack.c.h.b16 %v1923
      %v2102 = vunpack.c.l.b16 %v1924
      %v2103 = vunpack.c.h.b16 %v1924
      %v2104 = vpack.c.b16 %v2100, %v2096
      %v2105 = vpack.c.b16 %v2101, %v2097
      %v2106 = vpack.c.b16 %v2102, %v2098
      %v2107 = vpack.c.b16 %v2103, %v2099
      %v2116 = vunpack.c.l.b16 %v1942
      %v2117 = vunpack.c.h.b16 %v1942
      %v2118 = vunpack.c.l.b16 %v1943
      %v2119 = vunpack.c.h.b16 %v1943
      %v2120 = vunpack.c.l.b16 %v1944
      %v2121 = vunpack.c.h.b16 %v1944
      %v2122 = vunpack.c.l.b16 %v1945
      %v2123 = vunpack.c.h.b16 %v1945
      %v2124 = vpack.c.b16 %v2120, %v2116
      %v2125 = vpack.c.b16 %v2121, %v2117
      %v2126 = vpack.c.b16 %v2122, %v2118
      %v2127 = vpack.c.b16 %v2123, %v2119
      %v2136 = vunpack.c.l.b16 %v1963
      %v2137 = vunpack.c.h.b16 %v1963
      %v2138 = vunpack.c.l.b16 %v1964
      %v2139 = vunpack.c.h.b16 %v1964
      %v2140 = vunpack.c.l.b16 %v1965
      %v2141 = vunpack.c.h.b16 %v1965
      %v2142 = vunpack.c.l.b16 %v1966
      %v2143 = vunpack.c.h.b16 %v1966
      %v2144 = vpack.c.b16 %v2140, %v2136
      %v2145 = vpack.c.b16 %v2141, %v2137
      %v2146 = vpack.c.b16 %v2142, %v2138
      %v2147 = vpack.c.b16 %v2143, %v2139
      %v2156 = vunpack.c.l.b16 %v1984
      %v2157 = vunpack.c.h.b16 %v1984
      %v2158 = vunpack.c.l.b16 %v1985
      %v2159 = vunpack.c.h.b16 %v1985
      %v2160 = vunpack.c.l.b16 %v1986
      %v2161 = vunpack.c.h.b16 %v1986
      %v2162 = vunpack.c.l.b16 %v1987
      %v2163 = vunpack.c.h.b16 %v1987
      %v2164 = vpack.c.b16 %v2160, %v2156
      %v2165 = vpack.c.b16 %v2161, %v2157
      %v2166 = vpack.c.b16 %v2162, %v2158
      %v2167 = vpack.c.b16 %v2163, %v2159
      %v2176 = vunpack.c.l.b16 %v2005
      %v2177 = vunpack.c.h.b16 %v2005
      %v2178 = vunpack.c.l.b16 %v2006
      %v2179 = vunpack.c.h.b16 %v2006
      %v2180 = vunpack.c.l.b16 %v2007
      %v2181 = vunpack.c.h.b16 %v2007
      %v2182 = vunpack.c.l.b16 %v2008
      %v2183 = vunpack.c.h.b16 %v2008
      %v2184 = vpack.c.b16 %v2180, %v2176
      %v2185 = vpack.c.b16 %v2181, %v2177
      %v2186 = vpack.c.b16 %v2182, %v2178
      %v2187 = vpack.c.b16 %v2183, %v2179
      %v2196 = vunpack.c.l.b16 %v2026
      %v2197 = vunpack.c.h.b16 %v2026
      %v2198 = vunpack.c.l.b16 %v2027
      %v2199 = vunpack.c.h.b16 %v2027
      %v2200 = vunpack.c.l.b16 %v2028
      %v2201 = vunpack.c.h.b16 %v2028
      %v2202 = vunpack.c.l.b16 %v2029
      %v2203 = vunpack.c.h.b16 %v2029
      %v2204 = vpack.c.b16 %v2200, %v2196
      %v2205 = vpack.c.b16 %v2201, %v2197
      %v2206 = vpack.c.b16 %v2202, %v2198
      %v2207 = vpack.c.b16 %v2203, %v2199
      %v2216 = vunpack.c.l.b16 %v2047
      %v2217 = vunpack.c.h.b16 %v2047
      %v2218 = vunpack.c.l.b16 %v2048
      %v2219 = vunpack.c.h.b16 %v2048
      %v2220 = vunpack.c.l.b16 %v2049
      %v2221 = vunpack.c.h.b16 %v2049
      %v2222 = vunpack.c.l.b16 %v2050
      %v2223 = vunpack.c.h.b16 %v2050
      %v2224 = vpack.c.b16 %v2220, %v2216
      %v2225 = vpack.c.b16 %v2221, %v2217
      %v2226 = vpack.c.b16 %v2222, %v2218
      %v2227 = vpack.c.b16 %v2223, %v2219
      %v2236 = vunpack.c.l.b16 %v2068
      %v2237 = vunpack.c.h.b16 %v2068
      %v2238 = vunpack.c.l.b16 %v2069
      %v2239 = vunpack.c.h.b16 %v2069
      %v2240 = vunpack.c.l.b16 %v2070
      %v2241 = vunpack.c.h.b16 %v2070
      %v2242 = vunpack.c.l.b16 %v2071
      %v2243 = vunpack.c.h.b16 %v2071
      %v2244 = vpack.c.b16 %v2240, %v2236
      %v2245 = vpack.c.b16 %v2241, %v2237
      %v2246 = vpack.c.b16 %v2242, %v2238
      %v2247 = vpack.c.b16 %v2243, %v2239
      %s2252 = scalar_lea.vmem %s2, 64
      %v2253 = vld [vmem:[%s2252] sm:$0xff]
      %v2254 = vld [vmem:[%s2252 + $0x8] sm:$0xff]
      %v2255 = vld [vmem:[%s2252 + $0x10] sm:$0xff]
      %v2256 = vld [vmem:[%s2252 + $0x18] sm:$0xff]
      %v2261 = vunpack.c.l.b16 %v2253
      %v2262 = vunpack.c.h.b16 %v2253
      %v2263 = vunpack.c.l.b16 %v2254
      %v2264 = vunpack.c.h.b16 %v2254
      %v2265 = vunpack.c.l.b16 %v2255
      %v2266 = vunpack.c.h.b16 %v2255
      %v2267 = vunpack.c.l.b16 %v2256
      %v2268 = vunpack.c.h.b16 %v2256
      %v2269 = vpack.c.b16 %v2263, %v2261
      %v2270 = vpack.c.b16 %v2264, %v2262
      %v2271 = vpack.c.b16 %v2267, %v2265
      %v2272 = vpack.c.b16 %v2268, %v2266
      %v2276 = vsel %vm1548, %v2270, 0
      %v2279 = vsel %vm1548, %v2272, 0
      %2281 = vmatpush.bf16.msra.mxu0 %v2224
      %2282 = vmatpush.bf16.msra.mxu0 %v2204
      %2283 = vmatpush.bf16.msra.mxu0 %v2184
      %2284 = vmatpush.bf16.msra.mxu0 %v2164
      %2285 = vmatpush.bf16.msra.mxu0 %v2144
      %2286 = vmatpush.bf16.msra.mxu0 %v2124
      %2287 = vmatpush.bf16.msra.mxu0 %v2104
      %2288 = vmatpush.bf16.msra.mxu0 %v2084
      %2289 = vmatmul.bf16.gmra.mxu0 %v2269
      %v2290 = vpop.f32.mrf.mxu0
      %v2291 = vadd.f32 0.0, %v2290
      %v2292 = vpop.f32.mrf.mxu0
      %v2293 = vadd.f32 0.0, %v2292
      %2294 = vmatmul.bf16.gmra.mxu0 %v2271
      %v2295 = vpop.f32.mrf.mxu0
      %v2296 = vadd.f32 0.0, %v2295
      %v2297 = vpop.f32.mrf.mxu0
      %v2298 = vadd.f32 0.0, %v2297
      %2299 = vdwg.mxu0
      %2300 = vmatpush.bf16.msra.mxu0 0
      %2301 = vmatpush.bf16.msra.mxu0 0
      %2302 = vmatpush.bf16.msra.mxu0 0
      %2303 = vmatpush.bf16.msra.mxu0 0
      %2304 = vmatpush.bf16.msra.mxu0 0
      %2305 = vmatpush.bf16.msra.mxu0 0
      %2306 = vmatpush.bf16.msra.mxu0 0
      %2307 = vmatpush.bf16.msra.mxu0 %v2244
      %2308 = vmatmul.bf16.gmra.mxu0 %v2276
      %v2309 = vpop.f32.mrf.mxu0
      %v2310 = vadd.f32 %v2291, %v2309
      %v2311 = vpop.f32.mrf.mxu0
      %v2312 = vadd.f32 %v2293, %v2311
      %2313 = vmatmul.bf16.gmra.mxu0 %v2279
      %v2314 = vpop.f32.mrf.mxu0
      %v2315 = vadd.f32 %v2296, %v2314
      %v2316 = vpop.f32.mrf.mxu0
      %v2317 = vadd.f32 %v2298, %v2316
      %2318 = vdwg.mxu0
      %2319 = vmatpush.bf16.msra.mxu0 %v2225
      %2320 = vmatpush.bf16.msra.mxu0 %v2205
      %2321 = vmatpush.bf16.msra.mxu0 %v2185
      %2322 = vmatpush.bf16.msra.mxu0 %v2165
      %2323 = vmatpush.bf16.msra.mxu0 %v2145
      %2324 = vmatpush.bf16.msra.mxu0 %v2125
      %2325 = vmatpush.bf16.msra.mxu0 %v2105
      %2326 = vmatpush.bf16.msra.mxu0 %v2085
      %2327 = vmatmul.bf16.gmra.mxu0 %v2269
      %v2328 = vpop.f32.mrf.mxu0
      %v2329 = vadd.f32 0.0, %v2328
      %v2330 = vpop.f32.mrf.mxu0
      %v2331 = vadd.f32 0.0, %v2330
      %2332 = vmatmul.bf16.gmra.mxu0 %v2271
      %v2333 = vpop.f32.mrf.mxu0
      %v2334 = vadd.f32 0.0, %v2333
      %v2335 = vpop.f32.mrf.mxu0
      %v2336 = vadd.f32 0.0, %v2335
      %2337 = vdwg.mxu0
      %2338 = vmatpush.bf16.msra.mxu0 0
      %2339 = vmatpush.bf16.msra.mxu0 0
      %2340 = vmatpush.bf16.msra.mxu0 0
      %2341 = vmatpush.bf16.msra.mxu0 0
      %2342 = vmatpush.bf16.msra.mxu0 0
      %2343 = vmatpush.bf16.msra.mxu0 0
      %2344 = vmatpush.bf16.msra.mxu0 0
      %2345 = vmatpush.bf16.msra.mxu0 %v2245
      %2346 = vmatmul.bf16.gmra.mxu0 %v2276
      %v2347 = vpop.f32.mrf.mxu0
      %v2348 = vadd.f32 %v2329, %v2347
      %v2349 = vpop.f32.mrf.mxu0
      %v2350 = vadd.f32 %v2331, %v2349
      %2351 = vmatmul.bf16.gmra.mxu0 %v2279
      %v2352 = vpop.f32.mrf.mxu0
      %v2353 = vadd.f32 %v2334, %v2352
      %v2354 = vpop.f32.mrf.mxu0
      %v2355 = vadd.f32 %v2336, %v2354
      %2356 = vdwg.mxu0
      %2357 = vmatpush.bf16.msra.mxu0 %v2226
      %2358 = vmatpush.bf16.msra.mxu0 %v2206
      %2359 = vmatpush.bf16.msra.mxu0 %v2186
      %2360 = vmatpush.bf16.msra.mxu0 %v2166
      %2361 = vmatpush.bf16.msra.mxu0 %v2146
      %2362 = vmatpush.bf16.msra.mxu0 %v2126
      %2363 = vmatpush.bf16.msra.mxu0 %v2106
      %2364 = vmatpush.bf16.msra.mxu0 %v2086
      %2365 = vmatmul.bf16.gmra.mxu0 %v2269
      %v2366 = vpop.f32.mrf.mxu0
      %v2367 = vadd.f32 0.0, %v2366
      %v2368 = vpop.f32.mrf.mxu0
      %v2369 = vadd.f32 0.0, %v2368
      %2370 = vmatmul.bf16.gmra.mxu0 %v2271
      %v2371 = vpop.f32.mrf.mxu0
      %v2372 = vadd.f32 0.0, %v2371
      %v2373 = vpop.f32.mrf.mxu0
      %v2374 = vadd.f32 0.0, %v2373
      %2375 = vdwg.mxu0
      %2376 = vmatpush.bf16.msra.mxu0 0
      %2377 = vmatpush.bf16.msra.mxu0 0
      %2378 = vmatpush.bf16.msra.mxu0 0
      %2379 = vmatpush.bf16.msra.mxu0 0
      %2380 = vmatpush.bf16.msra.mxu0 0
      %2381 = vmatpush.bf16.msra.mxu0 0
      %2382 = vmatpush.bf16.msra.mxu0 0
      %2383 = vmatpush.bf16.msra.mxu0 %v2246
      %2384 = vmatmul.bf16.gmra.mxu0 %v2276
      %v2385 = vpop.f32.mrf.mxu0
      %v2386 = vadd.f32 %v2367, %v2385
      %v2387 = vpop.f32.mrf.mxu0
      %v2388 = vadd.f32 %v2369, %v2387
      %2389 = vmatmul.bf16.gmra.mxu0 %v2279
      %v2390 = vpop.f32.mrf.mxu0
      %v2391 = vadd.f32 %v2372, %v2390
      %v2392 = vpop.f32.mrf.mxu0
      %v2393 = vadd.f32 %v2374, %v2392
      %2394 = vdwg.mxu0
      %2395 = vmatpush.bf16.msra.mxu0 %v2227
      %2396 = vmatpush.bf16.msra.mxu0 %v2207
      %2397 = vmatpush.bf16.msra.mxu0 %v2187
      %2398 = vmatpush.bf16.msra.mxu0 %v2167
      %2399 = vmatpush.bf16.msra.mxu0 %v2147
      %2400 = vmatpush.bf16.msra.mxu0 %v2127
      %2401 = vmatpush.bf16.msra.mxu0 %v2107
      %2402 = vmatpush.bf16.msra.mxu0 %v2087
      %2403 = vmatmul.bf16.gmra.mxu0 %v2269
      %v2404 = vpop.f32.mrf.mxu0
      %v2405 = vadd.f32 0.0, %v2404
      %v2406 = vpop.f32.mrf.mxu0
      %v2407 = vadd.f32 0.0, %v2406
      %2408 = vmatmul.bf16.gmra.mxu0 %v2271
      %v2409 = vpop.f32.mrf.mxu0
      %v2410 = vadd.f32 0.0, %v2409
      %v2411 = vpop.f32.mrf.mxu0
      %v2412 = vadd.f32 0.0, %v2411
      %2413 = vdwg.mxu0
      %2414 = vmatpush.bf16.msra.mxu0 0
      %2415 = vmatpush.bf16.msra.mxu0 0
      %2416 = vmatpush.bf16.msra.mxu0 0
      %2417 = vmatpush.bf16.msra.mxu0 0
      %2418 = vmatpush.bf16.msra.mxu0 0
      %2419 = vmatpush.bf16.msra.mxu0 0
      %2420 = vmatpush.bf16.msra.mxu0 0
      %2421 = vmatpush.bf16.msra.mxu0 %v2247
      %2422 = vmatmul.bf16.gmra.mxu0 %v2276
      %v2423 = vpop.f32.mrf.mxu0
      %v2424 = vadd.f32 %v2405, %v2423
      %v2425 = vpop.f32.mrf.mxu0
      %v2426 = vadd.f32 %v2407, %v2425
      %2427 = vmatmul.bf16.gmra.mxu0 %v2279
      %v2428 = vpop.f32.mrf.mxu0
      %v2429 = vadd.f32 %v2410, %v2428
      %v2430 = vpop.f32.mrf.mxu0
      %v2431 = vadd.f32 %v2412, %v2430
      %2432 = vdwg.mxu0
      %v2433 = vadd.f32 %v1760, %v2310
      %v2434 = vadd.f32 %v1798, %v2348
      %v2435 = vadd.f32 %v1836, %v2386
      %v2436 = vadd.f32 %v1874, %v2424
      %v2437 = vadd.f32 %v1762, %v2312
      %v2438 = vadd.f32 %v1800, %v2350
      %v2439 = vadd.f32 %v1838, %v2388
      %v2440 = vadd.f32 %v1876, %v2426
      %v2441 = vadd.f32 %v1765, %v2315
      %v2442 = vadd.f32 %v1803, %v2353
      %v2443 = vadd.f32 %v1841, %v2391
      %v2444 = vadd.f32 %v1879, %v2429
      %v2445 = vadd.f32 %v1767, %v2317
      %v2446 = vadd.f32 %v1805, %v2355
      %v2447 = vadd.f32 %v1843, %v2393
      %v2448 = vadd.f32 %v1881, %v2431
      %v2449 = vld [vmem:[%s3] sm:$0xff]
      %v2450 = vld [vmem:[%s3 + $0x8] sm:$0xff]
      %2452 = vset.pattern.permute.xlu0 0
      %2453 = vperm.xlu0 %2452, %v2449
      %v2454 = vpop.permute.xlu0 %2453
      %2457 = vset.pattern.permute.xlu0 0
      %2458 = vperm.xlu0 %2457, %v2450
      %v2459 = vpop.permute.xlu0 %2458
      %v2461 = vmul.f32 %v2433, %v2454
      %v2462 = vmul.f32 %v2434, %v2454
      %v2463 = vmul.f32 %v2435, %v2454
      %v2464 = vmul.f32 %v2436, %v2454
      %v2465 = vmul.f32 %v2437, %v2459
      %v2466 = vmul.f32 %v2438, %v2459
      %v2467 = vmul.f32 %v2439, %v2459
      %v2468 = vmul.f32 %v2440, %v2459
      %v2469 = vld [vmem:[%s4] sm:$0xff]
      %v2470 = vld [vmem:[%s4 + $0x8] sm:$0xff]
      %2472 = vset.pattern.permute.xlu0 0
      %2473 = vperm.xlu0 %2472, %v2469
      %v2474 = vpop.permute.xlu0 %2473
      %2477 = vset.pattern.permute.xlu0 0
      %2478 = vperm.xlu0 %2477, %v2470
      %v2479 = vpop.permute.xlu0 %2478
      %v2481 = vadd.f32 %v2461, %v2474
      %v2482 = vadd.f32 %v2462, %v2474
      %v2483 = vadd.f32 %v2463, %v2474
      %v2484 = vadd.f32 %v2464, %v2474
      %v2485 = vadd.f32 %v2465, %v2479
      %v2486 = vadd.f32 %v2466, %v2479
      %v2487 = vadd.f32 %v2467, %v2479
      %v2488 = vadd.f32 %v2468, %v2479
      %v2489 = vmax.f32 %v2481, 0.0
      %v2490 = vmax.f32 %v2482, 0.0
      %v2491 = vmax.f32 %v2483, 0.0
      %v2492 = vmax.f32 %v2484, 0.0
      %v2493 = vmax.f32 %v2485, 0.0
      %v2494 = vmax.f32 %v2486, 0.0
      %v2495 = vmax.f32 %v2487, 0.0
      %v2496 = vmax.f32 %v2488, 0.0
      %v2497 = vld [vmem:[%s8] sm:$0xff]
      %v2498 = vld [vmem:[%s8 + $0x8] sm:$0xff]
      %2500 = vset.pattern.permute.xlu0 0
      %2501 = vperm.xlu0 %2500, %v2497
      %v2502 = vpop.permute.xlu0 %2501
      %2505 = vset.pattern.permute.xlu0 0
      %2506 = vperm.xlu0 %2505, %v2498
      %v2507 = vpop.permute.xlu0 %2506
      %v2509 = vadd.f32 %v2441, %v2502
      %v2510 = vadd.f32 %v2442, %v2502
      %v2511 = vadd.f32 %v2443, %v2502
      %v2512 = vadd.f32 %v2444, %v2502
      %v2513 = vadd.f32 %v2445, %v2507
      %v2514 = vadd.f32 %v2446, %v2507
      %v2515 = vadd.f32 %v2447, %v2507
      %v2516 = vadd.f32 %v2448, %v2507
      %2517 = vrot.lane.b32.xlu0 %v2489, 73
      %v2518 = vpop.permute.xlu0 %2517
      %2519 = vrot.lane.b32.xlu0 %v2493, 73
      %v2520 = vpop.permute.xlu0 %2519
      %2521 = vrot.lane.b32.xlu0 %v2490, 73
      %v2522 = vpop.permute.xlu0 %2521
      %2523 = vrot.lane.b32.xlu0 %v2494, 73
      %v2524 = vpop.permute.xlu0 %2523
      %2525 = vrot.lane.b32.xlu0 %v2491, 73
      %v2526 = vpop.permute.xlu0 %2525
      %2527 = vrot.lane.b32.xlu0 %v2495, 73
      %v2528 = vpop.permute.xlu0 %2527
      %2529 = vrot.lane.b32.xlu0 %v2492, 73
      %v2530 = vpop.permute.xlu0 %2529
      %2531 = vrot.lane.b32.xlu0 %v2496, 73
      %v2532 = vpop.permute.xlu0 %2531
      %v2533 = vsel %vm391, %v2526, %v2530
      %v2534 = vsel %vm391, %v2528, %v2532
      %v2535 = vsel %vm391, %v2522, %v2526
      %v2536 = vsel %vm391, %v2524, %v2528
      %v2537 = vsel %vm391, %v2518, %v2522
      %v2538 = vsel %vm391, %v2520, %v2524
      %v2539 = vsel %vm391, %v2530, %v2518
      %v2540 = vsel %vm391, %v2532, %v2520
      %v2541 = vmul.f32 %v2539, %v401
      %v2542 = vmul.f32 %v2537, %v402
      %v2543 = vmul.f32 %v2535, %v403
      %v2544 = vmul.f32 %v2533, %v404
      %v2545 = vmul.f32 %v2540, %v401
      %v2546 = vmul.f32 %v2538, %v402
      %v2547 = vmul.f32 %v2536, %v403
      %v2548 = vmul.f32 %v2534, %v404
      %v2549 = vpack.c.bf16 %v2542, %v2541
      %v2550 = vpack.c.bf16 %v2544, %v2543
      %v2551 = vpack.c.bf16 %v2546, %v2545
      %v2552 = vpack.c.bf16 %v2548, %v2547
      %2553 = vrot.lane.b32.xlu0 %v2489, 72
      %v2554 = vpop.permute.xlu0 %2553
      %2555 = vrot.lane.b32.xlu0 %v2493, 72
      %v2556 = vpop.permute.xlu0 %2555
      %2557 = vrot.lane.b32.xlu0 %v2490, 72
      %v2558 = vpop.permute.xlu0 %2557
      %2559 = vrot.lane.b32.xlu0 %v2494, 72
      %v2560 = vpop.permute.xlu0 %2559
      %2561 = vrot.lane.b32.xlu0 %v2491, 72
      %v2562 = vpop.permute.xlu0 %2561
      %2563 = vrot.lane.b32.xlu0 %v2495, 72
      %v2564 = vpop.permute.xlu0 %2563
      %2565 = vrot.lane.b32.xlu0 %v2492, 72
      %v2566 = vpop.permute.xlu0 %2565
      %2567 = vrot.lane.b32.xlu0 %v2496, 72
      %v2568 = vpop.permute.xlu0 %2567
      %v2569 = vsel %vm437, %v2562, %v2566
      %v2570 = vsel %vm437, %v2564, %v2568
      %v2571 = vsel %vm437, %v2558, %v2562
      %v2572 = vsel %vm437, %v2560, %v2564
      %v2573 = vsel %vm437, %v2554, %v2558
      %v2574 = vsel %vm437, %v2556, %v2560
      %v2575 = vsel %vm437, %v2566, %v2554
      %v2576 = vsel %vm437, %v2568, %v2556
      %v2577 = vmul.f32 %v2575, %v447
      %v2578 = vmul.f32 %v2573, %v448
      %v2579 = vmul.f32 %v2571, %v449
      %v2580 = vmul.f32 %v2569, %v450
      %v2581 = vmul.f32 %v2576, %v447
      %v2582 = vmul.f32 %v2574, %v448
      %v2583 = vmul.f32 %v2572, %v449
      %v2584 = vmul.f32 %v2570, %v450
      %v2585 = vpack.c.bf16 %v2578, %v2577
      %v2586 = vpack.c.bf16 %v2580, %v2579
      %v2587 = vpack.c.bf16 %v2582, %v2581
      %v2588 = vpack.c.bf16 %v2584, %v2583
      %2589 = vrot.lane.b32.xlu0 %v2489, 71
      %v2590 = vpop.permute.xlu0 %2589
      %2591 = vrot.lane.b32.xlu0 %v2493, 71
      %v2592 = vpop.permute.xlu0 %2591
      %2593 = vrot.lane.b32.xlu0 %v2490, 71
      %v2594 = vpop.permute.xlu0 %2593
      %2595 = vrot.lane.b32.xlu0 %v2494, 71
      %v2596 = vpop.permute.xlu0 %2595
      %2597 = vrot.lane.b32.xlu0 %v2491, 71
      %v2598 = vpop.permute.xlu0 %2597
      %2599 = vrot.lane.b32.xlu0 %v2495, 71
      %v2600 = vpop.permute.xlu0 %2599
      %2601 = vrot.lane.b32.xlu0 %v2492, 71
      %v2602 = vpop.permute.xlu0 %2601
      %2603 = vrot.lane.b32.xlu0 %v2496, 71
      %v2604 = vpop.permute.xlu0 %2603
      %v2605 = vsel %vm483, %v2598, %v2602
      %v2606 = vsel %vm483, %v2600, %v2604
      %v2607 = vsel %vm483, %v2594, %v2598
      %v2608 = vsel %vm483, %v2596, %v2600
      %v2609 = vsel %vm483, %v2590, %v2594
      %v2610 = vsel %vm483, %v2592, %v2596
      %v2611 = vsel %vm483, %v2602, %v2590
      %v2612 = vsel %vm483, %v2604, %v2592
      %v2613 = vmul.f32 %v2611, %v493
      %v2614 = vmul.f32 %v2609, %v494
      %v2615 = vmul.f32 %v2607, %v495
      %v2616 = vmul.f32 %v2605, %v496
      %v2617 = vmul.f32 %v2612, %v493
      %v2618 = vmul.f32 %v2610, %v494
      %v2619 = vmul.f32 %v2608, %v495
      %v2620 = vmul.f32 %v2606, %v496
      %v2621 = vpack.c.bf16 %v2614, %v2613
      %v2622 = vpack.c.bf16 %v2616, %v2615
      %v2623 = vpack.c.bf16 %v2618, %v2617
      %v2624 = vpack.c.bf16 %v2620, %v2619
      %2625 = vrot.lane.b32.xlu0 %v2489, 65
      %v2626 = vpop.permute.xlu0 %2625
      %2627 = vrot.lane.b32.xlu0 %v2493, 65
      %v2628 = vpop.permute.xlu0 %2627
      %2629 = vrot.lane.b32.xlu0 %v2490, 65
      %v2630 = vpop.permute.xlu0 %2629
      %2631 = vrot.lane.b32.xlu0 %v2494, 65
      %v2632 = vpop.permute.xlu0 %2631
      %2633 = vrot.lane.b32.xlu0 %v2491, 65
      %v2634 = vpop.permute.xlu0 %2633
      %2635 = vrot.lane.b32.xlu0 %v2495, 65
      %v2636 = vpop.permute.xlu0 %2635
      %2637 = vrot.lane.b32.xlu0 %v2492, 65
      %v2638 = vpop.permute.xlu0 %2637
      %2639 = vrot.lane.b32.xlu0 %v2496, 65
      %v2640 = vpop.permute.xlu0 %2639
      %v2641 = vsel %vm529, %v2634, %v2638
      %v2642 = vsel %vm529, %v2636, %v2640
      %v2643 = vsel %vm529, %v2630, %v2634
      %v2644 = vsel %vm529, %v2632, %v2636
      %v2645 = vsel %vm529, %v2626, %v2630
      %v2646 = vsel %vm529, %v2628, %v2632
      %v2647 = vsel %vm529, %v2638, %v2626
      %v2648 = vsel %vm529, %v2640, %v2628
      %v2649 = vmul.f32 %v2647, %v539
      %v2650 = vmul.f32 %v2645, %v540
      %v2651 = vmul.f32 %v2643, %v541
      %v2652 = vmul.f32 %v2641, %v542
      %v2653 = vmul.f32 %v2648, %v539
      %v2654 = vmul.f32 %v2646, %v540
      %v2655 = vmul.f32 %v2644, %v541
      %v2656 = vmul.f32 %v2642, %v542
      %v2657 = vpack.c.bf16 %v2650, %v2649
      %v2658 = vpack.c.bf16 %v2652, %v2651
      %v2659 = vpack.c.bf16 %v2654, %v2653
      %v2660 = vpack.c.bf16 %v2656, %v2655
      %2661 = vrot.lane.b32.xlu0 %v2489, 64
      %v2662 = vpop.permute.xlu0 %2661
      %2663 = vrot.lane.b32.xlu0 %v2493, 64
      %v2664 = vpop.permute.xlu0 %2663
      %2665 = vrot.lane.b32.xlu0 %v2490, 64
      %v2666 = vpop.permute.xlu0 %2665
      %2667 = vrot.lane.b32.xlu0 %v2494, 64
      %v2668 = vpop.permute.xlu0 %2667
      %2669 = vrot.lane.b32.xlu0 %v2491, 64
      %v2670 = vpop.permute.xlu0 %2669
      %2671 = vrot.lane.b32.xlu0 %v2495, 64
      %v2672 = vpop.permute.xlu0 %2671
      %2673 = vrot.lane.b32.xlu0 %v2492, 64
      %v2674 = vpop.permute.xlu0 %2673
      %2675 = vrot.lane.b32.xlu0 %v2496, 64
      %v2676 = vpop.permute.xlu0 %2675
      %v2677 = vsel %vm575, %v2670, %v2674
      %v2678 = vsel %vm575, %v2672, %v2676
      %v2679 = vsel %vm575, %v2666, %v2670
      %v2680 = vsel %vm575, %v2668, %v2672
      %v2681 = vsel %vm575, %v2662, %v2666
      %v2682 = vsel %vm575, %v2664, %v2668
      %v2683 = vsel %vm575, %v2674, %v2662
      %v2684 = vsel %vm575, %v2676, %v2664
      %v2685 = vmul.f32 %v2683, %v585
      %v2686 = vmul.f32 %v2681, %v586
      %v2687 = vmul.f32 %v2679, %v587
      %v2688 = vmul.f32 %v2677, %v588
      %v2689 = vmul.f32 %v2684, %v585
      %v2690 = vmul.f32 %v2682, %v586
      %v2691 = vmul.f32 %v2680, %v587
      %v2692 = vmul.f32 %v2678, %v588
      %v2693 = vpack.c.bf16 %v2686, %v2685
      %v2694 = vpack.c.bf16 %v2688, %v2687
      %v2695 = vpack.c.bf16 %v2690, %v2689
      %v2696 = vpack.c.bf16 %v2692, %v2691
      %2697 = vrot.lane.b32.xlu0 %v2489, 63
      %v2698 = vpop.permute.xlu0 %2697
      %2699 = vrot.lane.b32.xlu0 %v2493, 63
      %v2700 = vpop.permute.xlu0 %2699
      %2701 = vrot.lane.b32.xlu0 %v2490, 63
      %v2702 = vpop.permute.xlu0 %2701
      %2703 = vrot.lane.b32.xlu0 %v2494, 63
      %v2704 = vpop.permute.xlu0 %2703
      %2705 = vrot.lane.b32.xlu0 %v2491, 63
      %v2706 = vpop.permute.xlu0 %2705
      %2707 = vrot.lane.b32.xlu0 %v2495, 63
      %v2708 = vpop.permute.xlu0 %2707
      %2709 = vrot.lane.b32.xlu0 %v2492, 63
      %v2710 = vpop.permute.xlu0 %2709
      %2711 = vrot.lane.b32.xlu0 %v2496, 63
      %v2712 = vpop.permute.xlu0 %2711
      %v2713 = vsel %vm621, %v2706, %v2710
      %v2714 = vsel %vm621, %v2708, %v2712
      %v2715 = vsel %vm621, %v2702, %v2706
      %v2716 = vsel %vm621, %v2704, %v2708
      %v2717 = vsel %vm621, %v2698, %v2702
      %v2718 = vsel %vm621, %v2700, %v2704
      %v2719 = vsel %vm621, %v2710, %v2698
      %v2720 = vsel %vm621, %v2712, %v2700
      %v2721 = vmul.f32 %v2719, %v631
      %v2722 = vmul.f32 %v2717, %v632
      %v2723 = vmul.f32 %v2715, %v633
      %v2724 = vmul.f32 %v2713, %v634
      %v2725 = vmul.f32 %v2720, %v631
      %v2726 = vmul.f32 %v2718, %v632
      %v2727 = vmul.f32 %v2716, %v633
      %v2728 = vmul.f32 %v2714, %v634
      %v2729 = vpack.c.bf16 %v2722, %v2721
      %v2730 = vpack.c.bf16 %v2724, %v2723
      %v2731 = vpack.c.bf16 %v2726, %v2725
      %v2732 = vpack.c.bf16 %v2728, %v2727
      %2733 = vrot.lane.b32.xlu0 %v2489, 57
      %v2734 = vpop.permute.xlu0 %2733
      %2735 = vrot.lane.b32.xlu0 %v2493, 57
      %v2736 = vpop.permute.xlu0 %2735
      %2737 = vrot.lane.b32.xlu0 %v2490, 57
      %v2738 = vpop.permute.xlu0 %2737
      %2739 = vrot.lane.b32.xlu0 %v2494, 57
      %v2740 = vpop.permute.xlu0 %2739
      %2741 = vrot.lane.b32.xlu0 %v2491, 57
      %v2742 = vpop.permute.xlu0 %2741
      %2743 = vrot.lane.b32.xlu0 %v2495, 57
      %v2744 = vpop.permute.xlu0 %2743
      %2745 = vrot.lane.b32.xlu0 %v2492, 57
      %v2746 = vpop.permute.xlu0 %2745
      %2747 = vrot.lane.b32.xlu0 %v2496, 57
      %v2748 = vpop.permute.xlu0 %2747
      %v2749 = vsel %vm667, %v2742, %v2746
      %v2750 = vsel %vm667, %v2744, %v2748
      %v2751 = vsel %vm667, %v2738, %v2742
      %v2752 = vsel %vm667, %v2740, %v2744
      %v2753 = vsel %vm667, %v2734, %v2738
      %v2754 = vsel %vm667, %v2736, %v2740
      %v2755 = vsel %vm667, %v2746, %v2734
      %v2756 = vsel %vm667, %v2748, %v2736
      %v2757 = vmul.f32 %v2755, %v677
      %v2758 = vmul.f32 %v2753, %v678
      %v2759 = vmul.f32 %v2751, %v679
      %v2760 = vmul.f32 %v2749, %v680
      %v2761 = vmul.f32 %v2756, %v677
      %v2762 = vmul.f32 %v2754, %v678
      %v2763 = vmul.f32 %v2752, %v679
      %v2764 = vmul.f32 %v2750, %v680
      %v2765 = vpack.c.bf16 %v2758, %v2757
      %v2766 = vpack.c.bf16 %v2760, %v2759
      %v2767 = vpack.c.bf16 %v2762, %v2761
      %v2768 = vpack.c.bf16 %v2764, %v2763
      %2769 = vrot.lane.b32.xlu0 %v2489, 56
      %v2770 = vpop.permute.xlu0 %2769
      %2771 = vrot.lane.b32.xlu0 %v2493, 56
      %v2772 = vpop.permute.xlu0 %2771
      %2773 = vrot.lane.b32.xlu0 %v2490, 56
      %v2774 = vpop.permute.xlu0 %2773
      %2775 = vrot.lane.b32.xlu0 %v2494, 56
      %v2776 = vpop.permute.xlu0 %2775
      %2777 = vrot.lane.b32.xlu0 %v2491, 56
      %v2778 = vpop.permute.xlu0 %2777
      %2779 = vrot.lane.b32.xlu0 %v2495, 56
      %v2780 = vpop.permute.xlu0 %2779
      %2781 = vrot.lane.b32.xlu0 %v2492, 56
      %v2782 = vpop.permute.xlu0 %2781
      %2783 = vrot.lane.b32.xlu0 %v2496, 56
      %v2784 = vpop.permute.xlu0 %2783
      %v2785 = vsel %vm713, %v2778, %v2782
      %v2786 = vsel %vm713, %v2780, %v2784
      %v2787 = vsel %vm713, %v2774, %v2778
      %v2788 = vsel %vm713, %v2776, %v2780
      %v2789 = vsel %vm713, %v2770, %v2774
      %v2790 = vsel %vm713, %v2772, %v2776
      %v2791 = vsel %vm713, %v2782, %v2770
      %v2792 = vsel %vm713, %v2784, %v2772
      %v2793 = vmul.f32 %v2791, %v723
      %v2794 = vmul.f32 %v2789, %v724
      %v2795 = vmul.f32 %v2787, %v725
      %v2796 = vmul.f32 %v2785, %v726
      %v2797 = vmul.f32 %v2792, %v723
      %v2798 = vmul.f32 %v2790, %v724
      %v2799 = vmul.f32 %v2788, %v725
      %v2800 = vmul.f32 %v2786, %v726
      %v2801 = vpack.c.bf16 %v2794, %v2793
      %v2802 = vpack.c.bf16 %v2796, %v2795
      %v2803 = vpack.c.bf16 %v2798, %v2797
      %v2804 = vpack.c.bf16 %v2800, %v2799
      %2805 = vrot.lane.b32.xlu0 %v2489, 55
      %v2806 = vpop.permute.xlu0 %2805
      %2807 = vrot.lane.b32.xlu0 %v2493, 55
      %v2808 = vpop.permute.xlu0 %2807
      %2809 = vrot.lane.b32.xlu0 %v2490, 55
      %v2810 = vpop.permute.xlu0 %2809
      %2811 = vrot.lane.b32.xlu0 %v2494, 55
      %v2812 = vpop.permute.xlu0 %2811
      %2813 = vrot.lane.b32.xlu0 %v2491, 55
      %v2814 = vpop.permute.xlu0 %2813
      %2815 = vrot.lane.b32.xlu0 %v2495, 55
      %v2816 = vpop.permute.xlu0 %2815
      %2817 = vrot.lane.b32.xlu0 %v2492, 55
      %v2818 = vpop.permute.xlu0 %2817
      %2819 = vrot.lane.b32.xlu0 %v2496, 55
      %v2820 = vpop.permute.xlu0 %2819
      %v2821 = vsel %vm759, %v2814, %v2818
      %v2822 = vsel %vm759, %v2816, %v2820
      %v2823 = vsel %vm759, %v2810, %v2814
      %v2824 = vsel %vm759, %v2812, %v2816
      %v2825 = vsel %vm759, %v2806, %v2810
      %v2826 = vsel %vm759, %v2808, %v2812
      %v2827 = vsel %vm759, %v2818, %v2806
      %v2828 = vsel %vm759, %v2820, %v2808
      %v2829 = vmul.f32 %v2827, %v769
      %v2830 = vmul.f32 %v2825, %v770
      %v2831 = vmul.f32 %v2823, %v771
      %v2832 = vmul.f32 %v2821, %v772
      %v2833 = vmul.f32 %v2828, %v769
      %v2834 = vmul.f32 %v2826, %v770
      %v2835 = vmul.f32 %v2824, %v771
      %v2836 = vmul.f32 %v2822, %v772
      %v2837 = vpack.c.bf16 %v2830, %v2829
      %v2838 = vpack.c.bf16 %v2832, %v2831
      %v2839 = vpack.c.bf16 %v2834, %v2833
      %v2840 = vpack.c.bf16 %v2836, %v2835
      %v2845 = vunpack.c.l.b16 %v2549
      %v2846 = vunpack.c.h.b16 %v2549
      %v2847 = vunpack.c.l.b16 %v2550
      %v2848 = vunpack.c.h.b16 %v2550
      %v2849 = vunpack.c.l.b16 %v2551
      %v2850 = vunpack.c.h.b16 %v2551
      %v2851 = vunpack.c.l.b16 %v2552
      %v2852 = vunpack.c.h.b16 %v2552
      %v2853 = vpack.c.b16 %v2849, %v2845
      %v2854 = vpack.c.b16 %v2850, %v2846
      %v2855 = vpack.c.b16 %v2851, %v2847
      %v2856 = vpack.c.b16 %v2852, %v2848
      %v2865 = vunpack.c.l.b16 %v2585
      %v2866 = vunpack.c.h.b16 %v2585
      %v2867 = vunpack.c.l.b16 %v2586
      %v2868 = vunpack.c.h.b16 %v2586
      %v2869 = vunpack.c.l.b16 %v2587
      %v2870 = vunpack.c.h.b16 %v2587
      %v2871 = vunpack.c.l.b16 %v2588
      %v2872 = vunpack.c.h.b16 %v2588
      %v2873 = vpack.c.b16 %v2869, %v2865
      %v2874 = vpack.c.b16 %v2870, %v2866
      %v2875 = vpack.c.b16 %v2871, %v2867
      %v2876 = vpack.c.b16 %v2872, %v2868
      %v2885 = vunpack.c.l.b16 %v2621
      %v2886 = vunpack.c.h.b16 %v2621
      %v2887 = vunpack.c.l.b16 %v2622
      %v2888 = vunpack.c.h.b16 %v2622
      %v2889 = vunpack.c.l.b16 %v2623
      %v2890 = vunpack.c.h.b16 %v2623
      %v2891 = vunpack.c.l.b16 %v2624
      %v2892 = vunpack.c.h.b16 %v2624
      %v2893 = vpack.c.b16 %v2889, %v2885
      %v2894 = vpack.c.b16 %v2890, %v2886
      %v2895 = vpack.c.b16 %v2891, %v2887
      %v2896 = vpack.c.b16 %v2892, %v2888
      %v2905 = vunpack.c.l.b16 %v2657
      %v2906 = vunpack.c.h.b16 %v2657
      %v2907 = vunpack.c.l.b16 %v2658
      %v2908 = vunpack.c.h.b16 %v2658
      %v2909 = vunpack.c.l.b16 %v2659
      %v2910 = vunpack.c.h.b16 %v2659
      %v2911 = vunpack.c.l.b16 %v2660
      %v2912 = vunpack.c.h.b16 %v2660
      %v2913 = vpack.c.b16 %v2909, %v2905
      %v2914 = vpack.c.b16 %v2910, %v2906
      %v2915 = vpack.c.b16 %v2911, %v2907
      %v2916 = vpack.c.b16 %v2912, %v2908
      %v2925 = vunpack.c.l.b16 %v2693
      %v2926 = vunpack.c.h.b16 %v2693
      %v2927 = vunpack.c.l.b16 %v2694
      %v2928 = vunpack.c.h.b16 %v2694
      %v2929 = vunpack.c.l.b16 %v2695
      %v2930 = vunpack.c.h.b16 %v2695
      %v2931 = vunpack.c.l.b16 %v2696
      %v2932 = vunpack.c.h.b16 %v2696
      %v2933 = vpack.c.b16 %v2929, %v2925
      %v2934 = vpack.c.b16 %v2930, %v2926
      %v2935 = vpack.c.b16 %v2931, %v2927
      %v2936 = vpack.c.b16 %v2932, %v2928
      %v2945 = vunpack.c.l.b16 %v2729
      %v2946 = vunpack.c.h.b16 %v2729
      %v2947 = vunpack.c.l.b16 %v2730
      %v2948 = vunpack.c.h.b16 %v2730
      %v2949 = vunpack.c.l.b16 %v2731
      %v2950 = vunpack.c.h.b16 %v2731
      %v2951 = vunpack.c.l.b16 %v2732
      %v2952 = vunpack.c.h.b16 %v2732
      %v2953 = vpack.c.b16 %v2949, %v2945
      %v2954 = vpack.c.b16 %v2950, %v2946
      %v2955 = vpack.c.b16 %v2951, %v2947
      %v2956 = vpack.c.b16 %v2952, %v2948
      %v2965 = vunpack.c.l.b16 %v2765
      %v2966 = vunpack.c.h.b16 %v2765
      %v2967 = vunpack.c.l.b16 %v2766
      %v2968 = vunpack.c.h.b16 %v2766
      %v2969 = vunpack.c.l.b16 %v2767
      %v2970 = vunpack.c.h.b16 %v2767
      %v2971 = vunpack.c.l.b16 %v2768
      %v2972 = vunpack.c.h.b16 %v2768
      %v2973 = vpack.c.b16 %v2969, %v2965
      %v2974 = vpack.c.b16 %v2970, %v2966
      %v2975 = vpack.c.b16 %v2971, %v2967
      %v2976 = vpack.c.b16 %v2972, %v2968
      %v2985 = vunpack.c.l.b16 %v2801
      %v2986 = vunpack.c.h.b16 %v2801
      %v2987 = vunpack.c.l.b16 %v2802
      %v2988 = vunpack.c.h.b16 %v2802
      %v2989 = vunpack.c.l.b16 %v2803
      %v2990 = vunpack.c.h.b16 %v2803
      %v2991 = vunpack.c.l.b16 %v2804
      %v2992 = vunpack.c.h.b16 %v2804
      %v2993 = vpack.c.b16 %v2989, %v2985
      %v2994 = vpack.c.b16 %v2990, %v2986
      %v2995 = vpack.c.b16 %v2991, %v2987
      %v2996 = vpack.c.b16 %v2992, %v2988
      %v3005 = vunpack.c.l.b16 %v2837
      %v3006 = vunpack.c.h.b16 %v2837
      %v3007 = vunpack.c.l.b16 %v2838
      %v3008 = vunpack.c.h.b16 %v2838
      %v3009 = vunpack.c.l.b16 %v2839
      %v3010 = vunpack.c.h.b16 %v2839
      %v3011 = vunpack.c.l.b16 %v2840
      %v3012 = vunpack.c.h.b16 %v2840
      %v3013 = vpack.c.b16 %v3009, %v3005
      %v3014 = vpack.c.b16 %v3010, %v3006
      %v3015 = vpack.c.b16 %v3011, %v3007
      %v3016 = vpack.c.b16 %v3012, %v3008
      %v3021 = vld [vmem:[%s5] sm:$0xff]
      %v3022 = vld [vmem:[%s5 + $0x8] sm:$0xff]
      %3023 = vrot.lane.b32.xlu0 %v2489, 9
      %v3024 = vpop.permute.xlu0 %3023
      %3025 = vrot.lane.b32.xlu0 %v2493, 9
      %v3026 = vpop.permute.xlu0 %3025
      %3027 = vrot.lane.b32.xlu0 %v2490, 9
      %v3028 = vpop.permute.xlu0 %3027
      %3029 = vrot.lane.b32.xlu0 %v2494, 9
      %v3030 = vpop.permute.xlu0 %3029
      %3031 = vrot.lane.b32.xlu0 %v2491, 9
      %v3032 = vpop.permute.xlu0 %3031
      %3033 = vrot.lane.b32.xlu0 %v2495, 9
      %v3034 = vpop.permute.xlu0 %3033
      %3035 = vrot.lane.b32.xlu0 %v2492, 9
      %v3036 = vpop.permute.xlu0 %3035
      %3037 = vrot.lane.b32.xlu0 %v2496, 9
      %v3038 = vpop.permute.xlu0 %3037
      %v3039 = vsel %vm989, %v3032, %v3036
      %v3040 = vsel %vm989, %v3034, %v3038
      %v3041 = vsel %vm989, %v3028, %v3032
      %v3042 = vsel %vm989, %v3030, %v3034
      %v3043 = vsel %vm989, %v3024, %v3028
      %v3044 = vsel %vm989, %v3026, %v3030
      %v3045 = vsel %vm989, %v3036, %v3024
      %v3046 = vsel %vm989, %v3038, %v3026
      %v3047 = vmul.f32 %v3045, %v999
      %v3048 = vmul.f32 %v3043, %v1000
      %v3049 = vmul.f32 %v3041, %v1001
      %v3050 = vmul.f32 %v3039, %v1002
      %v3051 = vmul.f32 %v3046, %v999
      %v3052 = vmul.f32 %v3044, %v1000
      %v3053 = vmul.f32 %v3042, %v1001
      %v3054 = vmul.f32 %v3040, %v1002
      %v3055 = vpack.c.bf16 %v3048, %v3047
      %v3056 = vpack.c.bf16 %v3050, %v3049
      %v3057 = vpack.c.bf16 %v3052, %v3051
      %v3058 = vpack.c.bf16 %v3054, %v3053
      %3059 = vrot.lane.b32.xlu0 %v2489, 8
      %v3060 = vpop.permute.xlu0 %3059
      %3061 = vrot.lane.b32.xlu0 %v2493, 8
      %v3062 = vpop.permute.xlu0 %3061
      %3063 = vrot.lane.b32.xlu0 %v2490, 8
      %v3064 = vpop.permute.xlu0 %3063
      %3065 = vrot.lane.b32.xlu0 %v2494, 8
      %v3066 = vpop.permute.xlu0 %3065
      %3067 = vrot.lane.b32.xlu0 %v2491, 8
      %v3068 = vpop.permute.xlu0 %3067
      %3069 = vrot.lane.b32.xlu0 %v2495, 8
      %v3070 = vpop.permute.xlu0 %3069
      %3071 = vrot.lane.b32.xlu0 %v2492, 8
      %v3072 = vpop.permute.xlu0 %3071
      %3073 = vrot.lane.b32.xlu0 %v2496, 8
      %v3074 = vpop.permute.xlu0 %3073
      %v3075 = vsel %vm1035, %v3068, %v3072
      %v3076 = vsel %vm1035, %v3070, %v3074
      %v3077 = vsel %vm1035, %v3064, %v3068
      %v3078 = vsel %vm1035, %v3066, %v3070
      %v3079 = vsel %vm1035, %v3060, %v3064
      %v3080 = vsel %vm1035, %v3062, %v3066
      %v3081 = vsel %vm1035, %v3072, %v3060
      %v3082 = vsel %vm1035, %v3074, %v3062
      %v3083 = vmul.f32 %v3081, %v1045
      %v3084 = vmul.f32 %v3079, %v1046
      %v3085 = vmul.f32 %v3077, %v1047
      %v3086 = vmul.f32 %v3075, %v1048
      %v3087 = vmul.f32 %v3082, %v1045
      %v3088 = vmul.f32 %v3080, %v1046
      %v3089 = vmul.f32 %v3078, %v1047
      %v3090 = vmul.f32 %v3076, %v1048
      %v3091 = vpack.c.bf16 %v3084, %v3083
      %v3092 = vpack.c.bf16 %v3086, %v3085
      %v3093 = vpack.c.bf16 %v3088, %v3087
      %v3094 = vpack.c.bf16 %v3090, %v3089
      %3095 = vrot.lane.b32.xlu0 %v2489, 7
      %v3096 = vpop.permute.xlu0 %3095
      %3097 = vrot.lane.b32.xlu0 %v2493, 7
      %v3098 = vpop.permute.xlu0 %3097
      %3099 = vrot.lane.b32.xlu0 %v2490, 7
      %v3100 = vpop.permute.xlu0 %3099
      %3101 = vrot.lane.b32.xlu0 %v2494, 7
      %v3102 = vpop.permute.xlu0 %3101
      %3103 = vrot.lane.b32.xlu0 %v2491, 7
      %v3104 = vpop.permute.xlu0 %3103
      %3105 = vrot.lane.b32.xlu0 %v2495, 7
      %v3106 = vpop.permute.xlu0 %3105
      %3107 = vrot.lane.b32.xlu0 %v2492, 7
      %v3108 = vpop.permute.xlu0 %3107
      %3109 = vrot.lane.b32.xlu0 %v2496, 7
      %v3110 = vpop.permute.xlu0 %3109
      %v3111 = vsel %vm1081, %v3104, %v3108
      %v3112 = vsel %vm1081, %v3106, %v3110
      %v3113 = vsel %vm1081, %v3100, %v3104
      %v3114 = vsel %vm1081, %v3102, %v3106
      %v3115 = vsel %vm1081, %v3096, %v3100
      %v3116 = vsel %vm1081, %v3098, %v3102
      %v3117 = vsel %vm1081, %v3108, %v3096
      %v3118 = vsel %vm1081, %v3110, %v3098
      %v3119 = vmul.f32 %v3117, %v1091
      %v3120 = vmul.f32 %v3115, %v1092
      %v3121 = vmul.f32 %v3113, %v1093
      %v3122 = vmul.f32 %v3111, %v1094
      %v3123 = vmul.f32 %v3118, %v1091
      %v3124 = vmul.f32 %v3116, %v1092
      %v3125 = vmul.f32 %v3114, %v1093
      %v3126 = vmul.f32 %v3112, %v1094
      %v3127 = vpack.c.bf16 %v3120, %v3119
      %v3128 = vpack.c.bf16 %v3122, %v3121
      %v3129 = vpack.c.bf16 %v3124, %v3123
      %v3130 = vpack.c.bf16 %v3126, %v3125
      %3131 = vrot.lane.b32.xlu0 %v2489, 1
      %v3132 = vpop.permute.xlu0 %3131
      %3133 = vrot.lane.b32.xlu0 %v2493, 1
      %v3134 = vpop.permute.xlu0 %3133
      %3135 = vrot.lane.b32.xlu0 %v2490, 1
      %v3136 = vpop.permute.xlu0 %3135
      %3137 = vrot.lane.b32.xlu0 %v2494, 1
      %v3138 = vpop.permute.xlu0 %3137
      %3139 = vrot.lane.b32.xlu0 %v2491, 1
      %v3140 = vpop.permute.xlu0 %3139
      %3141 = vrot.lane.b32.xlu0 %v2495, 1
      %v3142 = vpop.permute.xlu0 %3141
      %3143 = vrot.lane.b32.xlu0 %v2492, 1
      %v3144 = vpop.permute.xlu0 %3143
      %3145 = vrot.lane.b32.xlu0 %v2496, 1
      %v3146 = vpop.permute.xlu0 %3145
      %v3147 = vsel %vm1127, %v3140, %v3144
      %v3148 = vsel %vm1127, %v3142, %v3146
      %v3149 = vsel %vm1127, %v3136, %v3140
      %v3150 = vsel %vm1127, %v3138, %v3142
      %v3151 = vsel %vm1127, %v3132, %v3136
      %v3152 = vsel %vm1127, %v3134, %v3138
      %v3153 = vsel %vm1127, %v3144, %v3132
      %v3154 = vsel %vm1127, %v3146, %v3134
      %v3155 = vmul.f32 %v3153, %v1137
      %v3156 = vmul.f32 %v3151, %v1138
      %v3157 = vmul.f32 %v3149, %v1139
      %v3158 = vmul.f32 %v3147, %v1140
      %v3159 = vmul.f32 %v3154, %v1137
      %v3160 = vmul.f32 %v3152, %v1138
      %v3161 = vmul.f32 %v3150, %v1139
      %v3162 = vmul.f32 %v3148, %v1140
      %v3163 = vpack.c.bf16 %v3156, %v3155
      %v3164 = vpack.c.bf16 %v3158, %v3157
      %v3165 = vpack.c.bf16 %v3160, %v3159
      %v3166 = vpack.c.bf16 %v3162, %v3161
      %v3167 = vpack.c.bf16 %v2490, %v2489
      %v3168 = vpack.c.bf16 %v2492, %v2491
      %v3169 = vpack.c.bf16 %v2494, %v2493
      %v3170 = vpack.c.bf16 %v2496, %v2495
      %3171 = vrot.lane.b32.xlu0 %v2489, 127
      %v3172 = vpop.permute.xlu0 %3171
      %3173 = vrot.lane.b32.xlu0 %v2493, 127
      %v3174 = vpop.permute.xlu0 %3173
      %3175 = vrot.lane.b32.xlu0 %v2490, 127
      %v3176 = vpop.permute.xlu0 %3175
      %3177 = vrot.lane.b32.xlu0 %v2494, 127
      %v3178 = vpop.permute.xlu0 %3177
      %3179 = vrot.lane.b32.xlu0 %v2491, 127
      %v3180 = vpop.permute.xlu0 %3179
      %3181 = vrot.lane.b32.xlu0 %v2495, 127
      %v3182 = vpop.permute.xlu0 %3181
      %3183 = vrot.lane.b32.xlu0 %v2492, 127
      %v3184 = vpop.permute.xlu0 %3183
      %3185 = vrot.lane.b32.xlu0 %v2496, 127
      %v3186 = vpop.permute.xlu0 %3185
      %v3187 = vsel %vm1177, %v3180, %v3184
      %v3188 = vsel %vm1177, %v3182, %v3186
      %v3189 = vsel %vm1177, %v3176, %v3180
      %v3190 = vsel %vm1177, %v3178, %v3182
      %v3191 = vsel %vm1177, %v3172, %v3176
      %v3192 = vsel %vm1177, %v3174, %v3178
      %v3193 = vsel %vm1177, %v3184, %v3172
      %v3194 = vsel %vm1177, %v3186, %v3174
      %v3195 = vmul.f32 %v3191, %v1187
      %v3196 = vmul.f32 %v3189, %v1188
      %v3197 = vmul.f32 %v3187, %v1189
      %v3198 = vmul.f32 %v3193, %v1190
      %v3199 = vmul.f32 %v3192, %v1187
      %v3200 = vmul.f32 %v3190, %v1188
      %v3201 = vmul.f32 %v3188, %v1189
      %v3202 = vmul.f32 %v3194, %v1190
      %v3203 = vpack.c.bf16 %v3196, %v3195
      %v3204 = vpack.c.bf16 %v3198, %v3197
      %v3205 = vpack.c.bf16 %v3200, %v3199
      %v3206 = vpack.c.bf16 %v3202, %v3201
      %3207 = vrot.lane.b32.xlu0 %v2489, 121
      %v3208 = vpop.permute.xlu0 %3207
      %3209 = vrot.lane.b32.xlu0 %v2493, 121
      %v3210 = vpop.permute.xlu0 %3209
      %3211 = vrot.lane.b32.xlu0 %v2490, 121
      %v3212 = vpop.permute.xlu0 %3211
      %3213 = vrot.lane.b32.xlu0 %v2494, 121
      %v3214 = vpop.permute.xlu0 %3213
      %3215 = vrot.lane.b32.xlu0 %v2491, 121
      %v3216 = vpop.permute.xlu0 %3215
      %3217 = vrot.lane.b32.xlu0 %v2495, 121
      %v3218 = vpop.permute.xlu0 %3217
      %3219 = vrot.lane.b32.xlu0 %v2492, 121
      %v3220 = vpop.permute.xlu0 %3219
      %3221 = vrot.lane.b32.xlu0 %v2496, 121
      %v3222 = vpop.permute.xlu0 %3221
      %v3223 = vsel %vm1223, %v3216, %v3220
      %v3224 = vsel %vm1223, %v3218, %v3222
      %v3225 = vsel %vm1223, %v3212, %v3216
      %v3226 = vsel %vm1223, %v3214, %v3218
      %v3227 = vsel %vm1223, %v3208, %v3212
      %v3228 = vsel %vm1223, %v3210, %v3214
      %v3229 = vsel %vm1223, %v3220, %v3208
      %v3230 = vsel %vm1223, %v3222, %v3210
      %v3231 = vmul.f32 %v3227, %v1233
      %v3232 = vmul.f32 %v3225, %v1234
      %v3233 = vmul.f32 %v3223, %v1235
      %v3234 = vmul.f32 %v3229, %v1236
      %v3235 = vmul.f32 %v3228, %v1233
      %v3236 = vmul.f32 %v3226, %v1234
      %v3237 = vmul.f32 %v3224, %v1235
      %v3238 = vmul.f32 %v3230, %v1236
      %v3239 = vpack.c.bf16 %v3232, %v3231
      %v3240 = vpack.c.bf16 %v3234, %v3233
      %v3241 = vpack.c.bf16 %v3236, %v3235
      %v3242 = vpack.c.bf16 %v3238, %v3237
      %3243 = vrot.lane.b32.xlu0 %v2489, 120
      %v3244 = vpop.permute.xlu0 %3243
      %3245 = vrot.lane.b32.xlu0 %v2493, 120
      %v3246 = vpop.permute.xlu0 %3245
      %3247 = vrot.lane.b32.xlu0 %v2490, 120
      %v3248 = vpop.permute.xlu0 %3247
      %3249 = vrot.lane.b32.xlu0 %v2494, 120
      %v3250 = vpop.permute.xlu0 %3249
      %3251 = vrot.lane.b32.xlu0 %v2491, 120
      %v3252 = vpop.permute.xlu0 %3251
      %3253 = vrot.lane.b32.xlu0 %v2495, 120
      %v3254 = vpop.permute.xlu0 %3253
      %3255 = vrot.lane.b32.xlu0 %v2492, 120
      %v3256 = vpop.permute.xlu0 %3255
      %3257 = vrot.lane.b32.xlu0 %v2496, 120
      %v3258 = vpop.permute.xlu0 %3257
      %v3259 = vsel %vm1269, %v3252, %v3256
      %v3260 = vsel %vm1269, %v3254, %v3258
      %v3261 = vsel %vm1269, %v3248, %v3252
      %v3262 = vsel %vm1269, %v3250, %v3254
      %v3263 = vsel %vm1269, %v3244, %v3248
      %v3264 = vsel %vm1269, %v3246, %v3250
      %v3265 = vsel %vm1269, %v3256, %v3244
      %v3266 = vsel %vm1269, %v3258, %v3246
      %v3267 = vmul.f32 %v3263, %v1279
      %v3268 = vmul.f32 %v3261, %v1280
      %v3269 = vmul.f32 %v3259, %v1281
      %v3270 = vmul.f32 %v3265, %v1282
      %v3271 = vmul.f32 %v3264, %v1279
      %v3272 = vmul.f32 %v3262, %v1280
      %v3273 = vmul.f32 %v3260, %v1281
      %v3274 = vmul.f32 %v3266, %v1282
      %v3275 = vpack.c.bf16 %v3268, %v3267
      %v3276 = vpack.c.bf16 %v3270, %v3269
      %v3277 = vpack.c.bf16 %v3272, %v3271
      %v3278 = vpack.c.bf16 %v3274, %v3273
      %3279 = vrot.lane.b32.xlu0 %v2489, 119
      %v3280 = vpop.permute.xlu0 %3279
      %3281 = vrot.lane.b32.xlu0 %v2493, 119
      %v3282 = vpop.permute.xlu0 %3281
      %3283 = vrot.lane.b32.xlu0 %v2490, 119
      %v3284 = vpop.permute.xlu0 %3283
      %3285 = vrot.lane.b32.xlu0 %v2494, 119
      %v3286 = vpop.permute.xlu0 %3285
      %3287 = vrot.lane.b32.xlu0 %v2491, 119
      %v3288 = vpop.permute.xlu0 %3287
      %3289 = vrot.lane.b32.xlu0 %v2495, 119
      %v3290 = vpop.permute.xlu0 %3289
      %3291 = vrot.lane.b32.xlu0 %v2492, 119
      %v3292 = vpop.permute.xlu0 %3291
      %3293 = vrot.lane.b32.xlu0 %v2496, 119
      %v3294 = vpop.permute.xlu0 %3293
      %v3295 = vsel %vm1315, %v3288, %v3292
      %v3296 = vsel %vm1315, %v3290, %v3294
      %v3297 = vsel %vm1315, %v3284, %v3288
      %v3298 = vsel %vm1315, %v3286, %v3290
      %v3299 = vsel %vm1315, %v3280, %v3284
      %v3300 = vsel %vm1315, %v3282, %v3286
      %v3301 = vsel %vm1315, %v3292, %v3280
      %v3302 = vsel %vm1315, %v3294, %v3282
      %v3303 = vmul.f32 %v3299, %v1325
      %v3304 = vmul.f32 %v3297, %v1326
      %v3305 = vmul.f32 %v3295, %v1327
      %v3306 = vmul.f32 %v3301, %v1328
      %v3307 = vmul.f32 %v3300, %v1325
      %v3308 = vmul.f32 %v3298, %v1326
      %v3309 = vmul.f32 %v3296, %v1327
      %v3310 = vmul.f32 %v3302, %v1328
      %v3311 = vpack.c.bf16 %v3304, %v3303
      %v3312 = vpack.c.bf16 %v3306, %v3305
      %v3313 = vpack.c.bf16 %v3308, %v3307
      %v3314 = vpack.c.bf16 %v3310, %v3309
      %v3319 = vunpack.c.l.b16 %v3055
      %v3320 = vunpack.c.h.b16 %v3055
      %v3321 = vunpack.c.l.b16 %v3056
      %v3322 = vunpack.c.h.b16 %v3056
      %v3323 = vunpack.c.l.b16 %v3057
      %v3324 = vunpack.c.h.b16 %v3057
      %v3325 = vunpack.c.l.b16 %v3058
      %v3326 = vunpack.c.h.b16 %v3058
      %v3327 = vpack.c.b16 %v3323, %v3319
      %v3328 = vpack.c.b16 %v3324, %v3320
      %v3329 = vpack.c.b16 %v3325, %v3321
      %v3330 = vpack.c.b16 %v3326, %v3322
      %v3339 = vunpack.c.l.b16 %v3091
      %v3340 = vunpack.c.h.b16 %v3091
      %v3341 = vunpack.c.l.b16 %v3092
      %v3342 = vunpack.c.h.b16 %v3092
      %v3343 = vunpack.c.l.b16 %v3093
      %v3344 = vunpack.c.h.b16 %v3093
      %v3345 = vunpack.c.l.b16 %v3094
      %v3346 = vunpack.c.h.b16 %v3094
      %v3347 = vpack.c.b16 %v3343, %v3339
      %v3348 = vpack.c.b16 %v3344, %v3340
      %v3349 = vpack.c.b16 %v3345, %v3341
      %v3350 = vpack.c.b16 %v3346, %v3342
      %v3359 = vunpack.c.l.b16 %v3127
      %v3360 = vunpack.c.h.b16 %v3127
      %v3361 = vunpack.c.l.b16 %v3128
      %v3362 = vunpack.c.h.b16 %v3128
      %v3363 = vunpack.c.l.b16 %v3129
      %v3364 = vunpack.c.h.b16 %v3129
      %v3365 = vunpack.c.l.b16 %v3130
      %v3366 = vunpack.c.h.b16 %v3130
      %v3367 = vpack.c.b16 %v3363, %v3359
      %v3368 = vpack.c.b16 %v3364, %v3360
      %v3369 = vpack.c.b16 %v3365, %v3361
      %v3370 = vpack.c.b16 %v3366, %v3362
      %v3379 = vunpack.c.l.b16 %v3163
      %v3380 = vunpack.c.h.b16 %v3163
      %v3381 = vunpack.c.l.b16 %v3164
      %v3382 = vunpack.c.h.b16 %v3164
      %v3383 = vunpack.c.l.b16 %v3165
      %v3384 = vunpack.c.h.b16 %v3165
      %v3385 = vunpack.c.l.b16 %v3166
      %v3386 = vunpack.c.h.b16 %v3166
      %v3387 = vpack.c.b16 %v3383, %v3379
      %v3388 = vpack.c.b16 %v3384, %v3380
      %v3389 = vpack.c.b16 %v3385, %v3381
      %v3390 = vpack.c.b16 %v3386, %v3382
      %v3399 = vunpack.c.l.b16 %v3167
      %v3400 = vunpack.c.h.b16 %v3167
      %v3401 = vunpack.c.l.b16 %v3168
      %v3402 = vunpack.c.h.b16 %v3168
      %v3403 = vunpack.c.l.b16 %v3169
      %v3404 = vunpack.c.h.b16 %v3169
      %v3405 = vunpack.c.l.b16 %v3170
      %v3406 = vunpack.c.h.b16 %v3170
      %v3407 = vpack.c.b16 %v3403, %v3399
      %v3408 = vpack.c.b16 %v3404, %v3400
      %v3409 = vpack.c.b16 %v3405, %v3401
      %v3410 = vpack.c.b16 %v3406, %v3402
      %v3419 = vunpack.c.l.b16 %v3203
      %v3420 = vunpack.c.h.b16 %v3203
      %v3421 = vunpack.c.l.b16 %v3204
      %v3422 = vunpack.c.h.b16 %v3204
      %v3423 = vunpack.c.l.b16 %v3205
      %v3424 = vunpack.c.h.b16 %v3205
      %v3425 = vunpack.c.l.b16 %v3206
      %v3426 = vunpack.c.h.b16 %v3206
      %v3427 = vpack.c.b16 %v3423, %v3419
      %v3428 = vpack.c.b16 %v3424, %v3420
      %v3429 = vpack.c.b16 %v3425, %v3421
      %v3430 = vpack.c.b16 %v3426, %v3422
      %v3439 = vunpack.c.l.b16 %v3239
      %v3440 = vunpack.c.h.b16 %v3239
      %v3441 = vunpack.c.l.b16 %v3240
      %v3442 = vunpack.c.h.b16 %v3240
      %v3443 = vunpack.c.l.b16 %v3241
      %v3444 = vunpack.c.h.b16 %v3241
      %v3445 = vunpack.c.l.b16 %v3242
      %v3446 = vunpack.c.h.b16 %v3242
      %v3447 = vpack.c.b16 %v3443, %v3439
      %v3448 = vpack.c.b16 %v3444, %v3440
      %v3449 = vpack.c.b16 %v3445, %v3441
      %v3450 = vpack.c.b16 %v3446, %v3442
      %v3459 = vunpack.c.l.b16 %v3275
      %v3460 = vunpack.c.h.b16 %v3275
      %v3461 = vunpack.c.l.b16 %v3276
      %v3462 = vunpack.c.h.b16 %v3276
      %v3463 = vunpack.c.l.b16 %v3277
      %v3464 = vunpack.c.h.b16 %v3277
      %v3465 = vunpack.c.l.b16 %v3278
      %v3466 = vunpack.c.h.b16 %v3278
      %v3467 = vpack.c.b16 %v3463, %v3459
      %v3468 = vpack.c.b16 %v3464, %v3460
      %v3469 = vpack.c.b16 %v3465, %v3461
      %v3470 = vpack.c.b16 %v3466, %v3462
      %v3479 = vunpack.c.l.b16 %v3311
      %v3480 = vunpack.c.h.b16 %v3311
      %v3481 = vunpack.c.l.b16 %v3312
      %v3482 = vunpack.c.h.b16 %v3312
      %v3483 = vunpack.c.l.b16 %v3313
      %v3484 = vunpack.c.h.b16 %v3313
      %v3485 = vunpack.c.l.b16 %v3314
      %v3486 = vunpack.c.h.b16 %v3314
      %v3487 = vpack.c.b16 %v3483, %v3479
      %v3488 = vpack.c.b16 %v3484, %v3480
      %v3489 = vpack.c.b16 %v3485, %v3481
      %v3490 = vpack.c.b16 %v3486, %v3482
      %s3495 = scalar_lea.vmem %s5, 16
      %v3496 = vld [vmem:[%s3495] sm:$0xff]
      %v3497 = vld [vmem:[%s3495 + $0x8] sm:$0xff]
      %v3500 = vunpack.c.l.b16 %v3496
      %v3501 = vunpack.c.h.b16 %v3496
      %v3502 = vunpack.c.l.b16 %v3497
      %v3503 = vunpack.c.h.b16 %v3497
      %v3504 = vpack.c.b16 %v3502, %v3500
      %v3505 = vpack.c.b16 %v3503, %v3501
      %v3508 = vsel %vm1548, %v3505, 0
      %3510 = vmatpush.bf16.msra.mxu0 %v3467
      %3511 = vmatpush.bf16.msra.mxu0 %v3447
      %3512 = vmatpush.bf16.msra.mxu0 %v3427
      %3513 = vmatpush.bf16.msra.mxu0 %v3407
      %3514 = vmatpush.bf16.msra.mxu0 %v3387
      %3515 = vmatpush.bf16.msra.mxu0 %v3367
      %3516 = vmatpush.bf16.msra.mxu0 %v3347
      %3517 = vmatpush.bf16.msra.mxu0 %v3327
      %3518 = vmatmul.bf16.gmra.mxu0 %v3504
      %v3519 = vpop.f32.mrf.mxu0
      %v3520 = vadd.f32 0.0, %v3519
      %v3521 = vpop.f32.mrf.mxu0
      %v3522 = vadd.f32 0.0, %v3521
      %3523 = vdwg.mxu0
      %3524 = vmatpush.bf16.msra.mxu0 0
      %3525 = vmatpush.bf16.msra.mxu0 0
      %3526 = vmatpush.bf16.msra.mxu0 0
      %3527 = vmatpush.bf16.msra.mxu0 0
      %3528 = vmatpush.bf16.msra.mxu0 0
      %3529 = vmatpush.bf16.msra.mxu0 0
      %3530 = vmatpush.bf16.msra.mxu0 0
      %3531 = vmatpush.bf16.msra.mxu0 %v3487
      %3532 = vmatmul.bf16.gmra.mxu0 %v3508
      %v3533 = vpop.f32.mrf.mxu0
      %v3534 = vadd.f32 %v3520, %v3533
      %v3535 = vpop.f32.mrf.mxu0
      %v3536 = vadd.f32 %v3522, %v3535
      %3537 = vdwg.mxu0
      %3538 = vmatpush.bf16.msra.mxu0 %v3468
      %3539 = vmatpush.bf16.msra.mxu0 %v3448
      %3540 = vmatpush.bf16.msra.mxu0 %v3428
      %3541 = vmatpush.bf16.msra.mxu0 %v3408
      %3542 = vmatpush.bf16.msra.mxu0 %v3388
      %3543 = vmatpush.bf16.msra.mxu0 %v3368
      %3544 = vmatpush.bf16.msra.mxu0 %v3348
      %3545 = vmatpush.bf16.msra.mxu0 %v3328
      %3546 = vmatmul.bf16.gmra.mxu0 %v3504
      %v3547 = vpop.f32.mrf.mxu0
      %v3548 = vadd.f32 0.0, %v3547
      %v3549 = vpop.f32.mrf.mxu0
      %v3550 = vadd.f32 0.0, %v3549
      %3551 = vdwg.mxu0
      %3552 = vmatpush.bf16.msra.mxu0 0
      %3553 = vmatpush.bf16.msra.mxu0 0
      %3554 = vmatpush.bf16.msra.mxu0 0
      %3555 = vmatpush.bf16.msra.mxu0 0
      %3556 = vmatpush.bf16.msra.mxu0 0
      %3557 = vmatpush.bf16.msra.mxu0 0
      %3558 = vmatpush.bf16.msra.mxu0 0
      %3559 = vmatpush.bf16.msra.mxu0 %v3488
      %3560 = vmatmul.bf16.gmra.mxu0 %v3508
      %v3561 = vpop.f32.mrf.mxu0
      %v3562 = vadd.f32 %v3548, %v3561
      %v3563 = vpop.f32.mrf.mxu0
      %v3564 = vadd.f32 %v3550, %v3563
      %3565 = vdwg.mxu0
      %3566 = vmatpush.bf16.msra.mxu0 %v3469
      %3567 = vmatpush.bf16.msra.mxu0 %v3449
      %3568 = vmatpush.bf16.msra.mxu0 %v3429
      %3569 = vmatpush.bf16.msra.mxu0 %v3409
      %3570 = vmatpush.bf16.msra.mxu0 %v3389
      %3571 = vmatpush.bf16.msra.mxu0 %v3369
      %3572 = vmatpush.bf16.msra.mxu0 %v3349
      %3573 = vmatpush.bf16.msra.mxu0 %v3329
      %3574 = vmatmul.bf16.gmra.mxu0 %v3504
      %v3575 = vpop.f32.mrf.mxu0
      %v3576 = vadd.f32 0.0, %v3575
      %v3577 = vpop.f32.mrf.mxu0
      %v3578 = vadd.f32 0.0, %v3577
      %3579 = vdwg.mxu0
      %3580 = vmatpush.bf16.msra.mxu0 0
      %3581 = vmatpush.bf16.msra.mxu0 0
      %3582 = vmatpush.bf16.msra.mxu0 0
      %3583 = vmatpush.bf16.msra.mxu0 0
      %3584 = vmatpush.bf16.msra.mxu0 0
      %3585 = vmatpush.bf16.msra.mxu0 0
      %3586 = vmatpush.bf16.msra.mxu0 0
      %3587 = vmatpush.bf16.msra.mxu0 %v3489
      %3588 = vmatmul.bf16.gmra.mxu0 %v3508
      %v3589 = vpop.f32.mrf.mxu0
      %v3590 = vadd.f32 %v3576, %v3589
      %v3591 = vpop.f32.mrf.mxu0
      %v3592 = vadd.f32 %v3578, %v3591
      %3593 = vdwg.mxu0
      %3594 = vmatpush.bf16.msra.mxu0 %v3470
      %3595 = vmatpush.bf16.msra.mxu0 %v3450
      %3596 = vmatpush.bf16.msra.mxu0 %v3430
      %3597 = vmatpush.bf16.msra.mxu0 %v3410
      %3598 = vmatpush.bf16.msra.mxu0 %v3390
      %3599 = vmatpush.bf16.msra.mxu0 %v3370
      %3600 = vmatpush.bf16.msra.mxu0 %v3350
      %3601 = vmatpush.bf16.msra.mxu0 %v3330
      %3602 = vmatmul.bf16.gmra.mxu0 %v3504
      %v3603 = vpop.f32.mrf.mxu0
      %v3604 = vadd.f32 0.0, %v3603
      %v3605 = vpop.f32.mrf.mxu0
      %v3606 = vadd.f32 0.0, %v3605
      %3607 = vdwg.mxu0
      %3608 = vmatpush.bf16.msra.mxu0 0
      %3609 = vmatpush.bf16.msra.mxu0 0
      %3610 = vmatpush.bf16.msra.mxu0 0
      %3611 = vmatpush.bf16.msra.mxu0 0
      %3612 = vmatpush.bf16.msra.mxu0 0
      %3613 = vmatpush.bf16.msra.mxu0 0
      %3614 = vmatpush.bf16.msra.mxu0 0
      %3615 = vmatpush.bf16.msra.mxu0 %v3490
      %3616 = vmatmul.bf16.gmra.mxu0 %v3508
      %v3617 = vpop.f32.mrf.mxu0
      %v3618 = vadd.f32 %v3604, %v3617
      %v3619 = vpop.f32.mrf.mxu0
      %v3620 = vadd.f32 %v3606, %v3619
      %3621 = vdwg.mxu0
      %v3624 = vunpack.c.l.b16 %v3021
      %v3625 = vunpack.c.h.b16 %v3021
      %v3626 = vunpack.c.l.b16 %v3022
      %v3627 = vunpack.c.h.b16 %v3022
      %v3628 = vpack.c.b16 %v3626, %v3624
      %v3629 = vpack.c.b16 %v3627, %v3625
      %v3632 = vsel %vm1548, %v3629, 0
      %3634 = vmatpush.bf16.msra.mxu0 %v2993
      %3635 = vmatpush.bf16.msra.mxu0 %v2973
      %3636 = vmatpush.bf16.msra.mxu0 %v2953
      %3637 = vmatpush.bf16.msra.mxu0 %v2933
      %3638 = vmatpush.bf16.msra.mxu0 %v2913
      %3639 = vmatpush.bf16.msra.mxu0 %v2893
      %3640 = vmatpush.bf16.msra.mxu0 %v2873
      %3641 = vmatpush.bf16.msra.mxu0 %v2853
      %3642 = vmatmul.bf16.gmra.mxu0 %v3628
      %v3643 = vpop.f32.mrf.mxu0
      %v3644 = vadd.f32 %v3534, %v3643
      %v3645 = vpop.f32.mrf.mxu0
      %v3646 = vadd.f32 %v3536, %v3645
      %3647 = vdwg.mxu0
      %3648 = vmatpush.bf16.msra.mxu0 0
      %3649 = vmatpush.bf16.msra.mxu0 0
      %3650 = vmatpush.bf16.msra.mxu0 0
      %3651 = vmatpush.bf16.msra.mxu0 0
      %3652 = vmatpush.bf16.msra.mxu0 0
      %3653 = vmatpush.bf16.msra.mxu0 0
      %3654 = vmatpush.bf16.msra.mxu0 0
      %3655 = vmatpush.bf16.msra.mxu0 %v3013
      %3656 = vmatmul.bf16.gmra.mxu0 %v3632
      %v3657 = vpop.f32.mrf.mxu0
      %v3658 = vadd.f32 %v3644, %v3657
      %v3659 = vpop.f32.mrf.mxu0
      %v3660 = vadd.f32 %v3646, %v3659
      %3661 = vdwg.mxu0
      %3662 = vmatpush.bf16.msra.mxu0 %v2994
      %3663 = vmatpush.bf16.msra.mxu0 %v2974
      %3664 = vmatpush.bf16.msra.mxu0 %v2954
      %3665 = vmatpush.bf16.msra.mxu0 %v2934
      %3666 = vmatpush.bf16.msra.mxu0 %v2914
      %3667 = vmatpush.bf16.msra.mxu0 %v2894
      %3668 = vmatpush.bf16.msra.mxu0 %v2874
      %3669 = vmatpush.bf16.msra.mxu0 %v2854
      %3670 = vmatmul.bf16.gmra.mxu0 %v3628
      %v3671 = vpop.f32.mrf.mxu0
      %v3672 = vadd.f32 %v3562, %v3671
      %v3673 = vpop.f32.mrf.mxu0
      %v3674 = vadd.f32 %v3564, %v3673
      %3675 = vdwg.mxu0
      %3676 = vmatpush.bf16.msra.mxu0 0
      %3677 = vmatpush.bf16.msra.mxu0 0
      %3678 = vmatpush.bf16.msra.mxu0 0
      %3679 = vmatpush.bf16.msra.mxu0 0
      %3680 = vmatpush.bf16.msra.mxu0 0
      %3681 = vmatpush.bf16.msra.mxu0 0
      %3682 = vmatpush.bf16.msra.mxu0 0
      %3683 = vmatpush.bf16.msra.mxu0 %v3014
      %3684 = vmatmul.bf16.gmra.mxu0 %v3632
      %v3685 = vpop.f32.mrf.mxu0
      %v3686 = vadd.f32 %v3672, %v3685
      %v3687 = vpop.f32.mrf.mxu0
      %v3688 = vadd.f32 %v3674, %v3687
      %3689 = vdwg.mxu0
      %3690 = vmatpush.bf16.msra.mxu0 %v2995
      %3691 = vmatpush.bf16.msra.mxu0 %v2975
      %3692 = vmatpush.bf16.msra.mxu0 %v2955
      %3693 = vmatpush.bf16.msra.mxu0 %v2935
      %3694 = vmatpush.bf16.msra.mxu0 %v2915
      %3695 = vmatpush.bf16.msra.mxu0 %v2895
      %3696 = vmatpush.bf16.msra.mxu0 %v2875
      %3697 = vmatpush.bf16.msra.mxu0 %v2855
      %3698 = vmatmul.bf16.gmra.mxu0 %v3628
      %v3699 = vpop.f32.mrf.mxu0
      %v3700 = vadd.f32 %v3590, %v3699
      %v3701 = vpop.f32.mrf.mxu0
      %v3702 = vadd.f32 %v3592, %v3701
      %3703 = vdwg.mxu0
      %3704 = vmatpush.bf16.msra.mxu0 0
      %3705 = vmatpush.bf16.msra.mxu0 0
      %3706 = vmatpush.bf16.msra.mxu0 0
      %3707 = vmatpush.bf16.msra.mxu0 0
      %3708 = vmatpush.bf16.msra.mxu0 0
      %3709 = vmatpush.bf16.msra.mxu0 0
      %3710 = vmatpush.bf16.msra.mxu0 0
      %3711 = vmatpush.bf16.msra.mxu0 %v3015
      %3712 = vmatmul.bf16.gmra.mxu0 %v3632
      %v3713 = vpop.f32.mrf.mxu0
      %v3714 = vadd.f32 %v3700, %v3713
      %v3715 = vpop.f32.mrf.mxu0
      %v3716 = vadd.f32 %v3702, %v3715
      %3717 = vdwg.mxu0
      %3718 = vmatpush.bf16.msra.mxu0 %v2996
      %3719 = vmatpush.bf16.msra.mxu0 %v2976
      %3720 = vmatpush.bf16.msra.mxu0 %v2956
      %3721 = vmatpush.bf16.msra.mxu0 %v2936
      %3722 = vmatpush.bf16.msra.mxu0 %v2916
      %3723 = vmatpush.bf16.msra.mxu0 %v2896
      %3724 = vmatpush.bf16.msra.mxu0 %v2876
      %3725 = vmatpush.bf16.msra.mxu0 %v2856
      %3726 = vmatmul.bf16.gmra.mxu0 %v3628
      %v3727 = vpop.f32.mrf.mxu0
      %v3728 = vadd.f32 %v3618, %v3727
      %v3729 = vpop.f32.mrf.mxu0
      %v3730 = vadd.f32 %v3620, %v3729
      %3731 = vdwg.mxu0
      %3732 = vmatpush.bf16.msra.mxu0 0
      %3733 = vmatpush.bf16.msra.mxu0 0
      %3734 = vmatpush.bf16.msra.mxu0 0
      %3735 = vmatpush.bf16.msra.mxu0 0
      %3736 = vmatpush.bf16.msra.mxu0 0
      %3737 = vmatpush.bf16.msra.mxu0 0
      %3738 = vmatpush.bf16.msra.mxu0 0
      %3739 = vmatpush.bf16.msra.mxu0 %v3016
      %3740 = vmatmul.bf16.gmra.mxu0 %v3632
      %v3741 = vpop.f32.mrf.mxu0
      %v3742 = vadd.f32 %v3728, %v3741
      %v3743 = vpop.f32.mrf.mxu0
      %v3744 = vadd.f32 %v3730, %v3743
      %3745 = vdwg.mxu0
      %v3746 = vmul.f32 %v2537, %v1884
      %v3747 = vmul.f32 %v2535, %v1885
      %v3748 = vmul.f32 %v2533, %v1886
      %v3749 = vmul.f32 %v2539, %v1887
      %v3750 = vmul.f32 %v2538, %v1884
      %v3751 = vmul.f32 %v2536, %v1885
      %v3752 = vmul.f32 %v2534, %v1886
      %v3753 = vmul.f32 %v2540, %v1887
      %v3754 = vpack.c.bf16 %v3747, %v3746
      %v3755 = vpack.c.bf16 %v3749, %v3748
      %v3756 = vpack.c.bf16 %v3751, %v3750
      %v3757 = vpack.c.bf16 %v3753, %v3752
      %v3758 = vmul.f32 %v2573, %v1905
      %v3759 = vmul.f32 %v2571, %v1906
      %v3760 = vmul.f32 %v2569, %v1907
      %v3761 = vmul.f32 %v2575, %v1908
      %v3762 = vmul.f32 %v2574, %v1905
      %v3763 = vmul.f32 %v2572, %v1906
      %v3764 = vmul.f32 %v2570, %v1907
      %v3765 = vmul.f32 %v2576, %v1908
      %v3766 = vpack.c.bf16 %v3759, %v3758
      %v3767 = vpack.c.bf16 %v3761, %v3760
      %v3768 = vpack.c.bf16 %v3763, %v3762
      %v3769 = vpack.c.bf16 %v3765, %v3764
      %v3770 = vmul.f32 %v2609, %v1926
      %v3771 = vmul.f32 %v2607, %v1927
      %v3772 = vmul.f32 %v2605, %v1928
      %v3773 = vmul.f32 %v2611, %v1929
      %v3774 = vmul.f32 %v2610, %v1926
      %v3775 = vmul.f32 %v2608, %v1927
      %v3776 = vmul.f32 %v2606, %v1928
      %v3777 = vmul.f32 %v2612, %v1929
      %v3778 = vpack.c.bf16 %v3771, %v3770
      %v3779 = vpack.c.bf16 %v3773, %v3772
      %v3780 = vpack.c.bf16 %v3775, %v3774
      %v3781 = vpack.c.bf16 %v3777, %v3776
      %v3782 = vmul.f32 %v2645, %v1947
      %v3783 = vmul.f32 %v2643, %v1948
      %v3784 = vmul.f32 %v2641, %v1949
      %v3785 = vmul.f32 %v2647, %v1950
      %v3786 = vmul.f32 %v2646, %v1947
      %v3787 = vmul.f32 %v2644, %v1948
      %v3788 = vmul.f32 %v2642, %v1949
      %v3789 = vmul.f32 %v2648, %v1950
      %v3790 = vpack.c.bf16 %v3783, %v3782
      %v3791 = vpack.c.bf16 %v3785, %v3784
      %v3792 = vpack.c.bf16 %v3787, %v3786
      %v3793 = vpack.c.bf16 %v3789, %v3788
      %v3794 = vmul.f32 %v2681, %v1968
      %v3795 = vmul.f32 %v2679, %v1969
      %v3796 = vmul.f32 %v2677, %v1970
      %v3797 = vmul.f32 %v2683, %v1971
      %v3798 = vmul.f32 %v2682, %v1968
      %v3799 = vmul.f32 %v2680, %v1969
      %v3800 = vmul.f32 %v2678, %v1970
      %v3801 = vmul.f32 %v2684, %v1971
      %v3802 = vpack.c.bf16 %v3795, %v3794
      %v3803 = vpack.c.bf16 %v3797, %v3796
      %v3804 = vpack.c.bf16 %v3799, %v3798
      %v3805 = vpack.c.bf16 %v3801, %v3800
      %v3806 = vmul.f32 %v2717, %v1989
      %v3807 = vmul.f32 %v2715, %v1990
      %v3808 = vmul.f32 %v2713, %v1991
      %v3809 = vmul.f32 %v2719, %v1992
      %v3810 = vmul.f32 %v2718, %v1989
      %v3811 = vmul.f32 %v2716, %v1990
      %v3812 = vmul.f32 %v2714, %v1991
      %v3813 = vmul.f32 %v2720, %v1992
      %v3814 = vpack.c.bf16 %v3807, %v3806
      %v3815 = vpack.c.bf16 %v3809, %v3808
      %v3816 = vpack.c.bf16 %v3811, %v3810
      %v3817 = vpack.c.bf16 %v3813, %v3812
      %v3818 = vmul.f32 %v2753, %v2010
      %v3819 = vmul.f32 %v2751, %v2011
      %v3820 = vmul.f32 %v2749, %v2012
      %v3821 = vmul.f32 %v2755, %v2013
      %v3822 = vmul.f32 %v2754, %v2010
      %v3823 = vmul.f32 %v2752, %v2011
      %v3824 = vmul.f32 %v2750, %v2012
      %v3825 = vmul.f32 %v2756, %v2013
      %v3826 = vpack.c.bf16 %v3819, %v3818
      %v3827 = vpack.c.bf16 %v3821, %v3820
      %v3828 = vpack.c.bf16 %v3823, %v3822
      %v3829 = vpack.c.bf16 %v3825, %v3824
      %v3830 = vmul.f32 %v2789, %v2031
      %v3831 = vmul.f32 %v2787, %v2032
      %v3832 = vmul.f32 %v2785, %v2033
      %v3833 = vmul.f32 %v2791, %v2034
      %v3834 = vmul.f32 %v2790, %v2031
      %v3835 = vmul.f32 %v2788, %v2032
      %v3836 = vmul.f32 %v2786, %v2033
      %v3837 = vmul.f32 %v2792, %v2034
      %v3838 = vpack.c.bf16 %v3831, %v3830
      %v3839 = vpack.c.bf16 %v3833, %v3832
      %v3840 = vpack.c.bf16 %v3835, %v3834
      %v3841 = vpack.c.bf16 %v3837, %v3836
      %v3842 = vmul.f32 %v2825, %v2052
      %v3843 = vmul.f32 %v2823, %v2053
      %v3844 = vmul.f32 %v2821, %v2054
      %v3845 = vmul.f32 %v2827, %v2055
      %v3846 = vmul.f32 %v2826, %v2052
      %v3847 = vmul.f32 %v2824, %v2053
      %v3848 = vmul.f32 %v2822, %v2054
      %v3849 = vmul.f32 %v2828, %v2055
      %v3850 = vpack.c.bf16 %v3843, %v3842
      %v3851 = vpack.c.bf16 %v3845, %v3844
      %v3852 = vpack.c.bf16 %v3847, %v3846
      %v3853 = vpack.c.bf16 %v3849, %v3848
      %v3858 = vunpack.c.l.b16 %v3754
      %v3859 = vunpack.c.h.b16 %v3754
      %v3860 = vunpack.c.l.b16 %v3755
      %v3861 = vunpack.c.h.b16 %v3755
      %v3862 = vunpack.c.l.b16 %v3756
      %v3863 = vunpack.c.h.b16 %v3756
      %v3864 = vunpack.c.l.b16 %v3757
      %v3865 = vunpack.c.h.b16 %v3757
      %v3866 = vpack.c.b16 %v3862, %v3858
      %v3867 = vpack.c.b16 %v3863, %v3859
      %v3868 = vpack.c.b16 %v3864, %v3860
      %v3869 = vpack.c.b16 %v3865, %v3861
      %v3878 = vunpack.c.l.b16 %v3766
      %v3879 = vunpack.c.h.b16 %v3766
      %v3880 = vunpack.c.l.b16 %v3767
      %v3881 = vunpack.c.h.b16 %v3767
      %v3882 = vunpack.c.l.b16 %v3768
      %v3883 = vunpack.c.h.b16 %v3768
      %v3884 = vunpack.c.l.b16 %v3769
      %v3885 = vunpack.c.h.b16 %v3769
      %v3886 = vpack.c.b16 %v3882, %v3878
      %v3887 = vpack.c.b16 %v3883, %v3879
      %v3888 = vpack.c.b16 %v3884, %v3880
      %v3889 = vpack.c.b16 %v3885, %v3881
      %v3898 = vunpack.c.l.b16 %v3778
      %v3899 = vunpack.c.h.b16 %v3778
      %v3900 = vunpack.c.l.b16 %v3779
      %v3901 = vunpack.c.h.b16 %v3779
      %v3902 = vunpack.c.l.b16 %v3780
      %v3903 = vunpack.c.h.b16 %v3780
      %v3904 = vunpack.c.l.b16 %v3781
      %v3905 = vunpack.c.h.b16 %v3781
      %v3906 = vpack.c.b16 %v3902, %v3898
      %v3907 = vpack.c.b16 %v3903, %v3899
      %v3908 = vpack.c.b16 %v3904, %v3900
      %v3909 = vpack.c.b16 %v3905, %v3901
      %v3918 = vunpack.c.l.b16 %v3790
      %v3919 = vunpack.c.h.b16 %v3790
      %v3920 = vunpack.c.l.b16 %v3791
      %v3921 = vunpack.c.h.b16 %v3791
      %v3922 = vunpack.c.l.b16 %v3792
      %v3923 = vunpack.c.h.b16 %v3792
      %v3924 = vunpack.c.l.b16 %v3793
      %v3925 = vunpack.c.h.b16 %v3793
      %v3926 = vpack.c.b16 %v3922, %v3918
      %v3927 = vpack.c.b16 %v3923, %v3919
      %v3928 = vpack.c.b16 %v3924, %v3920
      %v3929 = vpack.c.b16 %v3925, %v3921
      %v3938 = vunpack.c.l.b16 %v3802
      %v3939 = vunpack.c.h.b16 %v3802
      %v3940 = vunpack.c.l.b16 %v3803
      %v3941 = vunpack.c.h.b16 %v3803
      %v3942 = vunpack.c.l.b16 %v3804
      %v3943 = vunpack.c.h.b16 %v3804
      %v3944 = vunpack.c.l.b16 %v3805
      %v3945 = vunpack.c.h.b16 %v3805
      %v3946 = vpack.c.b16 %v3942, %v3938
      %v3947 = vpack.c.b16 %v3943, %v3939
      %v3948 = vpack.c.b16 %v3944, %v3940
      %v3949 = vpack.c.b16 %v3945, %v3941
      %v3958 = vunpack.c.l.b16 %v3814
      %v3959 = vunpack.c.h.b16 %v3814
      %v3960 = vunpack.c.l.b16 %v3815
      %v3961 = vunpack.c.h.b16 %v3815
      %v3962 = vunpack.c.l.b16 %v3816
      %v3963 = vunpack.c.h.b16 %v3816
      %v3964 = vunpack.c.l.b16 %v3817
      %v3965 = vunpack.c.h.b16 %v3817
      %v3966 = vpack.c.b16 %v3962, %v3958
      %v3967 = vpack.c.b16 %v3963, %v3959
      %v3968 = vpack.c.b16 %v3964, %v3960
      %v3969 = vpack.c.b16 %v3965, %v3961
      %v3978 = vunpack.c.l.b16 %v3826
      %v3979 = vunpack.c.h.b16 %v3826
      %v3980 = vunpack.c.l.b16 %v3827
      %v3981 = vunpack.c.h.b16 %v3827
      %v3982 = vunpack.c.l.b16 %v3828
      %v3983 = vunpack.c.h.b16 %v3828
      %v3984 = vunpack.c.l.b16 %v3829
      %v3985 = vunpack.c.h.b16 %v3829
      %v3986 = vpack.c.b16 %v3982, %v3978
      %v3987 = vpack.c.b16 %v3983, %v3979
      %v3988 = vpack.c.b16 %v3984, %v3980
      %v3989 = vpack.c.b16 %v3985, %v3981
      %v3998 = vunpack.c.l.b16 %v3838
      %v3999 = vunpack.c.h.b16 %v3838
      %v4000 = vunpack.c.l.b16 %v3839
      %v4001 = vunpack.c.h.b16 %v3839
      %v4002 = vunpack.c.l.b16 %v3840
      %v4003 = vunpack.c.h.b16 %v3840
      %v4004 = vunpack.c.l.b16 %v3841
      %v4005 = vunpack.c.h.b16 %v3841
      %v4006 = vpack.c.b16 %v4002, %v3998
      %v4007 = vpack.c.b16 %v4003, %v3999
      %v4008 = vpack.c.b16 %v4004, %v4000
      %v4009 = vpack.c.b16 %v4005, %v4001
      %v4018 = vunpack.c.l.b16 %v3850
      %v4019 = vunpack.c.h.b16 %v3850
      %v4020 = vunpack.c.l.b16 %v3851
      %v4021 = vunpack.c.h.b16 %v3851
      %v4022 = vunpack.c.l.b16 %v3852
      %v4023 = vunpack.c.h.b16 %v3852
      %v4024 = vunpack.c.l.b16 %v3853
      %v4025 = vunpack.c.h.b16 %v3853
      %v4026 = vpack.c.b16 %v4022, %v4018
      %v4027 = vpack.c.b16 %v4023, %v4019
      %v4028 = vpack.c.b16 %v4024, %v4020
      %v4029 = vpack.c.b16 %v4025, %v4021
      %s4034 = scalar_lea.vmem %s5, 32
      %v4035 = vld [vmem:[%s4034] sm:$0xff]
      %v4036 = vld [vmem:[%s4034 + $0x8] sm:$0xff]
      %v4039 = vunpack.c.l.b16 %v4035
      %v4040 = vunpack.c.h.b16 %v4035
      %v4041 = vunpack.c.l.b16 %v4036
      %v4042 = vunpack.c.h.b16 %v4036
      %v4043 = vpack.c.b16 %v4041, %v4039
      %v4044 = vpack.c.b16 %v4042, %v4040
      %v4047 = vsel %vm1548, %v4044, 0
      %4049 = vmatpush.bf16.msra.mxu0 %v4006
      %4050 = vmatpush.bf16.msra.mxu0 %v3986
      %4051 = vmatpush.bf16.msra.mxu0 %v3966
      %4052 = vmatpush.bf16.msra.mxu0 %v3946
      %4053 = vmatpush.bf16.msra.mxu0 %v3926
      %4054 = vmatpush.bf16.msra.mxu0 %v3906
      %4055 = vmatpush.bf16.msra.mxu0 %v3886
      %4056 = vmatpush.bf16.msra.mxu0 %v3866
      %4057 = vmatmul.bf16.gmra.mxu0 %v4043
      %v4058 = vpop.f32.mrf.mxu0
      %v4059 = vadd.f32 0.0, %v4058
      %v4060 = vpop.f32.mrf.mxu0
      %v4061 = vadd.f32 0.0, %v4060
      %4062 = vdwg.mxu0
      %4063 = vmatpush.bf16.msra.mxu0 0
      %4064 = vmatpush.bf16.msra.mxu0 0
      %4065 = vmatpush.bf16.msra.mxu0 0
      %4066 = vmatpush.bf16.msra.mxu0 0
      %4067 = vmatpush.bf16.msra.mxu0 0
      %4068 = vmatpush.bf16.msra.mxu0 0
      %4069 = vmatpush.bf16.msra.mxu0 0
      %4070 = vmatpush.bf16.msra.mxu0 %v4026
      %4071 = vmatmul.bf16.gmra.mxu0 %v4047
      %v4072 = vpop.f32.mrf.mxu0
      %v4073 = vadd.f32 %v4059, %v4072
      %v4074 = vpop.f32.mrf.mxu0
      %v4075 = vadd.f32 %v4061, %v4074
      %4076 = vdwg.mxu0
      %4077 = vmatpush.bf16.msra.mxu0 %v4007
      %4078 = vmatpush.bf16.msra.mxu0 %v3987
      %4079 = vmatpush.bf16.msra.mxu0 %v3967
      %4080 = vmatpush.bf16.msra.mxu0 %v3947
      %4081 = vmatpush.bf16.msra.mxu0 %v3927
      %4082 = vmatpush.bf16.msra.mxu0 %v3907
      %4083 = vmatpush.bf16.msra.mxu0 %v3887
      %4084 = vmatpush.bf16.msra.mxu0 %v3867
      %4085 = vmatmul.bf16.gmra.mxu0 %v4043
      %v4086 = vpop.f32.mrf.mxu0
      %v4087 = vadd.f32 0.0, %v4086
      %v4088 = vpop.f32.mrf.mxu0
      %v4089 = vadd.f32 0.0, %v4088
      %4090 = vdwg.mxu0
      %4091 = vmatpush.bf16.msra.mxu0 0
      %4092 = vmatpush.bf16.msra.mxu0 0
      %4093 = vmatpush.bf16.msra.mxu0 0
      %4094 = vmatpush.bf16.msra.mxu0 0
      %4095 = vmatpush.bf16.msra.mxu0 0
      %4096 = vmatpush.bf16.msra.mxu0 0
      %4097 = vmatpush.bf16.msra.mxu0 0
      %4098 = vmatpush.bf16.msra.mxu0 %v4027
      %4099 = vmatmul.bf16.gmra.mxu0 %v4047
      %v4100 = vpop.f32.mrf.mxu0
      %v4101 = vadd.f32 %v4087, %v4100
      %v4102 = vpop.f32.mrf.mxu0
      %v4103 = vadd.f32 %v4089, %v4102
      %4104 = vdwg.mxu0
      %4105 = vmatpush.bf16.msra.mxu0 %v4008
      %4106 = vmatpush.bf16.msra.mxu0 %v3988
      %4107 = vmatpush.bf16.msra.mxu0 %v3968
      %4108 = vmatpush.bf16.msra.mxu0 %v3948
      %4109 = vmatpush.bf16.msra.mxu0 %v3928
      %4110 = vmatpush.bf16.msra.mxu0 %v3908
      %4111 = vmatpush.bf16.msra.mxu0 %v3888
      %4112 = vmatpush.bf16.msra.mxu0 %v3868
      %4113 = vmatmul.bf16.gmra.mxu0 %v4043
      %v4114 = vpop.f32.mrf.mxu0
      %v4115 = vadd.f32 0.0, %v4114
      %v4116 = vpop.f32.mrf.mxu0
      %v4117 = vadd.f32 0.0, %v4116
      %4118 = vdwg.mxu0
      %4119 = vmatpush.bf16.msra.mxu0 0
      %4120 = vmatpush.bf16.msra.mxu0 0
      %4121 = vmatpush.bf16.msra.mxu0 0
      %4122 = vmatpush.bf16.msra.mxu0 0
      %4123 = vmatpush.bf16.msra.mxu0 0
      %4124 = vmatpush.bf16.msra.mxu0 0
      %4125 = vmatpush.bf16.msra.mxu0 0
      %4126 = vmatpush.bf16.msra.mxu0 %v4028
      %4127 = vmatmul.bf16.gmra.mxu0 %v4047
      %v4128 = vpop.f32.mrf.mxu0
      %v4129 = vadd.f32 %v4115, %v4128
      %v4130 = vpop.f32.mrf.mxu0
      %v4131 = vadd.f32 %v4117, %v4130
      %4132 = vdwg.mxu0
      %4133 = vmatpush.bf16.msra.mxu0 %v4009
      %4134 = vmatpush.bf16.msra.mxu0 %v3989
      %4135 = vmatpush.bf16.msra.mxu0 %v3969
      %4136 = vmatpush.bf16.msra.mxu0 %v3949
      %4137 = vmatpush.bf16.msra.mxu0 %v3929
      %4138 = vmatpush.bf16.msra.mxu0 %v3909
      %4139 = vmatpush.bf16.msra.mxu0 %v3889
      %4140 = vmatpush.bf16.msra.mxu0 %v3869
      %4141 = vmatmul.bf16.gmra.mxu0 %v4043
      %v4142 = vpop.f32.mrf.mxu0
      %v4143 = vadd.f32 0.0, %v4142
      %v4144 = vpop.f32.mrf.mxu0
      %v4145 = vadd.f32 0.0, %v4144
      %4146 = vdwg.mxu0
      %4147 = vmatpush.bf16.msra.mxu0 0
      %4148 = vmatpush.bf16.msra.mxu0 0
      %4149 = vmatpush.bf16.msra.mxu0 0
      %4150 = vmatpush.bf16.msra.mxu0 0
      %4151 = vmatpush.bf16.msra.mxu0 0
      %4152 = vmatpush.bf16.msra.mxu0 0
      %4153 = vmatpush.bf16.msra.mxu0 0
      %4154 = vmatpush.bf16.msra.mxu0 %v4029
      %4155 = vmatmul.bf16.gmra.mxu0 %v4047
      %v4156 = vpop.f32.mrf.mxu0
      %v4157 = vadd.f32 %v4143, %v4156
      %v4158 = vpop.f32.mrf.mxu0
      %v4159 = vadd.f32 %v4145, %v4158
      %4160 = vdwg.mxu0
      %v4161 = vadd.f32 %v3658, %v4073
      %v4162 = vadd.f32 %v3686, %v4101
      %v4163 = vadd.f32 %v3714, %v4129
      %v4164 = vadd.f32 %v3742, %v4157
      %v4165 = vadd.f32 %v3660, %v4075
      %v4166 = vadd.f32 %v3688, %v4103
      %v4167 = vadd.f32 %v3716, %v4131
      %v4168 = vadd.f32 %v3744, %v4159
      %v4169 = vld [vmem:[%s6] sm:$0xff]
      %v4170 = vld [vmem:[%s6 + $0x8] sm:$0xff]
      %4172 = vset.pattern.permute.xlu0 0
      %4173 = vperm.xlu0 %4172, %v4169
      %v4174 = vpop.permute.xlu0 %4173
      %4177 = vset.pattern.permute.xlu0 0
      %4178 = vperm.xlu0 %4177, %v4170
      %v4179 = vpop.permute.xlu0 %4178
      %v4181 = vmul.f32 %v4161, %v4174
      %v4182 = vmul.f32 %v4162, %v4174
      %v4183 = vmul.f32 %v4163, %v4174
      %v4184 = vmul.f32 %v4164, %v4174
      %v4185 = vmul.f32 %v4165, %v4179
      %v4186 = vmul.f32 %v4166, %v4179
      %v4187 = vmul.f32 %v4167, %v4179
      %v4188 = vmul.f32 %v4168, %v4179
      %v4189 = vld [vmem:[%s7] sm:$0xff]
      %v4190 = vld [vmem:[%s7 + $0x8] sm:$0xff]
      %4192 = vset.pattern.permute.xlu0 0
      %4193 = vperm.xlu0 %4192, %v4189
      %v4194 = vpop.permute.xlu0 %4193
      %4197 = vset.pattern.permute.xlu0 0
      %4198 = vperm.xlu0 %4197, %v4190
      %v4199 = vpop.permute.xlu0 %4198
      %v4201 = vadd.f32 %v4181, %v4194
      %v4202 = vadd.f32 %v4182, %v4194
      %v4203 = vadd.f32 %v4183, %v4194
      %v4204 = vadd.f32 %v4184, %v4194
      %v4205 = vadd.f32 %v4185, %v4199
      %v4206 = vadd.f32 %v4186, %v4199
      %v4207 = vadd.f32 %v4187, %v4199
      %v4208 = vadd.f32 %v4188, %v4199
      %v4209 = vmax.f32 %v4201, 0.0
      %v4210 = vmax.f32 %v4202, 0.0
      %v4211 = vmax.f32 %v4203, 0.0
      %v4212 = vmax.f32 %v4204, 0.0
      %v4213 = vmax.f32 %v4205, 0.0
      %v4214 = vmax.f32 %v4206, 0.0
      %v4215 = vmax.f32 %v4207, 0.0
      %v4216 = vmax.f32 %v4208, 0.0
      %v4217 = vadd.f32 %v4209, %v2509
      %v4218 = vadd.f32 %v4210, %v2510
      %v4219 = vadd.f32 %v4211, %v2511
      %v4220 = vadd.f32 %v4212, %v2512
      %v4221 = vadd.f32 %v4213, %v2513
      %v4222 = vadd.f32 %v4214, %v2514
      %v4223 = vadd.f32 %v4215, %v2515
      %v4224 = vadd.f32 %v4216, %v2516
      %v4225 = vmax.f32 %v4217, 0.0
      %v4226 = vmax.f32 %v4218, 0.0
      %v4227 = vmax.f32 %v4219, 0.0
      %v4228 = vmax.f32 %v4220, 0.0
      %v4229 = vmax.f32 %v4221, 0.0
      %v4230 = vmax.f32 %v4222, 0.0
      %v4231 = vmax.f32 %v4223, 0.0
      %v4232 = vmax.f32 %v4224, 0.0
      %4233 = vst [vmem:[%s332] sm:$0xff] %v4225
      %4234 = vst [vmem:[%s332 + $0x8] sm:$0xff] %v4226
      %4235 = vst [vmem:[%s332 + $0x10] sm:$0xff] %v4227
      %4236 = vst [vmem:[%s332 + $0x18] sm:$0xff] %v4228
      %4237 = vst [vmem:[%s332 + $0x20] sm:$0xff] %v4229
      %4238 = vst [vmem:[%s332 + $0x28] sm:$0xff] %v4230
      %4239 = vst [vmem:[%s332 + $0x30] sm:$0xff] %v4231
      %4240 = vst [vmem:[%s332 + $0x38] sm:$0xff] %v4232
      %p4241 = scmp.lt.s32.totalorder %s20, 1
      %s4242 = scalar_select %p4241, %s20, 1
      %s4243 = smul.addr %s4242, 8
      %s4244 = smul.addr %s4243, 8
      %s4245 = scalar_lea.vmem %s9, %s4244
      // Predicated region
      $region57: #{res_encoder3d_forward.1} parent=55 // pred_check
        %p4246 = pneg %p232
      $region58: #{res_encoder3d_forward.1} parent=55 // pred_check_branch
        %4248 = sbr.rel (%p4246) target = $region60
      $region59: #{res_encoder3d_forward.1} parent=55 // pred_region
        _
      $region60: #{res_encoder3d_forward.1} parent=55 // pred_fallthru
        _
    $region56: #{res_encoder3d_forward.1} parent=5 // pred_fallthru
      _
    %p4249 = scmp.le.s32.totalorder 2, %s15
    // Predicated region
    $region61: #{res_encoder3d_forward.1} parent=5 // pred_check
      %p4250 = pneg %p4249
    $region62: #{res_encoder3d_forward.1} parent=5 // pred_check_branch
      %4252 = sbr.rel (%p4250) target = $region64
    $region63: #{res_encoder3d_forward.1} parent=5 // pred_region
      %s4253 = ssub.s32 %s15, 2
      // Predicated region
      $region65: #{res_encoder3d_forward.1} parent=63 // pred_check
        %p4254 = pneg %p238
      $region66: #{res_encoder3d_forward.1} parent=63 // pred_check_branch
        %4256 = sbr.rel (%p4254) target = $region68
      $region67: #{res_encoder3d_forward.1} parent=63 // pred_region
        %p4257 = scmp.lt.s32.totalorder %s21, 1
        %s4258 = scalar_select %p4257, %s21, 1
        %s4259 = smul.addr %s4258, 8
        %s4260 = smul.addr %s4259, 8
        %s4261 = scalar_lea.vmem %s9, %s4260
      $region68: #{res_encoder3d_forward.1} parent=63 // pred_fallthru
        _
    $region64: #{res_encoder3d_forward.1} parent=5 // pred_fallthru
      _
  $region6: #{res_encoder3d_forward.1} parent=0 // loop_footer
    %s19 = sadd.s32 1, %s15
  $region7: #{res_encoder3d_forward.1} parent=0 // loop_footer_branch
    %14 = sbr.rel target = $region3
  $region8: #{res_encoder3d_forward.1} parent=0 // loop_exit
    _

</llo_original>
